<compile_context>
chip_gen: v6e
topology: v6e:2x2x1
jax: 0.10.0
libtpu: 0.0.40
codegen_flags: <defaults>
</compile_context>

<pallas_src>
import functools

import jax
import jax.numpy as jnp
from jax import lax
from jax.experimental import pallas as pl
from jax.experimental.pallas import tpu as pltpu

BN_EPS = 1e-5
LANE = 128
_CONV_TILE_M = 1024      # sweep per generation
_MLP_TILE_M = 512
_GATES_TILE_M = 256


def _round_up(x, m):
    return (x + m - 1) // m * m


def _default_vmem_limit():
    # ~3/4 of physical VMEM, capped: v5e/v6e (128 MiB) -> 96 MiB, v7x (64 MiB) -> 48 MiB.
    try:
        info = pltpu.get_tpu_info()
        phys = int(getattr(info, "vmem_capacity_bytes", 64 * 1024 * 1024))
    except Exception:
        phys = 64 * 1024 * 1024
    return max(32 * 1024 * 1024, min(100 * 1024 * 1024, (phys * 3) // 4))


_VMEM_LIMIT = _default_vmem_limit()


def _sigmoid(x):
    return 1.0 / (1.0 + jnp.exp(-x))


# ----------------------------------------------------------------------------
# ConvBlock pass 1: GEMM + per-channel sum / sum-of-squares (per-core partials)
# ----------------------------------------------------------------------------
def _conv_stats_kernel(p_ref, w_ref, stats_ref):
    @pl.when(pl.program_id(1) == 0)
    def _():
        stats_ref[...] = jnp.zeros_like(stats_ref)

    y = jnp.dot(p_ref[...], w_ref[...], preferred_element_type=jnp.float32)
    stats_ref[0:2, :] += jnp.concatenate(
        [jnp.sum(y, axis=0, keepdims=True),
         jnp.sum(y * y, axis=0, keepdims=True)], axis=0)


def _conv_gemm_stats_kernel(p_ref, w_ref, y_ref, stats_ref):
    @pl.when(pl.program_id(1) == 0)
    def _():
        stats_ref[...] = jnp.zeros_like(stats_ref)

    y = jnp.dot(p_ref[...], w_ref[...], preferred_element_type=jnp.float32)
    y_ref[...] = y.astype(y_ref.dtype)                 # bf16 intermediate
    stats_ref[0:2, :] += jnp.concatenate(
        [jnp.sum(y, axis=0, keepdims=True),
         jnp.sum(y * y, axis=0, keepdims=True)], axis=0)


# ----------------------------------------------------------------------------
# ConvBlock pass 2: BatchNorm (batch stats) + ReLU
# ----------------------------------------------------------------------------
def _bn_scale_shift(stats_ref, gamma_ref, beta_ref, inv_m):
    mean = stats_ref[0:1, :] * inv_m
    var = jnp.maximum(stats_ref[1:2, :] * inv_m - mean * mean, 0.0)
    scale = gamma_ref[...] * lax.rsqrt(var + BN_EPS)
    shift = beta_ref[...] - mean * scale
    return scale, shift


def _bn_relu_from_patches_kernel(p_ref, w_ref, stats_ref, gamma_ref, beta_ref,
                                 o_ref, *, inv_m):
    y = jnp.dot(p_ref[...], w_ref[...], preferred_element_type=jnp.float32)
    scale, shift = _bn_scale_shift(stats_ref, gamma_ref, beta_ref, inv_m)
    o_ref[...] = jnp.maximum(y * scale + shift, 0.0).astype(o_ref.dtype)


def _bn_relu_from_y_kernel(y_ref, stats_ref, gamma_ref, beta_ref, o_ref, *, inv_m):
    y = y_ref[...].astype(jnp.float32)
    scale, shift = _bn_scale_shift(stats_ref, gamma_ref, beta_ref, inv_m)
    o_ref[...] = jnp.maximum(y * scale + shift, 0.0).astype(o_ref.dtype)


def _im2col_nhwc(x, kh, kw, dh, dw):
    """Zero padding (torch formula) + patch extraction. x: [N,H,W,C] -> [M, KH*KW*C]."""
    n, h, w, c = x.shape
    ph = (kh - 1) // 2 * dh
    pw = (kw - 1) // 2 * dw
    xp = jnp.pad(x, ((0, 0), (ph, ph), (pw, pw), (0, 0)))
    ho = h + 2 * ph - dh * (kh - 1)          # stride = 1
    wo = w + 2 * pw - dw * (kw - 1)
    cols = []
    for i in range(kh):
        for j in range(kw):
            cols.append(xp[:, i * dh:i * dh + ho, j * dw:j * dw + wo, :])
    patches = jnp.concatenate(cols, axis=-1)          # feature order (kh, kw, c)
    return patches.reshape(n * ho * wo, kh * kw * c), ho, wo


def conv_block_nhwc(x, conv_w, gamma, beta, *, kernel_size, dilation,
                    tile_m=_CONV_TILE_M):
    """ConvBlock forward (stride=1). x: [N,H,W,Cin], conv_w torch layout
    [Cout,Cin,KH,KW]. Returns [N,Ho,Wo,Cout] bf16."""
    n = x.shape[0]
    c_out = conv_w.shape[0]
    kh, kw = kernel_size
    dh, dw = dilation

    patches, ho, wo = _im2col_nhwc(x, kh, kw, dh, dw)
    m, p = patches.shape

    p_pad = _round_up(p, LANE)
    c_pad = _round_up(c_out, LANE)
    tm = min(tile_m, _round_up(m, 8))
    m_pad = _round_up(m, 2 * tm)             # 2-way core split in the stats pass
    n_tiles = m_pad // tm
    half = n_tiles // 2

    # bf16 operands for the MXU; zero padding keeps GEMM + BN stats exact
    # (padded rows/cols of patches and weights are all-zero).
    patches_bf = jnp.pad(patches.astype(jnp.bfloat16),
                         ((0, m_pad - m), (0, p_pad - p)))
    w_mat = jnp.transpose(conv_w, (2, 3, 1, 0)).reshape(p, c_out)
    w_bf = jnp.pad(w_mat.astype(jnp.bfloat16),
                   ((0, p_pad - p), (0, c_pad - c_out)))
    gamma_p = jnp.pad(gamma.reshape(1, c_out).astype(jnp.float32),
                      ((0, 0), (0, c_pad - c_out)))
    beta_p = jnp.pad(beta.reshape(1, c_out).astype(jnp.float32),
                     ((0, 0), (0, c_pad - c_out)))

    # Recompute the GEMM in pass 2 when re-reading the patches is cheaper than a
    # bf16 intermediate write + read (p_pad*2 bytes vs c_pad*4 bytes per row).
    recompute = p_pad <= 2 * c_pad

    p_spec = pl.BlockSpec((tm, p_pad), lambda c, i: (c * half + i, 0))
    w_spec = pl.BlockSpec((p_pad, c_pad), lambda c, i: (0, 0))
    stats_spec = pl.BlockSpec((8, c_pad), lambda c, i: (c, 0))
    pass1_params = pltpu.CompilerParams(
        dimension_semantics=("parallel", "arbitrary"),
        vmem_limit_bytes=_VMEM_LIMIT)

    y_bf = None
    if recompute:
        stats2 = pl.pallas_call(
            _conv_stats_kernel,
            out_shape=jax.ShapeDtypeStruct((16, c_pad), jnp.float32),
            grid=(2, half),
            in_specs=[p_spec, w_spec],
            out_specs=stats_spec,
            compiler_params=pass1_params,
        )(patches_bf, w_bf)
    else:
        y_bf, stats2 = pl.pallas_call(
            _conv_gemm_stats_kernel,
            out_shape=(jax.ShapeDtypeStruct((m_pad, c_pad), jnp.bfloat16),
                       jax.ShapeDtypeStruct((16, c_pad), jnp.float32)),
            grid=(2, half),
            in_specs=[p_spec, w_spec],
            out_specs=(pl.BlockSpec((tm, c_pad), lambda c, i: (c * half + i, 0)),
                       stats_spec),
            compiler_params=pass1_params,
        )(patches_bf, w_bf)

    stats = stats2[:8] + stats2[8:]          # merge per-core partial sums

    pass2_params = pltpu.CompilerParams(
        dimension_semantics=("parallel",), vmem_limit_bytes=_VMEM_LIMIT)
    if recompute:
        out_flat = pl.pallas_call(
            functools.partial(_bn_relu_from_patches_kernel, inv_m=1.0 / m),
            out_shape=jax.ShapeDtypeStruct((m_pad, c_pad), jnp.bfloat16),
            grid=(n_tiles,),
            in_specs=[pl.BlockSpec((tm, p_pad), lambda i: (i, 0)),
                      pl.BlockSpec((p_pad, c_pad), lambda i: (0, 0)),
                      pl.BlockSpec((8, c_pad), lambda i: (0, 0)),
                      pl.BlockSpec((1, c_pad), lambda i: (0, 0)),
                      pl.BlockSpec((1, c_pad), lambda i: (0, 0))],
            out_specs=pl.BlockSpec((tm, c_pad), lambda i: (i, 0)),
            compiler_params=pass2_params,
        )(patches_bf, w_bf, stats, gamma_p, beta_p)
    else:
        out_flat = pl.pallas_call(
            functools.partial(_bn_relu_from_y_kernel, inv_m=1.0 / m),
            out_shape=jax.ShapeDtypeStruct((m_pad, c_pad), jnp.bfloat16),
            grid=(n_tiles,),
            in_specs=[pl.BlockSpec((tm, c_pad), lambda i: (i, 0)),
                      pl.BlockSpec((8, c_pad), lambda i: (0, 0)),
                      pl.BlockSpec((1, c_pad), lambda i: (0, 0)),
                      pl.BlockSpec((1, c_pad), lambda i: (0, 0))],
            out_specs=pl.BlockSpec((tm, c_pad), lambda i: (i, 0)),
            compiler_params=pass2_params,
        )(y_bf, stats, gamma_p, beta_p)

    return out_flat[:m, :c_out].reshape(n, ho, wo, c_out)


# ----------------------------------------------------------------------------
# Generic tiled Linear (+bias) kernel: used for the hoisted LSTM input projection
# ----------------------------------------------------------------------------
def _linear_kernel(x_ref, w_ref, b_ref, o_ref):
    o_ref[...] = (jnp.dot(x_ref[...], w_ref[...],
                          preferred_element_type=jnp.float32)
                  + b_ref[...]).astype(o_ref.dtype)


# ----------------------------------------------------------------------------
# Fused bidirectional LSTM recurrence: grid = (direction, time)
# ----------------------------------------------------------------------------
def _bilstm_step_kernel(gx_ref, whh_ref, h_out_ref, h_scr, c_scr, *, h_pad):
    # h/c scratch is per-core on megacore and re-initialized at time step 0 for
    # each direction, so it is safe whether the direction axis is split across
    # cores (v7x) or iterated sequentially (v5e/v6e).
    @pl.when(pl.program_id(1) == 0)
    def _():
        h_scr[...] = jnp.zeros_like(h_scr)
        c_scr[...] = jnp.zeros_like(c_scr)

    gates = (jnp.dot(h_scr[...].astype(jnp.bfloat16), whh_ref[0],
                     preferred_element_type=jnp.float32)
             + gx_ref[0])                                   # x@W_ih + b (hoisted)
    i_g = _sigmoid(gates[:, 0 * h_pad:1 * h_pad])
    f_g = _sigmoid(gates[:, 1 * h_pad:2 * h_pad])
    g_g = jnp.tanh(gates[:, 2 * h_pad:3 * h_pad])
    o_g = _sigmoid(gates[:, 3 * h_pad:4 * h_pad])
    c_new = f_g * c_scr[...] + i_g * g_g
    h_new = o_g * jnp.tanh(c_new)
    c_scr[...] = c_new
    h_scr[...] = h_new
    h_out_ref[0] = h_new.astype(h_out_ref.dtype)


def _pack_bilstm_weights(lp, hidden, in_dim, h_pad, in_pad):
    """torch LSTM params -> lane-padded GEMM layout (gate g at cols g*h_pad:...)."""
    def pack_dir(w_ih, w_hh, b_ih, b_hh):
        w_ih4 = w_ih.reshape(4, hidden, in_dim)
        w_hh4 = w_hh.reshape(4, hidden, hidden)
        wih_p = jnp.zeros((4, h_pad, in_pad), jnp.float32).at[:, :hidden, :in_dim].set(w_ih4)
        whh_p = jnp.zeros((4, h_pad, h_pad), jnp.float32).at[:, :hidden, :hidden].set(w_hh4)
        wih_mat = jnp.transpose(wih_p, (2, 0, 1)).reshape(in_pad, 4 * h_pad)
        whh_mat = jnp.transpose(whh_p, (2, 0, 1)).reshape(h_pad, 4 * h_pad)
        b4 = (b_ih + b_hh).reshape(4, hidden)
        b_p = jnp.zeros((4, h_pad), jnp.float32).at[:, :hidden].set(b4)
        return wih_mat, whh_mat, b_p.reshape(1, 4 * h_pad)

    wih_f, whh_f, b_f = pack_dir(lp["w_ih"], lp["w_hh"], lp["b_ih"], lp["b_hh"])
    wih_r, whh_r, b_r = pack_dir(lp["w_ih_rev"], lp["w_hh_rev"],
                                 lp["b_ih_rev"], lp["b_hh_rev"])
    wih_both = jnp.concatenate([wih_f, wih_r], axis=1).astype(jnp.bfloat16)  # [in_pad, 8*h_pad]
    b_both = jnp.concatenate([b_f, b_r], axis=1)                             # [1, 8*h_pad] f32
    whh_both = jnp.stack([whh_f, whh_r], axis=0).astype(jnp.bfloat16)        # [2, h_pad, 4*h_pad]
    return wih_both, whh_both, b_both


def bilstm(feat, lp, *, hidden):
    """feat: [T, N, in_dim]. Returns lane-padded [T, N, 2*h_pad] f32 (fwd cols
    0:h_pad, bwd cols h_pad:2*h_pad; padded lanes are exactly zero)."""
    t, n, in_dim = feat.shape
    in_pad = _round_up(in_dim, LANE)
    h_pad = _round_up(hidden, LANE)
    wih_both, whh_both, b_both = _pack_bilstm_weights(lp, hidden, in_dim, h_pad, in_pad)

    # Hoisted input projection for BOTH directions: one tiled bf16 GEMM.
    rows = t * n
    tm = min(_GATES_TILE_M, _round_up(rows, 8))
    rows_pad = _round_up(rows, tm)
    x_flat = jnp.pad(feat.astype(jnp.bfloat16).reshape(rows, in_dim),
                     ((0, rows_pad - rows), (0, in_pad - in_dim)))
    gates_x = pl.pallas_call(
        _linear_kernel,
        out_shape=jax.ShapeDtypeStruct((rows_pad, 8 * h_pad), jnp.float32),
        grid=(rows_pad // tm,),
        in_specs=[pl.BlockSpec((tm, in_pad), lambda i: (i, 0)),
                  pl.BlockSpec((in_pad, 8 * h_pad), lambda i: (0, 0)),
                  pl.BlockSpec((1, 8 * h_pad), lambda i: (0, 0))],
        out_specs=pl.BlockSpec((tm, 8 * h_pad), lambda i: (i, 0)),
        compiler_params=pltpu.CompilerParams(
            dimension_semantics=("parallel",), vmem_limit_bytes=_VMEM_LIMIT),
    )(x_flat, wih_both, b_both)
    gates_x = gates_x[:rows].reshape(t, n, 8 * h_pad)

    # Recurrent part: direction axis "parallel" (megacore), time "arbitrary".
    def time_map(d, s):
        return ((1 - d) * s + d * (t - 1 - s), 0, d)

    h_out = pl.pallas_call(
        functools.partial(_bilstm_step_kernel, h_pad=h_pad),
        out_shape=jax.ShapeDtypeStruct((t, n, 2 * h_pad), jnp.float32),
        grid=(2, t),
        in_specs=[pl.BlockSpec((1, n, 4 * h_pad), time_map),
                  pl.BlockSpec((1, h_pad, 4 * h_pad), lambda d, s: (d, 0, 0))],
        out_specs=pl.BlockSpec((1, n, h_pad), time_map),
        scratch_shapes=[pltpu.VMEM((n, h_pad), jnp.float32),
                        pltpu.VMEM((n, h_pad), jnp.float32)],
        compiler_params=pltpu.CompilerParams(
            dimension_semantics=("parallel", "arbitrary"),
            vmem_limit_bytes=_VMEM_LIMIT),
    )(gates_x, whh_both)
    return h_out, h_pad


# ----------------------------------------------------------------------------
# fc head: fused Linear+ReLU, Linear+ReLU, Linear+Sigmoid (bf16 dots, f32 epilogue)
# ----------------------------------------------------------------------------
def _mlp_head_kernel(x_ref, w1_ref, b1_ref, w2_ref, b2_ref, w3_ref, b3_ref,
                     o_ref):
    h1 = jnp.maximum(
        jnp.dot(x_ref[...], w1_ref[...], preferred_element_type=jnp.float32)
        + b1_ref[...], 0.0)
    h2 = jnp.maximum(
        jnp.dot(h1.astype(jnp.bfloat16), w2_ref[...],
                preferred_element_type=jnp.float32) + b2_ref[...], 0.0)
    z = (jnp.dot(h2.astype(jnp.bfloat16), w3_ref[...],
                 preferred_element_type=jnp.float32) + b3_ref[...])
    o_ref[...] = _sigmoid(z).astype(o_ref.dtype)


def mlp_head(x, w1_t, b1, w2_t, b2, w3_t, b3, *, tile_m=_MLP_TILE_M):
    """x: [M, D_in]; w*_t already in [in, out] layout (w1_t row-packed for the
    lane-padded LSTM output)."""
    m, d_in = x.shape
    d_h1, d_h2, d_out = w1_t.shape[1], w2_t.shape[1], w3_t.shape[1]

    d_in_p = _round_up(d_in, LANE)
    d_h1_p = _round_up(d_h1, LANE)
    d_h2_p = _round_up(d_h2, LANE)
    d_out_p = _round_up(d_out, LANE)
    tm = min(tile_m, _round_up(m, 8))
    m_pad = _round_up(m, tm)

    x_p = jnp.pad(x.astype(jnp.bfloat16), ((0, m_pad - m), (0, d_in_p - d_in)))
    w1_p = jnp.pad(w1_t.astype(jnp.bfloat16), ((0, d_in_p - d_in), (0, d_h1_p - d_h1)))
    b1_p = jnp.pad(b1.reshape(1, d_h1).astype(jnp.float32), ((0, 0), (0, d_h1_p - d_h1)))
    w2_p = jnp.pad(w2_t.astype(jnp.bfloat16), ((0, d_h1_p - d_h1), (0, d_h2_p - d_h2)))
    b2_p = jnp.pad(b2.reshape(1, d_h2).astype(jnp.float32), ((0, 0), (0, d_h2_p - d_h2)))
    w3_p = jnp.pad(w3_t.astype(jnp.bfloat16), ((0, d_h2_p - d_h2), (0, d_out_p - d_out)))
    b3_p = jnp.pad(b3.reshape(1, d_out).astype(jnp.float32), ((0, 0), (0, d_out_p - d_out)))

    out = pl.pallas_call(
        _mlp_head_kernel,
        out_shape=jax.ShapeDtypeStruct((m_pad, d_out_p), jnp.float32),
        grid=(m_pad // tm,),
        in_specs=[
            pl.BlockSpec((tm, d_in_p), lambda i: (i, 0)),
            pl.BlockSpec((d_in_p, d_h1_p), lambda i: (0, 0)),
            pl.BlockSpec((1, d_h1_p), lambda i: (0, 0)),
            pl.BlockSpec((d_h1_p, d_h2_p), lambda i: (0, 0)),
            pl.BlockSpec((1, d_h2_p), lambda i: (0, 0)),
            pl.BlockSpec((d_h2_p, d_out_p), lambda i: (0, 0)),
            pl.BlockSpec((1, d_out_p), lambda i: (0, 0)),
        ],
        out_specs=pl.BlockSpec((tm, d_out_p), lambda i: (i, 0)),
        compiler_params=pltpu.CompilerParams(
            dimension_semantics=("parallel",), vmem_limit_bytes=_VMEM_LIMIT),
    )(x_p, w1_p, b1_p, w2_p, b2_p, w3_p, b3_p)
    return out[:m, :d_out]


def _pack_fc1(w1, hidden, h_pad):
    """torch fc1 [out, 2*hidden] -> [2*h_pad, out] with real rows at 0:hidden and
    h_pad:h_pad+hidden, zeros elsewhere (padded LSTM lanes are exactly zero)."""
    d_h1 = w1.shape[0]
    w1_t = jnp.zeros((2 * h_pad, d_h1), jnp.float32)
    w1_t = w1_t.at[:hidden, :].set(w1[:, :hidden].T)
    w1_t = w1_t.at[h_pad:h_pad + hidden, :].set(w1[:, hidden:2 * hidden].T)
    return w1_t


# ----------------------------------------------------------------------------
# Full ContextAggNet forward
# ----------------------------------------------------------------------------
def _encode(x_nhwc, layers, kernel_sizes, dilations):
    h = x_nhwc
    for i in range(len(kernel_sizes)):
        p = layers[i]
        h = conv_block_nhwc(h, p["w"], p["gamma"], p["beta"],
                            kernel_size=kernel_sizes[i], dilation=dilations[i])
    p = layers[len(kernel_sizes)]
    return conv_block_nhwc(h, p["w"], p["gamma"], p["beta"],
                           kernel_size=(1, 1), dilation=(1, 1))


def _features_for_lstm(f_nhwc):
    # NHWC [N,F,T,C] -> torch's NCHW.view(N, C*F, T).permute(2,0,1) == [T,N,C*F]
    n, f, t, c = f_nhwc.shape
    return jnp.transpose(f_nhwc, (2, 0, 3, 1)).reshape(t, n, c * f)


def make_context_agg_net(kernel_sizes, dilations, freq_bins, nf,
                         hidden=200, fc_hidden=600):
    del nf, fc_hidden  # fixed by the weights passed in params

    def forward(params, x, noise):
        # One NCHW -> NHWC permute at the boundary; encoders stay NHWC (bf16 out).
        fx = _encode(jnp.transpose(x, (0, 2, 3, 1)), params["enc_x"],
                     kernel_sizes, dilations)
        fn = _encode(jnp.transpose(noise, (0, 2, 3, 1)), params["enc_n"],
                     kernel_sizes, dilations)
        feat = jnp.concatenate(
            [_features_for_lstm(fx), _features_for_lstm(fn)], axis=-1)  # [T,N,12F]

        t, b, _ = feat.shape
        h_out, h_pad = bilstm(feat, params["lstm"], hidden=hidden)      # [T,N,2*h_pad]

        # Keep the lane-padded layout all the way into the MLP head.
        h_flat = jnp.transpose(h_out, (1, 0, 2)).reshape(b * t, 2 * h_pad)
        fp = params["fc"]
        y = mlp_head(h_flat, _pack_fc1(fp["w1"], hidden, h_pad), fp["b1"],
                     fp["w2"].T, fp["b2"], fp["w3"].T, fp["b3"])  # [N*T, 2*freq_bins]

        y = y.reshape(b, t, 2 * freq_bins)
        return jnp.transpose(y, (0, 2, 1)).reshape(b, 2, freq_bins, t)

    return jax.jit(forward)


def _init_params(key, kernel_sizes, freq_bins, nf, hidden=200, fc_hidden=600):
    keys = iter(jax.random.split(key, 64))

    def conv_layer(cin, cout, ks):
        kh, kw = ks
        return {
            "w": 0.1 * jax.random.normal(next(keys), (cout, cin, kh, kw), jnp.float32),
            "gamma": 1.0 + 0.05 * jax.random.normal(next(keys), (cout,), jnp.float32),
            "beta": 0.05 * jax.random.normal(next(keys), (cout,), jnp.float32),
        }

    def enc(width, outf):
        layers, cin = [], 2
        for ks in kernel_sizes:
            layers.append(conv_layer(cin, width, ks))
            cin = width
        layers.append(conv_layer(cin, outf, (1, 1)))
        return layers

    in_dim = 12 * freq_bins
    rnd = lambda shape, s=0.05: s * jax.random.normal(next(keys), shape, jnp.float32)

    return {
        "enc_x": enc(nf, 8),
        "enc_n": enc(nf // 2, 4),
        "lstm": {
            "w_ih": rnd((4 * hidden, in_dim)), "w_hh": rnd((4 * hidden, hidden)),
            "b_ih": rnd((4 * hidden,)), "b_hh": rnd((4 * hidden,)),
            "w_ih_rev": rnd((4 * hidden, in_dim)), "w_hh_rev": rnd((4 * hidden, hidden)),
            "b_ih_rev": rnd((4 * hidden,)), "b_hh_rev": rnd((4 * hidden,)),
        },
        "fc": {
            "w1": rnd((fc_hidden, 2 * hidden)), "b1": rnd((fc_hidden,)),
            "w2": rnd((fc_hidden, fc_hidden)), "b2": rnd((fc_hidden,)),
            "w3": rnd((2 * freq_bins, fc_hidden)), "b3": rnd((2 * freq_bins,)),
        },
    }


if __name__ == "__main__":
    # Small config consistent with the module: 2-channel spectrogram inputs,
    # freq_bins=16, 8 time frames, batch=2, nf=8 (encoder_n uses nf//2=4),
    # two dilated conv blocks + the 1x1 projection block per encoder,
    # BiLSTM hidden=200, fc 400->600->600->2*freq_bins.
    kernel_sizes = [(3, 3), (3, 3)]
    dilations = [(1, 1), (2, 1)]
    FREQ, T, N, NF = 16, 8, 2, 8

    key = jax.random.PRNGKey(0)
    k_p, k_x, k_n = jax.random.split(key, 3)
    params = _init_params(k_p, kernel_sizes, FREQ, NF)
    x = jax.random.normal(k_x, (N, 2, FREQ, T), jnp.float32)
    noise = jax.random.normal(k_n, (N, 2, FREQ, T), jnp.float32)

    fwd = make_context_agg_net(kernel_sizes, dilations, FREQ, NF)
    out = fwd(params, x, noise)
    jax.block_until_ready(out)
    assert out.shape == (N, 2, FREQ, T), out.shape
    assert bool(jnp.all(jnp.isfinite(out))), "non-finite output"
    print("KERNEL_OK")
</pallas_src>

<mosaic_0001>
module attributes {stable_mosaic.version = 11 : i64} {
  func.func @_conv_stats_kernel(%arg0: i32, %arg1: i32, %arg2: memref<256x128xbf16, #tpu.memory_space<vmem>>, %arg3: memref<128x128xbf16, #tpu.memory_space<vmem>>, %arg4: memref<8x128xf32, #tpu.memory_space<vmem>>) attributes {dimension_semantics = [#tpu.dimension_semantics<parallel>, #tpu.dimension_semantics<arbitrary>], iteration_bounds = array<i64: 2, 1>, scalar_prefetch = 0 : i64, scratch_operands = 0 : i64, tpu.core_type = #tpu.core_type<tc>, window_params = [{transform_indices = @transform_0, window_bounds = array<i64: 256, 128>}, {pipeline_mode = #tpu.pipeline_mode<synchronous>, transform_indices = @transform_1, window_bounds = array<i64: 128, 128>}, {transform_indices = @transform_2, window_bounds = array<i64: 8, 128>}]} {
    %c0_i32 = arith.constant 0 : i32
    %0 = arith.cmpi eq, %arg1, %c0_i32 : i32
    %1 = arith.extui %0 : i1 to i32
    %c0_i32_0 = arith.constant 0 : i32
    %2 = arith.cmpi ne, %1, %c0_i32_0 : i32
    scf.if %2 {
      %cst_10 = arith.constant 0.000000e+00 : f32
      %15 = vector.broadcast %cst_10 : f32 to vector<8x128xf32>
      %c0_11 = arith.constant 0 : index
      %c0_12 = arith.constant 0 : index
      %16 = vector.load %arg4[%c0_11, %c0_12] : memref<8x128xf32, #tpu.memory_space<vmem>>, vector<8x128xf32>
      tpu.vector_store %arg4[%c0_11, %c0_12], %15 {strides = array<i32>} : memref<8x128xf32, #tpu.memory_space<vmem>>, vector<8x128xf32>,
    } else {
    }
    %c0 = arith.constant 0 : index
    %c0_1 = arith.constant 0 : index
    %3 = vector.load %arg2[%c0, %c0_1] : memref<256x128xbf16, #tpu.memory_space<vmem>>, vector<256x128xbf16>
    %c0_2 = arith.constant 0 : index
    %c0_3 = arith.constant 0 : index
    %4 = vector.load %arg3[%c0_2, %c0_3] : memref<128x128xbf16, #tpu.memory_space<vmem>>, vector<128x128xbf16>
    %cst = arith.constant dense<0.000000e+00> : vector<256x128xf32>
    %5 = tpu.matmul %3, %4, %cst {dimension_numbers = #tpu.dot_dimension_numbers<[1], [0], [0], [1], [0, 0, 1, 1], [], []>} : vector<256x128xbf16>, vector<128x128xbf16>, vector<256x128xf32> -> vector<256x128xf32>
    %c0_4 = arith.constant 0 : index
    %c0_5 = arith.constant 0 : index
    %6 = vector.load %arg4[%c0_4, %c0_5] : memref<8x128xf32, #tpu.memory_space<vmem>>, vector<2x128xf32>
    %cst_6 = arith.constant dense<0.000000e+00> : vector<128xf32>
    %7 = vector.multi_reduction <add>, %5, %cst_6 [0] : vector<256x128xf32> to vector<128xf32>
    %8 = vector.shape_cast %7 : vector<128xf32> to vector<1x128xf32>
    %9 = arith.mulf %5, %5 : vector<256x128xf32>
    %cst_7 = arith.constant dense<0.000000e+00> : vector<128xf32>
    %10 = vector.multi_reduction <add>, %9, %cst_7 [0] : vector<256x128xf32> to vector<128xf32>
    %11 = vector.shape_cast %10 : vector<128xf32> to vector<1x128xf32>
    %12 = tpu.concatenate %8, %11 in 0 : vector<1x128xf32>, vector<1x128xf32> -> vector<2x128xf32>
    %13 = arith.addf %6, %12 : vector<2x128xf32>
    %c0_8 = arith.constant 0 : index
    %c0_9 = arith.constant 0 : index
    %14 = vector.load %arg4[%c0_8, %c0_9] : memref<8x128xf32, #tpu.memory_space<vmem>>, vector<2x128xf32>
    tpu.vector_store %arg4[%c0_8, %c0_9], %13 {strides = array<i32>} : memref<8x128xf32, #tpu.memory_space<vmem>>, vector<2x128xf32>,
    return
  }
  func.func @transform_0(%arg0: i32, %arg1: i32) -> (i32, i32) {
    %c1_i32 = arith.constant 1 : i32
    %0 = arith.muli %arg0, %c1_i32 : i32
    %1 = arith.addi %0, %arg1 : i32
    %c0_i32 = arith.constant 0 : i32
    %c0_i32_0 = arith.constant 0 : i32
    return %1, %c0_i32 : i32, i32
  }
  func.func @transform_1(%arg0: i32, %arg1: i32) -> (i32, i32) {
    %c0_i32 = arith.constant 0 : i32
    %c0_i32_0 = arith.constant 0 : i32
    %c0_i32_1 = arith.constant 0 : i32
    return %c0_i32, %c0_i32_0 : i32, i32
  }
  func.func @transform_2(%arg0: i32, %arg1: i32) -> (i32, i32) {
    %c0_i32 = arith.constant 0 : i32
    %c0_i32_0 = arith.constant 0 : i32
    return %arg0, %c0_i32 : i32, i32
  }
}

module attributes {stable_mosaic.version = 11 : i64} {
  func.func @_bn_relu_from_patches_kernel(%arg0: i32, %arg1: memref<256x128xbf16, #tpu.memory_space<vmem>>, %arg2: memref<128x128xbf16, #tpu.memory_space<vmem>>, %arg3: memref<8x128xf32, #tpu.memory_space<vmem>>, %arg4: memref<1x128xf32, #tpu.memory_space<vmem>>, %arg5: memref<1x128xf32, #tpu.memory_space<vmem>>, %arg6: memref<256x128xbf16, #tpu.memory_space<vmem>>) attributes {dimension_semantics = [#tpu.dimension_semantics<parallel>], iteration_bounds = array<i64: 2>, scalar_prefetch = 0 : i64, scratch_operands = 0 : i64, tpu.core_type = #tpu.core_type<tc>, window_params = [{transform_indices = @transform_0, window_bounds = array<i64: 256, 128>}, {pipeline_mode = #tpu.pipeline_mode<synchronous>, transform_indices = @transform_1, window_bounds = array<i64: 128, 128>}, {pipeline_mode = #tpu.pipeline_mode<synchronous>, transform_indices = @transform_2, window_bounds = array<i64: 8, 128>}, {pipeline_mode = #tpu.pipeline_mode<synchronous>, transform_indices = @transform_3, window_bounds = array<i64: 1, 128>}, {pipeline_mode = #tpu.pipeline_mode<synchronous>, transform_indices = @transform_4, window_bounds = array<i64: 1, 128>}, {transform_indices = @transform_5, window_bounds = array<i64: 256, 128>}]} {
    %c0 = arith.constant 0 : index
    %c0_0 = arith.constant 0 : index
    %0 = vector.load %arg1[%c0, %c0_0] : memref<256x128xbf16, #tpu.memory_space<vmem>>, vector<256x128xbf16>
    %c0_1 = arith.constant 0 : index
    %c0_2 = arith.constant 0 : index
    %1 = vector.load %arg2[%c0_1, %c0_2] : memref<128x128xbf16, #tpu.memory_space<vmem>>, vector<128x128xbf16>
    %cst = arith.constant dense<0.000000e+00> : vector<256x128xf32>
    %2 = tpu.matmul %0, %1, %cst {dimension_numbers = #tpu.dot_dimension_numbers<[1], [0], [0], [1], [0, 0, 1, 1], [], []>} : vector<256x128xbf16>, vector<128x128xbf16>, vector<256x128xf32> -> vector<256x128xf32>
    %c0_3 = arith.constant 0 : index
    %c0_4 = arith.constant 0 : index
    %3 = vector.load %arg3[%c0_3, %c0_4] : memref<8x128xf32, #tpu.memory_space<vmem>>, vector<1x128xf32>
    %cst_5 = arith.constant 3.906250e-03 : f32
    %4 = vector.broadcast %cst_5 : f32 to vector<1x128xf32>
    %5 = arith.mulf %3, %4 : vector<1x128xf32>
    %c1 = arith.constant 1 : index
    %c0_6 = arith.constant 0 : index
    %6 = vector.load %arg3[%c1, %c0_6] : memref<8x128xf32, #tpu.memory_space<vmem>>, vector<1x128xf32>
    %cst_7 = arith.constant 3.906250e-03 : f32
    %7 = vector.broadcast %cst_7 : f32 to vector<1x128xf32>
    %8 = arith.mulf %6, %7 : vector<1x128xf32>
    %9 = arith.mulf %5, %5 : vector<1x128xf32>
    %10 = arith.subf %8, %9 : vector<1x128xf32>
    %cst_8 = arith.constant 0.000000e+00 : f32
    %11 = vector.broadcast %cst_8 : f32 to vector<1x128xf32>
    %12 = arith.maximumf %10, %11 : vector<1x128xf32>
    %c0_9 = arith.constant 0 : index
    %c0_10 = arith.constant 0 : index
    %13 = vector.load %arg4[%c0_9, %c0_10] : memref<1x128xf32, #tpu.memory_space<vmem>>, vector<1x128xf32>
    %cst_11 = arith.constant 9.99999974E-6 : f32
    %14 = vector.broadcast %cst_11 : f32 to vector<1x128xf32>
    %15 = arith.addf %12, %14 : vector<1x128xf32>
    %16 = math.rsqrt %15 : vector<1x128xf32>
    %17 = arith.mulf %13, %16 : vector<1x128xf32>
    %c0_12 = arith.constant 0 : index
    %c0_13 = arith.constant 0 : index
    %18 = vector.load %arg5[%c0_12, %c0_13] : memref<1x128xf32, #tpu.memory_space<vmem>>, vector<1x128xf32>
    %19 = arith.mulf %5, %17 : vector<1x128xf32>
    %20 = arith.subf %18, %19 : vector<1x128xf32>
    %21 = vector.broadcast %17 : vector<1x128xf32> to vector<256x128xf32>
    %22 = arith.mulf %2, %21 : vector<256x128xf32>
    %23 = vector.broadcast %20 : vector<1x128xf32> to vector<256x128xf32>
    %24 = arith.addf %22, %23 : vector<256x128xf32>
    %cst_14 = arith.constant 0.000000e+00 : f32
    %25 = vector.broadcast %cst_14 : f32 to vector<256x128xf32>
    %26 = arith.maximumf %24, %25 : vector<256x128xf32>
    %27 = arith.truncf %26 : vector<256x128xf32> to vector<256x128xbf16>
    %c0_15 = arith.constant 0 : index
    %c0_16 = arith.constant 0 : index
    %28 = vector.load %arg6[%c0_15, %c0_16] : memref<256x128xbf16, #tpu.memory_space<vmem>>, vector<256x128xbf16>
    tpu.vector_store %arg6[%c0_15, %c0_16], %27 {strides = array<i32>} : memref<256x128xbf16, #tpu.memory_space<vmem>>, vector<256x128xbf16>,
    return
  }
  func.func @transform_0(%arg0: i32) -> (i32, i32) {
    %c0_i32 = arith.constant 0 : i32
    %c0_i32_0 = arith.constant 0 : i32
    return %arg0, %c0_i32 : i32, i32
  }
  func.func @transform_1(%arg0: i32) -> (i32, i32) {
    %c0_i32 = arith.constant 0 : i32
    %c0_i32_0 = arith.constant 0 : i32
    %c0_i32_1 = arith.constant 0 : i32
    return %c0_i32, %c0_i32_0 : i32, i32
  }
  func.func @transform_2(%arg0: i32) -> (i32, i32) {
    %c0_i32 = arith.constant 0 : i32
    %c0_i32_0 = arith.constant 0 : i32
    %c0_i32_1 = arith.constant 0 : i32
    return %c0_i32, %c0_i32_0 : i32, i32
  }
  func.func @transform_3(%arg0: i32) -> (i32, i32) {
    %c0_i32 = arith.constant 0 : i32
    %c0_i32_0 = arith.constant 0 : i32
    %c0_i32_1 = arith.constant 0 : i32
    return %c0_i32, %c0_i32_0 : i32, i32
  }
  func.func @transform_4(%arg0: i32) -> (i32, i32) {
    %c0_i32 = arith.constant 0 : i32
    %c0_i32_0 = arith.constant 0 : i32
    %c0_i32_1 = arith.constant 0 : i32
    return %c0_i32, %c0_i32_0 : i32, i32
  }
  func.func @transform_5(%arg0: i32) -> (i32, i32) {
    %c0_i32 = arith.constant 0 : i32
    %c0_i32_0 = arith.constant 0 : i32
    return %arg0, %c0_i32 : i32, i32
  }
}

module attributes {stable_mosaic.version = 11 : i64} {
  func.func @_linear_kernel(%arg0: i32, %arg1: memref<16x256xbf16, #tpu.memory_space<vmem>>, %arg2: memref<256x2048xbf16, #tpu.memory_space<vmem>>, %arg3: memref<1x2048xf32, #tpu.memory_space<vmem>>, %arg4: memref<16x2048xf32, #tpu.memory_space<vmem>>) attributes {dimension_semantics = [#tpu.dimension_semantics<parallel>], iteration_bounds = array<i64: 1>, scalar_prefetch = 0 : i64, scratch_operands = 0 : i64, tpu.core_type = #tpu.core_type<tc>, window_params = [{transform_indices = @transform_0, window_bounds = array<i64: 16, 256>}, {pipeline_mode = #tpu.pipeline_mode<synchronous>, transform_indices = @transform_1, window_bounds = array<i64: 256, 2048>}, {pipeline_mode = #tpu.pipeline_mode<synchronous>, transform_indices = @transform_2, window_bounds = array<i64: 1, 2048>}, {transform_indices = @transform_3, window_bounds = array<i64: 16, 2048>}]} {
    %c0 = arith.constant 0 : index
    %c0_0 = arith.constant 0 : index
    %0 = vector.load %arg1[%c0, %c0_0] : memref<16x256xbf16, #tpu.memory_space<vmem>>, vector<16x256xbf16>
    %c0_1 = arith.constant 0 : index
    %c0_2 = arith.constant 0 : index
    %1 = vector.load %arg2[%c0_1, %c0_2] : memref<256x2048xbf16, #tpu.memory_space<vmem>>, vector<256x2048xbf16>
    %cst = arith.constant dense<0.000000e+00> : vector<16x2048xf32>
    %2 = tpu.matmul %0, %1, %cst {dimension_numbers = #tpu.dot_dimension_numbers<[1], [0], [0], [1], [0, 0, 1, 1], [], []>} : vector<16x256xbf16>, vector<256x2048xbf16>, vector<16x2048xf32> -> vector<16x2048xf32>
    %c0_3 = arith.constant 0 : index
    %c0_4 = arith.constant 0 : index
    %3 = vector.load %arg3[%c0_3, %c0_4] : memref<1x2048xf32, #tpu.memory_space<vmem>>, vector<1x2048xf32>
    %4 = vector.broadcast %3 : vector<1x2048xf32> to vector<16x2048xf32>
    %5 = arith.addf %2, %4 : vector<16x2048xf32>
    %c0_5 = arith.constant 0 : index
    %c0_6 = arith.constant 0 : index
    %6 = vector.load %arg4[%c0_5, %c0_6] : memref<16x2048xf32, #tpu.memory_space<vmem>>, vector<16x2048xf32>
    tpu.vector_store %arg4[%c0_5, %c0_6], %5 {strides = array<i32>} : memref<16x2048xf32, #tpu.memory_space<vmem>>, vector<16x2048xf32>,
    return
  }
  func.func @transform_0(%arg0: i32) -> (i32, i32) {
    %c0_i32 = arith.constant 0 : i32
    %c0_i32_0 = arith.constant 0 : i32
    return %arg0, %c0_i32 : i32, i32
  }
  func.func @transform_1(%arg0: i32) -> (i32, i32) {
    %c0_i32 = arith.constant 0 : i32
    %c0_i32_0 = arith.constant 0 : i32
    %c0_i32_1 = arith.constant 0 : i32
    return %c0_i32, %c0_i32_0 : i32, i32
  }
  func.func @transform_2(%arg0: i32) -> (i32, i32) {
    %c0_i32 = arith.constant 0 : i32
    %c0_i32_0 = arith.constant 0 : i32
    %c0_i32_1 = arith.constant 0 : i32
    return %c0_i32, %c0_i32_0 : i32, i32
  }
  func.func @transform_3(%arg0: i32) -> (i32, i32) {
    %c0_i32 = arith.constant 0 : i32
    %c0_i32_0 = arith.constant 0 : i32
    return %arg0, %c0_i32 : i32, i32
  }
}

module attributes {stable_mosaic.version = 11 : i64} {
  func.func @_bilstm_step_kernel(%arg0: i32, %arg1: i32, %arg2: memref<1x2x1024xf32, #tpu.memory_space<vmem>>, %arg3: memref<1x256x1024xbf16, #tpu.memory_space<vmem>>, %arg4: memref<1x2x256xf32, #tpu.memory_space<vmem>>, %arg5: memref<2x256xf32, #tpu.memory_space<vmem>>, %arg6: memref<2x256xf32, #tpu.memory_space<vmem>>) attributes {dimension_semantics = [#tpu.dimension_semantics<parallel>, #tpu.dimension_semantics<arbitrary>], iteration_bounds = array<i64: 2, 8>, scalar_prefetch = 0 : i64, scratch_operands = 2 : i64, tpu.core_type = #tpu.core_type<tc>, window_params = [{transform_indices = @transform_0, window_bounds = array<i64: 1, 2, 1024>}, {transform_indices = @transform_1, window_bounds = array<i64: 1, 256, 1024>}, {transform_indices = @transform_2, window_bounds = array<i64: 1, 2, 256>}]} {
    %c0_i32 = arith.constant 0 : i32
    %0 = arith.cmpi eq, %arg1, %c0_i32 : i32
    %1 = arith.extui %0 : i1 to i32
    %c0_i32_0 = arith.constant 0 : i32
    %2 = arith.cmpi ne, %1, %c0_i32_0 : i32
    scf.if %2 {
      %cst_26 = arith.constant 0.000000e+00 : f32
      %48 = vector.broadcast %cst_26 : f32 to vector<2x256xf32>
      %c0_27 = arith.constant 0 : index
      %c0_28 = arith.constant 0 : index
      %49 = vector.load %arg5[%c0_27, %c0_28] : memref<2x256xf32, #tpu.memory_space<vmem>>, vector<2x256xf32>
      tpu.vector_store %arg5[%c0_27, %c0_28], %48 {strides = array<i32>} : memref<2x256xf32, #tpu.memory_space<vmem>>, vector<2x256xf32>,
      %cst_29 = arith.constant 0.000000e+00 : f32
      %50 = vector.broadcast %cst_29 : f32 to vector<2x256xf32>
      %c0_30 = arith.constant 0 : index
      %c0_31 = arith.constant 0 : index
      %51 = vector.load %arg6[%c0_30, %c0_31] : memref<2x256xf32, #tpu.memory_space<vmem>>, vector<2x256xf32>
      tpu.vector_store %arg6[%c0_30, %c0_31], %50 {strides = array<i32>} : memref<2x256xf32, #tpu.memory_space<vmem>>, vector<2x256xf32>,
    } else {
    }
    %c0 = arith.constant 0 : index
    %c0_1 = arith.constant 0 : index
    %3 = vector.load %arg5[%c0, %c0_1] : memref<2x256xf32, #tpu.memory_space<vmem>>, vector<2x256xf32>
    %4 = arith.truncf %3 : vector<2x256xf32> to vector<2x256xbf16>
    %c0_2 = arith.constant 0 : index
    %c0_3 = arith.constant 0 : index
    %c0_4 = arith.constant 0 : index
    %5 = vector.load %arg3[%c0_2, %c0_3, %c0_4] : memref<1x256x1024xbf16, #tpu.memory_space<vmem>>, vector<1x256x1024xbf16>
    %6 = vector.shape_cast %5 : vector<1x256x1024xbf16> to vector<256x1024xbf16>
    %cst = arith.constant dense<0.000000e+00> : vector<2x1024xf32>
    %7 = tpu.matmul %4, %6, %cst {dimension_numbers = #tpu.dot_dimension_numbers<[1], [0], [0], [1], [0, 0, 1, 1], [], []>} : vector<2x256xbf16>, vector<256x1024xbf16>, vector<2x1024xf32> -> vector<2x1024xf32>
    %c0_5 = arith.constant 0 : index
    %c0_6 = arith.constant 0 : index
    %c0_7 = arith.constant 0 : index
    %8 = vector.load %arg2[%c0_5, %c0_6, %c0_7] : memref<1x2x1024xf32, #tpu.memory_space<vmem>>, vector<1x2x1024xf32>
    %9 = vector.shape_cast %8 : vector<1x2x1024xf32> to vector<2x1024xf32>
    %10 = arith.addf %7, %9 : vector<2x1024xf32>
    %11 = vector.extract_strided_slice %10 {offsets = [0, 0], sizes = [2, 256], strides = [1, 1]} : vector<2x1024xf32> to vector<2x256xf32>
    %cst_8 = arith.constant 0.000000e+00 : f32
    %12 = vector.broadcast %cst_8 : f32 to vector<2x256xf32>
    %13 = arith.subf %12, %11 : vector<2x256xf32>
    %14 = math.exp %13 : vector<2x256xf32>
    %cst_9 = arith.constant 1.000000e+00 : f32
    %15 = vector.broadcast %cst_9 : f32 to vector<2x256xf32>
    %16 = arith.addf %15, %14 : vector<2x256xf32>
    %cst_10 = arith.constant 1.000000e+00 : f32
    %17 = vector.broadcast %cst_10 : f32 to vector<2x256xf32>
    %18 = arith.divf %17, %16 : vector<2x256xf32>
    %19 = vector.extract_strided_slice %10 {offsets = [0, 256], sizes = [2, 256], strides = [1, 1]} : vector<2x1024xf32> to vector<2x256xf32>
    %cst_11 = arith.constant 0.000000e+00 : f32
    %20 = vector.broadcast %cst_11 : f32 to vector<2x256xf32>
    %21 = arith.subf %20, %19 : vector<2x256xf32>
    %22 = math.exp %21 : vector<2x256xf32>
    %cst_12 = arith.constant 1.000000e+00 : f32
    %23 = vector.broadcast %cst_12 : f32 to vector<2x256xf32>
    %24 = arith.addf %23, %22 : vector<2x256xf32>
    %cst_13 = arith.constant 1.000000e+00 : f32
    %25 = vector.broadcast %cst_13 : f32 to vector<2x256xf32>
    %26 = arith.divf %25, %24 : vector<2x256xf32>
    %27 = vector.extract_strided_slice %10 {offsets = [0, 512], sizes = [2, 256], strides = [1, 1]} : vector<2x1024xf32> to vector<2x256xf32>
    %28 = math.tanh %27 : vector<2x256xf32>
    %29 = vector.extract_strided_slice %10 {offsets = [0, 768], sizes = [2, 256], strides = [1, 1]} : vector<2x1024xf32> to vector<2x256xf32>
    %cst_14 = arith.constant 0.000000e+00 : f32
    %30 = vector.broadcast %cst_14 : f32 to vector<2x256xf32>
    %31 = arith.subf %30, %29 : vector<2x256xf32>
    %32 = math.exp %31 : vector<2x256xf32>
    %cst_15 = arith.constant 1.000000e+00 : f32
    %33 = vector.broadcast %cst_15 : f32 to vector<2x256xf32>
    %34 = arith.addf %33, %32 : vector<2x256xf32>
    %cst_16 = arith.constant 1.000000e+00 : f32
    %35 = vector.broadcast %cst_16 : f32 to vector<2x256xf32>
    %36 = arith.divf %35, %34 : vector<2x256xf32>
    %c0_17 = arith.constant 0 : index
    %c0_18 = arith.constant 0 : index
    %37 = vector.load %arg6[%c0_17, %c0_18] : memref<2x256xf32, #tpu.memory_space<vmem>>, vector<2x256xf32>
    %38 = arith.mulf %26, %37 : vector<2x256xf32>
    %39 = arith.mulf %18, %28 : vector<2x256xf32>
    %40 = arith.addf %38, %39 : vector<2x256xf32>
    %41 = math.tanh %40 : vector<2x256xf32>
    %42 = arith.mulf %36, %41 : vector<2x256xf32>
    %c0_19 = arith.constant 0 : index
    %c0_20 = arith.constant 0 : index
    %43 = vector.load %arg6[%c0_19, %c0_20] : memref<2x256xf32, #tpu.memory_space<vmem>>, vector<2x256xf32>
    tpu.vector_store %arg6[%c0_19, %c0_20], %40 {strides = array<i32>} : memref<2x256xf32, #tpu.memory_space<vmem>>, vector<2x256xf32>,
    %c0_21 = arith.constant 0 : index
    %c0_22 = arith.constant 0 : index
    %44 = vector.load %arg5[%c0_21, %c0_22] : memref<2x256xf32, #tpu.memory_space<vmem>>, vector<2x256xf32>
    tpu.vector_store %arg5[%c0_21, %c0_22], %42 {strides = array<i32>} : memref<2x256xf32, #tpu.memory_space<vmem>>, vector<2x256xf32>,
    %c0_23 = arith.constant 0 : index
    %c0_24 = arith.constant 0 : index
    %c0_25 = arith.constant 0 : index
    %45 = vector.load %arg4[%c0_23, %c0_24, %c0_25] : memref<1x2x256xf32, #tpu.memory_space<vmem>>, vector<1x2x256xf32>
    %46 = vector.shape_cast %45 : vector<1x2x256xf32> to vector<2x256xf32>
    %47 = vector.shape_cast %42 : vector<2x256xf32> to vector<1x2x256xf32>
    tpu.vector_store %arg4[%c0_23, %c0_24, %c0_25], %47 {strides = array<i32>} : memref<1x2x256xf32, #tpu.memory_space<vmem>>, vector<1x2x256xf32>,
    return
  }
  func.func @transform_0(%arg0: i32, %arg1: i32) -> (i32, i32, i32) {
    %c1_i32 = arith.constant 1 : i32
    %0 = arith.subi %c1_i32, %arg0 : i32
    %1 = arith.muli %0, %arg1 : i32
    %c7_i32 = arith.constant 7 : i32
    %2 = arith.subi %c7_i32, %arg1 : i32
    %3 = arith.muli %arg0, %2 : i32
    %4 = arith.addi %1, %3 : i32
    %c0_i32 = arith.constant 0 : i32
    %c0_i32_0 = arith.constant 0 : i32
    return %4, %c0_i32, %arg0 : i32, i32, i32
  }
  func.func @transform_1(%arg0: i32, %arg1: i32) -> (i32, i32, i32) {
    %c0_i32 = arith.constant 0 : i32
    %c0_i32_0 = arith.constant 0 : i32
    %c0_i32_1 = arith.constant 0 : i32
    return %arg0, %c0_i32, %c0_i32_0 : i32, i32, i32
  }
  func.func @transform_2(%arg0: i32, %arg1: i32) -> (i32, i32, i32) {
    %c1_i32 = arith.constant 1 : i32
    %0 = arith.subi %c1_i32, %arg0 : i32
    %1 = arith.muli %0, %arg1 : i32
    %c7_i32 = arith.constant 7 : i32
    %2 = arith.subi %c7_i32, %arg1 : i32
    %3 = arith.muli %arg0, %2 : i32
    %4 = arith.addi %1, %3 : i32
    %c0_i32 = arith.constant 0 : i32
    %c0_i32_0 = arith.constant 0 : i32
    return %4, %c0_i32, %arg0 : i32, i32, i32
  }
}

module attributes {stable_mosaic.version = 11 : i64} {
  func.func @_mlp_head_kernel(%arg0: i32, %arg1: memref<16x512xbf16, #tpu.memory_space<vmem>>, %arg2: memref<512x640xbf16, #tpu.memory_space<vmem>>, %arg3: memref<1x640xf32, #tpu.memory_space<vmem>>, %arg4: memref<640x640xbf16, #tpu.memory_space<vmem>>, %arg5: memref<1x640xf32, #tpu.memory_space<vmem>>, %arg6: memref<640x128xbf16, #tpu.memory_space<vmem>>, %arg7: memref<1x128xf32, #tpu.memory_space<vmem>>, %arg8: memref<16x128xf32, #tpu.memory_space<vmem>>) attributes {dimension_semantics = [#tpu.dimension_semantics<parallel>], iteration_bounds = array<i64: 1>, scalar_prefetch = 0 : i64, scratch_operands = 0 : i64, tpu.core_type = #tpu.core_type<tc>, window_params = [{transform_indices = @transform_0, window_bounds = array<i64: 16, 512>}, {pipeline_mode = #tpu.pipeline_mode<synchronous>, transform_indices = @transform_1, window_bounds = array<i64: 512, 640>}, {pipeline_mode = #tpu.pipeline_mode<synchronous>, transform_indices = @transform_2, window_bounds = array<i64: 1, 640>}, {pipeline_mode = #tpu.pipeline_mode<synchronous>, transform_indices = @transform_3, window_bounds = array<i64: 640, 640>}, {pipeline_mode = #tpu.pipeline_mode<synchronous>, transform_indices = @transform_4, window_bounds = array<i64: 1, 640>}, {pipeline_mode = #tpu.pipeline_mode<synchronous>, transform_indices = @transform_5, window_bounds = array<i64: 640, 128>}, {pipeline_mode = #tpu.pipeline_mode<synchronous>, transform_indices = @transform_6, window_bounds = array<i64: 1, 128>}, {transform_indices = @transform_7, window_bounds = array<i64: 16, 128>}]} {
    %c0 = arith.constant 0 : index
    %c0_0 = arith.constant 0 : index
    %0 = vector.load %arg1[%c0, %c0_0] : memref<16x512xbf16, #tpu.memory_space<vmem>>, vector<16x512xbf16>
    %c0_1 = arith.constant 0 : index
    %c0_2 = arith.constant 0 : index
    %1 = vector.load %arg2[%c0_1, %c0_2] : memref<512x640xbf16, #tpu.memory_space<vmem>>, vector<512x640xbf16>
    %cst = arith.constant dense<0.000000e+00> : vector<16x640xf32>
    %2 = tpu.matmul %0, %1, %cst {dimension_numbers = #tpu.dot_dimension_numbers<[1], [0], [0], [1], [0, 0, 1, 1], [], []>} : vector<16x512xbf16>, vector<512x640xbf16>, vector<16x640xf32> -> vector<16x640xf32>
    %c0_3 = arith.constant 0 : index
    %c0_4 = arith.constant 0 : index
    %3 = vector.load %arg3[%c0_3, %c0_4] : memref<1x640xf32, #tpu.memory_space<vmem>>, vector<1x640xf32>
    %4 = vector.broadcast %3 : vector<1x640xf32> to vector<16x640xf32>
    %5 = arith.addf %2, %4 : vector<16x640xf32>
    %cst_5 = arith.constant 0.000000e+00 : f32
    %6 = vector.broadcast %cst_5 : f32 to vector<16x640xf32>
    %7 = arith.maximumf %5, %6 : vector<16x640xf32>
    %8 = arith.truncf %7 : vector<16x640xf32> to vector<16x640xbf16>
    %c0_6 = arith.constant 0 : index
    %c0_7 = arith.constant 0 : index
    %9 = vector.load %arg4[%c0_6, %c0_7] : memref<640x640xbf16, #tpu.memory_space<vmem>>, vector<640x640xbf16>
    %cst_8 = arith.constant dense<0.000000e+00> : vector<16x640xf32>
    %10 = tpu.matmul %8, %9, %cst_8 {dimension_numbers = #tpu.dot_dimension_numbers<[1], [0], [0], [1], [0, 0, 1, 1], [], []>} : vector<16x640xbf16>, vector<640x640xbf16>, vector<16x640xf32> -> vector<16x640xf32>
    %c0_9 = arith.constant 0 : index
    %c0_10 = arith.constant 0 : index
    %11 = vector.load %arg5[%c0_9, %c0_10] : memref<1x640xf32, #tpu.memory_space<vmem>>, vector<1x640xf32>
    %12 = vector.broadcast %11 : vector<1x640xf32> to vector<16x640xf32>
    %13 = arith.addf %10, %12 : vector<16x640xf32>
    %cst_11 = arith.constant 0.000000e+00 : f32
    %14 = vector.broadcast %cst_11 : f32 to vector<16x640xf32>
    %15 = arith.maximumf %13, %14 : vector<16x640xf32>
    %16 = arith.truncf %15 : vector<16x640xf32> to vector<16x640xbf16>
    %c0_12 = arith.constant 0 : index
    %c0_13 = arith.constant 0 : index
    %17 = vector.load %arg6[%c0_12, %c0_13] : memref<640x128xbf16, #tpu.memory_space<vmem>>, vector<640x128xbf16>
    %cst_14 = arith.constant dense<0.000000e+00> : vector<16x128xf32>
    %18 = tpu.matmul %16, %17, %cst_14 {dimension_numbers = #tpu.dot_dimension_numbers<[1], [0], [0], [1], [0, 0, 1, 1], [], []>} : vector<16x640xbf16>, vector<640x128xbf16>, vector<16x128xf32> -> vector<16x128xf32>
    %c0_15 = arith.constant 0 : index
    %c0_16 = arith.constant 0 : index
    %19 = vector.load %arg7[%c0_15, %c0_16] : memref<1x128xf32, #tpu.memory_space<vmem>>, vector<1x128xf32>
    %20 = vector.broadcast %19 : vector<1x128xf32> to vector<16x128xf32>
    %21 = arith.addf %18, %20 : vector<16x128xf32>
    %cst_17 = arith.constant 0.000000e+00 : f32
    %22 = vector.broadcast %cst_17 : f32 to vector<16x128xf32>
    %23 = arith.subf %22, %21 : vector<16x128xf32>
    %24 = math.exp %23 : vector<16x128xf32>
    %cst_18 = arith.constant 1.000000e+00 : f32
    %25 = vector.broadcast %cst_18 : f32 to vector<16x128xf32>
    %26 = arith.addf %25, %24 : vector<16x128xf32>
    %cst_19 = arith.constant 1.000000e+00 : f32
    %27 = vector.broadcast %cst_19 : f32 to vector<16x128xf32>
    %28 = arith.divf %27, %26 : vector<16x128xf32>
    %c0_20 = arith.constant 0 : index
    %c0_21 = arith.constant 0 : index
    %29 = vector.load %arg8[%c0_20, %c0_21] : memref<16x128xf32, #tpu.memory_space<vmem>>, vector<16x128xf32>
    tpu.vector_store %arg8[%c0_20, %c0_21], %28 {strides = array<i32>} : memref<16x128xf32, #tpu.memory_space<vmem>>, vector<16x128xf32>,
    return
  }
  func.func @transform_0(%arg0: i32) -> (i32, i32) {
    %c0_i32 = arith.constant 0 : i32
    %c0_i32_0 = arith.constant 0 : i32
    return %arg0, %c0_i32 : i32, i32
  }
  func.func @transform_1(%arg0: i32) -> (i32, i32) {
    %c0_i32 = arith.constant 0 : i32
    %c0_i32_0 = arith.constant 0 : i32
    %c0_i32_1 = arith.constant 0 : i32
    return %c0_i32, %c0_i32_0 : i32, i32
  }
  func.func @transform_2(%arg0: i32) -> (i32, i32) {
    %c0_i32 = arith.constant 0 : i32
    %c0_i32_0 = arith.constant 0 : i32
    %c0_i32_1 = arith.constant 0 : i32
    return %c0_i32, %c0_i32_0 : i32, i32
  }
  func.func @transform_3(%arg0: i32) -> (i32, i32) {
    %c0_i32 = arith.constant 0 : i32
    %c0_i32_0 = arith.constant 0 : i32
    %c0_i32_1 = arith.constant 0 : i32
    return %c0_i32, %c0_i32_0 : i32, i32
  }
  func.func @transform_4(%arg0: i32) -> (i32, i32) {
    %c0_i32 = arith.constant 0 : i32
    %c0_i32_0 = arith.constant 0 : i32
    %c0_i32_1 = arith.constant 0 : i32
    return %c0_i32, %c0_i32_0 : i32, i32
  }
  func.func @transform_5(%arg0: i32) -> (i32, i32) {
    %c0_i32 = arith.constant 0 : i32
    %c0_i32_0 = arith.constant 0 : i32
    %c0_i32_1 = arith.constant 0 : i32
    return %c0_i32, %c0_i32_0 : i32, i32
  }
  func.func @transform_6(%arg0: i32) -> (i32, i32) {
    %c0_i32 = arith.constant 0 : i32
    %c0_i32_0 = arith.constant 0 : i32
    %c0_i32_1 = arith.constant 0 : i32
    return %c0_i32, %c0_i32_0 : i32, i32
  }
  func.func @transform_7(%arg0: i32) -> (i32, i32) {
    %c0_i32 = arith.constant 0 : i32
    %c0_i32_0 = arith.constant 0 : i32
    return %arg0, %c0_i32 : i32, i32
  }
}

</mosaic_0001>

<llo_original>
// kernel: forward.15
$region0: #{forward.15}
  #allocation0 [shape = 'u32[]', space=smem, size = 0x4, offset = 0x4, fixed_abs, tag = 'smem constant byte address 0x4 - core index']
  #allocation1 [shape = 'u32[144,128]{1,0:T(1,128)}', space=vmem, size = 0x12000, scoped, tag = 'internal scratch']
  %s0 = inlined_call_operand.vmem [shape: bf16[512,128], index: 0, kind: input, shape index: {}]
  %s1 = inlined_call_operand.vmem [shape: bf16[128,128], index: 1, kind: input, shape index: {}]
  %s2 = inlined_call_operand.vmem [shape: f32[16,128], index: 2, kind: output, shape index: {}]
  %s3 = sld [smem:[#allocation0]]
  $region45: #{forward.15} parent=0
    _
  %s5 = ssub.s32 1, %s3
  %s6 = scalar_select 0, %s5, %s3
  loop: start=0, step=1, limit=4
  $region2: #{forward.15} parent=0 // loop_pre_header
    _
  $region3: #{forward.15} parent=0 // loop_header
    %s8 = sphi 0, %s12
    %p9 = scmp.ge.s32.totalorder %s8, 4
    %s15 = sphi 0, %s27
    %s16 = sphi 0, %s23
    %s17 = sphi 0, %s15
    %s18 = sphi 0, %s16
    %s19 = sphi 0, %s17
    %s20 = sphi 0, %s18
    %s32 = sphi 0, %s34
    %s35 = sphi 0, %s32
    %s36 = sphi 0, %s35
    %s52 = sphi 0, %s36
    %s56 = sphi 0, %s56
    %s58 = sphi 0, %s56
    %s59 = sphi 0, %s58
    %s73 = sphi 0, %s59
    %s79 = sphi 0, %s81
    %s82 = sphi 0, %s79
    %s83 = sphi 0, %s82
    %s99 = sphi 0, %s83
  $region4: #{forward.15} parent=0 // loop_header_branch
    %11 = sbr.rel (%p9) target = $region8
  $region5: #{forward.15} parent=0 // loop_body
    %s13 = ssub.s32 %s8, 1
    %s14 = ssub.s32 %s8, 2
    %s21 = sadd.s32 1, %s16
    %p22 = scmp.ge.s32.totalorder %s21, 1
    %s23 = scalar_select %p22, 0, %s21
    %s24 = sadd.s32 1, %s15
    %s25 = scalar_select %p22, %s24, %s15
    %p26 = scmp.ge.s32.totalorder %s25, 2
    %s27 = scalar_select %p26, 0, %s25
    %s28 = sadd.s32 %s15, %s16
    %s29 = sadd.s32 %s27, %s23
    %s30 = ssub.s32 %s28, %s29
    %p31 = scmp.eq.s32.totalorder %s30, 0
    %s33 = sadd.s32 %s32, 1
    %s34 = scalar_select %p31, %s32, %s33
    %p37 = pneg %p31
    %p38 = scmp.eq.s32.totalorder %s8, 1
    %p39 = por %p37, %p38
    %p40 = scmp.ne.s32.totalorder %s32, %s35
    %p41 = scmp.eq.s32.totalorder %s8, 0
    %p42 = por %p40, %p41
    %p43 = scmp.ne.s32.totalorder %s32, %s35
    %p44 = scmp.eq.s32.totalorder %s13, 1
    %p45 = por %p43, %p44
    %p46 = scmp.ne.s32.totalorder %s35, %s36
    %p47 = scmp.eq.s32.totalorder %s13, 0
    %p48 = por %p46, %p47
    %p49 = scmp.ne.s32.totalorder %s35, %s36
    %p50 = scmp.eq.s32.totalorder %s14, 1
    %p51 = por %p49, %p50
    %p53 = scmp.ne.s32.totalorder %s36, %s52
    %p54 = scmp.eq.s32.totalorder %s14, 0
    %p55 = por %p53, %p54
    %s57 = sadd.s32 %s56, 1
    %p60 = scmp.eq.s32.totalorder %s8, 1
    %p61 = scmp.ne.s32.totalorder %s56, %s58
    %p62 = scmp.eq.s32.totalorder %s8, 0
    %p63 = por %p61, %p62
    %p64 = scmp.ne.s32.totalorder %s56, %s58
    %p65 = scmp.eq.s32.totalorder %s13, 1
    %p66 = por %p64, %p65
    %p67 = scmp.ne.s32.totalorder %s58, %s59
    %p68 = scmp.eq.s32.totalorder %s13, 0
    %p69 = por %p67, %p68
    %p70 = scmp.ne.s32.totalorder %s58, %s59
    %p71 = scmp.eq.s32.totalorder %s14, 1
    %p72 = por %p70, %p71
    %p74 = scmp.ne.s32.totalorder %s59, %s73
    %p75 = scmp.eq.s32.totalorder %s14, 0
    %p76 = por %p74, %p75
    %s77 = ssub.s32 %s15, %s27
    %p78 = scmp.eq.s32.totalorder %s77, 0
    %s80 = sadd.s32 %s79, 1
    %s81 = scalar_select %p78, %s79, %s80
    %p84 = pneg %p78
    %p85 = scmp.eq.s32.totalorder %s8, 1
    %p86 = por %p84, %p85
    %p87 = scmp.ne.s32.totalorder %s79, %s82
    %p88 = scmp.eq.s32.totalorder %s8, 0
    %p89 = por %p87, %p88
    %p90 = scmp.ne.s32.totalorder %s79, %s82
    %p91 = scmp.eq.s32.totalorder %s13, 1
    %p92 = por %p90, %p91
    %p93 = scmp.ne.s32.totalorder %s82, %s83
    %p94 = scmp.eq.s32.totalorder %s13, 0
    %p95 = por %p93, %p94
    %p96 = scmp.ne.s32.totalorder %s82, %s83
    %p97 = scmp.eq.s32.totalorder %s14, 1
    %p98 = por %p96, %p97
    %p100 = scmp.ne.s32.totalorder %s83, %s99
    %p101 = scmp.eq.s32.totalorder %s14, 0
    %p102 = por %p100, %p101
    %p103 = scmp.le.s32.totalorder 1, %s8
    %p104 = scmp.lt.s32.totalorder %s8, 3
    %p105 = pnand %p103, %p104
    %p106 = pneg %p105
    // Predicated region
    $region9: #{forward.15} parent=5 // pred_check
      _
    $region10: #{forward.15} parent=5 // pred_check_branch
      %108 = sbr.rel (%p105) target = $region12
    $region11: #{forward.15} parent=5 // pred_region
      %s109 = ssub.s32 %s8, 1
      // Predicated region
      $region13: #{forward.15} parent=11 // pred_check
        %p110 = pneg %p69
      $region14: #{forward.15} parent=11 // pred_check_branch
        %112 = sbr.rel (%p110) target = $region16
      $region15: #{forward.15} parent=11 // pred_region
        _
      $region16: #{forward.15} parent=11 // pred_fallthru
        _
    $region12: #{forward.15} parent=5 // pred_fallthru
      _
    %p113 = scmp.lt.s32.totalorder %s8, 2
    // Predicated region
    $region17: #{forward.15} parent=5 // pred_check
      %p114 = pneg %p113
    $region18: #{forward.15} parent=5 // pred_check_branch
      %116 = sbr.rel (%p114) target = $region20
    $region19: #{forward.15} parent=5 // pred_region
      // Predicated region
      $region21: #{forward.15} parent=19 // pred_check
        %p117 = pneg %p42
      $region22: #{forward.15} parent=19 // pred_check_branch
        %119 = sbr.rel (%p117) target = $region24
      $region23: #{forward.15} parent=19 // pred_region
        %s120 = sadd.s32 %s15, %s16
        %s121 = smul.u32 32, %s120
        %p122 = scmp.lt.s32.totalorder %s121, 63
        %s123 = scalar_select %p122, %s121, 63
        %s124 = smul.addr %s123, 4
        %s125 = scalar_lea.vmem %s0, %s124
        %s126 = sadd.s32 %s15, %s16
        %s127 = smul.u32 32, %s126
      $region24: #{forward.15} parent=19 // pred_fallthru
        _
    $region20: #{forward.15} parent=5 // pred_fallthru
      _
    %p128 = scmp.le.s32.totalorder 1, %s8
    %p129 = scmp.lt.s32.totalorder %s8, 3
    %p130 = pnand %p128, %p129
    %p131 = pneg %p130
    // Predicated region
    $region25: #{forward.15} parent=5 // pred_check
      _
    $region26: #{forward.15} parent=5 // pred_check_branch
      %133 = sbr.rel (%p130) target = $region28
    $region27: #{forward.15} parent=5 // pred_region
      %s134 = ssub.s32 %s8, 1
      %s135 = sadd.s32 %s17, %s18
      %s136 = smul.u32 32, %s135
      %p137 = scmp.lt.s32.totalorder %s136, 63
      %s138 = scalar_select %p137, %s136, 63
      %s139 = smul.addr %s138, 4
      %s140 = scalar_lea.vmem %s0, %s139
      %p141 = pneg %p48
      %p142 = pneg %p45
      %p143 = pneg %p69
      %p144 = pneg %p66
      %p145 = pneg %p95
      %p146 = pneg %p92
      %p147 = scmp.lt.s32.totalorder %s17, 1
      %s148 = scalar_select %p147, %s17, 1
      %s149 = smul.addr %s148, 8
      %s150 = scalar_lea.vmem %s2, %s149
      %s151 = sadd.s32 %s17, %s18
      %s152 = smul.u32 32, %s151
      %p153 = scmp.lt.s32.totalorder %s152, 63
      %s154 = scalar_select %p153, %s152, 63
      %s155 = smul.addr %s154, 4
      %s156 = scalar_lea.vmem %s0, %s155
      %s157 = sadd.s32 %s17, %s18
      %s158 = smul.u32 32, %s157
      %p159 = scmp.lt.s32.totalorder %s17, 1
      %s160 = scalar_select %p159, %s17, 1
      %s161 = smul.addr %s160, 8
      %s162 = scalar_lea.vmem %s2, %s161
      %p164 = scmp.eq.s32.totalorder %s18, 0
      // Predicated region
      $region29: #{forward.15} parent=27 // pred_check
        %p165 = pneg %p164
      $region30: #{forward.15} parent=27 // pred_check_branch
        %167 = sbr.rel (%p165) target = $region32
      $region31: #{forward.15} parent=27 // pred_region
        %168 = vst [vmem:[%s162] sm:$0xff] 0.0
      $region32: #{forward.15} parent=27 // pred_fallthru
        _
      %v169 = vld [vmem:[%s156] sm:$0xf]
      %v170 = vld [vmem:[%s156 + $0x4] sm:$0xf]
      %v171 = vld [vmem:[%s156 + $0x8] sm:$0xf]
      %v172 = vld [vmem:[%s156 + $0xc] sm:$0xf]
      %v173 = vld [vmem:[%s156 + $0x10] sm:$0xf]
      %v174 = vld [vmem:[%s156 + $0x14] sm:$0xf]
      %v175 = vld [vmem:[%s156 + $0x18] sm:$0xf]
      %v176 = vld [vmem:[%s156 + $0x1c] sm:$0xf]
      %v177 = vld [vmem:[%s156 + $0x20] sm:$0xf]
      %v178 = vld [vmem:[%s156 + $0x24] sm:$0xf]
      %v179 = vld [vmem:[%s156 + $0x28] sm:$0xf]
      %v180 = vld [vmem:[%s156 + $0x2c] sm:$0xf]
      %v181 = vld [vmem:[%s156 + $0x30] sm:$0xf]
      %v182 = vld [vmem:[%s156 + $0x34] sm:$0xf]
      %v183 = vld [vmem:[%s156 + $0x38] sm:$0xf]
      %v184 = vld [vmem:[%s156 + $0x3c] sm:$0xf]
      %v185 = vld [vmem:[%s156 + $0x40] sm:$0xf]
      %v186 = vld [vmem:[%s156 + $0x44] sm:$0xf]
      %v187 = vld [vmem:[%s156 + $0x48] sm:$0xf]
      %v188 = vld [vmem:[%s156 + $0x4c] sm:$0xf]
      %v189 = vld [vmem:[%s156 + $0x50] sm:$0xf]
      %v190 = vld [vmem:[%s156 + $0x54] sm:$0xf]
      %v191 = vld [vmem:[%s156 + $0x58] sm:$0xf]
      %v192 = vld [vmem:[%s156 + $0x5c] sm:$0xf]
      %v193 = vld [vmem:[%s156 + $0x60] sm:$0xf]
      %v194 = vld [vmem:[%s156 + $0x64] sm:$0xf]
      %v195 = vld [vmem:[%s156 + $0x68] sm:$0xf]
      %v196 = vld [vmem:[%s156 + $0x6c] sm:$0xf]
      %v197 = vld [vmem:[%s156 + $0x70] sm:$0xf]
      %v198 = vld [vmem:[%s156 + $0x74] sm:$0xf]
      %v199 = vld [vmem:[%s156 + $0x78] sm:$0xf]
      %v200 = vld [vmem:[%s156 + $0x7c] sm:$0xf]
      %v201 = vld [vmem:[%s1] sm:$0xf]
      %v202 = vld [vmem:[%s1 + $0x4] sm:$0xf]
      %v203 = vld [vmem:[%s1 + $0x8] sm:$0xf]
      %v204 = vld [vmem:[%s1 + $0xc] sm:$0xf]
      %v205 = vld [vmem:[%s1 + $0x10] sm:$0xf]
      %v206 = vld [vmem:[%s1 + $0x14] sm:$0xf]
      %v207 = vld [vmem:[%s1 + $0x18] sm:$0xf]
      %v208 = vld [vmem:[%s1 + $0x1c] sm:$0xf]
      %v209 = vld [vmem:[%s1 + $0x20] sm:$0xf]
      %v210 = vld [vmem:[%s1 + $0x24] sm:$0xf]
      %v211 = vld [vmem:[%s1 + $0x28] sm:$0xf]
      %v212 = vld [vmem:[%s1 + $0x2c] sm:$0xf]
      %v213 = vld [vmem:[%s1 + $0x30] sm:$0xf]
      %v214 = vld [vmem:[%s1 + $0x34] sm:$0xf]
      %v215 = vld [vmem:[%s1 + $0x38] sm:$0xf]
      %v216 = vld [vmem:[%s1 + $0x3c] sm:$0xf]
      %v249 = vunpack.c.l.b16 %v169
      %v250 = vunpack.c.l.b16 %v170
      %v251 = vunpack.c.l.b16 %v171
      %v252 = vunpack.c.l.b16 %v172
      %v253 = vunpack.c.l.b16 %v173
      %v254 = vunpack.c.l.b16 %v174
      %v255 = vunpack.c.l.b16 %v175
      %v256 = vunpack.c.l.b16 %v176
      %v257 = vunpack.c.l.b16 %v177
      %v258 = vunpack.c.l.b16 %v178
      %v259 = vunpack.c.l.b16 %v179
      %v260 = vunpack.c.l.b16 %v180
      %v261 = vunpack.c.l.b16 %v181
      %v262 = vunpack.c.l.b16 %v182
      %v263 = vunpack.c.l.b16 %v183
      %v264 = vunpack.c.l.b16 %v184
      %v265 = vunpack.c.l.b16 %v185
      %v266 = vunpack.c.l.b16 %v186
      %v267 = vunpack.c.l.b16 %v187
      %v268 = vunpack.c.l.b16 %v188
      %v269 = vunpack.c.l.b16 %v189
      %v270 = vunpack.c.l.b16 %v190
      %v271 = vunpack.c.l.b16 %v191
      %v272 = vunpack.c.l.b16 %v192
      %v273 = vunpack.c.l.b16 %v193
      %v274 = vunpack.c.l.b16 %v194
      %v275 = vunpack.c.l.b16 %v195
      %v276 = vunpack.c.l.b16 %v196
      %v277 = vunpack.c.l.b16 %v197
      %v278 = vunpack.c.l.b16 %v198
      %v279 = vunpack.c.l.b16 %v199
      %v280 = vunpack.c.l.b16 %v200
      %v281 = vpack.c.b16 %v250, %v249
      %v282 = vpack.c.b16 %v252, %v251
      %v283 = vpack.c.b16 %v254, %v253
      %v284 = vpack.c.b16 %v256, %v255
      %v285 = vpack.c.b16 %v258, %v257
      %v286 = vpack.c.b16 %v260, %v259
      %v287 = vpack.c.b16 %v262, %v261
      %v288 = vpack.c.b16 %v264, %v263
      %v289 = vpack.c.b16 %v266, %v265
      %v290 = vpack.c.b16 %v268, %v267
      %v291 = vpack.c.b16 %v270, %v269
      %v292 = vpack.c.b16 %v272, %v271
      %v293 = vpack.c.b16 %v274, %v273
      %v294 = vpack.c.b16 %v276, %v275
      %v295 = vpack.c.b16 %v278, %v277
      %v296 = vpack.c.b16 %v280, %v279
      %v329 = vunpack.c.l.b16 %v201
      %v330 = vunpack.c.l.b16 %v202
      %v331 = vunpack.c.l.b16 %v203
      %v332 = vunpack.c.l.b16 %v204
      %v333 = vunpack.c.l.b16 %v205
      %v334 = vunpack.c.l.b16 %v206
      %v335 = vunpack.c.l.b16 %v207
      %v336 = vunpack.c.l.b16 %v208
      %v337 = vunpack.c.l.b16 %v209
      %v338 = vunpack.c.l.b16 %v210
      %v339 = vunpack.c.l.b16 %v211
      %v340 = vunpack.c.l.b16 %v212
      %v341 = vunpack.c.l.b16 %v213
      %v342 = vunpack.c.l.b16 %v214
      %v343 = vunpack.c.l.b16 %v215
      %v344 = vunpack.c.l.b16 %v216
      %v345 = vpack.c.b16 %v330, %v329
      %v346 = vpack.c.b16 %v332, %v331
      %v347 = vpack.c.b16 %v334, %v333
      %v348 = vpack.c.b16 %v336, %v335
      %v349 = vpack.c.b16 %v338, %v337
      %v350 = vpack.c.b16 %v340, %v339
      %v351 = vpack.c.b16 %v342, %v341
      %v352 = vpack.c.b16 %v344, %v343
      %361 = vmatprep.subr.bf16.mxu0 0
      %362 = vmatpush1.bf16.msra.mxu0 %v352
      %363 = vmatprep.subr.bf16.mxu0 0
      %364 = vmatpush1.bf16.msra.mxu0 %v351
      %365 = vmatprep.subr.bf16.mxu0 0
      %366 = vmatpush1.bf16.msra.mxu0 %v350
      %367 = vmatprep.subr.bf16.mxu0 0
      %368 = vmatpush1.bf16.msra.mxu0 %v349
      %369 = vmatprep.subr.bf16.mxu0 0
      %370 = vmatpush1.bf16.msra.mxu0 %v348
      %371 = vmatprep.subr.bf16.mxu0 0
      %372 = vmatpush1.bf16.msra.mxu0 %v347
      %373 = vmatprep.subr.bf16.mxu0 0
      %374 = vmatpush1.bf16.msra.mxu0 %v346
      %375 = vmatprep.subr.bf16.mxu0 0
      %376 = vmatpush1.bf16.msra.mxu0 %v345
      %377 = vmatprep.subr.bf16.mxu0 0
      %378 = vmatpush2.bf16.msra.mxu0 0
      %379 = vmatprep.subr.bf16.mxu0 0
      %380 = vmatpush2.bf16.msra.mxu0 0
      %381 = vmatprep.subr.bf16.mxu0 0
      %382 = vmatpush2.bf16.msra.mxu0 0
      %383 = vmatprep.subr.bf16.mxu0 0
      %384 = vmatpush2.bf16.msra.mxu0 0
      %385 = vmatprep.subr.bf16.mxu0 0
      %386 = vmatpush2.bf16.msra.mxu0 0
      %387 = vmatprep.subr.bf16.mxu0 0
      %388 = vmatpush2.bf16.msra.mxu0 0
      %389 = vmatprep.subr.bf16.mxu0 0
      %390 = vmatpush2.bf16.msra.mxu0 0
      %391 = vmatprep.subr.bf16.mxu0 0
      %392 = vmatpush2.bf16.msra.mxu0 0
      %393 = vmatprep.mubr.bf16.mxu0 0
      %394 = vmatmul.mubr.bf16.gmra.mxu0 %v281
      %v395 = vpop.f32.mrf.mxu0
      %v396 = vadd.f32 0.0, %v395
      %v397 = vpop.f32.mrf.mxu0
      %v398 = vpop.f32.mrf.mxu0
      %v399 = vadd.f32 0.0, %v398
      %v400 = vpop.f32.mrf.mxu0
      %401 = vmatprep.mubr.bf16.mxu0 0
      %402 = vmatmul.mubr.bf16.gmra.mxu0 %v282
      %v403 = vpop.f32.mrf.mxu0
      %v404 = vadd.f32 0.0, %v403
      %v405 = vpop.f32.mrf.mxu0
      %v406 = vpop.f32.mrf.mxu0
      %v407 = vadd.f32 0.0, %v406
      %v408 = vpop.f32.mrf.mxu0
      %409 = vmatprep.mubr.bf16.mxu0 0
      %410 = vmatmul.mubr.bf16.gmra.mxu0 %v283
      %v411 = vpop.f32.mrf.mxu0
      %v412 = vadd.f32 0.0, %v411
      %v413 = vpop.f32.mrf.mxu0
      %v414 = vpop.f32.mrf.mxu0
      %v415 = vadd.f32 0.0, %v414
      %v416 = vpop.f32.mrf.mxu0
      %417 = vmatprep.mubr.bf16.mxu0 0
      %418 = vmatmul.mubr.bf16.gmra.mxu0 %v284
      %v419 = vpop.f32.mrf.mxu0
      %v420 = vadd.f32 0.0, %v419
      %v421 = vpop.f32.mrf.mxu0
      %v422 = vpop.f32.mrf.mxu0
      %v423 = vadd.f32 0.0, %v422
      %v424 = vpop.f32.mrf.mxu0
      %425 = vmatprep.mubr.bf16.mxu0 0
      %426 = vmatmul.mubr.bf16.gmra.mxu0 %v285
      %v427 = vpop.f32.mrf.mxu0
      %v428 = vadd.f32 0.0, %v427
      %v429 = vpop.f32.mrf.mxu0
      %v430 = vpop.f32.mrf.mxu0
      %v431 = vadd.f32 0.0, %v430
      %v432 = vpop.f32.mrf.mxu0
      %433 = vmatprep.mubr.bf16.mxu0 0
      %434 = vmatmul.mubr.bf16.gmra.mxu0 %v286
      %v435 = vpop.f32.mrf.mxu0
      %v436 = vadd.f32 0.0, %v435
      %v437 = vpop.f32.mrf.mxu0
      %v438 = vpop.f32.mrf.mxu0
      %v439 = vadd.f32 0.0, %v438
      %v440 = vpop.f32.mrf.mxu0
      %441 = vmatprep.mubr.bf16.mxu0 0
      %442 = vmatmul.mubr.bf16.gmra.mxu0 %v287
      %v443 = vpop.f32.mrf.mxu0
      %v444 = vadd.f32 0.0, %v443
      %v445 = vpop.f32.mrf.mxu0
      %v446 = vpop.f32.mrf.mxu0
      %v447 = vadd.f32 0.0, %v446
      %v448 = vpop.f32.mrf.mxu0
      %449 = vmatprep.mubr.bf16.mxu0 0
      %450 = vmatmul.mubr.bf16.gmra.mxu0 %v288
      %v451 = vpop.f32.mrf.mxu0
      %v452 = vadd.f32 0.0, %v451
      %v453 = vpop.f32.mrf.mxu0
      %v454 = vpop.f32.mrf.mxu0
      %v455 = vadd.f32 0.0, %v454
      %v456 = vpop.f32.mrf.mxu0
      %457 = vmatprep.mubr.bf16.mxu0 0
      %458 = vmatmul.mubr.bf16.gmra.mxu0 %v289
      %v459 = vpop.f32.mrf.mxu0
      %v460 = vadd.f32 0.0, %v459
      %v461 = vpop.f32.mrf.mxu0
      %v462 = vpop.f32.mrf.mxu0
      %v463 = vadd.f32 0.0, %v462
      %v464 = vpop.f32.mrf.mxu0
      %465 = vmatprep.mubr.bf16.mxu0 0
      %466 = vmatmul.mubr.bf16.gmra.mxu0 %v290
      %v467 = vpop.f32.mrf.mxu0
      %v468 = vadd.f32 0.0, %v467
      %v469 = vpop.f32.mrf.mxu0
      %v470 = vpop.f32.mrf.mxu0
      %v471 = vadd.f32 0.0, %v470
      %v472 = vpop.f32.mrf.mxu0
      %473 = vmatprep.mubr.bf16.mxu0 0
      %474 = vmatmul.mubr.bf16.gmra.mxu0 %v291
      %v475 = vpop.f32.mrf.mxu0
      %v476 = vadd.f32 0.0, %v475
      %v477 = vpop.f32.mrf.mxu0
      %v478 = vpop.f32.mrf.mxu0
      %v479 = vadd.f32 0.0, %v478
      %v480 = vpop.f32.mrf.mxu0
      %481 = vmatprep.mubr.bf16.mxu0 0
      %482 = vmatmul.mubr.bf16.gmra.mxu0 %v292
      %v483 = vpop.f32.mrf.mxu0
      %v484 = vadd.f32 0.0, %v483
      %v485 = vpop.f32.mrf.mxu0
      %v486 = vpop.f32.mrf.mxu0
      %v487 = vadd.f32 0.0, %v486
      %v488 = vpop.f32.mrf.mxu0
      %489 = vmatprep.mubr.bf16.mxu0 0
      %490 = vmatmul.mubr.bf16.gmra.mxu0 %v293
      %v491 = vpop.f32.mrf.mxu0
      %v492 = vadd.f32 0.0, %v491
      %v493 = vpop.f32.mrf.mxu0
      %v494 = vpop.f32.mrf.mxu0
      %v495 = vadd.f32 0.0, %v494
      %v496 = vpop.f32.mrf.mxu0
      %497 = vmatprep.mubr.bf16.mxu0 0
      %498 = vmatmul.mubr.bf16.gmra.mxu0 %v294
      %v499 = vpop.f32.mrf.mxu0
      %v500 = vadd.f32 0.0, %v499
      %v501 = vpop.f32.mrf.mxu0
      %v502 = vpop.f32.mrf.mxu0
      %v503 = vadd.f32 0.0, %v502
      %v504 = vpop.f32.mrf.mxu0
      %505 = vmatprep.mubr.bf16.mxu0 0
      %506 = vmatmul.mubr.bf16.gmra.mxu0 %v295
      %v507 = vpop.f32.mrf.mxu0
      %v508 = vadd.f32 0.0, %v507
      %v509 = vpop.f32.mrf.mxu0
      %v510 = vpop.f32.mrf.mxu0
      %v511 = vadd.f32 0.0, %v510
      %v512 = vpop.f32.mrf.mxu0
      %513 = vmatprep.mubr.bf16.mxu0 0
      %514 = vmatmul.mubr.bf16.gmra.mxu0 %v296
      %v515 = vpop.f32.mrf.mxu0
      %v516 = vadd.f32 0.0, %v515
      %v517 = vpop.f32.mrf.mxu0
      %v518 = vpop.f32.mrf.mxu0
      %v519 = vadd.f32 0.0, %v518
      %v520 = vpop.f32.mrf.mxu0
      %521 = vdwg.mxu0
      %v522 = vld [vmem:[%s162] sm:$0x3]
      %v523 = vadd.f32 %v396, %v399
      %v524 = vadd.f32 %v523, %v404
      %v525 = vadd.f32 %v524, %v407
      %v526 = vadd.f32 %v525, %v412
      %v527 = vadd.f32 %v526, %v415
      %v528 = vadd.f32 %v527, %v420
      %v529 = vadd.f32 %v528, %v423
      %v530 = vadd.f32 %v529, %v428
      %v531 = vadd.f32 %v530, %v431
      %v532 = vadd.f32 %v531, %v436
      %v533 = vadd.f32 %v532, %v439
      %v534 = vadd.f32 %v533, %v444
      %v535 = vadd.f32 %v534, %v447
      %v536 = vadd.f32 %v535, %v452
      %v537 = vadd.f32 %v536, %v455
      %v538 = vadd.f32 %v537, %v460
      %v539 = vadd.f32 %v538, %v463
      %v540 = vadd.f32 %v539, %v468
      %v541 = vadd.f32 %v540, %v471
      %v542 = vadd.f32 %v541, %v476
      %v543 = vadd.f32 %v542, %v479
      %v544 = vadd.f32 %v543, %v484
      %v545 = vadd.f32 %v544, %v487
      %v546 = vadd.f32 %v545, %v492
      %v547 = vadd.f32 %v546, %v495
      %v548 = vadd.f32 %v547, %v500
      %v549 = vadd.f32 %v548, %v503
      %v550 = vadd.f32 %v549, %v508
      %v551 = vadd.f32 %v550, %v511
      %v552 = vadd.f32 %v551, %v516
      %v553 = vadd.f32 %v552, %v519
      %v554 = vrot.slane %v553, 4
      %v555 = vadd.f32 %v553, %v554
      %v556 = vrot.slane %v555, 2
      %v557 = vadd.f32 %v555, %v556
      %v558 = vrot.slane %v557, 1
      %v559 = vadd.f32 %v557, %v558
      %v560 = vmul.f32 %v396, %v396
      %v561 = vmul.f32 %v399, %v399
      %v562 = vmul.f32 %v404, %v404
      %v563 = vmul.f32 %v407, %v407
      %v564 = vmul.f32 %v412, %v412
      %v565 = vmul.f32 %v415, %v415
      %v566 = vmul.f32 %v420, %v420
      %v567 = vmul.f32 %v423, %v423
      %v568 = vmul.f32 %v428, %v428
      %v569 = vmul.f32 %v431, %v431
      %v570 = vmul.f32 %v436, %v436
      %v571 = vmul.f32 %v439, %v439
      %v572 = vmul.f32 %v444, %v444
      %v573 = vmul.f32 %v447, %v447
      %v574 = vmul.f32 %v452, %v452
      %v575 = vmul.f32 %v455, %v455
      %v576 = vmul.f32 %v460, %v460
      %v577 = vmul.f32 %v463, %v463
      %v578 = vmul.f32 %v468, %v468
      %v579 = vmul.f32 %v471, %v471
      %v580 = vmul.f32 %v476, %v476
      %v581 = vmul.f32 %v479, %v479
      %v582 = vmul.f32 %v484, %v484
      %v583 = vmul.f32 %v487, %v487
      %v584 = vmul.f32 %v492, %v492
      %v585 = vmul.f32 %v495, %v495
      %v586 = vmul.f32 %v500, %v500
      %v587 = vmul.f32 %v503, %v503
      %v588 = vmul.f32 %v508, %v508
      %v589 = vmul.f32 %v511, %v511
      %v590 = vmul.f32 %v516, %v516
      %v591 = vmul.f32 %v519, %v519
      %v592 = vadd.f32 %v560, %v561
      %v593 = vadd.f32 %v592, %v562
      %v594 = vadd.f32 %v593, %v563
      %v595 = vadd.f32 %v594, %v564
      %v596 = vadd.f32 %v595, %v565
      %v597 = vadd.f32 %v596, %v566
      %v598 = vadd.f32 %v597, %v567
      %v599 = vadd.f32 %v598, %v568
      %v600 = vadd.f32 %v599, %v569
      %v601 = vadd.f32 %v600, %v570
      %v602 = vadd.f32 %v601, %v571
      %v603 = vadd.f32 %v602, %v572
      %v604 = vadd.f32 %v603, %v573
      %v605 = vadd.f32 %v604, %v574
      %v606 = vadd.f32 %v605, %v575
      %v607 = vadd.f32 %v606, %v576
      %v608 = vadd.f32 %v607, %v577
      %v609 = vadd.f32 %v608, %v578
      %v610 = vadd.f32 %v609, %v579
      %v611 = vadd.f32 %v610, %v580
      %v612 = vadd.f32 %v611, %v581
      %v613 = vadd.f32 %v612, %v582
      %v614 = vadd.f32 %v613, %v583
      %v615 = vadd.f32 %v614, %v584
      %v616 = vadd.f32 %v615, %v585
      %v617 = vadd.f32 %v616, %v586
      %v618 = vadd.f32 %v617, %v587
      %v619 = vadd.f32 %v618, %v588
      %v620 = vadd.f32 %v619, %v589
      %v621 = vadd.f32 %v620, %v590
      %v622 = vadd.f32 %v621, %v591
      %v623 = vrot.slane %v622, 4
      %v624 = vadd.f32 %v622, %v623
      %v625 = vrot.slane %v624, 2
      %v626 = vadd.f32 %v624, %v625
      %v627 = vrot.slane %v626, 1
      %v628 = vadd.f32 %v626, %v627
      %vm629 = vcmask 1040384
      %v630 = vsel %vm629, %v559, %v628
      %v631 = vadd.f32 %v522, %v630
      %632 = vst [vmem:[%s162] sm:$0x3] %v631
      %p633 = scmp.lt.s32.totalorder %s17, 1
      %s634 = scalar_select %p633, %s17, 1
      %s635 = smul.addr %s634, 8
      %s636 = scalar_lea.vmem %s2, %s635
      // Predicated region
      $region33: #{forward.15} parent=27 // pred_check
        %p637 = pneg %p92
      $region34: #{forward.15} parent=27 // pred_check_branch
        %639 = sbr.rel (%p637) target = $region36
      $region35: #{forward.15} parent=27 // pred_region
        _
      $region36: #{forward.15} parent=27 // pred_fallthru
        _
    $region28: #{forward.15} parent=5 // pred_fallthru
      _
    %p640 = scmp.le.s32.totalorder 2, %s8
    // Predicated region
    $region37: #{forward.15} parent=5 // pred_check
      %p641 = pneg %p640
    $region38: #{forward.15} parent=5 // pred_check_branch
      %643 = sbr.rel (%p641) target = $region40
    $region39: #{forward.15} parent=5 // pred_region
      %s644 = ssub.s32 %s8, 2
      // Predicated region
      $region41: #{forward.15} parent=39 // pred_check
        %p645 = pneg %p98
      $region42: #{forward.15} parent=39 // pred_check_branch
        %647 = sbr.rel (%p645) target = $region44
      $region43: #{forward.15} parent=39 // pred_region
        %p648 = scmp.lt.s32.totalorder %s19, 1
        %s649 = scalar_select %p648, %s19, 1
        %s650 = smul.addr %s649, 8
        %s651 = scalar_lea.vmem %s2, %s650
      $region44: #{forward.15} parent=39 // pred_fallthru
        _
    $region40: #{forward.15} parent=5 // pred_fallthru
      _
  $region6: #{forward.15} parent=0 // loop_footer
    %s12 = sadd.s32 1, %s8
  $region7: #{forward.15} parent=0 // loop_footer_branch
    %7 = sbr.rel target = $region3
  $region8: #{forward.15} parent=0 // loop_exit
    _

// kernel: forward.16
$region0: #{forward.16}
  #allocation0 [shape = 'u32[]', space=smem, size = 0x4, offset = 0x4, fixed_abs, tag = 'smem constant byte address 0x4 - core index']
  #allocation1 [shape = 'u32[144,128]{1,0:T(1,128)}', space=vmem, size = 0x12000, scoped, tag = 'internal scratch']
  %s0 = inlined_call_operand.vmem [shape: bf16[512,128], index: 0, kind: input, shape index: {}]
  %s1 = inlined_call_operand.vmem [shape: bf16[128,128], index: 1, kind: input, shape index: {}]
  %s2 = inlined_call_operand.vmem [shape: f32[8,128], index: 2, kind: input, shape index: {}]
  %s3 = inlined_call_operand.vmem [shape: f32[1,128], index: 3, kind: input, shape index: {}]
  %s4 = inlined_call_operand.vmem [shape: f32[1,128], index: 4, kind: input, shape index: {}]
  %s5 = inlined_call_operand.vmem [shape: bf16[512,128], index: 5, kind: output, shape index: {}]
  %s6 = sld [smem:[#allocation0]]
  $region53: #{forward.16} parent=0
    _
  %s8 = ssub.s32 1, %s6
  %s9 = scalar_select 0, %s8, %s6
  loop: start=0, step=1, limit=4
  $region2: #{forward.16} parent=0 // loop_pre_header
    _
  $region3: #{forward.16} parent=0 // loop_header
    %s11 = sphi 0, %s15
    %p12 = scmp.ge.s32.totalorder %s11, 4
    %s21 = sphi 0, %s23
    %s24 = sphi 0, %s21
    %s25 = sphi 0, %s24
    %s41 = sphi 0, %s25
    %s45 = sphi 0, %s45
    %s47 = sphi 0, %s45
    %s48 = sphi 0, %s47
    %s62 = sphi 0, %s48
    %s66 = sphi 0, %s66
    %s68 = sphi 0, %s66
    %s69 = sphi 0, %s68
    %s83 = sphi 0, %s69
    %s87 = sphi 0, %s87
    %s89 = sphi 0, %s87
    %s90 = sphi 0, %s89
    %s104 = sphi 0, %s90
    %s108 = sphi 0, %s108
    %s110 = sphi 0, %s108
    %s111 = sphi 0, %s110
    %s125 = sphi 0, %s111
    %s131 = sphi 0, %s133
    %s134 = sphi 0, %s131
    %s135 = sphi 0, %s134
    %s151 = sphi 0, %s135
  $region4: #{forward.16} parent=0 // loop_header_branch
    %14 = sbr.rel (%p12) target = $region8
  $region5: #{forward.16} parent=0 // loop_body
    %s16 = ssub.s32 %s11, 1
    %s17 = ssub.s32 %s11, 2
    %s18 = sadd.s32 %s11, 1
    %s19 = ssub.s32 %s11, %s18
    %p20 = scmp.eq.s32.totalorder %s19, 0
    %s22 = sadd.s32 %s21, 1
    %s23 = scalar_select %p20, %s21, %s22
    %p26 = pneg %p20
    %p27 = scmp.eq.s32.totalorder %s11, 1
    %p28 = por %p26, %p27
    %p29 = scmp.ne.s32.totalorder %s21, %s24
    %p30 = scmp.eq.s32.totalorder %s11, 0
    %p31 = por %p29, %p30
    %p32 = scmp.ne.s32.totalorder %s21, %s24
    %p33 = scmp.eq.s32.totalorder %s16, 1
    %p34 = por %p32, %p33
    %p35 = scmp.ne.s32.totalorder %s24, %s25
    %p36 = scmp.eq.s32.totalorder %s16, 0
    %p37 = por %p35, %p36
    %p38 = scmp.ne.s32.totalorder %s24, %s25
    %p39 = scmp.eq.s32.totalorder %s17, 1
    %p40 = por %p38, %p39
    %p42 = scmp.ne.s32.totalorder %s25, %s41
    %p43 = scmp.eq.s32.totalorder %s17, 0
    %p44 = por %p42, %p43
    %s46 = sadd.s32 %s45, 1
    %p49 = scmp.eq.s32.totalorder %s11, 1
    %p50 = scmp.ne.s32.totalorder %s45, %s47
    %p51 = scmp.eq.s32.totalorder %s11, 0
    %p52 = por %p50, %p51
    %p53 = scmp.ne.s32.totalorder %s45, %s47
    %p54 = scmp.eq.s32.totalorder %s16, 1
    %p55 = por %p53, %p54
    %p56 = scmp.ne.s32.totalorder %s47, %s48
    %p57 = scmp.eq.s32.totalorder %s16, 0
    %p58 = por %p56, %p57
    %p59 = scmp.ne.s32.totalorder %s47, %s48
    %p60 = scmp.eq.s32.totalorder %s17, 1
    %p61 = por %p59, %p60
    %p63 = scmp.ne.s32.totalorder %s48, %s62
    %p64 = scmp.eq.s32.totalorder %s17, 0
    %p65 = por %p63, %p64
    %s67 = sadd.s32 %s66, 1
    %p70 = scmp.eq.s32.totalorder %s11, 1
    %p71 = scmp.ne.s32.totalorder %s66, %s68
    %p72 = scmp.eq.s32.totalorder %s11, 0
    %p73 = por %p71, %p72
    %p74 = scmp.ne.s32.totalorder %s66, %s68
    %p75 = scmp.eq.s32.totalorder %s16, 1
    %p76 = por %p74, %p75
    %p77 = scmp.ne.s32.totalorder %s68, %s69
    %p78 = scmp.eq.s32.totalorder %s16, 0
    %p79 = por %p77, %p78
    %p80 = scmp.ne.s32.totalorder %s68, %s69
    %p81 = scmp.eq.s32.totalorder %s17, 1
    %p82 = por %p80, %p81
    %p84 = scmp.ne.s32.totalorder %s69, %s83
    %p85 = scmp.eq.s32.totalorder %s17, 0
    %p86 = por %p84, %p85
    %s88 = sadd.s32 %s87, 1
    %p91 = scmp.eq.s32.totalorder %s11, 1
    %p92 = scmp.ne.s32.totalorder %s87, %s89
    %p93 = scmp.eq.s32.totalorder %s11, 0
    %p94 = por %p92, %p93
    %p95 = scmp.ne.s32.totalorder %s87, %s89
    %p96 = scmp.eq.s32.totalorder %s16, 1
    %p97 = por %p95, %p96
    %p98 = scmp.ne.s32.totalorder %s89, %s90
    %p99 = scmp.eq.s32.totalorder %s16, 0
    %p100 = por %p98, %p99
    %p101 = scmp.ne.s32.totalorder %s89, %s90
    %p102 = scmp.eq.s32.totalorder %s17, 1
    %p103 = por %p101, %p102
    %p105 = scmp.ne.s32.totalorder %s90, %s104
    %p106 = scmp.eq.s32.totalorder %s17, 0
    %p107 = por %p105, %p106
    %s109 = sadd.s32 %s108, 1
    %p112 = scmp.eq.s32.totalorder %s11, 1
    %p113 = scmp.ne.s32.totalorder %s108, %s110
    %p114 = scmp.eq.s32.totalorder %s11, 0
    %p115 = por %p113, %p114
    %p116 = scmp.ne.s32.totalorder %s108, %s110
    %p117 = scmp.eq.s32.totalorder %s16, 1
    %p118 = por %p116, %p117
    %p119 = scmp.ne.s32.totalorder %s110, %s111
    %p120 = scmp.eq.s32.totalorder %s16, 0
    %p121 = por %p119, %p120
    %p122 = scmp.ne.s32.totalorder %s110, %s111
    %p123 = scmp.eq.s32.totalorder %s17, 1
    %p124 = por %p122, %p123
    %p126 = scmp.ne.s32.totalorder %s111, %s125
    %p127 = scmp.eq.s32.totalorder %s17, 0
    %p128 = por %p126, %p127
    %s129 = ssub.s32 %s11, %s18
    %p130 = scmp.eq.s32.totalorder %s129, 0
    %s132 = sadd.s32 %s131, 1
    %s133 = scalar_select %p130, %s131, %s132
    %p136 = pneg %p130
    %p137 = scmp.eq.s32.totalorder %s11, 1
    %p138 = por %p136, %p137
    %p139 = scmp.ne.s32.totalorder %s131, %s134
    %p140 = scmp.eq.s32.totalorder %s11, 0
    %p141 = por %p139, %p140
    %p142 = scmp.ne.s32.totalorder %s131, %s134
    %p143 = scmp.eq.s32.totalorder %s16, 1
    %p144 = por %p142, %p143
    %p145 = scmp.ne.s32.totalorder %s134, %s135
    %p146 = scmp.eq.s32.totalorder %s16, 0
    %p147 = por %p145, %p146
    %p148 = scmp.ne.s32.totalorder %s134, %s135
    %p149 = scmp.eq.s32.totalorder %s17, 1
    %p150 = por %p148, %p149
    %p152 = scmp.ne.s32.totalorder %s135, %s151
    %p153 = scmp.eq.s32.totalorder %s17, 0
    %p154 = por %p152, %p153
    %p155 = scmp.le.s32.totalorder 1, %s11
    %p156 = scmp.lt.s32.totalorder %s11, 3
    %p157 = pnand %p155, %p156
    %p158 = pneg %p157
    // Predicated region
    $region9: #{forward.16} parent=5 // pred_check
      _
    $region10: #{forward.16} parent=5 // pred_check_branch
      %160 = sbr.rel (%p157) target = $region12
    $region11: #{forward.16} parent=5 // pred_region
      %s161 = ssub.s32 %s11, 1
      // Predicated region
      $region13: #{forward.16} parent=11 // pred_check
        %p162 = pneg %p58
      $region14: #{forward.16} parent=11 // pred_check_branch
        %164 = sbr.rel (%p162) target = $region16
      $region15: #{forward.16} parent=11 // pred_region
        _
      $region16: #{forward.16} parent=11 // pred_fallthru
        _
      // Predicated region
      $region17: #{forward.16} parent=11 // pred_check
        %p165 = pneg %p79
      $region18: #{forward.16} parent=11 // pred_check_branch
        %167 = sbr.rel (%p165) target = $region20
      $region19: #{forward.16} parent=11 // pred_region
        _
      $region20: #{forward.16} parent=11 // pred_fallthru
        _
      // Predicated region
      $region21: #{forward.16} parent=11 // pred_check
        %p168 = pneg %p100
      $region22: #{forward.16} parent=11 // pred_check_branch
        %170 = sbr.rel (%p168) target = $region24
      $region23: #{forward.16} parent=11 // pred_region
        _
      $region24: #{forward.16} parent=11 // pred_fallthru
        _
      // Predicated region
      $region25: #{forward.16} parent=11 // pred_check
        %p171 = pneg %p121
      $region26: #{forward.16} parent=11 // pred_check_branch
        %173 = sbr.rel (%p171) target = $region28
      $region27: #{forward.16} parent=11 // pred_region
        _
      $region28: #{forward.16} parent=11 // pred_fallthru
        _
    $region12: #{forward.16} parent=5 // pred_fallthru
      _
    %p174 = scmp.lt.s32.totalorder %s11, 2
    // Predicated region
    $region29: #{forward.16} parent=5 // pred_check
      %p175 = pneg %p174
    $region30: #{forward.16} parent=5 // pred_check_branch
      %177 = sbr.rel (%p175) target = $region32
    $region31: #{forward.16} parent=5 // pred_region
      // Predicated region
      $region33: #{forward.16} parent=31 // pred_check
        %p178 = pneg %p31
      $region34: #{forward.16} parent=31 // pred_check_branch
        %180 = sbr.rel (%p178) target = $region36
      $region35: #{forward.16} parent=31 // pred_region
        %s181 = smul.u32 32, %s11
        %p182 = scmp.lt.s32.totalorder %s181, 63
        %s183 = scalar_select %p182, %s181, 63
        %s184 = smul.addr %s183, 4
        %s185 = scalar_lea.vmem %s0, %s184
        %s186 = smul.u32 32, %s11
      $region36: #{forward.16} parent=31 // pred_fallthru
        _
    $region32: #{forward.16} parent=5 // pred_fallthru
      _
    %p187 = scmp.le.s32.totalorder 1, %s11
    %p188 = scmp.lt.s32.totalorder %s11, 3
    %p189 = pnand %p187, %p188
    %p190 = pneg %p189
    // Predicated region
    $region37: #{forward.16} parent=5 // pred_check
      _
    $region38: #{forward.16} parent=5 // pred_check_branch
      %192 = sbr.rel (%p189) target = $region40
    $region39: #{forward.16} parent=5 // pred_region
      %s193 = ssub.s32 %s11, 1
      %s194 = smul.u32 32, %s16
      %p195 = scmp.lt.s32.totalorder %s194, 63
      %s196 = scalar_select %p195, %s194, 63
      %s197 = smul.addr %s196, 4
      %s198 = scalar_lea.vmem %s0, %s197
      %p199 = pneg %p37
      %p200 = pneg %p34
      %p201 = pneg %p58
      %p202 = pneg %p55
      %p203 = pneg %p79
      %p204 = pneg %p76
      %p205 = pneg %p100
      %p206 = pneg %p97
      %p207 = pneg %p121
      %p208 = pneg %p118
      %p209 = pneg %p147
      %p210 = pneg %p144
      %s211 = smul.u32 32, %s16
      %p212 = scmp.lt.s32.totalorder %s211, 63
      %s213 = scalar_select %p212, %s211, 63
      %s214 = smul.addr %s213, 4
      %s215 = scalar_lea.vmem %s5, %s214
      %s216 = smul.u32 32, %s16
      %p217 = scmp.lt.s32.totalorder %s216, 63
      %s218 = scalar_select %p217, %s216, 63
      %s219 = smul.addr %s218, 4
      %s220 = scalar_lea.vmem %s0, %s219
      %s221 = smul.u32 32, %s16
      %s222 = smul.u32 32, %s16
      %p223 = scmp.lt.s32.totalorder %s222, 63
      %s224 = scalar_select %p223, %s222, 63
      %s225 = smul.addr %s224, 4
      %s226 = scalar_lea.vmem %s5, %s225
      %s227 = smul.u32 32, %s16
      %v229 = vld [vmem:[%s220] sm:$0xf]
      %v230 = vld [vmem:[%s220 + $0x4] sm:$0xf]
      %v231 = vld [vmem:[%s220 + $0x8] sm:$0xf]
      %v232 = vld [vmem:[%s220 + $0xc] sm:$0xf]
      %v233 = vld [vmem:[%s220 + $0x10] sm:$0xf]
      %v234 = vld [vmem:[%s220 + $0x14] sm:$0xf]
      %v235 = vld [vmem:[%s220 + $0x18] sm:$0xf]
      %v236 = vld [vmem:[%s220 + $0x1c] sm:$0xf]
      %v237 = vld [vmem:[%s220 + $0x20] sm:$0xf]
      %v238 = vld [vmem:[%s220 + $0x24] sm:$0xf]
      %v239 = vld [vmem:[%s220 + $0x28] sm:$0xf]
      %v240 = vld [vmem:[%s220 + $0x2c] sm:$0xf]
      %v241 = vld [vmem:[%s220 + $0x30] sm:$0xf]
      %v242 = vld [vmem:[%s220 + $0x34] sm:$0xf]
      %v243 = vld [vmem:[%s220 + $0x38] sm:$0xf]
      %v244 = vld [vmem:[%s220 + $0x3c] sm:$0xf]
      %v245 = vld [vmem:[%s220 + $0x40] sm:$0xf]
      %v246 = vld [vmem:[%s220 + $0x44] sm:$0xf]
      %v247 = vld [vmem:[%s220 + $0x48] sm:$0xf]
      %v248 = vld [vmem:[%s220 + $0x4c] sm:$0xf]
      %v249 = vld [vmem:[%s220 + $0x50] sm:$0xf]
      %v250 = vld [vmem:[%s220 + $0x54] sm:$0xf]
      %v251 = vld [vmem:[%s220 + $0x58] sm:$0xf]
      %v252 = vld [vmem:[%s220 + $0x5c] sm:$0xf]
      %v253 = vld [vmem:[%s220 + $0x60] sm:$0xf]
      %v254 = vld [vmem:[%s220 + $0x64] sm:$0xf]
      %v255 = vld [vmem:[%s220 + $0x68] sm:$0xf]
      %v256 = vld [vmem:[%s220 + $0x6c] sm:$0xf]
      %v257 = vld [vmem:[%s220 + $0x70] sm:$0xf]
      %v258 = vld [vmem:[%s220 + $0x74] sm:$0xf]
      %v259 = vld [vmem:[%s220 + $0x78] sm:$0xf]
      %v260 = vld [vmem:[%s220 + $0x7c] sm:$0xf]
      %v261 = vld [vmem:[%s1] sm:$0xf]
      %v262 = vld [vmem:[%s1 + $0x4] sm:$0xf]
      %v263 = vld [vmem:[%s1 + $0x8] sm:$0xf]
      %v264 = vld [vmem:[%s1 + $0xc] sm:$0xf]
      %v265 = vld [vmem:[%s1 + $0x10] sm:$0xf]
      %v266 = vld [vmem:[%s1 + $0x14] sm:$0xf]
      %v267 = vld [vmem:[%s1 + $0x18] sm:$0xf]
      %v268 = vld [vmem:[%s1 + $0x1c] sm:$0xf]
      %v269 = vld [vmem:[%s1 + $0x20] sm:$0xf]
      %v270 = vld [vmem:[%s1 + $0x24] sm:$0xf]
      %v271 = vld [vmem:[%s1 + $0x28] sm:$0xf]
      %v272 = vld [vmem:[%s1 + $0x2c] sm:$0xf]
      %v273 = vld [vmem:[%s1 + $0x30] sm:$0xf]
      %v274 = vld [vmem:[%s1 + $0x34] sm:$0xf]
      %v275 = vld [vmem:[%s1 + $0x38] sm:$0xf]
      %v276 = vld [vmem:[%s1 + $0x3c] sm:$0xf]
      %v309 = vunpack.c.l.b16 %v229
      %v310 = vunpack.c.l.b16 %v230
      %v311 = vunpack.c.l.b16 %v231
      %v312 = vunpack.c.l.b16 %v232
      %v313 = vunpack.c.l.b16 %v233
      %v314 = vunpack.c.l.b16 %v234
      %v315 = vunpack.c.l.b16 %v235
      %v316 = vunpack.c.l.b16 %v236
      %v317 = vunpack.c.l.b16 %v237
      %v318 = vunpack.c.l.b16 %v238
      %v319 = vunpack.c.l.b16 %v239
      %v320 = vunpack.c.l.b16 %v240
      %v321 = vunpack.c.l.b16 %v241
      %v322 = vunpack.c.l.b16 %v242
      %v323 = vunpack.c.l.b16 %v243
      %v324 = vunpack.c.l.b16 %v244
      %v325 = vunpack.c.l.b16 %v245
      %v326 = vunpack.c.l.b16 %v246
      %v327 = vunpack.c.l.b16 %v247
      %v328 = vunpack.c.l.b16 %v248
      %v329 = vunpack.c.l.b16 %v249
      %v330 = vunpack.c.l.b16 %v250
      %v331 = vunpack.c.l.b16 %v251
      %v332 = vunpack.c.l.b16 %v252
      %v333 = vunpack.c.l.b16 %v253
      %v334 = vunpack.c.l.b16 %v254
      %v335 = vunpack.c.l.b16 %v255
      %v336 = vunpack.c.l.b16 %v256
      %v337 = vunpack.c.l.b16 %v257
      %v338 = vunpack.c.l.b16 %v258
      %v339 = vunpack.c.l.b16 %v259
      %v340 = vunpack.c.l.b16 %v260
      %v341 = vpack.c.b16 %v310, %v309
      %v342 = vpack.c.b16 %v312, %v311
      %v343 = vpack.c.b16 %v314, %v313
      %v344 = vpack.c.b16 %v316, %v315
      %v345 = vpack.c.b16 %v318, %v317
      %v346 = vpack.c.b16 %v320, %v319
      %v347 = vpack.c.b16 %v322, %v321
      %v348 = vpack.c.b16 %v324, %v323
      %v349 = vpack.c.b16 %v326, %v325
      %v350 = vpack.c.b16 %v328, %v327
      %v351 = vpack.c.b16 %v330, %v329
      %v352 = vpack.c.b16 %v332, %v331
      %v353 = vpack.c.b16 %v334, %v333
      %v354 = vpack.c.b16 %v336, %v335
      %v355 = vpack.c.b16 %v338, %v337
      %v356 = vpack.c.b16 %v340, %v339
      %v389 = vunpack.c.l.b16 %v261
      %v390 = vunpack.c.l.b16 %v262
      %v391 = vunpack.c.l.b16 %v263
      %v392 = vunpack.c.l.b16 %v264
      %v393 = vunpack.c.l.b16 %v265
      %v394 = vunpack.c.l.b16 %v266
      %v395 = vunpack.c.l.b16 %v267
      %v396 = vunpack.c.l.b16 %v268
      %v397 = vunpack.c.l.b16 %v269
      %v398 = vunpack.c.l.b16 %v270
      %v399 = vunpack.c.l.b16 %v271
      %v400 = vunpack.c.l.b16 %v272
      %v401 = vunpack.c.l.b16 %v273
      %v402 = vunpack.c.l.b16 %v274
      %v403 = vunpack.c.l.b16 %v275
      %v404 = vunpack.c.l.b16 %v276
      %v405 = vpack.c.b16 %v390, %v389
      %v406 = vpack.c.b16 %v392, %v391
      %v407 = vpack.c.b16 %v394, %v393
      %v408 = vpack.c.b16 %v396, %v395
      %v409 = vpack.c.b16 %v398, %v397
      %v410 = vpack.c.b16 %v400, %v399
      %v411 = vpack.c.b16 %v402, %v401
      %v412 = vpack.c.b16 %v404, %v403
      %421 = vmatprep.subr.bf16.mxu0 0
      %422 = vmatpush1.bf16.msra.mxu0 %v412
      %423 = vmatprep.subr.bf16.mxu0 0
      %424 = vmatpush1.bf16.msra.mxu0 %v411
      %425 = vmatprep.subr.bf16.mxu0 0
      %426 = vmatpush1.bf16.msra.mxu0 %v410
      %427 = vmatprep.subr.bf16.mxu0 0
      %428 = vmatpush1.bf16.msra.mxu0 %v409
      %429 = vmatprep.subr.bf16.mxu0 0
      %430 = vmatpush1.bf16.msra.mxu0 %v408
      %431 = vmatprep.subr.bf16.mxu0 0
      %432 = vmatpush1.bf16.msra.mxu0 %v407
      %433 = vmatprep.subr.bf16.mxu0 0
      %434 = vmatpush1.bf16.msra.mxu0 %v406
      %435 = vmatprep.subr.bf16.mxu0 0
      %436 = vmatpush1.bf16.msra.mxu0 %v405
      %437 = vmatprep.subr.bf16.mxu0 0
      %438 = vmatpush2.bf16.msra.mxu0 0
      %439 = vmatprep.subr.bf16.mxu0 0
      %440 = vmatpush2.bf16.msra.mxu0 0
      %441 = vmatprep.subr.bf16.mxu0 0
      %442 = vmatpush2.bf16.msra.mxu0 0
      %443 = vmatprep.subr.bf16.mxu0 0
      %444 = vmatpush2.bf16.msra.mxu0 0
      %445 = vmatprep.subr.bf16.mxu0 0
      %446 = vmatpush2.bf16.msra.mxu0 0
      %447 = vmatprep.subr.bf16.mxu0 0
      %448 = vmatpush2.bf16.msra.mxu0 0
      %449 = vmatprep.subr.bf16.mxu0 0
      %450 = vmatpush2.bf16.msra.mxu0 0
      %451 = vmatprep.subr.bf16.mxu0 0
      %452 = vmatpush2.bf16.msra.mxu0 0
      %453 = vmatprep.mubr.bf16.mxu0 0
      %454 = vmatmul.mubr.bf16.gmra.mxu0 %v341
      %v455 = vpop.f32.mrf.mxu0
      %v456 = vadd.f32 0.0, %v455
      %v457 = vpop.f32.mrf.mxu0
      %v458 = vpop.f32.mrf.mxu0
      %v459 = vadd.f32 0.0, %v458
      %v460 = vpop.f32.mrf.mxu0
      %461 = vmatprep.mubr.bf16.mxu0 0
      %462 = vmatmul.mubr.bf16.gmra.mxu0 %v342
      %v463 = vpop.f32.mrf.mxu0
      %v464 = vadd.f32 0.0, %v463
      %v465 = vpop.f32.mrf.mxu0
      %v466 = vpop.f32.mrf.mxu0
      %v467 = vadd.f32 0.0, %v466
      %v468 = vpop.f32.mrf.mxu0
      %469 = vmatprep.mubr.bf16.mxu0 0
      %470 = vmatmul.mubr.bf16.gmra.mxu0 %v343
      %v471 = vpop.f32.mrf.mxu0
      %v472 = vadd.f32 0.0, %v471
      %v473 = vpop.f32.mrf.mxu0
      %v474 = vpop.f32.mrf.mxu0
      %v475 = vadd.f32 0.0, %v474
      %v476 = vpop.f32.mrf.mxu0
      %477 = vmatprep.mubr.bf16.mxu0 0
      %478 = vmatmul.mubr.bf16.gmra.mxu0 %v344
      %v479 = vpop.f32.mrf.mxu0
      %v480 = vadd.f32 0.0, %v479
      %v481 = vpop.f32.mrf.mxu0
      %v482 = vpop.f32.mrf.mxu0
      %v483 = vadd.f32 0.0, %v482
      %v484 = vpop.f32.mrf.mxu0
      %485 = vmatprep.mubr.bf16.mxu0 0
      %486 = vmatmul.mubr.bf16.gmra.mxu0 %v345
      %v487 = vpop.f32.mrf.mxu0
      %v488 = vadd.f32 0.0, %v487
      %v489 = vpop.f32.mrf.mxu0
      %v490 = vpop.f32.mrf.mxu0
      %v491 = vadd.f32 0.0, %v490
      %v492 = vpop.f32.mrf.mxu0
      %493 = vmatprep.mubr.bf16.mxu0 0
      %494 = vmatmul.mubr.bf16.gmra.mxu0 %v346
      %v495 = vpop.f32.mrf.mxu0
      %v496 = vadd.f32 0.0, %v495
      %v497 = vpop.f32.mrf.mxu0
      %v498 = vpop.f32.mrf.mxu0
      %v499 = vadd.f32 0.0, %v498
      %v500 = vpop.f32.mrf.mxu0
      %501 = vmatprep.mubr.bf16.mxu0 0
      %502 = vmatmul.mubr.bf16.gmra.mxu0 %v347
      %v503 = vpop.f32.mrf.mxu0
      %v504 = vadd.f32 0.0, %v503
      %v505 = vpop.f32.mrf.mxu0
      %v506 = vpop.f32.mrf.mxu0
      %v507 = vadd.f32 0.0, %v506
      %v508 = vpop.f32.mrf.mxu0
      %509 = vmatprep.mubr.bf16.mxu0 0
      %510 = vmatmul.mubr.bf16.gmra.mxu0 %v348
      %v511 = vpop.f32.mrf.mxu0
      %v512 = vadd.f32 0.0, %v511
      %v513 = vpop.f32.mrf.mxu0
      %v514 = vpop.f32.mrf.mxu0
      %v515 = vadd.f32 0.0, %v514
      %v516 = vpop.f32.mrf.mxu0
      %517 = vmatprep.mubr.bf16.mxu0 0
      %518 = vmatmul.mubr.bf16.gmra.mxu0 %v349
      %v519 = vpop.f32.mrf.mxu0
      %v520 = vadd.f32 0.0, %v519
      %v521 = vpop.f32.mrf.mxu0
      %v522 = vpop.f32.mrf.mxu0
      %v523 = vadd.f32 0.0, %v522
      %v524 = vpop.f32.mrf.mxu0
      %525 = vmatprep.mubr.bf16.mxu0 0
      %526 = vmatmul.mubr.bf16.gmra.mxu0 %v350
      %v527 = vpop.f32.mrf.mxu0
      %v528 = vadd.f32 0.0, %v527
      %v529 = vpop.f32.mrf.mxu0
      %v530 = vpop.f32.mrf.mxu0
      %v531 = vadd.f32 0.0, %v530
      %v532 = vpop.f32.mrf.mxu0
      %533 = vmatprep.mubr.bf16.mxu0 0
      %534 = vmatmul.mubr.bf16.gmra.mxu0 %v351
      %v535 = vpop.f32.mrf.mxu0
      %v536 = vadd.f32 0.0, %v535
      %v537 = vpop.f32.mrf.mxu0
      %v538 = vpop.f32.mrf.mxu0
      %v539 = vadd.f32 0.0, %v538
      %v540 = vpop.f32.mrf.mxu0
      %541 = vmatprep.mubr.bf16.mxu0 0
      %542 = vmatmul.mubr.bf16.gmra.mxu0 %v352
      %v543 = vpop.f32.mrf.mxu0
      %v544 = vadd.f32 0.0, %v543
      %v545 = vpop.f32.mrf.mxu0
      %v546 = vpop.f32.mrf.mxu0
      %v547 = vadd.f32 0.0, %v546
      %v548 = vpop.f32.mrf.mxu0
      %549 = vmatprep.mubr.bf16.mxu0 0
      %550 = vmatmul.mubr.bf16.gmra.mxu0 %v353
      %v551 = vpop.f32.mrf.mxu0
      %v552 = vadd.f32 0.0, %v551
      %v553 = vpop.f32.mrf.mxu0
      %v554 = vpop.f32.mrf.mxu0
      %v555 = vadd.f32 0.0, %v554
      %v556 = vpop.f32.mrf.mxu0
      %557 = vmatprep.mubr.bf16.mxu0 0
      %558 = vmatmul.mubr.bf16.gmra.mxu0 %v354
      %v559 = vpop.f32.mrf.mxu0
      %v560 = vadd.f32 0.0, %v559
      %v561 = vpop.f32.mrf.mxu0
      %v562 = vpop.f32.mrf.mxu0
      %v563 = vadd.f32 0.0, %v562
      %v564 = vpop.f32.mrf.mxu0
      %565 = vmatprep.mubr.bf16.mxu0 0
      %566 = vmatmul.mubr.bf16.gmra.mxu0 %v355
      %v567 = vpop.f32.mrf.mxu0
      %v568 = vadd.f32 0.0, %v567
      %v569 = vpop.f32.mrf.mxu0
      %v570 = vpop.f32.mrf.mxu0
      %v571 = vadd.f32 0.0, %v570
      %v572 = vpop.f32.mrf.mxu0
      %573 = vmatprep.mubr.bf16.mxu0 0
      %574 = vmatmul.mubr.bf16.gmra.mxu0 %v356
      %v575 = vpop.f32.mrf.mxu0
      %v576 = vadd.f32 0.0, %v575
      %v577 = vpop.f32.mrf.mxu0
      %v578 = vpop.f32.mrf.mxu0
      %v579 = vadd.f32 0.0, %v578
      %v580 = vpop.f32.mrf.mxu0
      %581 = vdwg.mxu0
      %v582 = vld [vmem:[%s2] sm:$0x1]
      %v583 = vmul.f32 %v582, 0.00390625
      %v584 = vld [vmem:[%s2 + $0x1] sm:$0x1]
      %v585 = vmul.f32 %v584, 0.00390625
      %v586 = vmul.f32 %v583, %v583
      %v587 = vsub.f32 %v585, %v586
      %v588 = vmax.f32 %v587, 0.0
      %v589 = vld [vmem:[%s3] sm:$0x1]
      %v590 = vadd.f32 %v588, 1e-05
      %v591 = vrsqrt.pop %v590
      %v592 = vmul.f32 %v589, %v591
      %v593 = vld [vmem:[%s4] sm:$0x1]
      %v594 = vmul.f32 %v583, %v592
      %v595 = vsub.f32 %v593, %v594
      %v597 = vlaneseq
      %v598 = vshrl.u32 %v597, 7
      %v599 = vsub.s32 0, %v598
      %v600 = vrot.slane %v592, %v599
      %v602 = vmul.f32 %v456, %v600
      %v603 = vmul.f32 %v459, %v600
      %v604 = vmul.f32 %v464, %v600
      %v605 = vmul.f32 %v467, %v600
      %v606 = vmul.f32 %v472, %v600
      %v607 = vmul.f32 %v475, %v600
      %v608 = vmul.f32 %v480, %v600
      %v609 = vmul.f32 %v483, %v600
      %v610 = vmul.f32 %v488, %v600
      %v611 = vmul.f32 %v491, %v600
      %v612 = vmul.f32 %v496, %v600
      %v613 = vmul.f32 %v499, %v600
      %v614 = vmul.f32 %v504, %v600
      %v615 = vmul.f32 %v507, %v600
      %v616 = vmul.f32 %v512, %v600
      %v617 = vmul.f32 %v515, %v600
      %v618 = vmul.f32 %v520, %v600
      %v619 = vmul.f32 %v523, %v600
      %v620 = vmul.f32 %v528, %v600
      %v621 = vmul.f32 %v531, %v600
      %v622 = vmul.f32 %v536, %v600
      %v623 = vmul.f32 %v539, %v600
      %v624 = vmul.f32 %v544, %v600
      %v625 = vmul.f32 %v547, %v600
      %v626 = vmul.f32 %v552, %v600
      %v627 = vmul.f32 %v555, %v600
      %v628 = vmul.f32 %v560, %v600
      %v629 = vmul.f32 %v563, %v600
      %v630 = vmul.f32 %v568, %v600
      %v631 = vmul.f32 %v571, %v600
      %v632 = vmul.f32 %v576, %v600
      %v633 = vmul.f32 %v579, %v600
      %v635 = vlaneseq
      %v636 = vshrl.u32 %v635, 7
      %v637 = vsub.s32 0, %v636
      %v638 = vrot.slane %v595, %v637
      %v640 = vadd.f32 %v602, %v638
      %v641 = vadd.f32 %v603, %v638
      %v642 = vadd.f32 %v604, %v638
      %v643 = vadd.f32 %v605, %v638
      %v644 = vadd.f32 %v606, %v638
      %v645 = vadd.f32 %v607, %v638
      %v646 = vadd.f32 %v608, %v638
      %v647 = vadd.f32 %v609, %v638
      %v648 = vadd.f32 %v610, %v638
      %v649 = vadd.f32 %v611, %v638
      %v650 = vadd.f32 %v612, %v638
      %v651 = vadd.f32 %v613, %v638
      %v652 = vadd.f32 %v614, %v638
      %v653 = vadd.f32 %v615, %v638
      %v654 = vadd.f32 %v616, %v638
      %v655 = vadd.f32 %v617, %v638
      %v656 = vadd.f32 %v618, %v638
      %v657 = vadd.f32 %v619, %v638
      %v658 = vadd.f32 %v620, %v638
      %v659 = vadd.f32 %v621, %v638
      %v660 = vadd.f32 %v622, %v638
      %v661 = vadd.f32 %v623, %v638
      %v662 = vadd.f32 %v624, %v638
      %v663 = vadd.f32 %v625, %v638
      %v664 = vadd.f32 %v626, %v638
      %v665 = vadd.f32 %v627, %v638
      %v666 = vadd.f32 %v628, %v638
      %v667 = vadd.f32 %v629, %v638
      %v668 = vadd.f32 %v630, %v638
      %v669 = vadd.f32 %v631, %v638
      %v670 = vadd.f32 %v632, %v638
      %v671 = vadd.f32 %v633, %v638
      %v672 = vmax.f32 %v640, 0.0
      %v673 = vmax.f32 %v641, 0.0
      %v674 = vmax.f32 %v642, 0.0
      %v675 = vmax.f32 %v643, 0.0
      %v676 = vmax.f32 %v644, 0.0
      %v677 = vmax.f32 %v645, 0.0
      %v678 = vmax.f32 %v646, 0.0
      %v679 = vmax.f32 %v647, 0.0
      %v680 = vmax.f32 %v648, 0.0
      %v681 = vmax.f32 %v649, 0.0
      %v682 = vmax.f32 %v650, 0.0
      %v683 = vmax.f32 %v651, 0.0
      %v684 = vmax.f32 %v652, 0.0
      %v685 = vmax.f32 %v653, 0.0
      %v686 = vmax.f32 %v654, 0.0
      %v687 = vmax.f32 %v655, 0.0
      %v688 = vmax.f32 %v656, 0.0
      %v689 = vmax.f32 %v657, 0.0
      %v690 = vmax.f32 %v658, 0.0
      %v691 = vmax.f32 %v659, 0.0
      %v692 = vmax.f32 %v660, 0.0
      %v693 = vmax.f32 %v661, 0.0
      %v694 = vmax.f32 %v662, 0.0
      %v695 = vmax.f32 %v663, 0.0
      %v696 = vmax.f32 %v664, 0.0
      %v697 = vmax.f32 %v665, 0.0
      %v698 = vmax.f32 %v666, 0.0
      %v699 = vmax.f32 %v667, 0.0
      %v700 = vmax.f32 %v668, 0.0
      %v701 = vmax.f32 %v669, 0.0
      %v702 = vmax.f32 %v670, 0.0
      %v703 = vmax.f32 %v671, 0.0
      %v704 = vpack.c.bf16 %v673, %v672
      %v705 = vpack.c.bf16 %v675, %v674
      %v706 = vpack.c.bf16 %v677, %v676
      %v707 = vpack.c.bf16 %v679, %v678
      %v708 = vpack.c.bf16 %v681, %v680
      %v709 = vpack.c.bf16 %v683, %v682
      %v710 = vpack.c.bf16 %v685, %v684
      %v711 = vpack.c.bf16 %v687, %v686
      %v712 = vpack.c.bf16 %v689, %v688
      %v713 = vpack.c.bf16 %v691, %v690
      %v714 = vpack.c.bf16 %v693, %v692
      %v715 = vpack.c.bf16 %v695, %v694
      %v716 = vpack.c.bf16 %v697, %v696
      %v717 = vpack.c.bf16 %v699, %v698
      %v718 = vpack.c.bf16 %v701, %v700
      %v719 = vpack.c.bf16 %v703, %v702
      %v736 = vunpack.c.l.b16 %v704
      %v737 = vunpack.c.h.b16 %v704
      %v738 = vunpack.c.l.b16 %v705
      %v739 = vunpack.c.h.b16 %v705
      %v740 = vunpack.c.l.b16 %v706
      %v741 = vunpack.c.h.b16 %v706
      %v742 = vunpack.c.l.b16 %v707
      %v743 = vunpack.c.h.b16 %v707
      %v744 = vunpack.c.l.b16 %v708
      %v745 = vunpack.c.h.b16 %v708
      %v746 = vunpack.c.l.b16 %v709
      %v747 = vunpack.c.h.b16 %v709
      %v748 = vunpack.c.l.b16 %v710
      %v749 = vunpack.c.h.b16 %v710
      %v750 = vunpack.c.l.b16 %v711
      %v751 = vunpack.c.h.b16 %v711
      %v752 = vunpack.c.l.b16 %v712
      %v753 = vunpack.c.h.b16 %v712
      %v754 = vunpack.c.l.b16 %v713
      %v755 = vunpack.c.h.b16 %v713
      %v756 = vunpack.c.l.b16 %v714
      %v757 = vunpack.c.h.b16 %v714
      %v758 = vunpack.c.l.b16 %v715
      %v759 = vunpack.c.h.b16 %v715
      %v760 = vunpack.c.l.b16 %v716
      %v761 = vunpack.c.h.b16 %v716
      %v762 = vunpack.c.l.b16 %v717
      %v763 = vunpack.c.h.b16 %v717
      %v764 = vunpack.c.l.b16 %v718
      %v765 = vunpack.c.h.b16 %v718
      %v766 = vunpack.c.l.b16 %v719
      %v767 = vunpack.c.h.b16 %v719
      %v768 = vpack.c.b16 %v736, %v736
      %v769 = vpack.c.b16 %v737, %v737
      %v770 = vpack.c.b16 %v738, %v738
      %v771 = vpack.c.b16 %v739, %v739
      %v772 = vpack.c.b16 %v740, %v740
      %v773 = vpack.c.b16 %v741, %v741
      %v774 = vpack.c.b16 %v742, %v742
      %v775 = vpack.c.b16 %v743, %v743
      %v776 = vpack.c.b16 %v744, %v744
      %v777 = vpack.c.b16 %v745, %v745
      %v778 = vpack.c.b16 %v746, %v746
      %v779 = vpack.c.b16 %v747, %v747
      %v780 = vpack.c.b16 %v748, %v748
      %v781 = vpack.c.b16 %v749, %v749
      %v782 = vpack.c.b16 %v750, %v750
      %v783 = vpack.c.b16 %v751, %v751
      %v784 = vpack.c.b16 %v752, %v752
      %v785 = vpack.c.b16 %v753, %v753
      %v786 = vpack.c.b16 %v754, %v754
      %v787 = vpack.c.b16 %v755, %v755
      %v788 = vpack.c.b16 %v756, %v756
      %v789 = vpack.c.b16 %v757, %v757
      %v790 = vpack.c.b16 %v758, %v758
      %v791 = vpack.c.b16 %v759, %v759
      %v792 = vpack.c.b16 %v760, %v760
      %v793 = vpack.c.b16 %v761, %v761
      %v794 = vpack.c.b16 %v762, %v762
      %v795 = vpack.c.b16 %v763, %v763
      %v796 = vpack.c.b16 %v764, %v764
      %v797 = vpack.c.b16 %v765, %v765
      %v798 = vpack.c.b16 %v766, %v766
      %v799 = vpack.c.b16 %v767, %v767
      %832 = vst [vmem:[%s226] sm:$0xf] %v768
      %833 = vst [vmem:[%s226 + $0x4] sm:$0xf] %v769
      %834 = vst [vmem:[%s226 + $0x8] sm:$0xf] %v770
      %835 = vst [vmem:[%s226 + $0xc] sm:$0xf] %v771
      %836 = vst [vmem:[%s226 + $0x10] sm:$0xf] %v772
      %837 = vst [vmem:[%s226 + $0x14] sm:$0xf] %v773
      %838 = vst [vmem:[%s226 + $0x18] sm:$0xf] %v774
      %839 = vst [vmem:[%s226 + $0x1c] sm:$0xf] %v775
      %840 = vst [vmem:[%s226 + $0x20] sm:$0xf] %v776
      %841 = vst [vmem:[%s226 + $0x24] sm:$0xf] %v777
      %842 = vst [vmem:[%s226 + $0x28] sm:$0xf] %v778
      %843 = vst [vmem:[%s226 + $0x2c] sm:$0xf] %v779
      %844 = vst [vmem:[%s226 + $0x30] sm:$0xf] %v780
      %845 = vst [vmem:[%s226 + $0x34] sm:$0xf] %v781
      %846 = vst [vmem:[%s226 + $0x38] sm:$0xf] %v782
      %847 = vst [vmem:[%s226 + $0x3c] sm:$0xf] %v783
      %848 = vst [vmem:[%s226 + $0x40] sm:$0xf] %v784
      %849 = vst [vmem:[%s226 + $0x44] sm:$0xf] %v785
      %850 = vst [vmem:[%s226 + $0x48] sm:$0xf] %v786
      %851 = vst [vmem:[%s226 + $0x4c] sm:$0xf] %v787
      %852 = vst [vmem:[%s226 + $0x50] sm:$0xf] %v788
      %853 = vst [vmem:[%s226 + $0x54] sm:$0xf] %v789
      %854 = vst [vmem:[%s226 + $0x58] sm:$0xf] %v790
      %855 = vst [vmem:[%s226 + $0x5c] sm:$0xf] %v791
      %856 = vst [vmem:[%s226 + $0x60] sm:$0xf] %v792
      %857 = vst [vmem:[%s226 + $0x64] sm:$0xf] %v793
      %858 = vst [vmem:[%s226 + $0x68] sm:$0xf] %v794
      %859 = vst [vmem:[%s226 + $0x6c] sm:$0xf] %v795
      %860 = vst [vmem:[%s226 + $0x70] sm:$0xf] %v796
      %861 = vst [vmem:[%s226 + $0x74] sm:$0xf] %v797
      %862 = vst [vmem:[%s226 + $0x78] sm:$0xf] %v798
      %863 = vst [vmem:[%s226 + $0x7c] sm:$0xf] %v799
      %s864 = smul.u32 32, %s16
      %p865 = scmp.lt.s32.totalorder %s864, 63
      %s866 = scalar_select %p865, %s864, 63
      %s867 = smul.addr %s866, 4
      %s868 = scalar_lea.vmem %s5, %s867
      // Predicated region
      $region41: #{forward.16} parent=39 // pred_check
        %p869 = pneg %p144
      $region42: #{forward.16} parent=39 // pred_check_branch
        %871 = sbr.rel (%p869) target = $region44
      $region43: #{forward.16} parent=39 // pred_region
        %s872 = smul.u32 32, %s16
      $region44: #{forward.16} parent=39 // pred_fallthru
        _
    $region40: #{forward.16} parent=5 // pred_fallthru
      _
    %p873 = scmp.le.s32.totalorder 2, %s11
    // Predicated region
    $region45: #{forward.16} parent=5 // pred_check
      %p874 = pneg %p873
    $region46: #{forward.16} parent=5 // pred_check_branch
      %876 = sbr.rel (%p874) target = $region48
    $region47: #{forward.16} parent=5 // pred_region
      %s877 = ssub.s32 %s11, 2
      // Predicated region
      $region49: #{forward.16} parent=47 // pred_check
        %p878 = pneg %p150
      $region50: #{forward.16} parent=47 // pred_check_branch
        %880 = sbr.rel (%p878) target = $region52
      $region51: #{forward.16} parent=47 // pred_region
        %s881 = smul.u32 32, %s17
        %p882 = scmp.lt.s32.totalorder %s881, 63
        %s883 = scalar_select %p882, %s881, 63
        %s884 = smul.addr %s883, 4
        %s885 = scalar_lea.vmem %s5, %s884
      $region52: #{forward.16} parent=47 // pred_fallthru
        _
    $region48: #{forward.16} parent=5 // pred_fallthru
      _
  $region6: #{forward.16} parent=0 // loop_footer
    %s15 = sadd.s32 1, %s11
  $region7: #{forward.16} parent=0 // loop_footer_branch
    %10 = sbr.rel target = $region3
  $region8: #{forward.16} parent=0 // loop_exit
    _

// kernel: forward.27
$region0: #{forward.27}
  #allocation0 [shape = 'u32[]', space=smem, size = 0x4, offset = 0x4, fixed_abs, tag = 'smem constant byte address 0x4 - core index']
  #allocation1 [shape = 'u32[144,128]{1,0:T(1,128)}', space=vmem, size = 0x12000, scoped, tag = 'internal scratch']
  %s0 = inlined_call_operand.vmem [shape: bf16[16,256], index: 0, kind: input, shape index: {}]
  %s1 = inlined_call_operand.vmem [shape: bf16[256,2048], index: 1, kind: input, shape index: {}]
  %s2 = inlined_call_operand.vmem [shape: f32[1,2048], index: 2, kind: input, shape index: {}]
  %s3 = inlined_call_operand.vmem [shape: f32[16,2048], index: 3, kind: output, shape index: {}]
  %s4 = sld [smem:[#allocation0]]
  $region22: #{forward.27} parent=0
    _
  %s6 = ssub.s32 1, %s4
  %s7 = scalar_select 0, %s6, %s4
  // Predicated region
  $region2: #{forward.27} parent=0 // pred_check
    _
  $region3: #{forward.27} parent=0 // pred_check_branch
    %9 = sbr.rel (0) target = $region5
  $region4: #{forward.27} parent=0 // pred_region
    _
  $region5: #{forward.27} parent=0 // pred_fallthru
    _
  // Predicated region
  $region6: #{forward.27} parent=0 // pred_check
    _
  $region7: #{forward.27} parent=0 // pred_check_branch
    %11 = sbr.rel (0) target = $region9
  $region8: #{forward.27} parent=0 // pred_region
    _
  $region9: #{forward.27} parent=0 // pred_fallthru
    _
  // Predicated region
  $region10: #{forward.27} parent=0 // pred_check
    _
  $region11: #{forward.27} parent=0 // pred_check_branch
    %13 = sbr.rel (0) target = $region13
  $region12: #{forward.27} parent=0 // pred_region
    _
  $region13: #{forward.27} parent=0 // pred_fallthru
    _
  %v14 = vld [vmem:[%s0] sm:$0xff]
  %v15 = vld [vmem:[%s0 + $0x8] sm:$0xff]
  %v16 = vld [vmem:[%s1] sm:$0xff]
  %v17 = vld [vmem:[%s1 + $0x8] sm:$0xff]
  %v18 = vld [vmem:[%s1 + $0x10] sm:$0xff]
  %v19 = vld [vmem:[%s1 + $0x18] sm:$0xff]
  %v20 = vld [vmem:[%s1 + $0x20] sm:$0xff]
  %v21 = vld [vmem:[%s1 + $0x28] sm:$0xff]
  %v22 = vld [vmem:[%s1 + $0x30] sm:$0xff]
  %v23 = vld [vmem:[%s1 + $0x38] sm:$0xff]
  %v24 = vld [vmem:[%s1 + $0x40] sm:$0xff]
  %v25 = vld [vmem:[%s1 + $0x48] sm:$0xff]
  %v26 = vld [vmem:[%s1 + $0x50] sm:$0xff]
  %v27 = vld [vmem:[%s1 + $0x58] sm:$0xff]
  %v28 = vld [vmem:[%s1 + $0x60] sm:$0xff]
  %v29 = vld [vmem:[%s1 + $0x68] sm:$0xff]
  %v30 = vld [vmem:[%s1 + $0x70] sm:$0xff]
  %v31 = vld [vmem:[%s1 + $0x78] sm:$0xff]
  %v32 = vld [vmem:[%s1 + $0x80] sm:$0xff]
  %v33 = vld [vmem:[%s1 + $0x88] sm:$0xff]
  %v34 = vld [vmem:[%s1 + $0x90] sm:$0xff]
  %v35 = vld [vmem:[%s1 + $0x98] sm:$0xff]
  %v36 = vld [vmem:[%s1 + $0xa0] sm:$0xff]
  %v37 = vld [vmem:[%s1 + $0xa8] sm:$0xff]
  %v38 = vld [vmem:[%s1 + $0xb0] sm:$0xff]
  %v39 = vld [vmem:[%s1 + $0xb8] sm:$0xff]
  %v40 = vld [vmem:[%s1 + $0xc0] sm:$0xff]
  %v41 = vld [vmem:[%s1 + $0xc8] sm:$0xff]
  %v42 = vld [vmem:[%s1 + $0xd0] sm:$0xff]
  %v43 = vld [vmem:[%s1 + $0xd8] sm:$0xff]
  %v44 = vld [vmem:[%s1 + $0xe0] sm:$0xff]
  %v45 = vld [vmem:[%s1 + $0xe8] sm:$0xff]
  %v46 = vld [vmem:[%s1 + $0xf0] sm:$0xff]
  %v47 = vld [vmem:[%s1 + $0xf8] sm:$0xff]
  %v48 = vld [vmem:[%s1 + $0x100] sm:$0xff]
  %v49 = vld [vmem:[%s1 + $0x108] sm:$0xff]
  %v50 = vld [vmem:[%s1 + $0x110] sm:$0xff]
  %v51 = vld [vmem:[%s1 + $0x118] sm:$0xff]
  %v52 = vld [vmem:[%s1 + $0x120] sm:$0xff]
  %v53 = vld [vmem:[%s1 + $0x128] sm:$0xff]
  %v54 = vld [vmem:[%s1 + $0x130] sm:$0xff]
  %v55 = vld [vmem:[%s1 + $0x138] sm:$0xff]
  %v56 = vld [vmem:[%s1 + $0x140] sm:$0xff]
  %v57 = vld [vmem:[%s1 + $0x148] sm:$0xff]
  %v58 = vld [vmem:[%s1 + $0x150] sm:$0xff]
  %v59 = vld [vmem:[%s1 + $0x158] sm:$0xff]
  %v60 = vld [vmem:[%s1 + $0x160] sm:$0xff]
  %v61 = vld [vmem:[%s1 + $0x168] sm:$0xff]
  %v62 = vld [vmem:[%s1 + $0x170] sm:$0xff]
  %v63 = vld [vmem:[%s1 + $0x178] sm:$0xff]
  %v64 = vld [vmem:[%s1 + $0x180] sm:$0xff]
  %v65 = vld [vmem:[%s1 + $0x188] sm:$0xff]
  %v66 = vld [vmem:[%s1 + $0x190] sm:$0xff]
  %v67 = vld [vmem:[%s1 + $0x198] sm:$0xff]
  %v68 = vld [vmem:[%s1 + $0x1a0] sm:$0xff]
  %v69 = vld [vmem:[%s1 + $0x1a8] sm:$0xff]
  %v70 = vld [vmem:[%s1 + $0x1b0] sm:$0xff]
  %v71 = vld [vmem:[%s1 + $0x1b8] sm:$0xff]
  %v72 = vld [vmem:[%s1 + $0x1c0] sm:$0xff]
  %v73 = vld [vmem:[%s1 + $0x1c8] sm:$0xff]
  %v74 = vld [vmem:[%s1 + $0x1d0] sm:$0xff]
  %v75 = vld [vmem:[%s1 + $0x1d8] sm:$0xff]
  %v76 = vld [vmem:[%s1 + $0x1e0] sm:$0xff]
  %v77 = vld [vmem:[%s1 + $0x1e8] sm:$0xff]
  %v78 = vld [vmem:[%s1 + $0x1f0] sm:$0xff]
  %v79 = vld [vmem:[%s1 + $0x1f8] sm:$0xff]
  %v80 = vld [vmem:[%s1 + $0x200] sm:$0xff]
  %v81 = vld [vmem:[%s1 + $0x208] sm:$0xff]
  %v82 = vld [vmem:[%s1 + $0x210] sm:$0xff]
  %v83 = vld [vmem:[%s1 + $0x218] sm:$0xff]
  %v84 = vld [vmem:[%s1 + $0x220] sm:$0xff]
  %v85 = vld [vmem:[%s1 + $0x228] sm:$0xff]
  %v86 = vld [vmem:[%s1 + $0x230] sm:$0xff]
  %v87 = vld [vmem:[%s1 + $0x238] sm:$0xff]
  %v88 = vld [vmem:[%s1 + $0x240] sm:$0xff]
  %v89 = vld [vmem:[%s1 + $0x248] sm:$0xff]
  %v90 = vld [vmem:[%s1 + $0x250] sm:$0xff]
  %v91 = vld [vmem:[%s1 + $0x258] sm:$0xff]
  %v92 = vld [vmem:[%s1 + $0x260] sm:$0xff]
  %v93 = vld [vmem:[%s1 + $0x268] sm:$0xff]
  %v94 = vld [vmem:[%s1 + $0x270] sm:$0xff]
  %v95 = vld [vmem:[%s1 + $0x278] sm:$0xff]
  %v96 = vld [vmem:[%s1 + $0x280] sm:$0xff]
  %v97 = vld [vmem:[%s1 + $0x288] sm:$0xff]
  %v98 = vld [vmem:[%s1 + $0x290] sm:$0xff]
  %v99 = vld [vmem:[%s1 + $0x298] sm:$0xff]
  %v100 = vld [vmem:[%s1 + $0x2a0] sm:$0xff]
  %v101 = vld [vmem:[%s1 + $0x2a8] sm:$0xff]
  %v102 = vld [vmem:[%s1 + $0x2b0] sm:$0xff]
  %v103 = vld [vmem:[%s1 + $0x2b8] sm:$0xff]
  %v104 = vld [vmem:[%s1 + $0x2c0] sm:$0xff]
  %v105 = vld [vmem:[%s1 + $0x2c8] sm:$0xff]
  %v106 = vld [vmem:[%s1 + $0x2d0] sm:$0xff]
  %v107 = vld [vmem:[%s1 + $0x2d8] sm:$0xff]
  %v108 = vld [vmem:[%s1 + $0x2e0] sm:$0xff]
  %v109 = vld [vmem:[%s1 + $0x2e8] sm:$0xff]
  %v110 = vld [vmem:[%s1 + $0x2f0] sm:$0xff]
  %v111 = vld [vmem:[%s1 + $0x2f8] sm:$0xff]
  %v112 = vld [vmem:[%s1 + $0x300] sm:$0xff]
  %v113 = vld [vmem:[%s1 + $0x308] sm:$0xff]
  %v114 = vld [vmem:[%s1 + $0x310] sm:$0xff]
  %v115 = vld [vmem:[%s1 + $0x318] sm:$0xff]
  %v116 = vld [vmem:[%s1 + $0x320] sm:$0xff]
  %v117 = vld [vmem:[%s1 + $0x328] sm:$0xff]
  %v118 = vld [vmem:[%s1 + $0x330] sm:$0xff]
  %v119 = vld [vmem:[%s1 + $0x338] sm:$0xff]
  %v120 = vld [vmem:[%s1 + $0x340] sm:$0xff]
  %v121 = vld [vmem:[%s1 + $0x348] sm:$0xff]
  %v122 = vld [vmem:[%s1 + $0x350] sm:$0xff]
  %v123 = vld [vmem:[%s1 + $0x358] sm:$0xff]
  %v124 = vld [vmem:[%s1 + $0x360] sm:$0xff]
  %v125 = vld [vmem:[%s1 + $0x368] sm:$0xff]
  %v126 = vld [vmem:[%s1 + $0x370] sm:$0xff]
  %v127 = vld [vmem:[%s1 + $0x378] sm:$0xff]
  %v128 = vld [vmem:[%s1 + $0x380] sm:$0xff]
  %v129 = vld [vmem:[%s1 + $0x388] sm:$0xff]
  %v130 = vld [vmem:[%s1 + $0x390] sm:$0xff]
  %v131 = vld [vmem:[%s1 + $0x398] sm:$0xff]
  %v132 = vld [vmem:[%s1 + $0x3a0] sm:$0xff]
  %v133 = vld [vmem:[%s1 + $0x3a8] sm:$0xff]
  %v134 = vld [vmem:[%s1 + $0x3b0] sm:$0xff]
  %v135 = vld [vmem:[%s1 + $0x3b8] sm:$0xff]
  %v136 = vld [vmem:[%s1 + $0x3c0] sm:$0xff]
  %v137 = vld [vmem:[%s1 + $0x3c8] sm:$0xff]
  %v138 = vld [vmem:[%s1 + $0x3d0] sm:$0xff]
  %v139 = vld [vmem:[%s1 + $0x3d8] sm:$0xff]
  %v140 = vld [vmem:[%s1 + $0x3e0] sm:$0xff]
  %v141 = vld [vmem:[%s1 + $0x3e8] sm:$0xff]
  %v142 = vld [vmem:[%s1 + $0x3f0] sm:$0xff]
  %v143 = vld [vmem:[%s1 + $0x3f8] sm:$0xff]
  %v144 = vld [vmem:[%s1 + $0x400] sm:$0xff]
  %v145 = vld [vmem:[%s1 + $0x408] sm:$0xff]
  %v146 = vld [vmem:[%s1 + $0x410] sm:$0xff]
  %v147 = vld [vmem:[%s1 + $0x418] sm:$0xff]
  %v148 = vld [vmem:[%s1 + $0x420] sm:$0xff]
  %v149 = vld [vmem:[%s1 + $0x428] sm:$0xff]
  %v150 = vld [vmem:[%s1 + $0x430] sm:$0xff]
  %v151 = vld [vmem:[%s1 + $0x438] sm:$0xff]
  %v152 = vld [vmem:[%s1 + $0x440] sm:$0xff]
  %v153 = vld [vmem:[%s1 + $0x448] sm:$0xff]
  %v154 = vld [vmem:[%s1 + $0x450] sm:$0xff]
  %v155 = vld [vmem:[%s1 + $0x458] sm:$0xff]
  %v156 = vld [vmem:[%s1 + $0x460] sm:$0xff]
  %v157 = vld [vmem:[%s1 + $0x468] sm:$0xff]
  %v158 = vld [vmem:[%s1 + $0x470] sm:$0xff]
  %v159 = vld [vmem:[%s1 + $0x478] sm:$0xff]
  %v160 = vld [vmem:[%s1 + $0x480] sm:$0xff]
  %v161 = vld [vmem:[%s1 + $0x488] sm:$0xff]
  %v162 = vld [vmem:[%s1 + $0x490] sm:$0xff]
  %v163 = vld [vmem:[%s1 + $0x498] sm:$0xff]
  %v164 = vld [vmem:[%s1 + $0x4a0] sm:$0xff]
  %v165 = vld [vmem:[%s1 + $0x4a8] sm:$0xff]
  %v166 = vld [vmem:[%s1 + $0x4b0] sm:$0xff]
  %v167 = vld [vmem:[%s1 + $0x4b8] sm:$0xff]
  %v168 = vld [vmem:[%s1 + $0x4c0] sm:$0xff]
  %v169 = vld [vmem:[%s1 + $0x4c8] sm:$0xff]
  %v170 = vld [vmem:[%s1 + $0x4d0] sm:$0xff]
  %v171 = vld [vmem:[%s1 + $0x4d8] sm:$0xff]
  %v172 = vld [vmem:[%s1 + $0x4e0] sm:$0xff]
  %v173 = vld [vmem:[%s1 + $0x4e8] sm:$0xff]
  %v174 = vld [vmem:[%s1 + $0x4f0] sm:$0xff]
  %v175 = vld [vmem:[%s1 + $0x4f8] sm:$0xff]
  %v176 = vld [vmem:[%s1 + $0x500] sm:$0xff]
  %v177 = vld [vmem:[%s1 + $0x508] sm:$0xff]
  %v178 = vld [vmem:[%s1 + $0x510] sm:$0xff]
  %v179 = vld [vmem:[%s1 + $0x518] sm:$0xff]
  %v180 = vld [vmem:[%s1 + $0x520] sm:$0xff]
  %v181 = vld [vmem:[%s1 + $0x528] sm:$0xff]
  %v182 = vld [vmem:[%s1 + $0x530] sm:$0xff]
  %v183 = vld [vmem:[%s1 + $0x538] sm:$0xff]
  %v184 = vld [vmem:[%s1 + $0x540] sm:$0xff]
  %v185 = vld [vmem:[%s1 + $0x548] sm:$0xff]
  %v186 = vld [vmem:[%s1 + $0x550] sm:$0xff]
  %v187 = vld [vmem:[%s1 + $0x558] sm:$0xff]
  %v188 = vld [vmem:[%s1 + $0x560] sm:$0xff]
  %v189 = vld [vmem:[%s1 + $0x568] sm:$0xff]
  %v190 = vld [vmem:[%s1 + $0x570] sm:$0xff]
  %v191 = vld [vmem:[%s1 + $0x578] sm:$0xff]
  %v192 = vld [vmem:[%s1 + $0x580] sm:$0xff]
  %v193 = vld [vmem:[%s1 + $0x588] sm:$0xff]
  %v194 = vld [vmem:[%s1 + $0x590] sm:$0xff]
  %v195 = vld [vmem:[%s1 + $0x598] sm:$0xff]
  %v196 = vld [vmem:[%s1 + $0x5a0] sm:$0xff]
  %v197 = vld [vmem:[%s1 + $0x5a8] sm:$0xff]
  %v198 = vld [vmem:[%s1 + $0x5b0] sm:$0xff]
  %v199 = vld [vmem:[%s1 + $0x5b8] sm:$0xff]
  %v200 = vld [vmem:[%s1 + $0x5c0] sm:$0xff]
  %v201 = vld [vmem:[%s1 + $0x5c8] sm:$0xff]
  %v202 = vld [vmem:[%s1 + $0x5d0] sm:$0xff]
  %v203 = vld [vmem:[%s1 + $0x5d8] sm:$0xff]
  %v204 = vld [vmem:[%s1 + $0x5e0] sm:$0xff]
  %v205 = vld [vmem:[%s1 + $0x5e8] sm:$0xff]
  %v206 = vld [vmem:[%s1 + $0x5f0] sm:$0xff]
  %v207 = vld [vmem:[%s1 + $0x5f8] sm:$0xff]
  %v208 = vld [vmem:[%s1 + $0x600] sm:$0xff]
  %v209 = vld [vmem:[%s1 + $0x608] sm:$0xff]
  %v210 = vld [vmem:[%s1 + $0x610] sm:$0xff]
  %v211 = vld [vmem:[%s1 + $0x618] sm:$0xff]
  %v212 = vld [vmem:[%s1 + $0x620] sm:$0xff]
  %v213 = vld [vmem:[%s1 + $0x628] sm:$0xff]
  %v214 = vld [vmem:[%s1 + $0x630] sm:$0xff]
  %v215 = vld [vmem:[%s1 + $0x638] sm:$0xff]
  %v216 = vld [vmem:[%s1 + $0x640] sm:$0xff]
  %v217 = vld [vmem:[%s1 + $0x648] sm:$0xff]
  %v218 = vld [vmem:[%s1 + $0x650] sm:$0xff]
  %v219 = vld [vmem:[%s1 + $0x658] sm:$0xff]
  %v220 = vld [vmem:[%s1 + $0x660] sm:$0xff]
  %v221 = vld [vmem:[%s1 + $0x668] sm:$0xff]
  %v222 = vld [vmem:[%s1 + $0x670] sm:$0xff]
  %v223 = vld [vmem:[%s1 + $0x678] sm:$0xff]
  %v224 = vld [vmem:[%s1 + $0x680] sm:$0xff]
  %v225 = vld [vmem:[%s1 + $0x688] sm:$0xff]
  %v226 = vld [vmem:[%s1 + $0x690] sm:$0xff]
  %v227 = vld [vmem:[%s1 + $0x698] sm:$0xff]
  %v228 = vld [vmem:[%s1 + $0x6a0] sm:$0xff]
  %v229 = vld [vmem:[%s1 + $0x6a8] sm:$0xff]
  %v230 = vld [vmem:[%s1 + $0x6b0] sm:$0xff]
  %v231 = vld [vmem:[%s1 + $0x6b8] sm:$0xff]
  %v232 = vld [vmem:[%s1 + $0x6c0] sm:$0xff]
  %v233 = vld [vmem:[%s1 + $0x6c8] sm:$0xff]
  %v234 = vld [vmem:[%s1 + $0x6d0] sm:$0xff]
  %v235 = vld [vmem:[%s1 + $0x6d8] sm:$0xff]
  %v236 = vld [vmem:[%s1 + $0x6e0] sm:$0xff]
  %v237 = vld [vmem:[%s1 + $0x6e8] sm:$0xff]
  %v238 = vld [vmem:[%s1 + $0x6f0] sm:$0xff]
  %v239 = vld [vmem:[%s1 + $0x6f8] sm:$0xff]
  %v240 = vld [vmem:[%s1 + $0x700] sm:$0xff]
  %v241 = vld [vmem:[%s1 + $0x708] sm:$0xff]
  %v242 = vld [vmem:[%s1 + $0x710] sm:$0xff]
  %v243 = vld [vmem:[%s1 + $0x718] sm:$0xff]
  %v244 = vld [vmem:[%s1 + $0x720] sm:$0xff]
  %v245 = vld [vmem:[%s1 + $0x728] sm:$0xff]
  %v246 = vld [vmem:[%s1 + $0x730] sm:$0xff]
  %v247 = vld [vmem:[%s1 + $0x738] sm:$0xff]
  %v248 = vld [vmem:[%s1 + $0x740] sm:$0xff]
  %v249 = vld [vmem:[%s1 + $0x748] sm:$0xff]
  %v250 = vld [vmem:[%s1 + $0x750] sm:$0xff]
  %v251 = vld [vmem:[%s1 + $0x758] sm:$0xff]
  %v252 = vld [vmem:[%s1 + $0x760] sm:$0xff]
  %v253 = vld [vmem:[%s1 + $0x768] sm:$0xff]
  %v254 = vld [vmem:[%s1 + $0x770] sm:$0xff]
  %v255 = vld [vmem:[%s1 + $0x778] sm:$0xff]
  %v256 = vld [vmem:[%s1 + $0x780] sm:$0xff]
  %v257 = vld [vmem:[%s1 + $0x788] sm:$0xff]
  %v258 = vld [vmem:[%s1 + $0x790] sm:$0xff]
  %v259 = vld [vmem:[%s1 + $0x798] sm:$0xff]
  %v260 = vld [vmem:[%s1 + $0x7a0] sm:$0xff]
  %v261 = vld [vmem:[%s1 + $0x7a8] sm:$0xff]
  %v262 = vld [vmem:[%s1 + $0x7b0] sm:$0xff]
  %v263 = vld [vmem:[%s1 + $0x7b8] sm:$0xff]
  %v264 = vld [vmem:[%s1 + $0x7c0] sm:$0xff]
  %v265 = vld [vmem:[%s1 + $0x7c8] sm:$0xff]
  %v266 = vld [vmem:[%s1 + $0x7d0] sm:$0xff]
  %v267 = vld [vmem:[%s1 + $0x7d8] sm:$0xff]
  %v268 = vld [vmem:[%s1 + $0x7e0] sm:$0xff]
  %v269 = vld [vmem:[%s1 + $0x7e8] sm:$0xff]
  %v270 = vld [vmem:[%s1 + $0x7f0] sm:$0xff]
  %v271 = vld [vmem:[%s1 + $0x7f8] sm:$0xff]
  %v272 = vld [vmem:[%s2] sm:$0xff]
  %v273 = vld [vmem:[%s2 + $0x8] sm:$0xff]
  %v276 = vlaneseq
  %v277 = vshrl.u32 %v276, 7
  %v278 = vsub.s32 0, %v277
  %v279 = vrot.slane %v272, %v278
  %v280 = vlaneseq
  %v281 = vshrl.u32 %v280, 7
  %v282 = vsub.s32 1, %v281
  %v283 = vrot.slane %v272, %v282
  %v284 = vlaneseq
  %v285 = vshrl.u32 %v284, 7
  %v286 = vsub.s32 2, %v285
  %v287 = vrot.slane %v272, %v286
  %v288 = vlaneseq
  %v289 = vshrl.u32 %v288, 7
  %v290 = vsub.s32 3, %v289
  %v291 = vrot.slane %v272, %v290
  %v292 = vlaneseq
  %v293 = vshrl.u32 %v292, 7
  %v294 = vsub.s32 4, %v293
  %v295 = vrot.slane %v272, %v294
  %v296 = vlaneseq
  %v297 = vshrl.u32 %v296, 7
  %v298 = vsub.s32 5, %v297
  %v299 = vrot.slane %v272, %v298
  %v300 = vlaneseq
  %v301 = vshrl.u32 %v300, 7
  %v302 = vsub.s32 6, %v301
  %v303 = vrot.slane %v272, %v302
  %v304 = vlaneseq
  %v305 = vshrl.u32 %v304, 7
  %v306 = vsub.s32 7, %v305
  %v307 = vrot.slane %v272, %v306
  %v308 = vlaneseq
  %v309 = vshrl.u32 %v308, 7
  %v310 = vsub.s32 0, %v309
  %v311 = vrot.slane %v273, %v310
  %v312 = vlaneseq
  %v313 = vshrl.u32 %v312, 7
  %v314 = vsub.s32 1, %v313
  %v315 = vrot.slane %v273, %v314
  %v316 = vlaneseq
  %v317 = vshrl.u32 %v316, 7
  %v318 = vsub.s32 2, %v317
  %v319 = vrot.slane %v273, %v318
  %v320 = vlaneseq
  %v321 = vshrl.u32 %v320, 7
  %v322 = vsub.s32 3, %v321
  %v323 = vrot.slane %v273, %v322
  %v324 = vlaneseq
  %v325 = vshrl.u32 %v324, 7
  %v326 = vsub.s32 4, %v325
  %v327 = vrot.slane %v273, %v326
  %v328 = vlaneseq
  %v329 = vshrl.u32 %v328, 7
  %v330 = vsub.s32 5, %v329
  %v331 = vrot.slane %v273, %v330
  %v332 = vlaneseq
  %v333 = vshrl.u32 %v332, 7
  %v334 = vsub.s32 6, %v333
  %v335 = vrot.slane %v273, %v334
  %v336 = vlaneseq
  %v337 = vshrl.u32 %v336, 7
  %v338 = vsub.s32 7, %v337
  %v339 = vrot.slane %v273, %v338
  %v358 = vunpack.c.l.b16 %v14
  %v359 = vunpack.c.h.b16 %v14
  %v360 = vunpack.c.l.b16 %v15
  %v361 = vunpack.c.h.b16 %v15
  %v362 = vpack.c.b16 %v360, %v358
  %v363 = vpack.c.b16 %v361, %v359
  %v622 = vunpack.c.l.b16 %v16
  %v623 = vunpack.c.h.b16 %v16
  %v624 = vunpack.c.l.b16 %v17
  %v625 = vunpack.c.h.b16 %v17
  %v626 = vunpack.c.l.b16 %v18
  %v627 = vunpack.c.h.b16 %v18
  %v628 = vunpack.c.l.b16 %v19
  %v629 = vunpack.c.h.b16 %v19
  %v630 = vunpack.c.l.b16 %v20
  %v631 = vunpack.c.h.b16 %v20
  %v632 = vunpack.c.l.b16 %v21
  %v633 = vunpack.c.h.b16 %v21
  %v634 = vunpack.c.l.b16 %v22
  %v635 = vunpack.c.h.b16 %v22
  %v636 = vunpack.c.l.b16 %v23
  %v637 = vunpack.c.h.b16 %v23
  %v638 = vunpack.c.l.b16 %v24
  %v639 = vunpack.c.h.b16 %v24
  %v640 = vunpack.c.l.b16 %v25
  %v641 = vunpack.c.h.b16 %v25
  %v642 = vunpack.c.l.b16 %v26
  %v643 = vunpack.c.h.b16 %v26
  %v644 = vunpack.c.l.b16 %v27
  %v645 = vunpack.c.h.b16 %v27
  %v646 = vunpack.c.l.b16 %v28
  %v647 = vunpack.c.h.b16 %v28
  %v648 = vunpack.c.l.b16 %v29
  %v649 = vunpack.c.h.b16 %v29
  %v650 = vunpack.c.l.b16 %v30
  %v651 = vunpack.c.h.b16 %v30
  %v652 = vunpack.c.l.b16 %v31
  %v653 = vunpack.c.h.b16 %v31
  %v654 = vunpack.c.l.b16 %v32
  %v655 = vunpack.c.h.b16 %v32
  %v656 = vunpack.c.l.b16 %v33
  %v657 = vunpack.c.h.b16 %v33
  %v658 = vunpack.c.l.b16 %v34
  %v659 = vunpack.c.h.b16 %v34
  %v660 = vunpack.c.l.b16 %v35
  %v661 = vunpack.c.h.b16 %v35
  %v662 = vunpack.c.l.b16 %v36
  %v663 = vunpack.c.h.b16 %v36
  %v664 = vunpack.c.l.b16 %v37
  %v665 = vunpack.c.h.b16 %v37
  %v666 = vunpack.c.l.b16 %v38
  %v667 = vunpack.c.h.b16 %v38
  %v668 = vunpack.c.l.b16 %v39
  %v669 = vunpack.c.h.b16 %v39
  %v670 = vunpack.c.l.b16 %v40
  %v671 = vunpack.c.h.b16 %v40
  %v672 = vunpack.c.l.b16 %v41
  %v673 = vunpack.c.h.b16 %v41
  %v674 = vunpack.c.l.b16 %v42
  %v675 = vunpack.c.h.b16 %v42
  %v676 = vunpack.c.l.b16 %v43
  %v677 = vunpack.c.h.b16 %v43
  %v678 = vunpack.c.l.b16 %v44
  %v679 = vunpack.c.h.b16 %v44
  %v680 = vunpack.c.l.b16 %v45
  %v681 = vunpack.c.h.b16 %v45
  %v682 = vunpack.c.l.b16 %v46
  %v683 = vunpack.c.h.b16 %v46
  %v684 = vunpack.c.l.b16 %v47
  %v685 = vunpack.c.h.b16 %v47
  %v686 = vunpack.c.l.b16 %v48
  %v687 = vunpack.c.h.b16 %v48
  %v688 = vunpack.c.l.b16 %v49
  %v689 = vunpack.c.h.b16 %v49
  %v690 = vunpack.c.l.b16 %v50
  %v691 = vunpack.c.h.b16 %v50
  %v692 = vunpack.c.l.b16 %v51
  %v693 = vunpack.c.h.b16 %v51
  %v694 = vunpack.c.l.b16 %v52
  %v695 = vunpack.c.h.b16 %v52
  %v696 = vunpack.c.l.b16 %v53
  %v697 = vunpack.c.h.b16 %v53
  %v698 = vunpack.c.l.b16 %v54
  %v699 = vunpack.c.h.b16 %v54
  %v700 = vunpack.c.l.b16 %v55
  %v701 = vunpack.c.h.b16 %v55
  %v702 = vunpack.c.l.b16 %v56
  %v703 = vunpack.c.h.b16 %v56
  %v704 = vunpack.c.l.b16 %v57
  %v705 = vunpack.c.h.b16 %v57
  %v706 = vunpack.c.l.b16 %v58
  %v707 = vunpack.c.h.b16 %v58
  %v708 = vunpack.c.l.b16 %v59
  %v709 = vunpack.c.h.b16 %v59
  %v710 = vunpack.c.l.b16 %v60
  %v711 = vunpack.c.h.b16 %v60
  %v712 = vunpack.c.l.b16 %v61
  %v713 = vunpack.c.h.b16 %v61
  %v714 = vunpack.c.l.b16 %v62
  %v715 = vunpack.c.h.b16 %v62
  %v716 = vunpack.c.l.b16 %v63
  %v717 = vunpack.c.h.b16 %v63
  %v718 = vunpack.c.l.b16 %v64
  %v719 = vunpack.c.h.b16 %v64
  %v720 = vunpack.c.l.b16 %v65
  %v721 = vunpack.c.h.b16 %v65
  %v722 = vunpack.c.l.b16 %v66
  %v723 = vunpack.c.h.b16 %v66
  %v724 = vunpack.c.l.b16 %v67
  %v725 = vunpack.c.h.b16 %v67
  %v726 = vunpack.c.l.b16 %v68
  %v727 = vunpack.c.h.b16 %v68
  %v728 = vunpack.c.l.b16 %v69
  %v729 = vunpack.c.h.b16 %v69
  %v730 = vunpack.c.l.b16 %v70
  %v731 = vunpack.c.h.b16 %v70
  %v732 = vunpack.c.l.b16 %v71
  %v733 = vunpack.c.h.b16 %v71
  %v734 = vunpack.c.l.b16 %v72
  %v735 = vunpack.c.h.b16 %v72
  %v736 = vunpack.c.l.b16 %v73
  %v737 = vunpack.c.h.b16 %v73
  %v738 = vunpack.c.l.b16 %v74
  %v739 = vunpack.c.h.b16 %v74
  %v740 = vunpack.c.l.b16 %v75
  %v741 = vunpack.c.h.b16 %v75
  %v742 = vunpack.c.l.b16 %v76
  %v743 = vunpack.c.h.b16 %v76
  %v744 = vunpack.c.l.b16 %v77
  %v745 = vunpack.c.h.b16 %v77
  %v746 = vunpack.c.l.b16 %v78
  %v747 = vunpack.c.h.b16 %v78
  %v748 = vunpack.c.l.b16 %v79
  %v749 = vunpack.c.h.b16 %v79
  %v750 = vunpack.c.l.b16 %v80
  %v751 = vunpack.c.h.b16 %v80
  %v752 = vunpack.c.l.b16 %v81
  %v753 = vunpack.c.h.b16 %v81
  %v754 = vunpack.c.l.b16 %v82
  %v755 = vunpack.c.h.b16 %v82
  %v756 = vunpack.c.l.b16 %v83
  %v757 = vunpack.c.h.b16 %v83
  %v758 = vunpack.c.l.b16 %v84
  %v759 = vunpack.c.h.b16 %v84
  %v760 = vunpack.c.l.b16 %v85
  %v761 = vunpack.c.h.b16 %v85
  %v762 = vunpack.c.l.b16 %v86
  %v763 = vunpack.c.h.b16 %v86
  %v764 = vunpack.c.l.b16 %v87
  %v765 = vunpack.c.h.b16 %v87
  %v766 = vunpack.c.l.b16 %v88
  %v767 = vunpack.c.h.b16 %v88
  %v768 = vunpack.c.l.b16 %v89
  %v769 = vunpack.c.h.b16 %v89
  %v770 = vunpack.c.l.b16 %v90
  %v771 = vunpack.c.h.b16 %v90
  %v772 = vunpack.c.l.b16 %v91
  %v773 = vunpack.c.h.b16 %v91
  %v774 = vunpack.c.l.b16 %v92
  %v775 = vunpack.c.h.b16 %v92
  %v776 = vunpack.c.l.b16 %v93
  %v777 = vunpack.c.h.b16 %v93
  %v778 = vunpack.c.l.b16 %v94
  %v779 = vunpack.c.h.b16 %v94
  %v780 = vunpack.c.l.b16 %v95
  %v781 = vunpack.c.h.b16 %v95
  %v782 = vunpack.c.l.b16 %v96
  %v783 = vunpack.c.h.b16 %v96
  %v784 = vunpack.c.l.b16 %v97
  %v785 = vunpack.c.h.b16 %v97
  %v786 = vunpack.c.l.b16 %v98
  %v787 = vunpack.c.h.b16 %v98
  %v788 = vunpack.c.l.b16 %v99
  %v789 = vunpack.c.h.b16 %v99
  %v790 = vunpack.c.l.b16 %v100
  %v791 = vunpack.c.h.b16 %v100
  %v792 = vunpack.c.l.b16 %v101
  %v793 = vunpack.c.h.b16 %v101
  %v794 = vunpack.c.l.b16 %v102
  %v795 = vunpack.c.h.b16 %v102
  %v796 = vunpack.c.l.b16 %v103
  %v797 = vunpack.c.h.b16 %v103
  %v798 = vunpack.c.l.b16 %v104
  %v799 = vunpack.c.h.b16 %v104
  %v800 = vunpack.c.l.b16 %v105
  %v801 = vunpack.c.h.b16 %v105
  %v802 = vunpack.c.l.b16 %v106
  %v803 = vunpack.c.h.b16 %v106
  %v804 = vunpack.c.l.b16 %v107
  %v805 = vunpack.c.h.b16 %v107
  %v806 = vunpack.c.l.b16 %v108
  %v807 = vunpack.c.h.b16 %v108
  %v808 = vunpack.c.l.b16 %v109
  %v809 = vunpack.c.h.b16 %v109
  %v810 = vunpack.c.l.b16 %v110
  %v811 = vunpack.c.h.b16 %v110
  %v812 = vunpack.c.l.b16 %v111
  %v813 = vunpack.c.h.b16 %v111
  %v814 = vunpack.c.l.b16 %v112
  %v815 = vunpack.c.h.b16 %v112
  %v816 = vunpack.c.l.b16 %v113
  %v817 = vunpack.c.h.b16 %v113
  %v818 = vunpack.c.l.b16 %v114
  %v819 = vunpack.c.h.b16 %v114
  %v820 = vunpack.c.l.b16 %v115
  %v821 = vunpack.c.h.b16 %v115
  %v822 = vunpack.c.l.b16 %v116
  %v823 = vunpack.c.h.b16 %v116
  %v824 = vunpack.c.l.b16 %v117
  %v825 = vunpack.c.h.b16 %v117
  %v826 = vunpack.c.l.b16 %v118
  %v827 = vunpack.c.h.b16 %v118
  %v828 = vunpack.c.l.b16 %v119
  %v829 = vunpack.c.h.b16 %v119
  %v830 = vunpack.c.l.b16 %v120
  %v831 = vunpack.c.h.b16 %v120
  %v832 = vunpack.c.l.b16 %v121
  %v833 = vunpack.c.h.b16 %v121
  %v834 = vunpack.c.l.b16 %v122
  %v835 = vunpack.c.h.b16 %v122
  %v836 = vunpack.c.l.b16 %v123
  %v837 = vunpack.c.h.b16 %v123
  %v838 = vunpack.c.l.b16 %v124
  %v839 = vunpack.c.h.b16 %v124
  %v840 = vunpack.c.l.b16 %v125
  %v841 = vunpack.c.h.b16 %v125
  %v842 = vunpack.c.l.b16 %v126
  %v843 = vunpack.c.h.b16 %v126
  %v844 = vunpack.c.l.b16 %v127
  %v845 = vunpack.c.h.b16 %v127
  %v846 = vunpack.c.l.b16 %v128
  %v847 = vunpack.c.h.b16 %v128
  %v848 = vunpack.c.l.b16 %v129
  %v849 = vunpack.c.h.b16 %v129
  %v850 = vunpack.c.l.b16 %v130
  %v851 = vunpack.c.h.b16 %v130
  %v852 = vunpack.c.l.b16 %v131
  %v853 = vunpack.c.h.b16 %v131
  %v854 = vunpack.c.l.b16 %v132
  %v855 = vunpack.c.h.b16 %v132
  %v856 = vunpack.c.l.b16 %v133
  %v857 = vunpack.c.h.b16 %v133
  %v858 = vunpack.c.l.b16 %v134
  %v859 = vunpack.c.h.b16 %v134
  %v860 = vunpack.c.l.b16 %v135
  %v861 = vunpack.c.h.b16 %v135
  %v862 = vunpack.c.l.b16 %v136
  %v863 = vunpack.c.h.b16 %v136
  %v864 = vunpack.c.l.b16 %v137
  %v865 = vunpack.c.h.b16 %v137
  %v866 = vunpack.c.l.b16 %v138
  %v867 = vunpack.c.h.b16 %v138
  %v868 = vunpack.c.l.b16 %v139
  %v869 = vunpack.c.h.b16 %v139
  %v870 = vunpack.c.l.b16 %v140
  %v871 = vunpack.c.h.b16 %v140
  %v872 = vunpack.c.l.b16 %v141
  %v873 = vunpack.c.h.b16 %v141
  %v874 = vunpack.c.l.b16 %v142
  %v875 = vunpack.c.h.b16 %v142
  %v876 = vunpack.c.l.b16 %v143
  %v877 = vunpack.c.h.b16 %v143
  %v878 = vunpack.c.l.b16 %v144
  %v879 = vunpack.c.h.b16 %v144
  %v880 = vunpack.c.l.b16 %v145
  %v881 = vunpack.c.h.b16 %v145
  %v882 = vunpack.c.l.b16 %v146
  %v883 = vunpack.c.h.b16 %v146
  %v884 = vunpack.c.l.b16 %v147
  %v885 = vunpack.c.h.b16 %v147
  %v886 = vunpack.c.l.b16 %v148
  %v887 = vunpack.c.h.b16 %v148
  %v888 = vunpack.c.l.b16 %v149
  %v889 = vunpack.c.h.b16 %v149
  %v890 = vunpack.c.l.b16 %v150
  %v891 = vunpack.c.h.b16 %v150
  %v892 = vunpack.c.l.b16 %v151
  %v893 = vunpack.c.h.b16 %v151
  %v894 = vunpack.c.l.b16 %v152
  %v895 = vunpack.c.h.b16 %v152
  %v896 = vunpack.c.l.b16 %v153
  %v897 = vunpack.c.h.b16 %v153
  %v898 = vunpack.c.l.b16 %v154
  %v899 = vunpack.c.h.b16 %v154
  %v900 = vunpack.c.l.b16 %v155
  %v901 = vunpack.c.h.b16 %v155
  %v902 = vunpack.c.l.b16 %v156
  %v903 = vunpack.c.h.b16 %v156
  %v904 = vunpack.c.l.b16 %v157
  %v905 = vunpack.c.h.b16 %v157
  %v906 = vunpack.c.l.b16 %v158
  %v907 = vunpack.c.h.b16 %v158
  %v908 = vunpack.c.l.b16 %v159
  %v909 = vunpack.c.h.b16 %v159
  %v910 = vunpack.c.l.b16 %v160
  %v911 = vunpack.c.h.b16 %v160
  %v912 = vunpack.c.l.b16 %v161
  %v913 = vunpack.c.h.b16 %v161
  %v914 = vunpack.c.l.b16 %v162
  %v915 = vunpack.c.h.b16 %v162
  %v916 = vunpack.c.l.b16 %v163
  %v917 = vunpack.c.h.b16 %v163
  %v918 = vunpack.c.l.b16 %v164
  %v919 = vunpack.c.h.b16 %v164
  %v920 = vunpack.c.l.b16 %v165
  %v921 = vunpack.c.h.b16 %v165
  %v922 = vunpack.c.l.b16 %v166
  %v923 = vunpack.c.h.b16 %v166
  %v924 = vunpack.c.l.b16 %v167
  %v925 = vunpack.c.h.b16 %v167
  %v926 = vunpack.c.l.b16 %v168
  %v927 = vunpack.c.h.b16 %v168
  %v928 = vunpack.c.l.b16 %v169
  %v929 = vunpack.c.h.b16 %v169
  %v930 = vunpack.c.l.b16 %v170
  %v931 = vunpack.c.h.b16 %v170
  %v932 = vunpack.c.l.b16 %v171
  %v933 = vunpack.c.h.b16 %v171
  %v934 = vunpack.c.l.b16 %v172
  %v935 = vunpack.c.h.b16 %v172
  %v936 = vunpack.c.l.b16 %v173
  %v937 = vunpack.c.h.b16 %v173
  %v938 = vunpack.c.l.b16 %v174
  %v939 = vunpack.c.h.b16 %v174
  %v940 = vunpack.c.l.b16 %v175
  %v941 = vunpack.c.h.b16 %v175
  %v942 = vunpack.c.l.b16 %v176
  %v943 = vunpack.c.h.b16 %v176
  %v944 = vunpack.c.l.b16 %v177
  %v945 = vunpack.c.h.b16 %v177
  %v946 = vunpack.c.l.b16 %v178
  %v947 = vunpack.c.h.b16 %v178
  %v948 = vunpack.c.l.b16 %v179
  %v949 = vunpack.c.h.b16 %v179
  %v950 = vunpack.c.l.b16 %v180
  %v951 = vunpack.c.h.b16 %v180
  %v952 = vunpack.c.l.b16 %v181
  %v953 = vunpack.c.h.b16 %v181
  %v954 = vunpack.c.l.b16 %v182
  %v955 = vunpack.c.h.b16 %v182
  %v956 = vunpack.c.l.b16 %v183
  %v957 = vunpack.c.h.b16 %v183
  %v958 = vunpack.c.l.b16 %v184
  %v959 = vunpack.c.h.b16 %v184
  %v960 = vunpack.c.l.b16 %v185
  %v961 = vunpack.c.h.b16 %v185
  %v962 = vunpack.c.l.b16 %v186
  %v963 = vunpack.c.h.b16 %v186
  %v964 = vunpack.c.l.b16 %v187
  %v965 = vunpack.c.h.b16 %v187
  %v966 = vunpack.c.l.b16 %v188
  %v967 = vunpack.c.h.b16 %v188
  %v968 = vunpack.c.l.b16 %v189
  %v969 = vunpack.c.h.b16 %v189
  %v970 = vunpack.c.l.b16 %v190
  %v971 = vunpack.c.h.b16 %v190
  %v972 = vunpack.c.l.b16 %v191
  %v973 = vunpack.c.h.b16 %v191
  %v974 = vunpack.c.l.b16 %v192
  %v975 = vunpack.c.h.b16 %v192
  %v976 = vunpack.c.l.b16 %v193
  %v977 = vunpack.c.h.b16 %v193
  %v978 = vunpack.c.l.b16 %v194
  %v979 = vunpack.c.h.b16 %v194
  %v980 = vunpack.c.l.b16 %v195
  %v981 = vunpack.c.h.b16 %v195
  %v982 = vunpack.c.l.b16 %v196
  %v983 = vunpack.c.h.b16 %v196
  %v984 = vunpack.c.l.b16 %v197
  %v985 = vunpack.c.h.b16 %v197
  %v986 = vunpack.c.l.b16 %v198
  %v987 = vunpack.c.h.b16 %v198
  %v988 = vunpack.c.l.b16 %v199
  %v989 = vunpack.c.h.b16 %v199
  %v990 = vunpack.c.l.b16 %v200
  %v991 = vunpack.c.h.b16 %v200
  %v992 = vunpack.c.l.b16 %v201
  %v993 = vunpack.c.h.b16 %v201
  %v994 = vunpack.c.l.b16 %v202
  %v995 = vunpack.c.h.b16 %v202
  %v996 = vunpack.c.l.b16 %v203
  %v997 = vunpack.c.h.b16 %v203
  %v998 = vunpack.c.l.b16 %v204
  %v999 = vunpack.c.h.b16 %v204
  %v1000 = vunpack.c.l.b16 %v205
  %v1001 = vunpack.c.h.b16 %v205
  %v1002 = vunpack.c.l.b16 %v206
  %v1003 = vunpack.c.h.b16 %v206
  %v1004 = vunpack.c.l.b16 %v207
  %v1005 = vunpack.c.h.b16 %v207
  %v1006 = vunpack.c.l.b16 %v208
  %v1007 = vunpack.c.h.b16 %v208
  %v1008 = vunpack.c.l.b16 %v209
  %v1009 = vunpack.c.h.b16 %v209
  %v1010 = vunpack.c.l.b16 %v210
  %v1011 = vunpack.c.h.b16 %v210
  %v1012 = vunpack.c.l.b16 %v211
  %v1013 = vunpack.c.h.b16 %v211
  %v1014 = vunpack.c.l.b16 %v212
  %v1015 = vunpack.c.h.b16 %v212
  %v1016 = vunpack.c.l.b16 %v213
  %v1017 = vunpack.c.h.b16 %v213
  %v1018 = vunpack.c.l.b16 %v214
  %v1019 = vunpack.c.h.b16 %v214
  %v1020 = vunpack.c.l.b16 %v215
  %v1021 = vunpack.c.h.b16 %v215
  %v1022 = vunpack.c.l.b16 %v216
  %v1023 = vunpack.c.h.b16 %v216
  %v1024 = vunpack.c.l.b16 %v217
  %v1025 = vunpack.c.h.b16 %v217
  %v1026 = vunpack.c.l.b16 %v218
  %v1027 = vunpack.c.h.b16 %v218
  %v1028 = vunpack.c.l.b16 %v219
  %v1029 = vunpack.c.h.b16 %v219
  %v1030 = vunpack.c.l.b16 %v220
  %v1031 = vunpack.c.h.b16 %v220
  %v1032 = vunpack.c.l.b16 %v221
  %v1033 = vunpack.c.h.b16 %v221
  %v1034 = vunpack.c.l.b16 %v222
  %v1035 = vunpack.c.h.b16 %v222
  %v1036 = vunpack.c.l.b16 %v223
  %v1037 = vunpack.c.h.b16 %v223
  %v1038 = vunpack.c.l.b16 %v224
  %v1039 = vunpack.c.h.b16 %v224
  %v1040 = vunpack.c.l.b16 %v225
  %v1041 = vunpack.c.h.b16 %v225
  %v1042 = vunpack.c.l.b16 %v226
  %v1043 = vunpack.c.h.b16 %v226
  %v1044 = vunpack.c.l.b16 %v227
  %v1045 = vunpack.c.h.b16 %v227
  %v1046 = vunpack.c.l.b16 %v228
  %v1047 = vunpack.c.h.b16 %v228
  %v1048 = vunpack.c.l.b16 %v229
  %v1049 = vunpack.c.h.b16 %v229
  %v1050 = vunpack.c.l.b16 %v230
  %v1051 = vunpack.c.h.b16 %v230
  %v1052 = vunpack.c.l.b16 %v231
  %v1053 = vunpack.c.h.b16 %v231
  %v1054 = vunpack.c.l.b16 %v232
  %v1055 = vunpack.c.h.b16 %v232
  %v1056 = vunpack.c.l.b16 %v233
  %v1057 = vunpack.c.h.b16 %v233
  %v1058 = vunpack.c.l.b16 %v234
  %v1059 = vunpack.c.h.b16 %v234
  %v1060 = vunpack.c.l.b16 %v235
  %v1061 = vunpack.c.h.b16 %v235
  %v1062 = vunpack.c.l.b16 %v236
  %v1063 = vunpack.c.h.b16 %v236
  %v1064 = vunpack.c.l.b16 %v237
  %v1065 = vunpack.c.h.b16 %v237
  %v1066 = vunpack.c.l.b16 %v238
  %v1067 = vunpack.c.h.b16 %v238
  %v1068 = vunpack.c.l.b16 %v239
  %v1069 = vunpack.c.h.b16 %v239
  %v1070 = vunpack.c.l.b16 %v240
  %v1071 = vunpack.c.h.b16 %v240
  %v1072 = vunpack.c.l.b16 %v241
  %v1073 = vunpack.c.h.b16 %v241
  %v1074 = vunpack.c.l.b16 %v242
  %v1075 = vunpack.c.h.b16 %v242
  %v1076 = vunpack.c.l.b16 %v243
  %v1077 = vunpack.c.h.b16 %v243
  %v1078 = vunpack.c.l.b16 %v244
  %v1079 = vunpack.c.h.b16 %v244
  %v1080 = vunpack.c.l.b16 %v245
  %v1081 = vunpack.c.h.b16 %v245
  %v1082 = vunpack.c.l.b16 %v246
  %v1083 = vunpack.c.h.b16 %v246
  %v1084 = vunpack.c.l.b16 %v247
  %v1085 = vunpack.c.h.b16 %v247
  %v1086 = vunpack.c.l.b16 %v248
  %v1087 = vunpack.c.h.b16 %v248
  %v1088 = vunpack.c.l.b16 %v249
  %v1089 = vunpack.c.h.b16 %v249
  %v1090 = vunpack.c.l.b16 %v250
  %v1091 = vunpack.c.h.b16 %v250
  %v1092 = vunpack.c.l.b16 %v251
  %v1093 = vunpack.c.h.b16 %v251
  %v1094 = vunpack.c.l.b16 %v252
  %v1095 = vunpack.c.h.b16 %v252
  %v1096 = vunpack.c.l.b16 %v253
  %v1097 = vunpack.c.h.b16 %v253
  %v1098 = vunpack.c.l.b16 %v254
  %v1099 = vunpack.c.h.b16 %v254
  %v1100 = vunpack.c.l.b16 %v255
  %v1101 = vunpack.c.h.b16 %v255
  %v1102 = vunpack.c.l.b16 %v256
  %v1103 = vunpack.c.h.b16 %v256
  %v1104 = vunpack.c.l.b16 %v257
  %v1105 = vunpack.c.h.b16 %v257
  %v1106 = vunpack.c.l.b16 %v258
  %v1107 = vunpack.c.h.b16 %v258
  %v1108 = vunpack.c.l.b16 %v259
  %v1109 = vunpack.c.h.b16 %v259
  %v1110 = vunpack.c.l.b16 %v260
  %v1111 = vunpack.c.h.b16 %v260
  %v1112 = vunpack.c.l.b16 %v261
  %v1113 = vunpack.c.h.b16 %v261
  %v1114 = vunpack.c.l.b16 %v262
  %v1115 = vunpack.c.h.b16 %v262
  %v1116 = vunpack.c.l.b16 %v263
  %v1117 = vunpack.c.h.b16 %v263
  %v1118 = vunpack.c.l.b16 %v264
  %v1119 = vunpack.c.h.b16 %v264
  %v1120 = vunpack.c.l.b16 %v265
  %v1121 = vunpack.c.h.b16 %v265
  %v1122 = vunpack.c.l.b16 %v266
  %v1123 = vunpack.c.h.b16 %v266
  %v1124 = vunpack.c.l.b16 %v267
  %v1125 = vunpack.c.h.b16 %v267
  %v1126 = vunpack.c.l.b16 %v268
  %v1127 = vunpack.c.h.b16 %v268
  %v1128 = vunpack.c.l.b16 %v269
  %v1129 = vunpack.c.h.b16 %v269
  %v1130 = vunpack.c.l.b16 %v270
  %v1131 = vunpack.c.h.b16 %v270
  %v1132 = vunpack.c.l.b16 %v271
  %v1133 = vunpack.c.h.b16 %v271
  %v1134 = vpack.c.b16 %v638, %v622
  %v1135 = vpack.c.b16 %v639, %v623
  %v1136 = vpack.c.b16 %v640, %v624
  %v1137 = vpack.c.b16 %v641, %v625
  %v1138 = vpack.c.b16 %v642, %v626
  %v1139 = vpack.c.b16 %v643, %v627
  %v1140 = vpack.c.b16 %v644, %v628
  %v1141 = vpack.c.b16 %v645, %v629
  %v1142 = vpack.c.b16 %v646, %v630
  %v1143 = vpack.c.b16 %v647, %v631
  %v1144 = vpack.c.b16 %v648, %v632
  %v1145 = vpack.c.b16 %v649, %v633
  %v1146 = vpack.c.b16 %v650, %v634
  %v1147 = vpack.c.b16 %v651, %v635
  %v1148 = vpack.c.b16 %v652, %v636
  %v1149 = vpack.c.b16 %v653, %v637
  %v1150 = vpack.c.b16 %v670, %v654
  %v1151 = vpack.c.b16 %v671, %v655
  %v1152 = vpack.c.b16 %v672, %v656
  %v1153 = vpack.c.b16 %v673, %v657
  %v1154 = vpack.c.b16 %v674, %v658
  %v1155 = vpack.c.b16 %v675, %v659
  %v1156 = vpack.c.b16 %v676, %v660
  %v1157 = vpack.c.b16 %v677, %v661
  %v1158 = vpack.c.b16 %v678, %v662
  %v1159 = vpack.c.b16 %v679, %v663
  %v1160 = vpack.c.b16 %v680, %v664
  %v1161 = vpack.c.b16 %v681, %v665
  %v1162 = vpack.c.b16 %v682, %v666
  %v1163 = vpack.c.b16 %v683, %v667
  %v1164 = vpack.c.b16 %v684, %v668
  %v1165 = vpack.c.b16 %v685, %v669
  %v1166 = vpack.c.b16 %v702, %v686
  %v1167 = vpack.c.b16 %v703, %v687
  %v1168 = vpack.c.b16 %v704, %v688
  %v1169 = vpack.c.b16 %v705, %v689
  %v1170 = vpack.c.b16 %v706, %v690
  %v1171 = vpack.c.b16 %v707, %v691
  %v1172 = vpack.c.b16 %v708, %v692
  %v1173 = vpack.c.b16 %v709, %v693
  %v1174 = vpack.c.b16 %v710, %v694
  %v1175 = vpack.c.b16 %v711, %v695
  %v1176 = vpack.c.b16 %v712, %v696
  %v1177 = vpack.c.b16 %v713, %v697
  %v1178 = vpack.c.b16 %v714, %v698
  %v1179 = vpack.c.b16 %v715, %v699
  %v1180 = vpack.c.b16 %v716, %v700
  %v1181 = vpack.c.b16 %v717, %v701
  %v1182 = vpack.c.b16 %v734, %v718
  %v1183 = vpack.c.b16 %v735, %v719
  %v1184 = vpack.c.b16 %v736, %v720
  %v1185 = vpack.c.b16 %v737, %v721
  %v1186 = vpack.c.b16 %v738, %v722
  %v1187 = vpack.c.b16 %v739, %v723
  %v1188 = vpack.c.b16 %v740, %v724
  %v1189 = vpack.c.b16 %v741, %v725
  %v1190 = vpack.c.b16 %v742, %v726
  %v1191 = vpack.c.b16 %v743, %v727
  %v1192 = vpack.c.b16 %v744, %v728
  %v1193 = vpack.c.b16 %v745, %v729
  %v1194 = vpack.c.b16 %v746, %v730
  %v1195 = vpack.c.b16 %v747, %v731
  %v1196 = vpack.c.b16 %v748, %v732
  %v1197 = vpack.c.b16 %v749, %v733
  %v1198 = vpack.c.b16 %v766, %v750
  %v1199 = vpack.c.b16 %v767, %v751
  %v1200 = vpack.c.b16 %v768, %v752
  %v1201 = vpack.c.b16 %v769, %v753
  %v1202 = vpack.c.b16 %v770, %v754
  %v1203 = vpack.c.b16 %v771, %v755
  %v1204 = vpack.c.b16 %v772, %v756
  %v1205 = vpack.c.b16 %v773, %v757
  %v1206 = vpack.c.b16 %v774, %v758
  %v1207 = vpack.c.b16 %v775, %v759
  %v1208 = vpack.c.b16 %v776, %v760
  %v1209 = vpack.c.b16 %v777, %v761
  %v1210 = vpack.c.b16 %v778, %v762
  %v1211 = vpack.c.b16 %v779, %v763
  %v1212 = vpack.c.b16 %v780, %v764
  %v1213 = vpack.c.b16 %v781, %v765
  %v1214 = vpack.c.b16 %v798, %v782
  %v1215 = vpack.c.b16 %v799, %v783
  %v1216 = vpack.c.b16 %v800, %v784
  %v1217 = vpack.c.b16 %v801, %v785
  %v1218 = vpack.c.b16 %v802, %v786
  %v1219 = vpack.c.b16 %v803, %v787
  %v1220 = vpack.c.b16 %v804, %v788
  %v1221 = vpack.c.b16 %v805, %v789
  %v1222 = vpack.c.b16 %v806, %v790
  %v1223 = vpack.c.b16 %v807, %v791
  %v1224 = vpack.c.b16 %v808, %v792
  %v1225 = vpack.c.b16 %v809, %v793
  %v1226 = vpack.c.b16 %v810, %v794
  %v1227 = vpack.c.b16 %v811, %v795
  %v1228 = vpack.c.b16 %v812, %v796
  %v1229 = vpack.c.b16 %v813, %v797
  %v1230 = vpack.c.b16 %v830, %v814
  %v1231 = vpack.c.b16 %v831, %v815
  %v1232 = vpack.c.b16 %v832, %v816
  %v1233 = vpack.c.b16 %v833, %v817
  %v1234 = vpack.c.b16 %v834, %v818
  %v1235 = vpack.c.b16 %v835, %v819
  %v1236 = vpack.c.b16 %v836, %v820
  %v1237 = vpack.c.b16 %v837, %v821
  %v1238 = vpack.c.b16 %v838, %v822
  %v1239 = vpack.c.b16 %v839, %v823
  %v1240 = vpack.c.b16 %v840, %v824
  %v1241 = vpack.c.b16 %v841, %v825
  %v1242 = vpack.c.b16 %v842, %v826
  %v1243 = vpack.c.b16 %v843, %v827
  %v1244 = vpack.c.b16 %v844, %v828
  %v1245 = vpack.c.b16 %v845, %v829
  %v1246 = vpack.c.b16 %v862, %v846
  %v1247 = vpack.c.b16 %v863, %v847
  %v1248 = vpack.c.b16 %v864, %v848
  %v1249 = vpack.c.b16 %v865, %v849
  %v1250 = vpack.c.b16 %v866, %v850
  %v1251 = vpack.c.b16 %v867, %v851
  %v1252 = vpack.c.b16 %v868, %v852
  %v1253 = vpack.c.b16 %v869, %v853
  %v1254 = vpack.c.b16 %v870, %v854
  %v1255 = vpack.c.b16 %v871, %v855
  %v1256 = vpack.c.b16 %v872, %v856
  %v1257 = vpack.c.b16 %v873, %v857
  %v1258 = vpack.c.b16 %v874, %v858
  %v1259 = vpack.c.b16 %v875, %v859
  %v1260 = vpack.c.b16 %v876, %v860
  %v1261 = vpack.c.b16 %v877, %v861
  %v1262 = vpack.c.b16 %v894, %v878
  %v1263 = vpack.c.b16 %v895, %v879
  %v1264 = vpack.c.b16 %v896, %v880
  %v1265 = vpack.c.b16 %v897, %v881
  %v1266 = vpack.c.b16 %v898, %v882
  %v1267 = vpack.c.b16 %v899, %v883
  %v1268 = vpack.c.b16 %v900, %v884
  %v1269 = vpack.c.b16 %v901, %v885
  %v1270 = vpack.c.b16 %v902, %v886
  %v1271 = vpack.c.b16 %v903, %v887
  %v1272 = vpack.c.b16 %v904, %v888
  %v1273 = vpack.c.b16 %v905, %v889
  %v1274 = vpack.c.b16 %v906, %v890
  %v1275 = vpack.c.b16 %v907, %v891
  %v1276 = vpack.c.b16 %v908, %v892
  %v1277 = vpack.c.b16 %v909, %v893
  %v1278 = vpack.c.b16 %v926, %v910
  %v1279 = vpack.c.b16 %v927, %v911
  %v1280 = vpack.c.b16 %v928, %v912
  %v1281 = vpack.c.b16 %v929, %v913
  %v1282 = vpack.c.b16 %v930, %v914
  %v1283 = vpack.c.b16 %v931, %v915
  %v1284 = vpack.c.b16 %v932, %v916
  %v1285 = vpack.c.b16 %v933, %v917
  %v1286 = vpack.c.b16 %v934, %v918
  %v1287 = vpack.c.b16 %v935, %v919
  %v1288 = vpack.c.b16 %v936, %v920
  %v1289 = vpack.c.b16 %v937, %v921
  %v1290 = vpack.c.b16 %v938, %v922
  %v1291 = vpack.c.b16 %v939, %v923
  %v1292 = vpack.c.b16 %v940, %v924
  %v1293 = vpack.c.b16 %v941, %v925
  %v1294 = vpack.c.b16 %v958, %v942
  %v1295 = vpack.c.b16 %v959, %v943
  %v1296 = vpack.c.b16 %v960, %v944
  %v1297 = vpack.c.b16 %v961, %v945
  %v1298 = vpack.c.b16 %v962, %v946
  %v1299 = vpack.c.b16 %v963, %v947
  %v1300 = vpack.c.b16 %v964, %v948
  %v1301 = vpack.c.b16 %v965, %v949
  %v1302 = vpack.c.b16 %v966, %v950
  %v1303 = vpack.c.b16 %v967, %v951
  %v1304 = vpack.c.b16 %v968, %v952
  %v1305 = vpack.c.b16 %v969, %v953
  %v1306 = vpack.c.b16 %v970, %v954
  %v1307 = vpack.c.b16 %v971, %v955
  %v1308 = vpack.c.b16 %v972, %v956
  %v1309 = vpack.c.b16 %v973, %v957
  %v1310 = vpack.c.b16 %v990, %v974
  %v1311 = vpack.c.b16 %v991, %v975
  %v1312 = vpack.c.b16 %v992, %v976
  %v1313 = vpack.c.b16 %v993, %v977
  %v1314 = vpack.c.b16 %v994, %v978
  %v1315 = vpack.c.b16 %v995, %v979
  %v1316 = vpack.c.b16 %v996, %v980
  %v1317 = vpack.c.b16 %v997, %v981
  %v1318 = vpack.c.b16 %v998, %v982
  %v1319 = vpack.c.b16 %v999, %v983
  %v1320 = vpack.c.b16 %v1000, %v984
  %v1321 = vpack.c.b16 %v1001, %v985
  %v1322 = vpack.c.b16 %v1002, %v986
  %v1323 = vpack.c.b16 %v1003, %v987
  %v1324 = vpack.c.b16 %v1004, %v988
  %v1325 = vpack.c.b16 %v1005, %v989
  %v1326 = vpack.c.b16 %v1022, %v1006
  %v1327 = vpack.c.b16 %v1023, %v1007
  %v1328 = vpack.c.b16 %v1024, %v1008
  %v1329 = vpack.c.b16 %v1025, %v1009
  %v1330 = vpack.c.b16 %v1026, %v1010
  %v1331 = vpack.c.b16 %v1027, %v1011
  %v1332 = vpack.c.b16 %v1028, %v1012
  %v1333 = vpack.c.b16 %v1029, %v1013
  %v1334 = vpack.c.b16 %v1030, %v1014
  %v1335 = vpack.c.b16 %v1031, %v1015
  %v1336 = vpack.c.b16 %v1032, %v1016
  %v1337 = vpack.c.b16 %v1033, %v1017
  %v1338 = vpack.c.b16 %v1034, %v1018
  %v1339 = vpack.c.b16 %v1035, %v1019
  %v1340 = vpack.c.b16 %v1036, %v1020
  %v1341 = vpack.c.b16 %v1037, %v1021
  %v1342 = vpack.c.b16 %v1054, %v1038
  %v1343 = vpack.c.b16 %v1055, %v1039
  %v1344 = vpack.c.b16 %v1056, %v1040
  %v1345 = vpack.c.b16 %v1057, %v1041
  %v1346 = vpack.c.b16 %v1058, %v1042
  %v1347 = vpack.c.b16 %v1059, %v1043
  %v1348 = vpack.c.b16 %v1060, %v1044
  %v1349 = vpack.c.b16 %v1061, %v1045
  %v1350 = vpack.c.b16 %v1062, %v1046
  %v1351 = vpack.c.b16 %v1063, %v1047
  %v1352 = vpack.c.b16 %v1064, %v1048
  %v1353 = vpack.c.b16 %v1065, %v1049
  %v1354 = vpack.c.b16 %v1066, %v1050
  %v1355 = vpack.c.b16 %v1067, %v1051
  %v1356 = vpack.c.b16 %v1068, %v1052
  %v1357 = vpack.c.b16 %v1069, %v1053
  %v1358 = vpack.c.b16 %v1086, %v1070
  %v1359 = vpack.c.b16 %v1087, %v1071
  %v1360 = vpack.c.b16 %v1088, %v1072
  %v1361 = vpack.c.b16 %v1089, %v1073
  %v1362 = vpack.c.b16 %v1090, %v1074
  %v1363 = vpack.c.b16 %v1091, %v1075
  %v1364 = vpack.c.b16 %v1092, %v1076
  %v1365 = vpack.c.b16 %v1093, %v1077
  %v1366 = vpack.c.b16 %v1094, %v1078
  %v1367 = vpack.c.b16 %v1095, %v1079
  %v1368 = vpack.c.b16 %v1096, %v1080
  %v1369 = vpack.c.b16 %v1097, %v1081
  %v1370 = vpack.c.b16 %v1098, %v1082
  %v1371 = vpack.c.b16 %v1099, %v1083
  %v1372 = vpack.c.b16 %v1100, %v1084
  %v1373 = vpack.c.b16 %v1101, %v1085
  %v1374 = vpack.c.b16 %v1118, %v1102
  %v1375 = vpack.c.b16 %v1119, %v1103
  %v1376 = vpack.c.b16 %v1120, %v1104
  %v1377 = vpack.c.b16 %v1121, %v1105
  %v1378 = vpack.c.b16 %v1122, %v1106
  %v1379 = vpack.c.b16 %v1123, %v1107
  %v1380 = vpack.c.b16 %v1124, %v1108
  %v1381 = vpack.c.b16 %v1125, %v1109
  %v1382 = vpack.c.b16 %v1126, %v1110
  %v1383 = vpack.c.b16 %v1127, %v1111
  %v1384 = vpack.c.b16 %v1128, %v1112
  %v1385 = vpack.c.b16 %v1129, %v1113
  %v1386 = vpack.c.b16 %v1130, %v1114
  %v1387 = vpack.c.b16 %v1131, %v1115
  %v1388 = vpack.c.b16 %v1132, %v1116
  %v1389 = vpack.c.b16 %v1133, %v1117
  %1646 = vmatprep.subr.bf16.mxu0 %v1247
  %1647 = vmatpush1.bf16.msra.mxu0 %v1246
  %1648 = vmatprep.subr.bf16.mxu0 %v1231
  %1649 = vmatpush1.bf16.msra.mxu0 %v1230
  %1650 = vmatprep.subr.bf16.mxu0 %v1215
  %1651 = vmatpush1.bf16.msra.mxu0 %v1214
  %1652 = vmatprep.subr.bf16.mxu0 %v1199
  %1653 = vmatpush1.bf16.msra.mxu0 %v1198
  %1654 = vmatprep.subr.bf16.mxu0 %v1183
  %1655 = vmatpush1.bf16.msra.mxu0 %v1182
  %1656 = vmatprep.subr.bf16.mxu0 %v1167
  %1657 = vmatpush1.bf16.msra.mxu0 %v1166
  %1658 = vmatprep.subr.bf16.mxu0 %v1151
  %1659 = vmatpush1.bf16.msra.mxu0 %v1150
  %1660 = vmatprep.subr.bf16.mxu0 %v1135
  %1661 = vmatpush1.bf16.msra.mxu0 %v1134
  %1662 = vmatprep.subr.bf16.mxu0 %v1375
  %1663 = vmatpush2.bf16.msra.mxu0 %v1374
  %1664 = vmatprep.subr.bf16.mxu0 %v1359
  %1665 = vmatpush2.bf16.msra.mxu0 %v1358
  %1666 = vmatprep.subr.bf16.mxu0 %v1343
  %1667 = vmatpush2.bf16.msra.mxu0 %v1342
  %1668 = vmatprep.subr.bf16.mxu0 %v1327
  %1669 = vmatpush2.bf16.msra.mxu0 %v1326
  %1670 = vmatprep.subr.bf16.mxu0 %v1311
  %1671 = vmatpush2.bf16.msra.mxu0 %v1310
  %1672 = vmatprep.subr.bf16.mxu0 %v1295
  %1673 = vmatpush2.bf16.msra.mxu0 %v1294
  %1674 = vmatprep.subr.bf16.mxu0 %v1279
  %1675 = vmatpush2.bf16.msra.mxu0 %v1278
  %1676 = vmatprep.subr.bf16.mxu0 %v1263
  %1677 = vmatpush2.bf16.msra.mxu0 %v1262
  %1678 = vmatprep.mubr.bf16.mxu0 %v363
  %1679 = vmatmul.mubr.bf16.gmra.mxu0 %v362
  %v1680 = vpop.f32.mrf.mxu0
  %v1681 = vadd.f32 %v279, %v1680
  %v1682 = vpop.f32.mrf.mxu0
  %v1683 = vadd.f32 %v283, %v1682
  %v1684 = vpop.f32.mrf.mxu0
  %v1685 = vadd.f32 %v279, %v1684
  %v1686 = vpop.f32.mrf.mxu0
  %v1687 = vadd.f32 %v283, %v1686
  %1688 = vdwg.mxu0
  %1689 = vmatprep.subr.bf16.mxu0 %v1249
  %1690 = vmatpush1.bf16.msra.mxu0 %v1248
  %1691 = vmatprep.subr.bf16.mxu0 %v1233
  %1692 = vmatpush1.bf16.msra.mxu0 %v1232
  %1693 = vmatprep.subr.bf16.mxu0 %v1217
  %1694 = vmatpush1.bf16.msra.mxu0 %v1216
  %1695 = vmatprep.subr.bf16.mxu0 %v1201
  %1696 = vmatpush1.bf16.msra.mxu0 %v1200
  %1697 = vmatprep.subr.bf16.mxu0 %v1185
  %1698 = vmatpush1.bf16.msra.mxu0 %v1184
  %1699 = vmatprep.subr.bf16.mxu0 %v1169
  %1700 = vmatpush1.bf16.msra.mxu0 %v1168
  %1701 = vmatprep.subr.bf16.mxu0 %v1153
  %1702 = vmatpush1.bf16.msra.mxu0 %v1152
  %1703 = vmatprep.subr.bf16.mxu0 %v1137
  %1704 = vmatpush1.bf16.msra.mxu0 %v1136
  %1705 = vmatprep.subr.bf16.mxu0 %v1377
  %1706 = vmatpush2.bf16.msra.mxu0 %v1376
  %1707 = vmatprep.subr.bf16.mxu0 %v1361
  %1708 = vmatpush2.bf16.msra.mxu0 %v1360
  %1709 = vmatprep.subr.bf16.mxu0 %v1345
  %1710 = vmatpush2.bf16.msra.mxu0 %v1344
  %1711 = vmatprep.subr.bf16.mxu0 %v1329
  %1712 = vmatpush2.bf16.msra.mxu0 %v1328
  %1713 = vmatprep.subr.bf16.mxu0 %v1313
  %1714 = vmatpush2.bf16.msra.mxu0 %v1312
  %1715 = vmatprep.subr.bf16.mxu0 %v1297
  %1716 = vmatpush2.bf16.msra.mxu0 %v1296
  %1717 = vmatprep.subr.bf16.mxu0 %v1281
  %1718 = vmatpush2.bf16.msra.mxu0 %v1280
  %1719 = vmatprep.subr.bf16.mxu0 %v1265
  %1720 = vmatpush2.bf16.msra.mxu0 %v1264
  %1721 = vmatprep.mubr.bf16.mxu0 %v363
  %1722 = vmatmul.mubr.bf16.gmra.mxu0 %v362
  %v1723 = vpop.f32.mrf.mxu0
  %v1724 = vadd.f32 %v287, %v1723
  %v1725 = vpop.f32.mrf.mxu0
  %v1726 = vadd.f32 %v291, %v1725
  %v1727 = vpop.f32.mrf.mxu0
  %v1728 = vadd.f32 %v287, %v1727
  %v1729 = vpop.f32.mrf.mxu0
  %v1730 = vadd.f32 %v291, %v1729
  %1731 = vdwg.mxu0
  %1732 = vmatprep.subr.bf16.mxu0 %v1251
  %1733 = vmatpush1.bf16.msra.mxu0 %v1250
  %1734 = vmatprep.subr.bf16.mxu0 %v1235
  %1735 = vmatpush1.bf16.msra.mxu0 %v1234
  %1736 = vmatprep.subr.bf16.mxu0 %v1219
  %1737 = vmatpush1.bf16.msra.mxu0 %v1218
  %1738 = vmatprep.subr.bf16.mxu0 %v1203
  %1739 = vmatpush1.bf16.msra.mxu0 %v1202
  %1740 = vmatprep.subr.bf16.mxu0 %v1187
  %1741 = vmatpush1.bf16.msra.mxu0 %v1186
  %1742 = vmatprep.subr.bf16.mxu0 %v1171
  %1743 = vmatpush1.bf16.msra.mxu0 %v1170
  %1744 = vmatprep.subr.bf16.mxu0 %v1155
  %1745 = vmatpush1.bf16.msra.mxu0 %v1154
  %1746 = vmatprep.subr.bf16.mxu0 %v1139
  %1747 = vmatpush1.bf16.msra.mxu0 %v1138
  %1748 = vmatprep.subr.bf16.mxu0 %v1379
  %1749 = vmatpush2.bf16.msra.mxu0 %v1378
  %1750 = vmatprep.subr.bf16.mxu0 %v1363
  %1751 = vmatpush2.bf16.msra.mxu0 %v1362
  %1752 = vmatprep.subr.bf16.mxu0 %v1347
  %1753 = vmatpush2.bf16.msra.mxu0 %v1346
  %1754 = vmatprep.subr.bf16.mxu0 %v1331
  %1755 = vmatpush2.bf16.msra.mxu0 %v1330
  %1756 = vmatprep.subr.bf16.mxu0 %v1315
  %1757 = vmatpush2.bf16.msra.mxu0 %v1314
  %1758 = vmatprep.subr.bf16.mxu0 %v1299
  %1759 = vmatpush2.bf16.msra.mxu0 %v1298
  %1760 = vmatprep.subr.bf16.mxu0 %v1283
  %1761 = vmatpush2.bf16.msra.mxu0 %v1282
  %1762 = vmatprep.subr.bf16.mxu0 %v1267
  %1763 = vmatpush2.bf16.msra.mxu0 %v1266
  %1764 = vmatprep.mubr.bf16.mxu0 %v363
  %1765 = vmatmul.mubr.bf16.gmra.mxu0 %v362
  %v1766 = vpop.f32.mrf.mxu0
  %v1767 = vadd.f32 %v295, %v1766
  %v1768 = vpop.f32.mrf.mxu0
  %v1769 = vadd.f32 %v299, %v1768
  %v1770 = vpop.f32.mrf.mxu0
  %v1771 = vadd.f32 %v295, %v1770
  %v1772 = vpop.f32.mrf.mxu0
  %v1773 = vadd.f32 %v299, %v1772
  %1774 = vdwg.mxu0
  %1775 = vmatprep.subr.bf16.mxu0 %v1253
  %1776 = vmatpush1.bf16.msra.mxu0 %v1252
  %1777 = vmatprep.subr.bf16.mxu0 %v1237
  %1778 = vmatpush1.bf16.msra.mxu0 %v1236
  %1779 = vmatprep.subr.bf16.mxu0 %v1221
  %1780 = vmatpush1.bf16.msra.mxu0 %v1220
  %1781 = vmatprep.subr.bf16.mxu0 %v1205
  %1782 = vmatpush1.bf16.msra.mxu0 %v1204
  %1783 = vmatprep.subr.bf16.mxu0 %v1189
  %1784 = vmatpush1.bf16.msra.mxu0 %v1188
  %1785 = vmatprep.subr.bf16.mxu0 %v1173
  %1786 = vmatpush1.bf16.msra.mxu0 %v1172
  %1787 = vmatprep.subr.bf16.mxu0 %v1157
  %1788 = vmatpush1.bf16.msra.mxu0 %v1156
  %1789 = vmatprep.subr.bf16.mxu0 %v1141
  %1790 = vmatpush1.bf16.msra.mxu0 %v1140
  %1791 = vmatprep.subr.bf16.mxu0 %v1381
  %1792 = vmatpush2.bf16.msra.mxu0 %v1380
  %1793 = vmatprep.subr.bf16.mxu0 %v1365
  %1794 = vmatpush2.bf16.msra.mxu0 %v1364
  %1795 = vmatprep.subr.bf16.mxu0 %v1349
  %1796 = vmatpush2.bf16.msra.mxu0 %v1348
  %1797 = vmatprep.subr.bf16.mxu0 %v1333
  %1798 = vmatpush2.bf16.msra.mxu0 %v1332
  %1799 = vmatprep.subr.bf16.mxu0 %v1317
  %1800 = vmatpush2.bf16.msra.mxu0 %v1316
  %1801 = vmatprep.subr.bf16.mxu0 %v1301
  %1802 = vmatpush2.bf16.msra.mxu0 %v1300
  %1803 = vmatprep.subr.bf16.mxu0 %v1285
  %1804 = vmatpush2.bf16.msra.mxu0 %v1284
  %1805 = vmatprep.subr.bf16.mxu0 %v1269
  %1806 = vmatpush2.bf16.msra.mxu0 %v1268
  %1807 = vmatprep.mubr.bf16.mxu0 %v363
  %1808 = vmatmul.mubr.bf16.gmra.mxu0 %v362
  %v1809 = vpop.f32.mrf.mxu0
  %v1810 = vadd.f32 %v303, %v1809
  %v1811 = vpop.f32.mrf.mxu0
  %v1812 = vadd.f32 %v307, %v1811
  %v1813 = vpop.f32.mrf.mxu0
  %v1814 = vadd.f32 %v303, %v1813
  %v1815 = vpop.f32.mrf.mxu0
  %v1816 = vadd.f32 %v307, %v1815
  %1817 = vdwg.mxu0
  %1818 = vmatprep.subr.bf16.mxu0 %v1255
  %1819 = vmatpush1.bf16.msra.mxu0 %v1254
  %1820 = vmatprep.subr.bf16.mxu0 %v1239
  %1821 = vmatpush1.bf16.msra.mxu0 %v1238
  %1822 = vmatprep.subr.bf16.mxu0 %v1223
  %1823 = vmatpush1.bf16.msra.mxu0 %v1222
  %1824 = vmatprep.subr.bf16.mxu0 %v1207
  %1825 = vmatpush1.bf16.msra.mxu0 %v1206
  %1826 = vmatprep.subr.bf16.mxu0 %v1191
  %1827 = vmatpush1.bf16.msra.mxu0 %v1190
  %1828 = vmatprep.subr.bf16.mxu0 %v1175
  %1829 = vmatpush1.bf16.msra.mxu0 %v1174
  %1830 = vmatprep.subr.bf16.mxu0 %v1159
  %1831 = vmatpush1.bf16.msra.mxu0 %v1158
  %1832 = vmatprep.subr.bf16.mxu0 %v1143
  %1833 = vmatpush1.bf16.msra.mxu0 %v1142
  %1834 = vmatprep.subr.bf16.mxu0 %v1383
  %1835 = vmatpush2.bf16.msra.mxu0 %v1382
  %1836 = vmatprep.subr.bf16.mxu0 %v1367
  %1837 = vmatpush2.bf16.msra.mxu0 %v1366
  %1838 = vmatprep.subr.bf16.mxu0 %v1351
  %1839 = vmatpush2.bf16.msra.mxu0 %v1350
  %1840 = vmatprep.subr.bf16.mxu0 %v1335
  %1841 = vmatpush2.bf16.msra.mxu0 %v1334
  %1842 = vmatprep.subr.bf16.mxu0 %v1319
  %1843 = vmatpush2.bf16.msra.mxu0 %v1318
  %1844 = vmatprep.subr.bf16.mxu0 %v1303
  %1845 = vmatpush2.bf16.msra.mxu0 %v1302
  %1846 = vmatprep.subr.bf16.mxu0 %v1287
  %1847 = vmatpush2.bf16.msra.mxu0 %v1286
  %1848 = vmatprep.subr.bf16.mxu0 %v1271
  %1849 = vmatpush2.bf16.msra.mxu0 %v1270
  %1850 = vmatprep.mubr.bf16.mxu0 %v363
  %1851 = vmatmul.mubr.bf16.gmra.mxu0 %v362
  %v1852 = vpop.f32.mrf.mxu0
  %v1853 = vadd.f32 %v311, %v1852
  %v1854 = vpop.f32.mrf.mxu0
  %v1855 = vadd.f32 %v315, %v1854
  %v1856 = vpop.f32.mrf.mxu0
  %v1857 = vadd.f32 %v311, %v1856
  %v1858 = vpop.f32.mrf.mxu0
  %v1859 = vadd.f32 %v315, %v1858
  %1860 = vdwg.mxu0
  %1861 = vmatprep.subr.bf16.mxu0 %v1257
  %1862 = vmatpush1.bf16.msra.mxu0 %v1256
  %1863 = vmatprep.subr.bf16.mxu0 %v1241
  %1864 = vmatpush1.bf16.msra.mxu0 %v1240
  %1865 = vmatprep.subr.bf16.mxu0 %v1225
  %1866 = vmatpush1.bf16.msra.mxu0 %v1224
  %1867 = vmatprep.subr.bf16.mxu0 %v1209
  %1868 = vmatpush1.bf16.msra.mxu0 %v1208
  %1869 = vmatprep.subr.bf16.mxu0 %v1193
  %1870 = vmatpush1.bf16.msra.mxu0 %v1192
  %1871 = vmatprep.subr.bf16.mxu0 %v1177
  %1872 = vmatpush1.bf16.msra.mxu0 %v1176
  %1873 = vmatprep.subr.bf16.mxu0 %v1161
  %1874 = vmatpush1.bf16.msra.mxu0 %v1160
  %1875 = vmatprep.subr.bf16.mxu0 %v1145
  %1876 = vmatpush1.bf16.msra.mxu0 %v1144
  %1877 = vmatprep.subr.bf16.mxu0 %v1385
  %1878 = vmatpush2.bf16.msra.mxu0 %v1384
  %1879 = vmatprep.subr.bf16.mxu0 %v1369
  %1880 = vmatpush2.bf16.msra.mxu0 %v1368
  %1881 = vmatprep.subr.bf16.mxu0 %v1353
  %1882 = vmatpush2.bf16.msra.mxu0 %v1352
  %1883 = vmatprep.subr.bf16.mxu0 %v1337
  %1884 = vmatpush2.bf16.msra.mxu0 %v1336
  %1885 = vmatprep.subr.bf16.mxu0 %v1321
  %1886 = vmatpush2.bf16.msra.mxu0 %v1320
  %1887 = vmatprep.subr.bf16.mxu0 %v1305
  %1888 = vmatpush2.bf16.msra.mxu0 %v1304
  %1889 = vmatprep.subr.bf16.mxu0 %v1289
  %1890 = vmatpush2.bf16.msra.mxu0 %v1288
  %1891 = vmatprep.subr.bf16.mxu0 %v1273
  %1892 = vmatpush2.bf16.msra.mxu0 %v1272
  %1893 = vmatprep.mubr.bf16.mxu0 %v363
  %1894 = vmatmul.mubr.bf16.gmra.mxu0 %v362
  %v1895 = vpop.f32.mrf.mxu0
  %v1896 = vadd.f32 %v319, %v1895
  %v1897 = vpop.f32.mrf.mxu0
  %v1898 = vadd.f32 %v323, %v1897
  %v1899 = vpop.f32.mrf.mxu0
  %v1900 = vadd.f32 %v319, %v1899
  %v1901 = vpop.f32.mrf.mxu0
  %v1902 = vadd.f32 %v323, %v1901
  %1903 = vdwg.mxu0
  %1904 = vmatprep.subr.bf16.mxu0 %v1259
  %1905 = vmatpush1.bf16.msra.mxu0 %v1258
  %1906 = vmatprep.subr.bf16.mxu0 %v1243
  %1907 = vmatpush1.bf16.msra.mxu0 %v1242
  %1908 = vmatprep.subr.bf16.mxu0 %v1227
  %1909 = vmatpush1.bf16.msra.mxu0 %v1226
  %1910 = vmatprep.subr.bf16.mxu0 %v1211
  %1911 = vmatpush1.bf16.msra.mxu0 %v1210
  %1912 = vmatprep.subr.bf16.mxu0 %v1195
  %1913 = vmatpush1.bf16.msra.mxu0 %v1194
  %1914 = vmatprep.subr.bf16.mxu0 %v1179
  %1915 = vmatpush1.bf16.msra.mxu0 %v1178
  %1916 = vmatprep.subr.bf16.mxu0 %v1163
  %1917 = vmatpush1.bf16.msra.mxu0 %v1162
  %1918 = vmatprep.subr.bf16.mxu0 %v1147
  %1919 = vmatpush1.bf16.msra.mxu0 %v1146
  %1920 = vmatprep.subr.bf16.mxu0 %v1387
  %1921 = vmatpush2.bf16.msra.mxu0 %v1386
  %1922 = vmatprep.subr.bf16.mxu0 %v1371
  %1923 = vmatpush2.bf16.msra.mxu0 %v1370
  %1924 = vmatprep.subr.bf16.mxu0 %v1355
  %1925 = vmatpush2.bf16.msra.mxu0 %v1354
  %1926 = vmatprep.subr.bf16.mxu0 %v1339
  %1927 = vmatpush2.bf16.msra.mxu0 %v1338
  %1928 = vmatprep.subr.bf16.mxu0 %v1323
  %1929 = vmatpush2.bf16.msra.mxu0 %v1322
  %1930 = vmatprep.subr.bf16.mxu0 %v1307
  %1931 = vmatpush2.bf16.msra.mxu0 %v1306
  %1932 = vmatprep.subr.bf16.mxu0 %v1291
  %1933 = vmatpush2.bf16.msra.mxu0 %v1290
  %1934 = vmatprep.subr.bf16.mxu0 %v1275
  %1935 = vmatpush2.bf16.msra.mxu0 %v1274
  %1936 = vmatprep.mubr.bf16.mxu0 %v363
  %1937 = vmatmul.mubr.bf16.gmra.mxu0 %v362
  %v1938 = vpop.f32.mrf.mxu0
  %v1939 = vadd.f32 %v327, %v1938
  %v1940 = vpop.f32.mrf.mxu0
  %v1941 = vadd.f32 %v331, %v1940
  %v1942 = vpop.f32.mrf.mxu0
  %v1943 = vadd.f32 %v327, %v1942
  %v1944 = vpop.f32.mrf.mxu0
  %v1945 = vadd.f32 %v331, %v1944
  %1946 = vdwg.mxu0
  %1947 = vmatprep.subr.bf16.mxu0 %v1261
  %1948 = vmatpush1.bf16.msra.mxu0 %v1260
  %1949 = vmatprep.subr.bf16.mxu0 %v1245
  %1950 = vmatpush1.bf16.msra.mxu0 %v1244
  %1951 = vmatprep.subr.bf16.mxu0 %v1229
  %1952 = vmatpush1.bf16.msra.mxu0 %v1228
  %1953 = vmatprep.subr.bf16.mxu0 %v1213
  %1954 = vmatpush1.bf16.msra.mxu0 %v1212
  %1955 = vmatprep.subr.bf16.mxu0 %v1197
  %1956 = vmatpush1.bf16.msra.mxu0 %v1196
  %1957 = vmatprep.subr.bf16.mxu0 %v1181
  %1958 = vmatpush1.bf16.msra.mxu0 %v1180
  %1959 = vmatprep.subr.bf16.mxu0 %v1165
  %1960 = vmatpush1.bf16.msra.mxu0 %v1164
  %1961 = vmatprep.subr.bf16.mxu0 %v1149
  %1962 = vmatpush1.bf16.msra.mxu0 %v1148
  %1963 = vmatprep.subr.bf16.mxu0 %v1389
  %1964 = vmatpush2.bf16.msra.mxu0 %v1388
  %1965 = vmatprep.subr.bf16.mxu0 %v1373
  %1966 = vmatpush2.bf16.msra.mxu0 %v1372
  %1967 = vmatprep.subr.bf16.mxu0 %v1357
  %1968 = vmatpush2.bf16.msra.mxu0 %v1356
  %1969 = vmatprep.subr.bf16.mxu0 %v1341
  %1970 = vmatpush2.bf16.msra.mxu0 %v1340
  %1971 = vmatprep.subr.bf16.mxu0 %v1325
  %1972 = vmatpush2.bf16.msra.mxu0 %v1324
  %1973 = vmatprep.subr.bf16.mxu0 %v1309
  %1974 = vmatpush2.bf16.msra.mxu0 %v1308
  %1975 = vmatprep.subr.bf16.mxu0 %v1293
  %1976 = vmatpush2.bf16.msra.mxu0 %v1292
  %1977 = vmatprep.subr.bf16.mxu0 %v1277
  %1978 = vmatpush2.bf16.msra.mxu0 %v1276
  %1979 = vmatprep.mubr.bf16.mxu0 %v363
  %1980 = vmatmul.mubr.bf16.gmra.mxu0 %v362
  %v1981 = vpop.f32.mrf.mxu0
  %v1982 = vadd.f32 %v335, %v1981
  %v1983 = vpop.f32.mrf.mxu0
  %v1984 = vadd.f32 %v339, %v1983
  %v1985 = vpop.f32.mrf.mxu0
  %v1986 = vadd.f32 %v335, %v1985
  %v1987 = vpop.f32.mrf.mxu0
  %v1988 = vadd.f32 %v339, %v1987
  %1989 = vdwg.mxu0
  %1990 = vst [vmem:[%s3] sm:$0xff] %v1681
  %1991 = vst [vmem:[%s3 + $0x8] sm:$0xff] %v1683
  %1992 = vst [vmem:[%s3 + $0x10] sm:$0xff] %v1724
  %1993 = vst [vmem:[%s3 + $0x18] sm:$0xff] %v1726
  %1994 = vst [vmem:[%s3 + $0x20] sm:$0xff] %v1767
  %1995 = vst [vmem:[%s3 + $0x28] sm:$0xff] %v1769
  %1996 = vst [vmem:[%s3 + $0x30] sm:$0xff] %v1810
  %1997 = vst [vmem:[%s3 + $0x38] sm:$0xff] %v1812
  %1998 = vst [vmem:[%s3 + $0x40] sm:$0xff] %v1853
  %1999 = vst [vmem:[%s3 + $0x48] sm:$0xff] %v1855
  %2000 = vst [vmem:[%s3 + $0x50] sm:$0xff] %v1896
  %2001 = vst [vmem:[%s3 + $0x58] sm:$0xff] %v1898
  %2002 = vst [vmem:[%s3 + $0x60] sm:$0xff] %v1939
  %2003 = vst [vmem:[%s3 + $0x68] sm:$0xff] %v1941
  %2004 = vst [vmem:[%s3 + $0x70] sm:$0xff] %v1982
  %2005 = vst [vmem:[%s3 + $0x78] sm:$0xff] %v1984
  %2006 = vst [vmem:[%s3 + $0x80] sm:$0xff] %v1685
  %2007 = vst [vmem:[%s3 + $0x88] sm:$0xff] %v1687
  %2008 = vst [vmem:[%s3 + $0x90] sm:$0xff] %v1728
  %2009 = vst [vmem:[%s3 + $0x98] sm:$0xff] %v1730
  %2010 = vst [vmem:[%s3 + $0xa0] sm:$0xff] %v1771
  %2011 = vst [vmem:[%s3 + $0xa8] sm:$0xff] %v1773
  %2012 = vst [vmem:[%s3 + $0xb0] sm:$0xff] %v1814
  %2013 = vst [vmem:[%s3 + $0xb8] sm:$0xff] %v1816
  %2014 = vst [vmem:[%s3 + $0xc0] sm:$0xff] %v1857
  %2015 = vst [vmem:[%s3 + $0xc8] sm:$0xff] %v1859
  %2016 = vst [vmem:[%s3 + $0xd0] sm:$0xff] %v1900
  %2017 = vst [vmem:[%s3 + $0xd8] sm:$0xff] %v1902
  %2018 = vst [vmem:[%s3 + $0xe0] sm:$0xff] %v1943
  %2019 = vst [vmem:[%s3 + $0xe8] sm:$0xff] %v1945
  %2020 = vst [vmem:[%s3 + $0xf0] sm:$0xff] %v1986
  %2021 = vst [vmem:[%s3 + $0xf8] sm:$0xff] %v1988
  // Predicated region
  $region14: #{forward.27} parent=0 // pred_check
    _
  $region15: #{forward.27} parent=0 // pred_check_branch
    %2023 = sbr.rel (0) target = $region17
  $region16: #{forward.27} parent=0 // pred_region
    _
  $region17: #{forward.27} parent=0 // pred_fallthru
    _
  // Predicated region
  $region18: #{forward.27} parent=0 // pred_check
    _
  $region19: #{forward.27} parent=0 // pred_check_branch
    %2025 = sbr.rel (0) target = $region21
  $region20: #{forward.27} parent=0 // pred_region
    _
  $region21: #{forward.27} parent=0 // pred_fallthru
    _

// kernel: forward.28
$region0: #{forward.28}
  #allocation0 [shape = 'u32[]', space=smem, size = 0x4, offset = 0x4, fixed_abs, tag = 'smem constant byte address 0x4 - core index']
  #allocation1 [shape = 'u32[144,128]{1,0:T(1,128)}', space=vmem, size = 0x12000, scoped, tag = 'internal scratch']
  #allocation2 [shape = 'f32[2,256]{1,0:T(2,128)}', space=vmem, size = 0x800, scoped, tag = 'scratch operand']
  #allocation3 [shape = 'f32[2,256]{1,0:T(2,128)}', space=vmem, size = 0x800, scoped, tag = 'scratch operand']
  %s0 = inlined_call_operand.vmem [shape: f32[8,2,2048], index: 0, kind: input, shape index: {}]
  %s1 = inlined_call_operand.vmem [shape: bf16[2,256,1024], index: 1, kind: input, shape index: {}]
  %s2 = inlined_call_operand.vmem [shape: f32[8,2,512], index: 2, kind: output, shape index: {}]
  %s3 = sld [smem:[#allocation0]]
  $region45: #{forward.28} parent=0
    _
  %s5 = ssub.s32 1, %s3
  %s6 = scalar_select 0, %s5, %s3
  loop: start=0, step=1, limit=18
  $region2: #{forward.28} parent=0 // loop_pre_header
    _
  $region3: #{forward.28} parent=0 // loop_header
    %s8 = sphi 0, %s12
    %p9 = scmp.ge.s32.totalorder %s8, 18
    %s15 = sphi 0, %s27
    %s16 = sphi 0, %s23
    %s17 = sphi 0, %s15
    %s18 = sphi 0, %s16
    %s19 = sphi 0, %s17
    %s20 = sphi 0, %s18
    %s42 = sphi 0, %s44
    %s45 = sphi 0, %s42
    %s46 = sphi 0, %s45
    %s62 = sphi 0, %s46
    %s68 = sphi 0, %s70
    %s71 = sphi 0, %s68
    %s72 = sphi 0, %s71
    %s88 = sphi 0, %s72
    %s106 = sphi 0, %s108
    %s109 = sphi 0, %s106
    %s110 = sphi 0, %s109
    %s126 = sphi 0, %s110
  $region4: #{forward.28} parent=0 // loop_header_branch
    %11 = sbr.rel (%p9) target = $region8
  $region5: #{forward.28} parent=0 // loop_body
    %s13 = ssub.s32 %s8, 1
    %s14 = ssub.s32 %s8, 2
    %s21 = sadd.s32 1, %s16
    %p22 = scmp.ge.s32.totalorder %s21, 8
    %s23 = scalar_select %p22, 0, %s21
    %s24 = sadd.s32 1, %s15
    %s25 = scalar_select %p22, %s24, %s15
    %p26 = scmp.ge.s32.totalorder %s25, 2
    %s27 = scalar_select %p26, 0, %s25
    %s28 = ssub.s32 1, %s15
    %s29 = smul.u32 %s28, %s16
    %s30 = ssub.s32 7, %s16
    %s31 = smul.u32 %s15, %s30
    %s32 = sadd.s32 %s29, %s31
    %s33 = ssub.s32 1, %s27
    %s34 = smul.u32 %s33, %s23
    %s35 = ssub.s32 7, %s23
    %s36 = smul.u32 %s27, %s35
    %s37 = sadd.s32 %s34, %s36
    %s38 = ssub.s32 %s32, %s37
    %s39 = ssub.s32 %s15, %s27
    %s40 = sor.u32 %s38, %s39
    %p41 = scmp.eq.s32.totalorder %s40, 0
    %s43 = sadd.s32 %s42, 1
    %s44 = scalar_select %p41, %s42, %s43
    %p47 = pneg %p41
    %p48 = scmp.eq.s32.totalorder %s8, 15
    %p49 = por %p47, %p48
    %p50 = scmp.ne.s32.totalorder %s42, %s45
    %p51 = scmp.eq.s32.totalorder %s8, 0
    %p52 = por %p50, %p51
    %p53 = scmp.ne.s32.totalorder %s42, %s45
    %p54 = scmp.eq.s32.totalorder %s13, 15
    %p55 = por %p53, %p54
    %p56 = scmp.ne.s32.totalorder %s45, %s46
    %p57 = scmp.eq.s32.totalorder %s13, 0
    %p58 = por %p56, %p57
    %p59 = scmp.ne.s32.totalorder %s45, %s46
    %p60 = scmp.eq.s32.totalorder %s14, 15
    %p61 = por %p59, %p60
    %p63 = scmp.ne.s32.totalorder %s46, %s62
    %p64 = scmp.eq.s32.totalorder %s14, 0
    %p65 = por %p63, %p64
    %s66 = ssub.s32 %s15, %s27
    %p67 = scmp.eq.s32.totalorder %s66, 0
    %s69 = sadd.s32 %s68, 1
    %s70 = scalar_select %p67, %s68, %s69
    %p73 = pneg %p67
    %p74 = scmp.eq.s32.totalorder %s8, 15
    %p75 = por %p73, %p74
    %p76 = scmp.ne.s32.totalorder %s68, %s71
    %p77 = scmp.eq.s32.totalorder %s8, 0
    %p78 = por %p76, %p77
    %p79 = scmp.ne.s32.totalorder %s68, %s71
    %p80 = scmp.eq.s32.totalorder %s13, 15
    %p81 = por %p79, %p80
    %p82 = scmp.ne.s32.totalorder %s71, %s72
    %p83 = scmp.eq.s32.totalorder %s13, 0
    %p84 = por %p82, %p83
    %p85 = scmp.ne.s32.totalorder %s71, %s72
    %p86 = scmp.eq.s32.totalorder %s14, 15
    %p87 = por %p85, %p86
    %p89 = scmp.ne.s32.totalorder %s72, %s88
    %p90 = scmp.eq.s32.totalorder %s14, 0
    %p91 = por %p89, %p90
    %s92 = ssub.s32 1, %s15
    %s93 = smul.u32 %s92, %s16
    %s94 = ssub.s32 7, %s16
    %s95 = smul.u32 %s15, %s94
    %s96 = sadd.s32 %s93, %s95
    %s97 = ssub.s32 1, %s27
    %s98 = smul.u32 %s97, %s23
    %s99 = ssub.s32 7, %s23
    %s100 = smul.u32 %s27, %s99
    %s101 = sadd.s32 %s98, %s100
    %s102 = ssub.s32 %s96, %s101
    %s103 = ssub.s32 %s15, %s27
    %s104 = sor.u32 %s102, %s103
    %p105 = scmp.eq.s32.totalorder %s104, 0
    %s107 = sadd.s32 %s106, 1
    %s108 = scalar_select %p105, %s106, %s107
    %p111 = pneg %p105
    %p112 = scmp.eq.s32.totalorder %s8, 15
    %p113 = por %p111, %p112
    %p114 = scmp.ne.s32.totalorder %s106, %s109
    %p115 = scmp.eq.s32.totalorder %s8, 0
    %p116 = por %p114, %p115
    %p117 = scmp.ne.s32.totalorder %s106, %s109
    %p118 = scmp.eq.s32.totalorder %s13, 15
    %p119 = por %p117, %p118
    %p120 = scmp.ne.s32.totalorder %s109, %s110
    %p121 = scmp.eq.s32.totalorder %s13, 0
    %p122 = por %p120, %p121
    %p123 = scmp.ne.s32.totalorder %s109, %s110
    %p124 = scmp.eq.s32.totalorder %s14, 15
    %p125 = por %p123, %p124
    %p127 = scmp.ne.s32.totalorder %s110, %s126
    %p128 = scmp.eq.s32.totalorder %s14, 0
    %p129 = por %p127, %p128
    %p130 = scmp.le.s32.totalorder 1, %s8
    %p131 = scmp.lt.s32.totalorder %s8, 17
    %p132 = pnand %p130, %p131
    %p133 = pneg %p132
    // Predicated region
    $region9: #{forward.28} parent=5 // pred_check
      _
    $region10: #{forward.28} parent=5 // pred_check_branch
      %135 = sbr.rel (%p132) target = $region12
    $region11: #{forward.28} parent=5 // pred_region
      %s136 = ssub.s32 %s8, 1
    $region12: #{forward.28} parent=5 // pred_fallthru
      _
    %p137 = scmp.lt.s32.totalorder %s8, 16
    // Predicated region
    $region13: #{forward.28} parent=5 // pred_check
      %p138 = pneg %p137
    $region14: #{forward.28} parent=5 // pred_check_branch
      %140 = sbr.rel (%p138) target = $region16
    $region15: #{forward.28} parent=5 // pred_region
      // Predicated region
      $region17: #{forward.28} parent=15 // pred_check
        %p141 = pneg %p52
      $region18: #{forward.28} parent=15 // pred_check_branch
        %143 = sbr.rel (%p141) target = $region20
      $region19: #{forward.28} parent=15 // pred_region
        %s144 = ssub.s32 1, %s15
        %s145 = smul.u32 %s144, %s16
        %s146 = ssub.s32 7, %s16
        %s147 = smul.u32 %s15, %s146
        %s148 = sadd.s32 %s145, %s147
        %s149 = smul.u32 8, %s15
        %p150 = scmp.lt.s32.totalorder %s148, 7
        %s151 = scalar_select %p150, %s148, 7
        %p152 = scmp.lt.s32.totalorder %s149, 15
        %s153 = scalar_select %p152, %s149, 15
        %s154 = smul.addr %s151, 16
        %s155 = sadd.s32 %s153, %s154
        %s156 = smul.addr %s155, 2
        %s157 = scalar_lea.vmem %s0, %s156
        %s158 = ssub.s32 1, %s15
        %s159 = smul.u32 %s158, %s16
        %s160 = ssub.s32 7, %s16
        %s161 = smul.u32 %s15, %s160
        %s162 = sadd.s32 %s159, %s161
        %s163 = smul.u32 8, %s15
      $region20: #{forward.28} parent=15 // pred_fallthru
        _
      // Predicated region
      $region21: #{forward.28} parent=15 // pred_check
        %p164 = pneg %p78
      $region22: #{forward.28} parent=15 // pred_check_branch
        %166 = sbr.rel (%p164) target = $region24
      $region23: #{forward.28} parent=15 // pred_region
        %p167 = scmp.lt.s32.totalorder %s15, 1
        %s168 = scalar_select %p167, %s15, 1
        %s169 = smul.addr %s168, 256
        %s170 = smul.addr %s169, 4
        %s171 = scalar_lea.vmem %s1, %s170
      $region24: #{forward.28} parent=15 // pred_fallthru
        _
    $region16: #{forward.28} parent=5 // pred_fallthru
      _
    %p172 = scmp.le.s32.totalorder 1, %s8
    %p173 = scmp.lt.s32.totalorder %s8, 17
    %p174 = pnand %p172, %p173
    %p175 = pneg %p174
    // Predicated region
    $region25: #{forward.28} parent=5 // pred_check
      _
    $region26: #{forward.28} parent=5 // pred_check_branch
      %177 = sbr.rel (%p174) target = $region28
    $region27: #{forward.28} parent=5 // pred_region
      %s178 = ssub.s32 %s8, 1
      %s179 = ssub.s32 1, %s17
      %s180 = smul.u32 %s179, %s18
      %s181 = ssub.s32 7, %s18
      %s182 = smul.u32 %s17, %s181
      %s183 = sadd.s32 %s180, %s182
      %s184 = smul.u32 8, %s17
      %p185 = scmp.lt.s32.totalorder %s183, 7
      %s186 = scalar_select %p185, %s183, 7
      %p187 = scmp.lt.s32.totalorder %s184, 15
      %s188 = scalar_select %p187, %s184, 15
      %s189 = smul.addr %s186, 16
      %s190 = sadd.s32 %s188, %s189
      %s191 = smul.addr %s190, 2
      %s192 = scalar_lea.vmem %s0, %s191
      %p193 = pneg %p58
      %p194 = pneg %p55
      %p195 = scmp.lt.s32.totalorder %s17, 1
      %s196 = scalar_select %p195, %s17, 1
      %s197 = smul.addr %s196, 256
      %s198 = smul.addr %s197, 4
      %s199 = scalar_lea.vmem %s1, %s198
      %p200 = pneg %p84
      %p201 = pneg %p81
      %p202 = pneg %p122
      %p203 = pneg %p119
      %s204 = ssub.s32 1, %s17
      %s205 = smul.u32 %s204, %s18
      %s206 = ssub.s32 7, %s18
      %s207 = smul.u32 %s17, %s206
      %s208 = sadd.s32 %s205, %s207
      %s209 = smul.u32 2, %s17
      %p210 = scmp.lt.s32.totalorder %s208, 7
      %s211 = scalar_select %p210, %s208, 7
      %p212 = scmp.lt.s32.totalorder %s209, 3
      %s213 = scalar_select %p212, %s209, 3
      %s214 = smul.addr %s211, 4
      %s215 = sadd.s32 %s213, %s214
      %s216 = smul.addr %s215, 2
      %s217 = scalar_lea.vmem %s2, %s216
      %s218 = ssub.s32 1, %s17
      %s219 = smul.u32 %s218, %s18
      %s220 = ssub.s32 7, %s18
      %s221 = smul.u32 %s17, %s220
      %s222 = sadd.s32 %s219, %s221
      %s223 = smul.u32 8, %s17
      %p224 = scmp.lt.s32.totalorder %s222, 7
      %s225 = scalar_select %p224, %s222, 7
      %p226 = scmp.lt.s32.totalorder %s223, 15
      %s227 = scalar_select %p226, %s223, 15
      %s228 = smul.addr %s225, 16
      %s229 = sadd.s32 %s227, %s228
      %s230 = smul.addr %s229, 2
      %s231 = scalar_lea.vmem %s0, %s230
      %s232 = ssub.s32 1, %s17
      %s233 = smul.u32 %s232, %s18
      %s234 = ssub.s32 7, %s18
      %s235 = smul.u32 %s17, %s234
      %s236 = sadd.s32 %s233, %s235
      %s237 = smul.u32 8, %s17
      %p238 = scmp.lt.s32.totalorder %s17, 1
      %s239 = scalar_select %p238, %s17, 1
      %s240 = smul.addr %s239, 256
      %s241 = smul.addr %s240, 4
      %s242 = scalar_lea.vmem %s1, %s241
      %s243 = ssub.s32 1, %s17
      %s244 = smul.u32 %s243, %s18
      %s245 = ssub.s32 7, %s18
      %s246 = smul.u32 %s17, %s245
      %s247 = sadd.s32 %s244, %s246
      %s248 = smul.u32 2, %s17
      %p249 = scmp.lt.s32.totalorder %s247, 7
      %s250 = scalar_select %p249, %s247, 7
      %p251 = scmp.lt.s32.totalorder %s248, 3
      %s252 = scalar_select %p251, %s248, 3
      %s253 = smul.addr %s250, 4
      %s254 = sadd.s32 %s252, %s253
      %s255 = smul.addr %s254, 2
      %s256 = scalar_lea.vmem %s2, %s255
      %s257 = ssub.s32 1, %s17
      %s258 = smul.u32 %s257, %s18
      %s259 = ssub.s32 7, %s18
      %s260 = smul.u32 %s17, %s259
      %s261 = sadd.s32 %s258, %s260
      %s262 = smul.u32 2, %s17
      %p263 = scmp.eq.s32.totalorder %s18, 0
      // Predicated region
      $region29: #{forward.28} parent=27 // pred_check
        %p264 = pneg %p263
      $region30: #{forward.28} parent=27 // pred_check_branch
        %266 = sbr.rel (%p264) target = $region32
      $region31: #{forward.28} parent=27 // pred_region
        %267 = vst [vmem:[#allocation2] sm:$0xf] 0.0
        %268 = vst [vmem:[#allocation3] sm:$0xf] 0.0
      $region32: #{forward.28} parent=27 // pred_fallthru
        _
      %v269 = vld [vmem:[#allocation2] sm:$0xf]
      %v272 = vunpack.c.l.s4 1983009808
      %v273 = vunpack.c.0.s8 %v272
      %v274 = vlaneseq
      %v275 = vshrl.u32 %v274, 7
      %v276 = vsub.s32 %v273, %v275
      %v277 = vrot.slane %v269, %v276
      %v278 = vcombine.high %v277, %v277
      %v281 = vpack.c.bf16 %v277, %v277
      %v282 = vpack.c.bf16 %v278, %v278
      %v283 = vld [vmem:[%s242] sm:$0xff]
      %v284 = vld [vmem:[%s242 + $0x8] sm:$0xff]
      %v285 = vld [vmem:[%s242 + $0x10] sm:$0xff]
      %v286 = vld [vmem:[%s242 + $0x18] sm:$0xff]
      %v287 = vld [vmem:[%s242 + $0x20] sm:$0xff]
      %v288 = vld [vmem:[%s242 + $0x28] sm:$0xff]
      %v289 = vld [vmem:[%s242 + $0x30] sm:$0xff]
      %v290 = vld [vmem:[%s242 + $0x38] sm:$0xff]
      %v291 = vld [vmem:[%s242 + $0x40] sm:$0xff]
      %v292 = vld [vmem:[%s242 + $0x48] sm:$0xff]
      %v293 = vld [vmem:[%s242 + $0x50] sm:$0xff]
      %v294 = vld [vmem:[%s242 + $0x58] sm:$0xff]
      %v295 = vld [vmem:[%s242 + $0x60] sm:$0xff]
      %v296 = vld [vmem:[%s242 + $0x68] sm:$0xff]
      %v297 = vld [vmem:[%s242 + $0x70] sm:$0xff]
      %v298 = vld [vmem:[%s242 + $0x78] sm:$0xff]
      %v299 = vld [vmem:[%s242 + $0x80] sm:$0xff]
      %v300 = vld [vmem:[%s242 + $0x88] sm:$0xff]
      %v301 = vld [vmem:[%s242 + $0x90] sm:$0xff]
      %v302 = vld [vmem:[%s242 + $0x98] sm:$0xff]
      %v303 = vld [vmem:[%s242 + $0xa0] sm:$0xff]
      %v304 = vld [vmem:[%s242 + $0xa8] sm:$0xff]
      %v305 = vld [vmem:[%s242 + $0xb0] sm:$0xff]
      %v306 = vld [vmem:[%s242 + $0xb8] sm:$0xff]
      %v307 = vld [vmem:[%s242 + $0xc0] sm:$0xff]
      %v308 = vld [vmem:[%s242 + $0xc8] sm:$0xff]
      %v309 = vld [vmem:[%s242 + $0xd0] sm:$0xff]
      %v310 = vld [vmem:[%s242 + $0xd8] sm:$0xff]
      %v311 = vld [vmem:[%s242 + $0xe0] sm:$0xff]
      %v312 = vld [vmem:[%s242 + $0xe8] sm:$0xff]
      %v313 = vld [vmem:[%s242 + $0xf0] sm:$0xff]
      %v314 = vld [vmem:[%s242 + $0xf8] sm:$0xff]
      %v315 = vld [vmem:[%s242 + $0x100] sm:$0xff]
      %v316 = vld [vmem:[%s242 + $0x108] sm:$0xff]
      %v317 = vld [vmem:[%s242 + $0x110] sm:$0xff]
      %v318 = vld [vmem:[%s242 + $0x118] sm:$0xff]
      %v319 = vld [vmem:[%s242 + $0x120] sm:$0xff]
      %v320 = vld [vmem:[%s242 + $0x128] sm:$0xff]
      %v321 = vld [vmem:[%s242 + $0x130] sm:$0xff]
      %v322 = vld [vmem:[%s242 + $0x138] sm:$0xff]
      %v323 = vld [vmem:[%s242 + $0x140] sm:$0xff]
      %v324 = vld [vmem:[%s242 + $0x148] sm:$0xff]
      %v325 = vld [vmem:[%s242 + $0x150] sm:$0xff]
      %v326 = vld [vmem:[%s242 + $0x158] sm:$0xff]
      %v327 = vld [vmem:[%s242 + $0x160] sm:$0xff]
      %v328 = vld [vmem:[%s242 + $0x168] sm:$0xff]
      %v329 = vld [vmem:[%s242 + $0x170] sm:$0xff]
      %v330 = vld [vmem:[%s242 + $0x178] sm:$0xff]
      %v331 = vld [vmem:[%s242 + $0x180] sm:$0xff]
      %v332 = vld [vmem:[%s242 + $0x188] sm:$0xff]
      %v333 = vld [vmem:[%s242 + $0x190] sm:$0xff]
      %v334 = vld [vmem:[%s242 + $0x198] sm:$0xff]
      %v335 = vld [vmem:[%s242 + $0x1a0] sm:$0xff]
      %v336 = vld [vmem:[%s242 + $0x1a8] sm:$0xff]
      %v337 = vld [vmem:[%s242 + $0x1b0] sm:$0xff]
      %v338 = vld [vmem:[%s242 + $0x1b8] sm:$0xff]
      %v339 = vld [vmem:[%s242 + $0x1c0] sm:$0xff]
      %v340 = vld [vmem:[%s242 + $0x1c8] sm:$0xff]
      %v341 = vld [vmem:[%s242 + $0x1d0] sm:$0xff]
      %v342 = vld [vmem:[%s242 + $0x1d8] sm:$0xff]
      %v343 = vld [vmem:[%s242 + $0x1e0] sm:$0xff]
      %v344 = vld [vmem:[%s242 + $0x1e8] sm:$0xff]
      %v345 = vld [vmem:[%s242 + $0x1f0] sm:$0xff]
      %v346 = vld [vmem:[%s242 + $0x1f8] sm:$0xff]
      %v347 = vld [vmem:[%s242 + $0x200] sm:$0xff]
      %v348 = vld [vmem:[%s242 + $0x208] sm:$0xff]
      %v349 = vld [vmem:[%s242 + $0x210] sm:$0xff]
      %v350 = vld [vmem:[%s242 + $0x218] sm:$0xff]
      %v351 = vld [vmem:[%s242 + $0x220] sm:$0xff]
      %v352 = vld [vmem:[%s242 + $0x228] sm:$0xff]
      %v353 = vld [vmem:[%s242 + $0x230] sm:$0xff]
      %v354 = vld [vmem:[%s242 + $0x238] sm:$0xff]
      %v355 = vld [vmem:[%s242 + $0x240] sm:$0xff]
      %v356 = vld [vmem:[%s242 + $0x248] sm:$0xff]
      %v357 = vld [vmem:[%s242 + $0x250] sm:$0xff]
      %v358 = vld [vmem:[%s242 + $0x258] sm:$0xff]
      %v359 = vld [vmem:[%s242 + $0x260] sm:$0xff]
      %v360 = vld [vmem:[%s242 + $0x268] sm:$0xff]
      %v361 = vld [vmem:[%s242 + $0x270] sm:$0xff]
      %v362 = vld [vmem:[%s242 + $0x278] sm:$0xff]
      %v363 = vld [vmem:[%s242 + $0x280] sm:$0xff]
      %v364 = vld [vmem:[%s242 + $0x288] sm:$0xff]
      %v365 = vld [vmem:[%s242 + $0x290] sm:$0xff]
      %v366 = vld [vmem:[%s242 + $0x298] sm:$0xff]
      %v367 = vld [vmem:[%s242 + $0x2a0] sm:$0xff]
      %v368 = vld [vmem:[%s242 + $0x2a8] sm:$0xff]
      %v369 = vld [vmem:[%s242 + $0x2b0] sm:$0xff]
      %v370 = vld [vmem:[%s242 + $0x2b8] sm:$0xff]
      %v371 = vld [vmem:[%s242 + $0x2c0] sm:$0xff]
      %v372 = vld [vmem:[%s242 + $0x2c8] sm:$0xff]
      %v373 = vld [vmem:[%s242 + $0x2d0] sm:$0xff]
      %v374 = vld [vmem:[%s242 + $0x2d8] sm:$0xff]
      %v375 = vld [vmem:[%s242 + $0x2e0] sm:$0xff]
      %v376 = vld [vmem:[%s242 + $0x2e8] sm:$0xff]
      %v377 = vld [vmem:[%s242 + $0x2f0] sm:$0xff]
      %v378 = vld [vmem:[%s242 + $0x2f8] sm:$0xff]
      %v379 = vld [vmem:[%s242 + $0x300] sm:$0xff]
      %v380 = vld [vmem:[%s242 + $0x308] sm:$0xff]
      %v381 = vld [vmem:[%s242 + $0x310] sm:$0xff]
      %v382 = vld [vmem:[%s242 + $0x318] sm:$0xff]
      %v383 = vld [vmem:[%s242 + $0x320] sm:$0xff]
      %v384 = vld [vmem:[%s242 + $0x328] sm:$0xff]
      %v385 = vld [vmem:[%s242 + $0x330] sm:$0xff]
      %v386 = vld [vmem:[%s242 + $0x338] sm:$0xff]
      %v387 = vld [vmem:[%s242 + $0x340] sm:$0xff]
      %v388 = vld [vmem:[%s242 + $0x348] sm:$0xff]
      %v389 = vld [vmem:[%s242 + $0x350] sm:$0xff]
      %v390 = vld [vmem:[%s242 + $0x358] sm:$0xff]
      %v391 = vld [vmem:[%s242 + $0x360] sm:$0xff]
      %v392 = vld [vmem:[%s242 + $0x368] sm:$0xff]
      %v393 = vld [vmem:[%s242 + $0x370] sm:$0xff]
      %v394 = vld [vmem:[%s242 + $0x378] sm:$0xff]
      %v395 = vld [vmem:[%s242 + $0x380] sm:$0xff]
      %v396 = vld [vmem:[%s242 + $0x388] sm:$0xff]
      %v397 = vld [vmem:[%s242 + $0x390] sm:$0xff]
      %v398 = vld [vmem:[%s242 + $0x398] sm:$0xff]
      %v399 = vld [vmem:[%s242 + $0x3a0] sm:$0xff]
      %v400 = vld [vmem:[%s242 + $0x3a8] sm:$0xff]
      %v401 = vld [vmem:[%s242 + $0x3b0] sm:$0xff]
      %v402 = vld [vmem:[%s242 + $0x3b8] sm:$0xff]
      %v403 = vld [vmem:[%s242 + $0x3c0] sm:$0xff]
      %v404 = vld [vmem:[%s242 + $0x3c8] sm:$0xff]
      %v405 = vld [vmem:[%s242 + $0x3d0] sm:$0xff]
      %v406 = vld [vmem:[%s242 + $0x3d8] sm:$0xff]
      %v407 = vld [vmem:[%s242 + $0x3e0] sm:$0xff]
      %v408 = vld [vmem:[%s242 + $0x3e8] sm:$0xff]
      %v409 = vld [vmem:[%s242 + $0x3f0] sm:$0xff]
      %v410 = vld [vmem:[%s242 + $0x3f8] sm:$0xff]
      %v411 = vld [vmem:[%s231] sm:$0xff]
      %v412 = vld [vmem:[%s231 + $0x8] sm:$0xff]
      %v541 = vunpack.c.l.b16 %v283
      %v542 = vunpack.c.h.b16 %v283
      %v543 = vunpack.c.l.b16 %v284
      %v544 = vunpack.c.h.b16 %v284
      %v545 = vunpack.c.l.b16 %v285
      %v546 = vunpack.c.h.b16 %v285
      %v547 = vunpack.c.l.b16 %v286
      %v548 = vunpack.c.h.b16 %v286
      %v549 = vunpack.c.l.b16 %v287
      %v550 = vunpack.c.h.b16 %v287
      %v551 = vunpack.c.l.b16 %v288
      %v552 = vunpack.c.h.b16 %v288
      %v553 = vunpack.c.l.b16 %v289
      %v554 = vunpack.c.h.b16 %v289
      %v555 = vunpack.c.l.b16 %v290
      %v556 = vunpack.c.h.b16 %v290
      %v557 = vunpack.c.l.b16 %v291
      %v558 = vunpack.c.h.b16 %v291
      %v559 = vunpack.c.l.b16 %v292
      %v560 = vunpack.c.h.b16 %v292
      %v561 = vunpack.c.l.b16 %v293
      %v562 = vunpack.c.h.b16 %v293
      %v563 = vunpack.c.l.b16 %v294
      %v564 = vunpack.c.h.b16 %v294
      %v565 = vunpack.c.l.b16 %v295
      %v566 = vunpack.c.h.b16 %v295
      %v567 = vunpack.c.l.b16 %v296
      %v568 = vunpack.c.h.b16 %v296
      %v569 = vunpack.c.l.b16 %v297
      %v570 = vunpack.c.h.b16 %v297
      %v571 = vunpack.c.l.b16 %v298
      %v572 = vunpack.c.h.b16 %v298
      %v573 = vunpack.c.l.b16 %v299
      %v574 = vunpack.c.h.b16 %v299
      %v575 = vunpack.c.l.b16 %v300
      %v576 = vunpack.c.h.b16 %v300
      %v577 = vunpack.c.l.b16 %v301
      %v578 = vunpack.c.h.b16 %v301
      %v579 = vunpack.c.l.b16 %v302
      %v580 = vunpack.c.h.b16 %v302
      %v581 = vunpack.c.l.b16 %v303
      %v582 = vunpack.c.h.b16 %v303
      %v583 = vunpack.c.l.b16 %v304
      %v584 = vunpack.c.h.b16 %v304
      %v585 = vunpack.c.l.b16 %v305
      %v586 = vunpack.c.h.b16 %v305
      %v587 = vunpack.c.l.b16 %v306
      %v588 = vunpack.c.h.b16 %v306
      %v589 = vunpack.c.l.b16 %v307
      %v590 = vunpack.c.h.b16 %v307
      %v591 = vunpack.c.l.b16 %v308
      %v592 = vunpack.c.h.b16 %v308
      %v593 = vunpack.c.l.b16 %v309
      %v594 = vunpack.c.h.b16 %v309
      %v595 = vunpack.c.l.b16 %v310
      %v596 = vunpack.c.h.b16 %v310
      %v597 = vunpack.c.l.b16 %v311
      %v598 = vunpack.c.h.b16 %v311
      %v599 = vunpack.c.l.b16 %v312
      %v600 = vunpack.c.h.b16 %v312
      %v601 = vunpack.c.l.b16 %v313
      %v602 = vunpack.c.h.b16 %v313
      %v603 = vunpack.c.l.b16 %v314
      %v604 = vunpack.c.h.b16 %v314
      %v605 = vunpack.c.l.b16 %v315
      %v606 = vunpack.c.h.b16 %v315
      %v607 = vunpack.c.l.b16 %v316
      %v608 = vunpack.c.h.b16 %v316
      %v609 = vunpack.c.l.b16 %v317
      %v610 = vunpack.c.h.b16 %v317
      %v611 = vunpack.c.l.b16 %v318
      %v612 = vunpack.c.h.b16 %v318
      %v613 = vunpack.c.l.b16 %v319
      %v614 = vunpack.c.h.b16 %v319
      %v615 = vunpack.c.l.b16 %v320
      %v616 = vunpack.c.h.b16 %v320
      %v617 = vunpack.c.l.b16 %v321
      %v618 = vunpack.c.h.b16 %v321
      %v619 = vunpack.c.l.b16 %v322
      %v620 = vunpack.c.h.b16 %v322
      %v621 = vunpack.c.l.b16 %v323
      %v622 = vunpack.c.h.b16 %v323
      %v623 = vunpack.c.l.b16 %v324
      %v624 = vunpack.c.h.b16 %v324
      %v625 = vunpack.c.l.b16 %v325
      %v626 = vunpack.c.h.b16 %v325
      %v627 = vunpack.c.l.b16 %v326
      %v628 = vunpack.c.h.b16 %v326
      %v629 = vunpack.c.l.b16 %v327
      %v630 = vunpack.c.h.b16 %v327
      %v631 = vunpack.c.l.b16 %v328
      %v632 = vunpack.c.h.b16 %v328
      %v633 = vunpack.c.l.b16 %v329
      %v634 = vunpack.c.h.b16 %v329
      %v635 = vunpack.c.l.b16 %v330
      %v636 = vunpack.c.h.b16 %v330
      %v637 = vunpack.c.l.b16 %v331
      %v638 = vunpack.c.h.b16 %v331
      %v639 = vunpack.c.l.b16 %v332
      %v640 = vunpack.c.h.b16 %v332
      %v641 = vunpack.c.l.b16 %v333
      %v642 = vunpack.c.h.b16 %v333
      %v643 = vunpack.c.l.b16 %v334
      %v644 = vunpack.c.h.b16 %v334
      %v645 = vunpack.c.l.b16 %v335
      %v646 = vunpack.c.h.b16 %v335
      %v647 = vunpack.c.l.b16 %v336
      %v648 = vunpack.c.h.b16 %v336
      %v649 = vunpack.c.l.b16 %v337
      %v650 = vunpack.c.h.b16 %v337
      %v651 = vunpack.c.l.b16 %v338
      %v652 = vunpack.c.h.b16 %v338
      %v653 = vunpack.c.l.b16 %v339
      %v654 = vunpack.c.h.b16 %v339
      %v655 = vunpack.c.l.b16 %v340
      %v656 = vunpack.c.h.b16 %v340
      %v657 = vunpack.c.l.b16 %v341
      %v658 = vunpack.c.h.b16 %v341
      %v659 = vunpack.c.l.b16 %v342
      %v660 = vunpack.c.h.b16 %v342
      %v661 = vunpack.c.l.b16 %v343
      %v662 = vunpack.c.h.b16 %v343
      %v663 = vunpack.c.l.b16 %v344
      %v664 = vunpack.c.h.b16 %v344
      %v665 = vunpack.c.l.b16 %v345
      %v666 = vunpack.c.h.b16 %v345
      %v667 = vunpack.c.l.b16 %v346
      %v668 = vunpack.c.h.b16 %v346
      %v669 = vunpack.c.l.b16 %v347
      %v670 = vunpack.c.h.b16 %v347
      %v671 = vunpack.c.l.b16 %v348
      %v672 = vunpack.c.h.b16 %v348
      %v673 = vunpack.c.l.b16 %v349
      %v674 = vunpack.c.h.b16 %v349
      %v675 = vunpack.c.l.b16 %v350
      %v676 = vunpack.c.h.b16 %v350
      %v677 = vunpack.c.l.b16 %v351
      %v678 = vunpack.c.h.b16 %v351
      %v679 = vunpack.c.l.b16 %v352
      %v680 = vunpack.c.h.b16 %v352
      %v681 = vunpack.c.l.b16 %v353
      %v682 = vunpack.c.h.b16 %v353
      %v683 = vunpack.c.l.b16 %v354
      %v684 = vunpack.c.h.b16 %v354
      %v685 = vunpack.c.l.b16 %v355
      %v686 = vunpack.c.h.b16 %v355
      %v687 = vunpack.c.l.b16 %v356
      %v688 = vunpack.c.h.b16 %v356
      %v689 = vunpack.c.l.b16 %v357
      %v690 = vunpack.c.h.b16 %v357
      %v691 = vunpack.c.l.b16 %v358
      %v692 = vunpack.c.h.b16 %v358
      %v693 = vunpack.c.l.b16 %v359
      %v694 = vunpack.c.h.b16 %v359
      %v695 = vunpack.c.l.b16 %v360
      %v696 = vunpack.c.h.b16 %v360
      %v697 = vunpack.c.l.b16 %v361
      %v698 = vunpack.c.h.b16 %v361
      %v699 = vunpack.c.l.b16 %v362
      %v700 = vunpack.c.h.b16 %v362
      %v701 = vunpack.c.l.b16 %v363
      %v702 = vunpack.c.h.b16 %v363
      %v703 = vunpack.c.l.b16 %v364
      %v704 = vunpack.c.h.b16 %v364
      %v705 = vunpack.c.l.b16 %v365
      %v706 = vunpack.c.h.b16 %v365
      %v707 = vunpack.c.l.b16 %v366
      %v708 = vunpack.c.h.b16 %v366
      %v709 = vunpack.c.l.b16 %v367
      %v710 = vunpack.c.h.b16 %v367
      %v711 = vunpack.c.l.b16 %v368
      %v712 = vunpack.c.h.b16 %v368
      %v713 = vunpack.c.l.b16 %v369
      %v714 = vunpack.c.h.b16 %v369
      %v715 = vunpack.c.l.b16 %v370
      %v716 = vunpack.c.h.b16 %v370
      %v717 = vunpack.c.l.b16 %v371
      %v718 = vunpack.c.h.b16 %v371
      %v719 = vunpack.c.l.b16 %v372
      %v720 = vunpack.c.h.b16 %v372
      %v721 = vunpack.c.l.b16 %v373
      %v722 = vunpack.c.h.b16 %v373
      %v723 = vunpack.c.l.b16 %v374
      %v724 = vunpack.c.h.b16 %v374
      %v725 = vunpack.c.l.b16 %v375
      %v726 = vunpack.c.h.b16 %v375
      %v727 = vunpack.c.l.b16 %v376
      %v728 = vunpack.c.h.b16 %v376
      %v729 = vunpack.c.l.b16 %v377
      %v730 = vunpack.c.h.b16 %v377
      %v731 = vunpack.c.l.b16 %v378
      %v732 = vunpack.c.h.b16 %v378
      %v733 = vunpack.c.l.b16 %v379
      %v734 = vunpack.c.h.b16 %v379
      %v735 = vunpack.c.l.b16 %v380
      %v736 = vunpack.c.h.b16 %v380
      %v737 = vunpack.c.l.b16 %v381
      %v738 = vunpack.c.h.b16 %v381
      %v739 = vunpack.c.l.b16 %v382
      %v740 = vunpack.c.h.b16 %v382
      %v741 = vunpack.c.l.b16 %v383
      %v742 = vunpack.c.h.b16 %v383
      %v743 = vunpack.c.l.b16 %v384
      %v744 = vunpack.c.h.b16 %v384
      %v745 = vunpack.c.l.b16 %v385
      %v746 = vunpack.c.h.b16 %v385
      %v747 = vunpack.c.l.b16 %v386
      %v748 = vunpack.c.h.b16 %v386
      %v749 = vunpack.c.l.b16 %v387
      %v750 = vunpack.c.h.b16 %v387
      %v751 = vunpack.c.l.b16 %v388
      %v752 = vunpack.c.h.b16 %v388
      %v753 = vunpack.c.l.b16 %v389
      %v754 = vunpack.c.h.b16 %v389
      %v755 = vunpack.c.l.b16 %v390
      %v756 = vunpack.c.h.b16 %v390
      %v757 = vunpack.c.l.b16 %v391
      %v758 = vunpack.c.h.b16 %v391
      %v759 = vunpack.c.l.b16 %v392
      %v760 = vunpack.c.h.b16 %v392
      %v761 = vunpack.c.l.b16 %v393
      %v762 = vunpack.c.h.b16 %v393
      %v763 = vunpack.c.l.b16 %v394
      %v764 = vunpack.c.h.b16 %v394
      %v765 = vunpack.c.l.b16 %v395
      %v766 = vunpack.c.h.b16 %v395
      %v767 = vunpack.c.l.b16 %v396
      %v768 = vunpack.c.h.b16 %v396
      %v769 = vunpack.c.l.b16 %v397
      %v770 = vunpack.c.h.b16 %v397
      %v771 = vunpack.c.l.b16 %v398
      %v772 = vunpack.c.h.b16 %v398
      %v773 = vunpack.c.l.b16 %v399
      %v774 = vunpack.c.h.b16 %v399
      %v775 = vunpack.c.l.b16 %v400
      %v776 = vunpack.c.h.b16 %v400
      %v777 = vunpack.c.l.b16 %v401
      %v778 = vunpack.c.h.b16 %v401
      %v779 = vunpack.c.l.b16 %v402
      %v780 = vunpack.c.h.b16 %v402
      %v781 = vunpack.c.l.b16 %v403
      %v782 = vunpack.c.h.b16 %v403
      %v783 = vunpack.c.l.b16 %v404
      %v784 = vunpack.c.h.b16 %v404
      %v785 = vunpack.c.l.b16 %v405
      %v786 = vunpack.c.h.b16 %v405
      %v787 = vunpack.c.l.b16 %v406
      %v788 = vunpack.c.h.b16 %v406
      %v789 = vunpack.c.l.b16 %v407
      %v790 = vunpack.c.h.b16 %v407
      %v791 = vunpack.c.l.b16 %v408
      %v792 = vunpack.c.h.b16 %v408
      %v793 = vunpack.c.l.b16 %v409
      %v794 = vunpack.c.h.b16 %v409
      %v795 = vunpack.c.l.b16 %v410
      %v796 = vunpack.c.h.b16 %v410
      %v797 = vpack.c.b16 %v549, %v541
      %v798 = vpack.c.b16 %v550, %v542
      %v799 = vpack.c.b16 %v551, %v543
      %v800 = vpack.c.b16 %v552, %v544
      %v801 = vpack.c.b16 %v553, %v545
      %v802 = vpack.c.b16 %v554, %v546
      %v803 = vpack.c.b16 %v555, %v547
      %v804 = vpack.c.b16 %v556, %v548
      %v805 = vpack.c.b16 %v565, %v557
      %v806 = vpack.c.b16 %v566, %v558
      %v807 = vpack.c.b16 %v567, %v559
      %v808 = vpack.c.b16 %v568, %v560
      %v809 = vpack.c.b16 %v569, %v561
      %v810 = vpack.c.b16 %v570, %v562
      %v811 = vpack.c.b16 %v571, %v563
      %v812 = vpack.c.b16 %v572, %v564
      %v813 = vpack.c.b16 %v581, %v573
      %v814 = vpack.c.b16 %v582, %v574
      %v815 = vpack.c.b16 %v583, %v575
      %v816 = vpack.c.b16 %v584, %v576
      %v817 = vpack.c.b16 %v585, %v577
      %v818 = vpack.c.b16 %v586, %v578
      %v819 = vpack.c.b16 %v587, %v579
      %v820 = vpack.c.b16 %v588, %v580
      %v821 = vpack.c.b16 %v597, %v589
      %v822 = vpack.c.b16 %v598, %v590
      %v823 = vpack.c.b16 %v599, %v591
      %v824 = vpack.c.b16 %v600, %v592
      %v825 = vpack.c.b16 %v601, %v593
      %v826 = vpack.c.b16 %v602, %v594
      %v827 = vpack.c.b16 %v603, %v595
      %v828 = vpack.c.b16 %v604, %v596
      %v829 = vpack.c.b16 %v613, %v605
      %v830 = vpack.c.b16 %v614, %v606
      %v831 = vpack.c.b16 %v615, %v607
      %v832 = vpack.c.b16 %v616, %v608
      %v833 = vpack.c.b16 %v617, %v609
      %v834 = vpack.c.b16 %v618, %v610
      %v835 = vpack.c.b16 %v619, %v611
      %v836 = vpack.c.b16 %v620, %v612
      %v837 = vpack.c.b16 %v629, %v621
      %v838 = vpack.c.b16 %v630, %v622
      %v839 = vpack.c.b16 %v631, %v623
      %v840 = vpack.c.b16 %v632, %v624
      %v841 = vpack.c.b16 %v633, %v625
      %v842 = vpack.c.b16 %v634, %v626
      %v843 = vpack.c.b16 %v635, %v627
      %v844 = vpack.c.b16 %v636, %v628
      %v845 = vpack.c.b16 %v645, %v637
      %v846 = vpack.c.b16 %v646, %v638
      %v847 = vpack.c.b16 %v647, %v639
      %v848 = vpack.c.b16 %v648, %v640
      %v849 = vpack.c.b16 %v649, %v641
      %v850 = vpack.c.b16 %v650, %v642
      %v851 = vpack.c.b16 %v651, %v643
      %v852 = vpack.c.b16 %v652, %v644
      %v853 = vpack.c.b16 %v661, %v653
      %v854 = vpack.c.b16 %v662, %v654
      %v855 = vpack.c.b16 %v663, %v655
      %v856 = vpack.c.b16 %v664, %v656
      %v857 = vpack.c.b16 %v665, %v657
      %v858 = vpack.c.b16 %v666, %v658
      %v859 = vpack.c.b16 %v667, %v659
      %v860 = vpack.c.b16 %v668, %v660
      %v861 = vpack.c.b16 %v677, %v669
      %v862 = vpack.c.b16 %v678, %v670
      %v863 = vpack.c.b16 %v679, %v671
      %v864 = vpack.c.b16 %v680, %v672
      %v865 = vpack.c.b16 %v681, %v673
      %v866 = vpack.c.b16 %v682, %v674
      %v867 = vpack.c.b16 %v683, %v675
      %v868 = vpack.c.b16 %v684, %v676
      %v869 = vpack.c.b16 %v693, %v685
      %v870 = vpack.c.b16 %v694, %v686
      %v871 = vpack.c.b16 %v695, %v687
      %v872 = vpack.c.b16 %v696, %v688
      %v873 = vpack.c.b16 %v697, %v689
      %v874 = vpack.c.b16 %v698, %v690
      %v875 = vpack.c.b16 %v699, %v691
      %v876 = vpack.c.b16 %v700, %v692
      %v877 = vpack.c.b16 %v709, %v701
      %v878 = vpack.c.b16 %v710, %v702
      %v879 = vpack.c.b16 %v711, %v703
      %v880 = vpack.c.b16 %v712, %v704
      %v881 = vpack.c.b16 %v713, %v705
      %v882 = vpack.c.b16 %v714, %v706
      %v883 = vpack.c.b16 %v715, %v707
      %v884 = vpack.c.b16 %v716, %v708
      %v885 = vpack.c.b16 %v725, %v717
      %v886 = vpack.c.b16 %v726, %v718
      %v887 = vpack.c.b16 %v727, %v719
      %v888 = vpack.c.b16 %v728, %v720
      %v889 = vpack.c.b16 %v729, %v721
      %v890 = vpack.c.b16 %v730, %v722
      %v891 = vpack.c.b16 %v731, %v723
      %v892 = vpack.c.b16 %v732, %v724
      %v893 = vpack.c.b16 %v741, %v733
      %v894 = vpack.c.b16 %v742, %v734
      %v895 = vpack.c.b16 %v743, %v735
      %v896 = vpack.c.b16 %v744, %v736
      %v897 = vpack.c.b16 %v745, %v737
      %v898 = vpack.c.b16 %v746, %v738
      %v899 = vpack.c.b16 %v747, %v739
      %v900 = vpack.c.b16 %v748, %v740
      %v901 = vpack.c.b16 %v757, %v749
      %v902 = vpack.c.b16 %v758, %v750
      %v903 = vpack.c.b16 %v759, %v751
      %v904 = vpack.c.b16 %v760, %v752
      %v905 = vpack.c.b16 %v761, %v753
      %v906 = vpack.c.b16 %v762, %v754
      %v907 = vpack.c.b16 %v763, %v755
      %v908 = vpack.c.b16 %v764, %v756
      %v909 = vpack.c.b16 %v773, %v765
      %v910 = vpack.c.b16 %v774, %v766
      %v911 = vpack.c.b16 %v775, %v767
      %v912 = vpack.c.b16 %v776, %v768
      %v913 = vpack.c.b16 %v777, %v769
      %v914 = vpack.c.b16 %v778, %v770
      %v915 = vpack.c.b16 %v779, %v771
      %v916 = vpack.c.b16 %v780, %v772
      %v917 = vpack.c.b16 %v789, %v781
      %v918 = vpack.c.b16 %v790, %v782
      %v919 = vpack.c.b16 %v791, %v783
      %v920 = vpack.c.b16 %v792, %v784
      %v921 = vpack.c.b16 %v793, %v785
      %v922 = vpack.c.b16 %v794, %v786
      %v923 = vpack.c.b16 %v795, %v787
      %v924 = vpack.c.b16 %v796, %v788
      %v1055 = vcombine.high %v411, %v411
      %v1057 = vunpack.c.l.s4 1983009808
      %v1058 = vunpack.c.0.s8 %v1057
      %v1059 = vlaneseq
      %v1060 = vshrl.u32 %v1059, 7
      %v1061 = vsub.s32 %v1058, %v1060
      %v1062 = vrot.slane %v411, %v1061
      %v1064 = vunpack.c.l.s4 1983009808
      %v1065 = vunpack.c.0.s8 %v1064
      %v1066 = vlaneseq
      %v1067 = vshrl.u32 %v1066, 7
      %v1068 = vsub.s32 %v1065, %v1067
      %v1069 = vrot.slane %v1055, %v1068
      %v1070 = vcombine.high %v1062, %v1062
      %v1071 = vcombine.high %v1069, %v1069
      %v1072 = vcombine.high %v412, %v412
      %v1074 = vunpack.c.l.s4 1983009808
      %v1075 = vunpack.c.0.s8 %v1074
      %v1076 = vlaneseq
      %v1077 = vshrl.u32 %v1076, 7
      %v1078 = vsub.s32 %v1075, %v1077
      %v1079 = vrot.slane %v412, %v1078
      %v1081 = vunpack.c.l.s4 1983009808
      %v1082 = vunpack.c.0.s8 %v1081
      %v1083 = vlaneseq
      %v1084 = vshrl.u32 %v1083, 7
      %v1085 = vsub.s32 %v1082, %v1084
      %v1086 = vrot.slane %v1072, %v1085
      %v1087 = vcombine.high %v1079, %v1079
      %v1088 = vcombine.high %v1086, %v1086
      %1097 = vmatprep.subr.bf16.mxu0 %v854
      %1098 = vmatpush1.bf16.msra.mxu0 %v853
      %1099 = vmatprep.subr.bf16.mxu0 %v846
      %1100 = vmatpush1.bf16.msra.mxu0 %v845
      %1101 = vmatprep.subr.bf16.mxu0 %v838
      %1102 = vmatpush1.bf16.msra.mxu0 %v837
      %1103 = vmatprep.subr.bf16.mxu0 %v830
      %1104 = vmatpush1.bf16.msra.mxu0 %v829
      %1105 = vmatprep.subr.bf16.mxu0 %v822
      %1106 = vmatpush1.bf16.msra.mxu0 %v821
      %1107 = vmatprep.subr.bf16.mxu0 %v814
      %1108 = vmatpush1.bf16.msra.mxu0 %v813
      %1109 = vmatprep.subr.bf16.mxu0 %v806
      %1110 = vmatpush1.bf16.msra.mxu0 %v805
      %1111 = vmatprep.subr.bf16.mxu0 %v798
      %1112 = vmatpush1.bf16.msra.mxu0 %v797
      %1113 = vmatprep.subr.bf16.mxu0 %v918
      %1114 = vmatpush2.bf16.msra.mxu0 %v917
      %1115 = vmatprep.subr.bf16.mxu0 %v910
      %1116 = vmatpush2.bf16.msra.mxu0 %v909
      %1117 = vmatprep.subr.bf16.mxu0 %v902
      %1118 = vmatpush2.bf16.msra.mxu0 %v901
      %1119 = vmatprep.subr.bf16.mxu0 %v894
      %1120 = vmatpush2.bf16.msra.mxu0 %v893
      %1121 = vmatprep.subr.bf16.mxu0 %v886
      %1122 = vmatpush2.bf16.msra.mxu0 %v885
      %1123 = vmatprep.subr.bf16.mxu0 %v878
      %1124 = vmatpush2.bf16.msra.mxu0 %v877
      %1125 = vmatprep.subr.bf16.mxu0 %v870
      %1126 = vmatpush2.bf16.msra.mxu0 %v869
      %1127 = vmatprep.subr.bf16.mxu0 %v862
      %1128 = vmatpush2.bf16.msra.mxu0 %v861
      %1129 = vmatprep.mubr.bf16.mxu0 %v282
      %1130 = vmatmul.mubr.bf16.gmra.mxu0 %v281
      %v1131 = vpop.f32.mrf.mxu0
      %v1132 = vadd.f32 %v1062, %v1131
      %v1133 = vpop.f32.mrf.mxu0
      %v1134 = vadd.f32 %v1070, %v1133
      %v1135 = vpop.f32.mrf.mxu0
      %v1136 = vpop.f32.mrf.mxu0
      %1137 = vdwg.mxu0
      %1138 = vmatprep.subr.bf16.mxu0 %v856
      %1139 = vmatpush1.bf16.msra.mxu0 %v855
      %1140 = vmatprep.subr.bf16.mxu0 %v848
      %1141 = vmatpush1.bf16.msra.mxu0 %v847
      %1142 = vmatprep.subr.bf16.mxu0 %v840
      %1143 = vmatpush1.bf16.msra.mxu0 %v839
      %1144 = vmatprep.subr.bf16.mxu0 %v832
      %1145 = vmatpush1.bf16.msra.mxu0 %v831
      %1146 = vmatprep.subr.bf16.mxu0 %v824
      %1147 = vmatpush1.bf16.msra.mxu0 %v823
      %1148 = vmatprep.subr.bf16.mxu0 %v816
      %1149 = vmatpush1.bf16.msra.mxu0 %v815
      %1150 = vmatprep.subr.bf16.mxu0 %v808
      %1151 = vmatpush1.bf16.msra.mxu0 %v807
      %1152 = vmatprep.subr.bf16.mxu0 %v800
      %1153 = vmatpush1.bf16.msra.mxu0 %v799
      %1154 = vmatprep.subr.bf16.mxu0 %v920
      %1155 = vmatpush2.bf16.msra.mxu0 %v919
      %1156 = vmatprep.subr.bf16.mxu0 %v912
      %1157 = vmatpush2.bf16.msra.mxu0 %v911
      %1158 = vmatprep.subr.bf16.mxu0 %v904
      %1159 = vmatpush2.bf16.msra.mxu0 %v903
      %1160 = vmatprep.subr.bf16.mxu0 %v896
      %1161 = vmatpush2.bf16.msra.mxu0 %v895
      %1162 = vmatprep.subr.bf16.mxu0 %v888
      %1163 = vmatpush2.bf16.msra.mxu0 %v887
      %1164 = vmatprep.subr.bf16.mxu0 %v880
      %1165 = vmatpush2.bf16.msra.mxu0 %v879
      %1166 = vmatprep.subr.bf16.mxu0 %v872
      %1167 = vmatpush2.bf16.msra.mxu0 %v871
      %1168 = vmatprep.subr.bf16.mxu0 %v864
      %1169 = vmatpush2.bf16.msra.mxu0 %v863
      %1170 = vmatprep.mubr.bf16.mxu0 %v282
      %1171 = vmatmul.mubr.bf16.gmra.mxu0 %v281
      %v1172 = vpop.f32.mrf.mxu0
      %v1173 = vadd.f32 %v1069, %v1172
      %v1174 = vpop.f32.mrf.mxu0
      %v1175 = vadd.f32 %v1071, %v1174
      %v1176 = vpop.f32.mrf.mxu0
      %v1177 = vpop.f32.mrf.mxu0
      %1178 = vdwg.mxu0
      %1179 = vmatprep.subr.bf16.mxu0 %v858
      %1180 = vmatpush1.bf16.msra.mxu0 %v857
      %1181 = vmatprep.subr.bf16.mxu0 %v850
      %1182 = vmatpush1.bf16.msra.mxu0 %v849
      %1183 = vmatprep.subr.bf16.mxu0 %v842
      %1184 = vmatpush1.bf16.msra.mxu0 %v841
      %1185 = vmatprep.subr.bf16.mxu0 %v834
      %1186 = vmatpush1.bf16.msra.mxu0 %v833
      %1187 = vmatprep.subr.bf16.mxu0 %v826
      %1188 = vmatpush1.bf16.msra.mxu0 %v825
      %1189 = vmatprep.subr.bf16.mxu0 %v818
      %1190 = vmatpush1.bf16.msra.mxu0 %v817
      %1191 = vmatprep.subr.bf16.mxu0 %v810
      %1192 = vmatpush1.bf16.msra.mxu0 %v809
      %1193 = vmatprep.subr.bf16.mxu0 %v802
      %1194 = vmatpush1.bf16.msra.mxu0 %v801
      %1195 = vmatprep.subr.bf16.mxu0 %v922
      %1196 = vmatpush2.bf16.msra.mxu0 %v921
      %1197 = vmatprep.subr.bf16.mxu0 %v914
      %1198 = vmatpush2.bf16.msra.mxu0 %v913
      %1199 = vmatprep.subr.bf16.mxu0 %v906
      %1200 = vmatpush2.bf16.msra.mxu0 %v905
      %1201 = vmatprep.subr.bf16.mxu0 %v898
      %1202 = vmatpush2.bf16.msra.mxu0 %v897
      %1203 = vmatprep.subr.bf16.mxu0 %v890
      %1204 = vmatpush2.bf16.msra.mxu0 %v889
      %1205 = vmatprep.subr.bf16.mxu0 %v882
      %1206 = vmatpush2.bf16.msra.mxu0 %v881
      %1207 = vmatprep.subr.bf16.mxu0 %v874
      %1208 = vmatpush2.bf16.msra.mxu0 %v873
      %1209 = vmatprep.subr.bf16.mxu0 %v866
      %1210 = vmatpush2.bf16.msra.mxu0 %v865
      %1211 = vmatprep.mubr.bf16.mxu0 %v282
      %1212 = vmatmul.mubr.bf16.gmra.mxu0 %v281
      %v1213 = vpop.f32.mrf.mxu0
      %v1214 = vadd.f32 %v1079, %v1213
      %v1215 = vpop.f32.mrf.mxu0
      %v1216 = vadd.f32 %v1087, %v1215
      %v1217 = vpop.f32.mrf.mxu0
      %v1218 = vpop.f32.mrf.mxu0
      %1219 = vdwg.mxu0
      %1220 = vmatprep.subr.bf16.mxu0 %v860
      %1221 = vmatpush1.bf16.msra.mxu0 %v859
      %1222 = vmatprep.subr.bf16.mxu0 %v852
      %1223 = vmatpush1.bf16.msra.mxu0 %v851
      %1224 = vmatprep.subr.bf16.mxu0 %v844
      %1225 = vmatpush1.bf16.msra.mxu0 %v843
      %1226 = vmatprep.subr.bf16.mxu0 %v836
      %1227 = vmatpush1.bf16.msra.mxu0 %v835
      %1228 = vmatprep.subr.bf16.mxu0 %v828
      %1229 = vmatpush1.bf16.msra.mxu0 %v827
      %1230 = vmatprep.subr.bf16.mxu0 %v820
      %1231 = vmatpush1.bf16.msra.mxu0 %v819
      %1232 = vmatprep.subr.bf16.mxu0 %v812
      %1233 = vmatpush1.bf16.msra.mxu0 %v811
      %1234 = vmatprep.subr.bf16.mxu0 %v804
      %1235 = vmatpush1.bf16.msra.mxu0 %v803
      %1236 = vmatprep.subr.bf16.mxu0 %v924
      %1237 = vmatpush2.bf16.msra.mxu0 %v923
      %1238 = vmatprep.subr.bf16.mxu0 %v916
      %1239 = vmatpush2.bf16.msra.mxu0 %v915
      %1240 = vmatprep.subr.bf16.mxu0 %v908
      %1241 = vmatpush2.bf16.msra.mxu0 %v907
      %1242 = vmatprep.subr.bf16.mxu0 %v900
      %1243 = vmatpush2.bf16.msra.mxu0 %v899
      %1244 = vmatprep.subr.bf16.mxu0 %v892
      %1245 = vmatpush2.bf16.msra.mxu0 %v891
      %1246 = vmatprep.subr.bf16.mxu0 %v884
      %1247 = vmatpush2.bf16.msra.mxu0 %v883
      %1248 = vmatprep.subr.bf16.mxu0 %v876
      %1249 = vmatpush2.bf16.msra.mxu0 %v875
      %1250 = vmatprep.subr.bf16.mxu0 %v868
      %1251 = vmatpush2.bf16.msra.mxu0 %v867
      %1252 = vmatprep.mubr.bf16.mxu0 %v282
      %1253 = vmatmul.mubr.bf16.gmra.mxu0 %v281
      %v1254 = vpop.f32.mrf.mxu0
      %v1255 = vadd.f32 %v1086, %v1254
      %v1256 = vpop.f32.mrf.mxu0
      %v1257 = vadd.f32 %v1088, %v1256
      %v1258 = vpop.f32.mrf.mxu0
      %v1259 = vpop.f32.mrf.mxu0
      %1260 = vdwg.mxu0
      %v1261 = vsub.f32 0.0, %v1132
      %v1262 = vsub.f32 0.0, %v1134
      %v1263 = vmul.f32 %v1261, 1.442695
      %v1264 = vpow.pop %v1263
      %v1265 = vmul.f32 %v1262, 1.442695
      %v1266 = vpow.pop %v1265
      %v1267 = vadd.f32 %v1264, 1.0
      %v1268 = vadd.f32 %v1266, 1.0
      %v1269 = vrcp.pop %v1267
      %v1270 = vmul.f32 1.0, %v1269
      %v1271 = vrcp.pop %v1268
      %v1272 = vmul.f32 1.0, %v1271
      %v1273 = vsub.f32 0.0, %v1173
      %v1274 = vsub.f32 0.0, %v1175
      %v1275 = vmul.f32 %v1273, 1.442695
      %v1276 = vpow.pop %v1275
      %v1277 = vmul.f32 %v1274, 1.442695
      %v1278 = vpow.pop %v1277
      %v1279 = vadd.f32 %v1276, 1.0
      %v1280 = vadd.f32 %v1278, 1.0
      %v1281 = vrcp.pop %v1279
      %v1282 = vmul.f32 1.0, %v1281
      %v1283 = vrcp.pop %v1280
      %v1284 = vmul.f32 1.0, %v1283
      %v1285 = vtanh.pop %v1214
      %v1286 = vtanh.pop %v1216
      %v1287 = vsub.f32 0.0, %v1255
      %v1288 = vsub.f32 0.0, %v1257
      %v1289 = vmul.f32 %v1287, 1.442695
      %v1290 = vpow.pop %v1289
      %v1291 = vmul.f32 %v1288, 1.442695
      %v1292 = vpow.pop %v1291
      %v1293 = vadd.f32 %v1290, 1.0
      %v1294 = vadd.f32 %v1292, 1.0
      %v1295 = vrcp.pop %v1293
      %v1296 = vmul.f32 1.0, %v1295
      %v1297 = vrcp.pop %v1294
      %v1298 = vmul.f32 1.0, %v1297
      %v1299 = vld [vmem:[#allocation3] sm:$0xf]
      %v1302 = vunpack.c.l.s4 1983009808
      %v1303 = vunpack.c.0.s8 %v1302
      %v1304 = vlaneseq
      %v1305 = vshrl.u32 %v1304, 7
      %v1306 = vsub.s32 %v1303, %v1305
      %v1307 = vrot.slane %v1299, %v1306
      %v1308 = vcombine.high %v1307, %v1307
      %v1311 = vmul.f32 %v1282, %v1307
      %v1312 = vmul.f32 %v1284, %v1308
      %v1313 = vmul.f32 %v1270, %v1285
      %v1314 = vmul.f32 %v1272, %v1286
      %v1315 = vadd.f32 %v1311, %v1313
      %v1316 = vadd.f32 %v1312, %v1314
      %v1317 = vtanh.pop %v1315
      %v1318 = vtanh.pop %v1316
      %v1319 = vmul.f32 %v1296, %v1317
      %v1320 = vmul.f32 %v1298, %v1318
      %v1323 = vcombine.low %v1315, %v1316
      %v1325 = vunpack.c.l.s4 1983009808
      %v1326 = vunpack.c.0.s8 %v1325
      %v1327 = vlaneseq
      %v1328 = vshrl.u32 %v1327, 7
      %v1329 = vsub.s32 %v1326, %v1328
      %v1330 = vrot.slane %v1323, %v1329
      %1332 = vst [vmem:[#allocation3] sm:$0xf] %v1330
      %v1335 = vcombine.low %v1319, %v1320
      %v1337 = vunpack.c.l.s4 1983009808
      %v1338 = vunpack.c.0.s8 %v1337
      %v1339 = vlaneseq
      %v1340 = vshrl.u32 %v1339, 7
      %v1341 = vsub.s32 %v1338, %v1340
      %v1342 = vrot.slane %v1335, %v1341
      %1344 = vst [vmem:[#allocation2] sm:$0xf] %v1342
      %1345 = vst [vmem:[%s256] sm:$0xf] %v1342
      %s1346 = ssub.s32 1, %s17
      %s1347 = smul.u32 %s1346, %s18
      %s1348 = ssub.s32 7, %s18
      %s1349 = smul.u32 %s17, %s1348
      %s1350 = sadd.s32 %s1347, %s1349
      %s1351 = smul.u32 2, %s17
      %p1352 = scmp.lt.s32.totalorder %s1350, 7
      %s1353 = scalar_select %p1352, %s1350, 7
      %p1354 = scmp.lt.s32.totalorder %s1351, 3
      %s1355 = scalar_select %p1354, %s1351, 3
      %s1356 = smul.addr %s1353, 4
      %s1357 = sadd.s32 %s1355, %s1356
      %s1358 = smul.addr %s1357, 2
      %s1359 = scalar_lea.vmem %s2, %s1358
      // Predicated region
      $region33: #{forward.28} parent=27 // pred_check
        %p1360 = pneg %p119
      $region34: #{forward.28} parent=27 // pred_check_branch
        %1362 = sbr.rel (%p1360) target = $region36
      $region35: #{forward.28} parent=27 // pred_region
        %s1363 = ssub.s32 1, %s17
        %s1364 = smul.u32 %s1363, %s18
        %s1365 = ssub.s32 7, %s18
        %s1366 = smul.u32 %s17, %s1365
        %s1367 = sadd.s32 %s1364, %s1366
        %s1368 = smul.u32 2, %s17
      $region36: #{forward.28} parent=27 // pred_fallthru
        _
    $region28: #{forward.28} parent=5 // pred_fallthru
      _
    %p1369 = scmp.le.s32.totalorder 2, %s8
    // Predicated region
    $region37: #{forward.28} parent=5 // pred_check
      %p1370 = pneg %p1369
    $region38: #{forward.28} parent=5 // pred_check_branch
      %1372 = sbr.rel (%p1370) target = $region40
    $region39: #{forward.28} parent=5 // pred_region
      %s1373 = ssub.s32 %s8, 2
      // Predicated region
      $region41: #{forward.28} parent=39 // pred_check
        %p1374 = pneg %p125
      $region42: #{forward.28} parent=39 // pred_check_branch
        %1376 = sbr.rel (%p1374) target = $region44
      $region43: #{forward.28} parent=39 // pred_region
        %s1377 = ssub.s32 1, %s19
        %s1378 = smul.u32 %s1377, %s20
        %s1379 = ssub.s32 7, %s20
        %s1380 = smul.u32 %s19, %s1379
        %s1381 = sadd.s32 %s1378, %s1380
        %s1382 = smul.u32 2, %s19
        %p1383 = scmp.lt.s32.totalorder %s1381, 7
        %s1384 = scalar_select %p1383, %s1381, 7
        %p1385 = scmp.lt.s32.totalorder %s1382, 3
        %s1386 = scalar_select %p1385, %s1382, 3
        %s1387 = smul.addr %s1384, 4
        %s1388 = sadd.s32 %s1386, %s1387
        %s1389 = smul.addr %s1388, 2
        %s1390 = scalar_lea.vmem %s2, %s1389
      $region44: #{forward.28} parent=39 // pred_fallthru
        _
    $region40: #{forward.28} parent=5 // pred_fallthru
      _
  $region6: #{forward.28} parent=0 // loop_footer
    %s12 = sadd.s32 1, %s8
  $region7: #{forward.28} parent=0 // loop_footer_branch
    %7 = sbr.rel target = $region3
  $region8: #{forward.28} parent=0 // loop_exit
    _

// kernel: forward.29
$region0: #{forward.29}
  #allocation0 [shape = 'u32[]', space=smem, size = 0x4, offset = 0x4, fixed_abs, tag = 'smem constant byte address 0x4 - core index']
  #allocation1 [shape = 'u32[144,128]{1,0:T(1,128)}', space=vmem, size = 0x12000, scoped, tag = 'internal scratch']
  %s0 = inlined_call_operand.vmem [shape: bf16[16,512], index: 0, kind: input, shape index: {}]
  %s1 = inlined_call_operand.vmem [shape: bf16[512,640], index: 1, kind: input, shape index: {}]
  %s2 = inlined_call_operand.vmem [shape: f32[1,640], index: 2, kind: input, shape index: {}]
  %s3 = inlined_call_operand.vmem [shape: bf16[640,640], index: 3, kind: input, shape index: {}]
  %s4 = inlined_call_operand.vmem [shape: f32[1,640], index: 4, kind: input, shape index: {}]
  %s5 = inlined_call_operand.vmem [shape: bf16[640,128], index: 5, kind: input, shape index: {}]
  %s6 = inlined_call_operand.vmem [shape: f32[1,128], index: 6, kind: input, shape index: {}]
  %s7 = inlined_call_operand.vmem [shape: f32[16,128], index: 7, kind: output, shape index: {}]
  %s8 = sld [smem:[#allocation0]]
  $region38: #{forward.29} parent=0
    _
  %s10 = ssub.s32 1, %s8
  %s11 = scalar_select 0, %s10, %s8
  // Predicated region
  $region2: #{forward.29} parent=0 // pred_check
    _
  $region3: #{forward.29} parent=0 // pred_check_branch
    %13 = sbr.rel (0) target = $region5
  $region4: #{forward.29} parent=0 // pred_region
    _
  $region5: #{forward.29} parent=0 // pred_fallthru
    _
  // Predicated region
  $region6: #{forward.29} parent=0 // pred_check
    _
  $region7: #{forward.29} parent=0 // pred_check_branch
    %15 = sbr.rel (0) target = $region9
  $region8: #{forward.29} parent=0 // pred_region
    _
  $region9: #{forward.29} parent=0 // pred_fallthru
    _
  // Predicated region
  $region10: #{forward.29} parent=0 // pred_check
    _
  $region11: #{forward.29} parent=0 // pred_check_branch
    %17 = sbr.rel (0) target = $region13
  $region12: #{forward.29} parent=0 // pred_region
    _
  $region13: #{forward.29} parent=0 // pred_fallthru
    _
  // Predicated region
  $region14: #{forward.29} parent=0 // pred_check
    _
  $region15: #{forward.29} parent=0 // pred_check_branch
    %19 = sbr.rel (0) target = $region17
  $region16: #{forward.29} parent=0 // pred_region
    _
  $region17: #{forward.29} parent=0 // pred_fallthru
    _
  // Predicated region
  $region18: #{forward.29} parent=0 // pred_check
    _
  $region19: #{forward.29} parent=0 // pred_check_branch
    %21 = sbr.rel (0) target = $region21
  $region20: #{forward.29} parent=0 // pred_region
    _
  $region21: #{forward.29} parent=0 // pred_fallthru
    _
  // Predicated region
  $region22: #{forward.29} parent=0 // pred_check
    _
  $region23: #{forward.29} parent=0 // pred_check_branch
    %23 = sbr.rel (0) target = $region25
  $region24: #{forward.29} parent=0 // pred_region
    _
  $region25: #{forward.29} parent=0 // pred_fallthru
    _
  // Predicated region
  $region26: #{forward.29} parent=0 // pred_check
    _
  $region27: #{forward.29} parent=0 // pred_check_branch
    %25 = sbr.rel (0) target = $region29
  $region28: #{forward.29} parent=0 // pred_region
    _
  $region29: #{forward.29} parent=0 // pred_fallthru
    _
  %v27 = vld [vmem:[%s0] sm:$0xff]
  %v28 = vld [vmem:[%s0 + $0x8] sm:$0xff]
  %v29 = vld [vmem:[%s0 + $0x10] sm:$0xff]
  %v30 = vld [vmem:[%s0 + $0x18] sm:$0xff]
  %v31 = vld [vmem:[%s1] sm:$0xff]
  %v32 = vld [vmem:[%s1 + $0x8] sm:$0xff]
  %v33 = vld [vmem:[%s1 + $0x10] sm:$0xf]
  %v34 = vld [vmem:[%s1 + $0x14] sm:$0xff]
  %v35 = vld [vmem:[%s1 + $0x1c] sm:$0xff]
  %v36 = vld [vmem:[%s1 + $0x24] sm:$0xf]
  %v37 = vld [vmem:[%s1 + $0x28] sm:$0xff]
  %v38 = vld [vmem:[%s1 + $0x30] sm:$0xff]
  %v39 = vld [vmem:[%s1 + $0x38] sm:$0xf]
  %v40 = vld [vmem:[%s1 + $0x3c] sm:$0xff]
  %v41 = vld [vmem:[%s1 + $0x44] sm:$0xff]
  %v42 = vld [vmem:[%s1 + $0x4c] sm:$0xf]
  %v43 = vld [vmem:[%s1 + $0x50] sm:$0xff]
  %v44 = vld [vmem:[%s1 + $0x58] sm:$0xff]
  %v45 = vld [vmem:[%s1 + $0x60] sm:$0xf]
  %v46 = vld [vmem:[%s1 + $0x64] sm:$0xff]
  %v47 = vld [vmem:[%s1 + $0x6c] sm:$0xff]
  %v48 = vld [vmem:[%s1 + $0x74] sm:$0xf]
  %v49 = vld [vmem:[%s1 + $0x78] sm:$0xff]
  %v50 = vld [vmem:[%s1 + $0x80] sm:$0xff]
  %v51 = vld [vmem:[%s1 + $0x88] sm:$0xf]
  %v52 = vld [vmem:[%s1 + $0x8c] sm:$0xff]
  %v53 = vld [vmem:[%s1 + $0x94] sm:$0xff]
  %v54 = vld [vmem:[%s1 + $0x9c] sm:$0xf]
  %v55 = vld [vmem:[%s1 + $0xa0] sm:$0xff]
  %v56 = vld [vmem:[%s1 + $0xa8] sm:$0xff]
  %v57 = vld [vmem:[%s1 + $0xb0] sm:$0xf]
  %v58 = vld [vmem:[%s1 + $0xb4] sm:$0xff]
  %v59 = vld [vmem:[%s1 + $0xbc] sm:$0xff]
  %v60 = vld [vmem:[%s1 + $0xc4] sm:$0xf]
  %v61 = vld [vmem:[%s1 + $0xc8] sm:$0xff]
  %v62 = vld [vmem:[%s1 + $0xd0] sm:$0xff]
  %v63 = vld [vmem:[%s1 + $0xd8] sm:$0xf]
  %v64 = vld [vmem:[%s1 + $0xdc] sm:$0xff]
  %v65 = vld [vmem:[%s1 + $0xe4] sm:$0xff]
  %v66 = vld [vmem:[%s1 + $0xec] sm:$0xf]
  %v67 = vld [vmem:[%s1 + $0xf0] sm:$0xff]
  %v68 = vld [vmem:[%s1 + $0xf8] sm:$0xff]
  %v69 = vld [vmem:[%s1 + $0x100] sm:$0xf]
  %v70 = vld [vmem:[%s1 + $0x104] sm:$0xff]
  %v71 = vld [vmem:[%s1 + $0x10c] sm:$0xff]
  %v72 = vld [vmem:[%s1 + $0x114] sm:$0xf]
  %v73 = vld [vmem:[%s1 + $0x118] sm:$0xff]
  %v74 = vld [vmem:[%s1 + $0x120] sm:$0xff]
  %v75 = vld [vmem:[%s1 + $0x128] sm:$0xf]
  %v76 = vld [vmem:[%s1 + $0x12c] sm:$0xff]
  %v77 = vld [vmem:[%s1 + $0x134] sm:$0xff]
  %v78 = vld [vmem:[%s1 + $0x13c] sm:$0xf]
  %v79 = vld [vmem:[%s1 + $0x140] sm:$0xff]
  %v80 = vld [vmem:[%s1 + $0x148] sm:$0xff]
  %v81 = vld [vmem:[%s1 + $0x150] sm:$0xf]
  %v82 = vld [vmem:[%s1 + $0x154] sm:$0xff]
  %v83 = vld [vmem:[%s1 + $0x15c] sm:$0xff]
  %v84 = vld [vmem:[%s1 + $0x164] sm:$0xf]
  %v85 = vld [vmem:[%s1 + $0x168] sm:$0xff]
  %v86 = vld [vmem:[%s1 + $0x170] sm:$0xff]
  %v87 = vld [vmem:[%s1 + $0x178] sm:$0xf]
  %v88 = vld [vmem:[%s1 + $0x17c] sm:$0xff]
  %v89 = vld [vmem:[%s1 + $0x184] sm:$0xff]
  %v90 = vld [vmem:[%s1 + $0x18c] sm:$0xf]
  %v91 = vld [vmem:[%s1 + $0x190] sm:$0xff]
  %v92 = vld [vmem:[%s1 + $0x198] sm:$0xff]
  %v93 = vld [vmem:[%s1 + $0x1a0] sm:$0xf]
  %v94 = vld [vmem:[%s1 + $0x1a4] sm:$0xff]
  %v95 = vld [vmem:[%s1 + $0x1ac] sm:$0xff]
  %v96 = vld [vmem:[%s1 + $0x1b4] sm:$0xf]
  %v97 = vld [vmem:[%s1 + $0x1b8] sm:$0xff]
  %v98 = vld [vmem:[%s1 + $0x1c0] sm:$0xff]
  %v99 = vld [vmem:[%s1 + $0x1c8] sm:$0xf]
  %v100 = vld [vmem:[%s1 + $0x1cc] sm:$0xff]
  %v101 = vld [vmem:[%s1 + $0x1d4] sm:$0xff]
  %v102 = vld [vmem:[%s1 + $0x1dc] sm:$0xf]
  %v103 = vld [vmem:[%s1 + $0x1e0] sm:$0xff]
  %v104 = vld [vmem:[%s1 + $0x1e8] sm:$0xff]
  %v105 = vld [vmem:[%s1 + $0x1f0] sm:$0xf]
  %v106 = vld [vmem:[%s1 + $0x1f4] sm:$0xff]
  %v107 = vld [vmem:[%s1 + $0x1fc] sm:$0xff]
  %v108 = vld [vmem:[%s1 + $0x204] sm:$0xf]
  %v109 = vld [vmem:[%s1 + $0x208] sm:$0xff]
  %v110 = vld [vmem:[%s1 + $0x210] sm:$0xff]
  %v111 = vld [vmem:[%s1 + $0x218] sm:$0xf]
  %v112 = vld [vmem:[%s1 + $0x21c] sm:$0xff]
  %v113 = vld [vmem:[%s1 + $0x224] sm:$0xff]
  %v114 = vld [vmem:[%s1 + $0x22c] sm:$0xf]
  %v115 = vld [vmem:[%s1 + $0x230] sm:$0xff]
  %v116 = vld [vmem:[%s1 + $0x238] sm:$0xff]
  %v117 = vld [vmem:[%s1 + $0x240] sm:$0xf]
  %v118 = vld [vmem:[%s1 + $0x244] sm:$0xff]
  %v119 = vld [vmem:[%s1 + $0x24c] sm:$0xff]
  %v120 = vld [vmem:[%s1 + $0x254] sm:$0xf]
  %v121 = vld [vmem:[%s1 + $0x258] sm:$0xff]
  %v122 = vld [vmem:[%s1 + $0x260] sm:$0xff]
  %v123 = vld [vmem:[%s1 + $0x268] sm:$0xf]
  %v124 = vld [vmem:[%s1 + $0x26c] sm:$0xff]
  %v125 = vld [vmem:[%s1 + $0x274] sm:$0xff]
  %v126 = vld [vmem:[%s1 + $0x27c] sm:$0xf]
  %v127 = vld [vmem:[%s1 + $0x280] sm:$0xff]
  %v128 = vld [vmem:[%s1 + $0x288] sm:$0xff]
  %v129 = vld [vmem:[%s1 + $0x290] sm:$0xf]
  %v130 = vld [vmem:[%s1 + $0x294] sm:$0xff]
  %v131 = vld [vmem:[%s1 + $0x29c] sm:$0xff]
  %v132 = vld [vmem:[%s1 + $0x2a4] sm:$0xf]
  %v133 = vld [vmem:[%s1 + $0x2a8] sm:$0xff]
  %v134 = vld [vmem:[%s1 + $0x2b0] sm:$0xff]
  %v135 = vld [vmem:[%s1 + $0x2b8] sm:$0xf]
  %v136 = vld [vmem:[%s1 + $0x2bc] sm:$0xff]
  %v137 = vld [vmem:[%s1 + $0x2c4] sm:$0xff]
  %v138 = vld [vmem:[%s1 + $0x2cc] sm:$0xf]
  %v139 = vld [vmem:[%s1 + $0x2d0] sm:$0xff]
  %v140 = vld [vmem:[%s1 + $0x2d8] sm:$0xff]
  %v141 = vld [vmem:[%s1 + $0x2e0] sm:$0xf]
  %v142 = vld [vmem:[%s1 + $0x2e4] sm:$0xff]
  %v143 = vld [vmem:[%s1 + $0x2ec] sm:$0xff]
  %v144 = vld [vmem:[%s1 + $0x2f4] sm:$0xf]
  %v145 = vld [vmem:[%s1 + $0x2f8] sm:$0xff]
  %v146 = vld [vmem:[%s1 + $0x300] sm:$0xff]
  %v147 = vld [vmem:[%s1 + $0x308] sm:$0xf]
  %v148 = vld [vmem:[%s1 + $0x30c] sm:$0xff]
  %v149 = vld [vmem:[%s1 + $0x314] sm:$0xff]
  %v150 = vld [vmem:[%s1 + $0x31c] sm:$0xf]
  %v151 = vld [vmem:[%s1 + $0x320] sm:$0xff]
  %v152 = vld [vmem:[%s1 + $0x328] sm:$0xff]
  %v153 = vld [vmem:[%s1 + $0x330] sm:$0xf]
  %v154 = vld [vmem:[%s1 + $0x334] sm:$0xff]
  %v155 = vld [vmem:[%s1 + $0x33c] sm:$0xff]
  %v156 = vld [vmem:[%s1 + $0x344] sm:$0xf]
  %v157 = vld [vmem:[%s1 + $0x348] sm:$0xff]
  %v158 = vld [vmem:[%s1 + $0x350] sm:$0xff]
  %v159 = vld [vmem:[%s1 + $0x358] sm:$0xf]
  %v160 = vld [vmem:[%s1 + $0x35c] sm:$0xff]
  %v161 = vld [vmem:[%s1 + $0x364] sm:$0xff]
  %v162 = vld [vmem:[%s1 + $0x36c] sm:$0xf]
  %v163 = vld [vmem:[%s1 + $0x370] sm:$0xff]
  %v164 = vld [vmem:[%s1 + $0x378] sm:$0xff]
  %v165 = vld [vmem:[%s1 + $0x380] sm:$0xf]
  %v166 = vld [vmem:[%s1 + $0x384] sm:$0xff]
  %v167 = vld [vmem:[%s1 + $0x38c] sm:$0xff]
  %v168 = vld [vmem:[%s1 + $0x394] sm:$0xf]
  %v169 = vld [vmem:[%s1 + $0x398] sm:$0xff]
  %v170 = vld [vmem:[%s1 + $0x3a0] sm:$0xff]
  %v171 = vld [vmem:[%s1 + $0x3a8] sm:$0xf]
  %v172 = vld [vmem:[%s1 + $0x3ac] sm:$0xff]
  %v173 = vld [vmem:[%s1 + $0x3b4] sm:$0xff]
  %v174 = vld [vmem:[%s1 + $0x3bc] sm:$0xf]
  %v175 = vld [vmem:[%s1 + $0x3c0] sm:$0xff]
  %v176 = vld [vmem:[%s1 + $0x3c8] sm:$0xff]
  %v177 = vld [vmem:[%s1 + $0x3d0] sm:$0xf]
  %v178 = vld [vmem:[%s1 + $0x3d4] sm:$0xff]
  %v179 = vld [vmem:[%s1 + $0x3dc] sm:$0xff]
  %v180 = vld [vmem:[%s1 + $0x3e4] sm:$0xf]
  %v181 = vld [vmem:[%s1 + $0x3e8] sm:$0xff]
  %v182 = vld [vmem:[%s1 + $0x3f0] sm:$0xff]
  %v183 = vld [vmem:[%s1 + $0x3f8] sm:$0xf]
  %v184 = vld [vmem:[%s1 + $0x3fc] sm:$0xff]
  %v185 = vld [vmem:[%s1 + $0x404] sm:$0xff]
  %v186 = vld [vmem:[%s1 + $0x40c] sm:$0xf]
  %v187 = vld [vmem:[%s1 + $0x410] sm:$0xff]
  %v188 = vld [vmem:[%s1 + $0x418] sm:$0xff]
  %v189 = vld [vmem:[%s1 + $0x420] sm:$0xf]
  %v190 = vld [vmem:[%s1 + $0x424] sm:$0xff]
  %v191 = vld [vmem:[%s1 + $0x42c] sm:$0xff]
  %v192 = vld [vmem:[%s1 + $0x434] sm:$0xf]
  %v193 = vld [vmem:[%s1 + $0x438] sm:$0xff]
  %v194 = vld [vmem:[%s1 + $0x440] sm:$0xff]
  %v195 = vld [vmem:[%s1 + $0x448] sm:$0xf]
  %v196 = vld [vmem:[%s1 + $0x44c] sm:$0xff]
  %v197 = vld [vmem:[%s1 + $0x454] sm:$0xff]
  %v198 = vld [vmem:[%s1 + $0x45c] sm:$0xf]
  %v199 = vld [vmem:[%s1 + $0x460] sm:$0xff]
  %v200 = vld [vmem:[%s1 + $0x468] sm:$0xff]
  %v201 = vld [vmem:[%s1 + $0x470] sm:$0xf]
  %v202 = vld [vmem:[%s1 + $0x474] sm:$0xff]
  %v203 = vld [vmem:[%s1 + $0x47c] sm:$0xff]
  %v204 = vld [vmem:[%s1 + $0x484] sm:$0xf]
  %v205 = vld [vmem:[%s1 + $0x488] sm:$0xff]
  %v206 = vld [vmem:[%s1 + $0x490] sm:$0xff]
  %v207 = vld [vmem:[%s1 + $0x498] sm:$0xf]
  %v208 = vld [vmem:[%s1 + $0x49c] sm:$0xff]
  %v209 = vld [vmem:[%s1 + $0x4a4] sm:$0xff]
  %v210 = vld [vmem:[%s1 + $0x4ac] sm:$0xf]
  %v211 = vld [vmem:[%s1 + $0x4b0] sm:$0xff]
  %v212 = vld [vmem:[%s1 + $0x4b8] sm:$0xff]
  %v213 = vld [vmem:[%s1 + $0x4c0] sm:$0xf]
  %v214 = vld [vmem:[%s1 + $0x4c4] sm:$0xff]
  %v215 = vld [vmem:[%s1 + $0x4cc] sm:$0xff]
  %v216 = vld [vmem:[%s1 + $0x4d4] sm:$0xf]
  %v217 = vld [vmem:[%s1 + $0x4d8] sm:$0xff]
  %v218 = vld [vmem:[%s1 + $0x4e0] sm:$0xff]
  %v219 = vld [vmem:[%s1 + $0x4e8] sm:$0xf]
  %v220 = vld [vmem:[%s1 + $0x4ec] sm:$0xff]
  %v221 = vld [vmem:[%s1 + $0x4f4] sm:$0xff]
  %v222 = vld [vmem:[%s1 + $0x4fc] sm:$0xf]
  %v223 = vld [vmem:[%s2] sm:$0x1f]
  %v225 = vlaneseq
  %v226 = vshrl.u32 %v225, 7
  %v227 = vsub.s32 0, %v226
  %v228 = vrot.slane %v223, %v227
  %v229 = vlaneseq
  %v230 = vshrl.u32 %v229, 7
  %v231 = vsub.s32 1, %v230
  %v232 = vrot.slane %v223, %v231
  %v233 = vlaneseq
  %v234 = vshrl.u32 %v233, 7
  %v235 = vsub.s32 2, %v234
  %v236 = vrot.slane %v223, %v235
  %v237 = vlaneseq
  %v238 = vshrl.u32 %v237, 7
  %v239 = vsub.s32 3, %v238
  %v240 = vrot.slane %v223, %v239
  %v241 = vlaneseq
  %v242 = vshrl.u32 %v241, 7
  %v243 = vsub.s32 4, %v242
  %v244 = vrot.slane %v223, %v243
  %v254 = vunpack.c.l.b16 %v27
  %v255 = vunpack.c.h.b16 %v27
  %v256 = vunpack.c.l.b16 %v28
  %v257 = vunpack.c.h.b16 %v28
  %v258 = vunpack.c.l.b16 %v29
  %v259 = vunpack.c.h.b16 %v29
  %v260 = vunpack.c.l.b16 %v30
  %v261 = vunpack.c.h.b16 %v30
  %v262 = vpack.c.b16 %v258, %v254
  %v263 = vpack.c.b16 %v259, %v255
  %v264 = vpack.c.b16 %v260, %v256
  %v265 = vpack.c.b16 %v261, %v257
  %v462 = vunpack.c.l.b16 %v31
  %v463 = vunpack.c.h.b16 %v31
  %v464 = vunpack.c.l.b16 %v32
  %v465 = vunpack.c.h.b16 %v32
  %v466 = vunpack.c.l.b16 %v33
  %v467 = vunpack.c.l.b16 %v34
  %v468 = vunpack.c.h.b16 %v34
  %v469 = vunpack.c.l.b16 %v35
  %v470 = vunpack.c.h.b16 %v35
  %v471 = vunpack.c.l.b16 %v36
  %v472 = vunpack.c.l.b16 %v37
  %v473 = vunpack.c.h.b16 %v37
  %v474 = vunpack.c.l.b16 %v38
  %v475 = vunpack.c.h.b16 %v38
  %v476 = vunpack.c.l.b16 %v39
  %v477 = vunpack.c.l.b16 %v40
  %v478 = vunpack.c.h.b16 %v40
  %v479 = vunpack.c.l.b16 %v41
  %v480 = vunpack.c.h.b16 %v41
  %v481 = vunpack.c.l.b16 %v42
  %v482 = vunpack.c.l.b16 %v43
  %v483 = vunpack.c.h.b16 %v43
  %v484 = vunpack.c.l.b16 %v44
  %v485 = vunpack.c.h.b16 %v44
  %v486 = vunpack.c.l.b16 %v45
  %v487 = vunpack.c.l.b16 %v46
  %v488 = vunpack.c.h.b16 %v46
  %v489 = vunpack.c.l.b16 %v47
  %v490 = vunpack.c.h.b16 %v47
  %v491 = vunpack.c.l.b16 %v48
  %v492 = vunpack.c.l.b16 %v49
  %v493 = vunpack.c.h.b16 %v49
  %v494 = vunpack.c.l.b16 %v50
  %v495 = vunpack.c.h.b16 %v50
  %v496 = vunpack.c.l.b16 %v51
  %v497 = vunpack.c.l.b16 %v52
  %v498 = vunpack.c.h.b16 %v52
  %v499 = vunpack.c.l.b16 %v53
  %v500 = vunpack.c.h.b16 %v53
  %v501 = vunpack.c.l.b16 %v54
  %v502 = vunpack.c.l.b16 %v55
  %v503 = vunpack.c.h.b16 %v55
  %v504 = vunpack.c.l.b16 %v56
  %v505 = vunpack.c.h.b16 %v56
  %v506 = vunpack.c.l.b16 %v57
  %v507 = vunpack.c.l.b16 %v58
  %v508 = vunpack.c.h.b16 %v58
  %v509 = vunpack.c.l.b16 %v59
  %v510 = vunpack.c.h.b16 %v59
  %v511 = vunpack.c.l.b16 %v60
  %v512 = vunpack.c.l.b16 %v61
  %v513 = vunpack.c.h.b16 %v61
  %v514 = vunpack.c.l.b16 %v62
  %v515 = vunpack.c.h.b16 %v62
  %v516 = vunpack.c.l.b16 %v63
  %v517 = vunpack.c.l.b16 %v64
  %v518 = vunpack.c.h.b16 %v64
  %v519 = vunpack.c.l.b16 %v65
  %v520 = vunpack.c.h.b16 %v65
  %v521 = vunpack.c.l.b16 %v66
  %v522 = vunpack.c.l.b16 %v67
  %v523 = vunpack.c.h.b16 %v67
  %v524 = vunpack.c.l.b16 %v68
  %v525 = vunpack.c.h.b16 %v68
  %v526 = vunpack.c.l.b16 %v69
  %v527 = vunpack.c.l.b16 %v70
  %v528 = vunpack.c.h.b16 %v70
  %v529 = vunpack.c.l.b16 %v71
  %v530 = vunpack.c.h.b16 %v71
  %v531 = vunpack.c.l.b16 %v72
  %v532 = vunpack.c.l.b16 %v73
  %v533 = vunpack.c.h.b16 %v73
  %v534 = vunpack.c.l.b16 %v74
  %v535 = vunpack.c.h.b16 %v74
  %v536 = vunpack.c.l.b16 %v75
  %v537 = vunpack.c.l.b16 %v76
  %v538 = vunpack.c.h.b16 %v76
  %v539 = vunpack.c.l.b16 %v77
  %v540 = vunpack.c.h.b16 %v77
  %v541 = vunpack.c.l.b16 %v78
  %v542 = vunpack.c.l.b16 %v79
  %v543 = vunpack.c.h.b16 %v79
  %v544 = vunpack.c.l.b16 %v80
  %v545 = vunpack.c.h.b16 %v80
  %v546 = vunpack.c.l.b16 %v81
  %v547 = vunpack.c.l.b16 %v82
  %v548 = vunpack.c.h.b16 %v82
  %v549 = vunpack.c.l.b16 %v83
  %v550 = vunpack.c.h.b16 %v83
  %v551 = vunpack.c.l.b16 %v84
  %v552 = vunpack.c.l.b16 %v85
  %v553 = vunpack.c.h.b16 %v85
  %v554 = vunpack.c.l.b16 %v86
  %v555 = vunpack.c.h.b16 %v86
  %v556 = vunpack.c.l.b16 %v87
  %v557 = vunpack.c.l.b16 %v88
  %v558 = vunpack.c.h.b16 %v88
  %v559 = vunpack.c.l.b16 %v89
  %v560 = vunpack.c.h.b16 %v89
  %v561 = vunpack.c.l.b16 %v90
  %v562 = vunpack.c.l.b16 %v91
  %v563 = vunpack.c.h.b16 %v91
  %v564 = vunpack.c.l.b16 %v92
  %v565 = vunpack.c.h.b16 %v92
  %v566 = vunpack.c.l.b16 %v93
  %v567 = vunpack.c.l.b16 %v94
  %v568 = vunpack.c.h.b16 %v94
  %v569 = vunpack.c.l.b16 %v95
  %v570 = vunpack.c.h.b16 %v95
  %v571 = vunpack.c.l.b16 %v96
  %v572 = vunpack.c.l.b16 %v97
  %v573 = vunpack.c.h.b16 %v97
  %v574 = vunpack.c.l.b16 %v98
  %v575 = vunpack.c.h.b16 %v98
  %v576 = vunpack.c.l.b16 %v99
  %v577 = vunpack.c.l.b16 %v100
  %v578 = vunpack.c.h.b16 %v100
  %v579 = vunpack.c.l.b16 %v101
  %v580 = vunpack.c.h.b16 %v101
  %v581 = vunpack.c.l.b16 %v102
  %v582 = vunpack.c.l.b16 %v103
  %v583 = vunpack.c.h.b16 %v103
  %v584 = vunpack.c.l.b16 %v104
  %v585 = vunpack.c.h.b16 %v104
  %v586 = vunpack.c.l.b16 %v105
  %v587 = vunpack.c.l.b16 %v106
  %v588 = vunpack.c.h.b16 %v106
  %v589 = vunpack.c.l.b16 %v107
  %v590 = vunpack.c.h.b16 %v107
  %v591 = vunpack.c.l.b16 %v108
  %v592 = vunpack.c.l.b16 %v109
  %v593 = vunpack.c.h.b16 %v109
  %v594 = vunpack.c.l.b16 %v110
  %v595 = vunpack.c.h.b16 %v110
  %v596 = vunpack.c.l.b16 %v111
  %v597 = vunpack.c.l.b16 %v112
  %v598 = vunpack.c.h.b16 %v112
  %v599 = vunpack.c.l.b16 %v113
  %v600 = vunpack.c.h.b16 %v113
  %v601 = vunpack.c.l.b16 %v114
  %v602 = vunpack.c.l.b16 %v115
  %v603 = vunpack.c.h.b16 %v115
  %v604 = vunpack.c.l.b16 %v116
  %v605 = vunpack.c.h.b16 %v116
  %v606 = vunpack.c.l.b16 %v117
  %v607 = vunpack.c.l.b16 %v118
  %v608 = vunpack.c.h.b16 %v118
  %v609 = vunpack.c.l.b16 %v119
  %v610 = vunpack.c.h.b16 %v119
  %v611 = vunpack.c.l.b16 %v120
  %v612 = vunpack.c.l.b16 %v121
  %v613 = vunpack.c.h.b16 %v121
  %v614 = vunpack.c.l.b16 %v122
  %v615 = vunpack.c.h.b16 %v122
  %v616 = vunpack.c.l.b16 %v123
  %v617 = vunpack.c.l.b16 %v124
  %v618 = vunpack.c.h.b16 %v124
  %v619 = vunpack.c.l.b16 %v125
  %v620 = vunpack.c.h.b16 %v125
  %v621 = vunpack.c.l.b16 %v126
  %v622 = vunpack.c.l.b16 %v127
  %v623 = vunpack.c.h.b16 %v127
  %v624 = vunpack.c.l.b16 %v128
  %v625 = vunpack.c.h.b16 %v128
  %v626 = vunpack.c.l.b16 %v129
  %v627 = vunpack.c.l.b16 %v130
  %v628 = vunpack.c.h.b16 %v130
  %v629 = vunpack.c.l.b16 %v131
  %v630 = vunpack.c.h.b16 %v131
  %v631 = vunpack.c.l.b16 %v132
  %v632 = vunpack.c.l.b16 %v133
  %v633 = vunpack.c.h.b16 %v133
  %v634 = vunpack.c.l.b16 %v134
  %v635 = vunpack.c.h.b16 %v134
  %v636 = vunpack.c.l.b16 %v135
  %v637 = vunpack.c.l.b16 %v136
  %v638 = vunpack.c.h.b16 %v136
  %v639 = vunpack.c.l.b16 %v137
  %v640 = vunpack.c.h.b16 %v137
  %v641 = vunpack.c.l.b16 %v138
  %v642 = vunpack.c.l.b16 %v139
  %v643 = vunpack.c.h.b16 %v139
  %v644 = vunpack.c.l.b16 %v140
  %v645 = vunpack.c.h.b16 %v140
  %v646 = vunpack.c.l.b16 %v141
  %v647 = vunpack.c.l.b16 %v142
  %v648 = vunpack.c.h.b16 %v142
  %v649 = vunpack.c.l.b16 %v143
  %v650 = vunpack.c.h.b16 %v143
  %v651 = vunpack.c.l.b16 %v144
  %v652 = vunpack.c.l.b16 %v145
  %v653 = vunpack.c.h.b16 %v145
  %v654 = vunpack.c.l.b16 %v146
  %v655 = vunpack.c.h.b16 %v146
  %v656 = vunpack.c.l.b16 %v147
  %v657 = vunpack.c.l.b16 %v148
  %v658 = vunpack.c.h.b16 %v148
  %v659 = vunpack.c.l.b16 %v149
  %v660 = vunpack.c.h.b16 %v149
  %v661 = vunpack.c.l.b16 %v150
  %v662 = vunpack.c.l.b16 %v151
  %v663 = vunpack.c.h.b16 %v151
  %v664 = vunpack.c.l.b16 %v152
  %v665 = vunpack.c.h.b16 %v152
  %v666 = vunpack.c.l.b16 %v153
  %v667 = vunpack.c.l.b16 %v154
  %v668 = vunpack.c.h.b16 %v154
  %v669 = vunpack.c.l.b16 %v155
  %v670 = vunpack.c.h.b16 %v155
  %v671 = vunpack.c.l.b16 %v156
  %v672 = vunpack.c.l.b16 %v157
  %v673 = vunpack.c.h.b16 %v157
  %v674 = vunpack.c.l.b16 %v158
  %v675 = vunpack.c.h.b16 %v158
  %v676 = vunpack.c.l.b16 %v159
  %v677 = vunpack.c.l.b16 %v160
  %v678 = vunpack.c.h.b16 %v160
  %v679 = vunpack.c.l.b16 %v161
  %v680 = vunpack.c.h.b16 %v161
  %v681 = vunpack.c.l.b16 %v162
  %v682 = vunpack.c.l.b16 %v163
  %v683 = vunpack.c.h.b16 %v163
  %v684 = vunpack.c.l.b16 %v164
  %v685 = vunpack.c.h.b16 %v164
  %v686 = vunpack.c.l.b16 %v165
  %v687 = vunpack.c.l.b16 %v166
  %v688 = vunpack.c.h.b16 %v166
  %v689 = vunpack.c.l.b16 %v167
  %v690 = vunpack.c.h.b16 %v167
  %v691 = vunpack.c.l.b16 %v168
  %v692 = vunpack.c.l.b16 %v169
  %v693 = vunpack.c.h.b16 %v169
  %v694 = vunpack.c.l.b16 %v170
  %v695 = vunpack.c.h.b16 %v170
  %v696 = vunpack.c.l.b16 %v171
  %v697 = vunpack.c.l.b16 %v172
  %v698 = vunpack.c.h.b16 %v172
  %v699 = vunpack.c.l.b16 %v173
  %v700 = vunpack.c.h.b16 %v173
  %v701 = vunpack.c.l.b16 %v174
  %v702 = vunpack.c.l.b16 %v175
  %v703 = vunpack.c.h.b16 %v175
  %v704 = vunpack.c.l.b16 %v176
  %v705 = vunpack.c.h.b16 %v176
  %v706 = vunpack.c.l.b16 %v177
  %v707 = vunpack.c.l.b16 %v178
  %v708 = vunpack.c.h.b16 %v178
  %v709 = vunpack.c.l.b16 %v179
  %v710 = vunpack.c.h.b16 %v179
  %v711 = vunpack.c.l.b16 %v180
  %v712 = vunpack.c.l.b16 %v181
  %v713 = vunpack.c.h.b16 %v181
  %v714 = vunpack.c.l.b16 %v182
  %v715 = vunpack.c.h.b16 %v182
  %v716 = vunpack.c.l.b16 %v183
  %v717 = vunpack.c.l.b16 %v184
  %v718 = vunpack.c.h.b16 %v184
  %v719 = vunpack.c.l.b16 %v185
  %v720 = vunpack.c.h.b16 %v185
  %v721 = vunpack.c.l.b16 %v186
  %v722 = vunpack.c.l.b16 %v187
  %v723 = vunpack.c.h.b16 %v187
  %v724 = vunpack.c.l.b16 %v188
  %v725 = vunpack.c.h.b16 %v188
  %v726 = vunpack.c.l.b16 %v189
  %v727 = vunpack.c.l.b16 %v190
  %v728 = vunpack.c.h.b16 %v190
  %v729 = vunpack.c.l.b16 %v191
  %v730 = vunpack.c.h.b16 %v191
  %v731 = vunpack.c.l.b16 %v192
  %v732 = vunpack.c.l.b16 %v193
  %v733 = vunpack.c.h.b16 %v193
  %v734 = vunpack.c.l.b16 %v194
  %v735 = vunpack.c.h.b16 %v194
  %v736 = vunpack.c.l.b16 %v195
  %v737 = vunpack.c.l.b16 %v196
  %v738 = vunpack.c.h.b16 %v196
  %v739 = vunpack.c.l.b16 %v197
  %v740 = vunpack.c.h.b16 %v197
  %v741 = vunpack.c.l.b16 %v198
  %v742 = vunpack.c.l.b16 %v199
  %v743 = vunpack.c.h.b16 %v199
  %v744 = vunpack.c.l.b16 %v200
  %v745 = vunpack.c.h.b16 %v200
  %v746 = vunpack.c.l.b16 %v201
  %v747 = vunpack.c.l.b16 %v202
  %v748 = vunpack.c.h.b16 %v202
  %v749 = vunpack.c.l.b16 %v203
  %v750 = vunpack.c.h.b16 %v203
  %v751 = vunpack.c.l.b16 %v204
  %v752 = vunpack.c.l.b16 %v205
  %v753 = vunpack.c.h.b16 %v205
  %v754 = vunpack.c.l.b16 %v206
  %v755 = vunpack.c.h.b16 %v206
  %v756 = vunpack.c.l.b16 %v207
  %v757 = vunpack.c.l.b16 %v208
  %v758 = vunpack.c.h.b16 %v208
  %v759 = vunpack.c.l.b16 %v209
  %v760 = vunpack.c.h.b16 %v209
  %v761 = vunpack.c.l.b16 %v210
  %v762 = vunpack.c.l.b16 %v211
  %v763 = vunpack.c.h.b16 %v211
  %v764 = vunpack.c.l.b16 %v212
  %v765 = vunpack.c.h.b16 %v212
  %v766 = vunpack.c.l.b16 %v213
  %v767 = vunpack.c.l.b16 %v214
  %v768 = vunpack.c.h.b16 %v214
  %v769 = vunpack.c.l.b16 %v215
  %v770 = vunpack.c.h.b16 %v215
  %v771 = vunpack.c.l.b16 %v216
  %v772 = vunpack.c.l.b16 %v217
  %v773 = vunpack.c.h.b16 %v217
  %v774 = vunpack.c.l.b16 %v218
  %v775 = vunpack.c.h.b16 %v218
  %v776 = vunpack.c.l.b16 %v219
  %v777 = vunpack.c.l.b16 %v220
  %v778 = vunpack.c.h.b16 %v220
  %v779 = vunpack.c.l.b16 %v221
  %v780 = vunpack.c.h.b16 %v221
  %v781 = vunpack.c.l.b16 %v222
  %v782 = vpack.c.b16 %v467, %v462
  %v783 = vpack.c.b16 %v468, %v463
  %v784 = vpack.c.b16 %v469, %v464
  %v785 = vpack.c.b16 %v470, %v465
  %v786 = vpack.c.b16 %v471, %v466
  %v787 = vpack.c.b16 %v477, %v472
  %v788 = vpack.c.b16 %v478, %v473
  %v789 = vpack.c.b16 %v479, %v474
  %v790 = vpack.c.b16 %v480, %v475
  %v791 = vpack.c.b16 %v481, %v476
  %v792 = vpack.c.b16 %v487, %v482
  %v793 = vpack.c.b16 %v488, %v483
  %v794 = vpack.c.b16 %v489, %v484
  %v795 = vpack.c.b16 %v490, %v485
  %v796 = vpack.c.b16 %v491, %v486
  %v797 = vpack.c.b16 %v497, %v492
  %v798 = vpack.c.b16 %v498, %v493
  %v799 = vpack.c.b16 %v499, %v494
  %v800 = vpack.c.b16 %v500, %v495
  %v801 = vpack.c.b16 %v501, %v496
  %v802 = vpack.c.b16 %v507, %v502
  %v803 = vpack.c.b16 %v508, %v503
  %v804 = vpack.c.b16 %v509, %v504
  %v805 = vpack.c.b16 %v510, %v505
  %v806 = vpack.c.b16 %v511, %v506
  %v807 = vpack.c.b16 %v517, %v512
  %v808 = vpack.c.b16 %v518, %v513
  %v809 = vpack.c.b16 %v519, %v514
  %v810 = vpack.c.b16 %v520, %v515
  %v811 = vpack.c.b16 %v521, %v516
  %v812 = vpack.c.b16 %v527, %v522
  %v813 = vpack.c.b16 %v528, %v523
  %v814 = vpack.c.b16 %v529, %v524
  %v815 = vpack.c.b16 %v530, %v525
  %v816 = vpack.c.b16 %v531, %v526
  %v817 = vpack.c.b16 %v537, %v532
  %v818 = vpack.c.b16 %v538, %v533
  %v819 = vpack.c.b16 %v539, %v534
  %v820 = vpack.c.b16 %v540, %v535
  %v821 = vpack.c.b16 %v541, %v536
  %v822 = vpack.c.b16 %v547, %v542
  %v823 = vpack.c.b16 %v548, %v543
  %v824 = vpack.c.b16 %v549, %v544
  %v825 = vpack.c.b16 %v550, %v545
  %v826 = vpack.c.b16 %v551, %v546
  %v827 = vpack.c.b16 %v557, %v552
  %v828 = vpack.c.b16 %v558, %v553
  %v829 = vpack.c.b16 %v559, %v554
  %v830 = vpack.c.b16 %v560, %v555
  %v831 = vpack.c.b16 %v561, %v556
  %v832 = vpack.c.b16 %v567, %v562
  %v833 = vpack.c.b16 %v568, %v563
  %v834 = vpack.c.b16 %v569, %v564
  %v835 = vpack.c.b16 %v570, %v565
  %v836 = vpack.c.b16 %v571, %v566
  %v837 = vpack.c.b16 %v577, %v572
  %v838 = vpack.c.b16 %v578, %v573
  %v839 = vpack.c.b16 %v579, %v574
  %v840 = vpack.c.b16 %v580, %v575
  %v841 = vpack.c.b16 %v581, %v576
  %v842 = vpack.c.b16 %v587, %v582
  %v843 = vpack.c.b16 %v588, %v583
  %v844 = vpack.c.b16 %v589, %v584
  %v845 = vpack.c.b16 %v590, %v585
  %v846 = vpack.c.b16 %v591, %v586
  %v847 = vpack.c.b16 %v597, %v592
  %v848 = vpack.c.b16 %v598, %v593
  %v849 = vpack.c.b16 %v599, %v594
  %v850 = vpack.c.b16 %v600, %v595
  %v851 = vpack.c.b16 %v601, %v596
  %v852 = vpack.c.b16 %v607, %v602
  %v853 = vpack.c.b16 %v608, %v603
  %v854 = vpack.c.b16 %v609, %v604
  %v855 = vpack.c.b16 %v610, %v605
  %v856 = vpack.c.b16 %v611, %v606
  %v857 = vpack.c.b16 %v617, %v612
  %v858 = vpack.c.b16 %v618, %v613
  %v859 = vpack.c.b16 %v619, %v614
  %v860 = vpack.c.b16 %v620, %v615
  %v861 = vpack.c.b16 %v621, %v616
  %v862 = vpack.c.b16 %v627, %v622
  %v863 = vpack.c.b16 %v628, %v623
  %v864 = vpack.c.b16 %v629, %v624
  %v865 = vpack.c.b16 %v630, %v625
  %v866 = vpack.c.b16 %v631, %v626
  %v867 = vpack.c.b16 %v637, %v632
  %v868 = vpack.c.b16 %v638, %v633
  %v869 = vpack.c.b16 %v639, %v634
  %v870 = vpack.c.b16 %v640, %v635
  %v871 = vpack.c.b16 %v641, %v636
  %v872 = vpack.c.b16 %v647, %v642
  %v873 = vpack.c.b16 %v648, %v643
  %v874 = vpack.c.b16 %v649, %v644
  %v875 = vpack.c.b16 %v650, %v645
  %v876 = vpack.c.b16 %v651, %v646
  %v877 = vpack.c.b16 %v657, %v652
  %v878 = vpack.c.b16 %v658, %v653
  %v879 = vpack.c.b16 %v659, %v654
  %v880 = vpack.c.b16 %v660, %v655
  %v881 = vpack.c.b16 %v661, %v656
  %v882 = vpack.c.b16 %v667, %v662
  %v883 = vpack.c.b16 %v668, %v663
  %v884 = vpack.c.b16 %v669, %v664
  %v885 = vpack.c.b16 %v670, %v665
  %v886 = vpack.c.b16 %v671, %v666
  %v887 = vpack.c.b16 %v677, %v672
  %v888 = vpack.c.b16 %v678, %v673
  %v889 = vpack.c.b16 %v679, %v674
  %v890 = vpack.c.b16 %v680, %v675
  %v891 = vpack.c.b16 %v681, %v676
  %v892 = vpack.c.b16 %v687, %v682
  %v893 = vpack.c.b16 %v688, %v683
  %v894 = vpack.c.b16 %v689, %v684
  %v895 = vpack.c.b16 %v690, %v685
  %v896 = vpack.c.b16 %v691, %v686
  %v897 = vpack.c.b16 %v697, %v692
  %v898 = vpack.c.b16 %v698, %v693
  %v899 = vpack.c.b16 %v699, %v694
  %v900 = vpack.c.b16 %v700, %v695
  %v901 = vpack.c.b16 %v701, %v696
  %v902 = vpack.c.b16 %v707, %v702
  %v903 = vpack.c.b16 %v708, %v703
  %v904 = vpack.c.b16 %v709, %v704
  %v905 = vpack.c.b16 %v710, %v705
  %v906 = vpack.c.b16 %v711, %v706
  %v907 = vpack.c.b16 %v717, %v712
  %v908 = vpack.c.b16 %v718, %v713
  %v909 = vpack.c.b16 %v719, %v714
  %v910 = vpack.c.b16 %v720, %v715
  %v911 = vpack.c.b16 %v721, %v716
  %v912 = vpack.c.b16 %v727, %v722
  %v913 = vpack.c.b16 %v728, %v723
  %v914 = vpack.c.b16 %v729, %v724
  %v915 = vpack.c.b16 %v730, %v725
  %v916 = vpack.c.b16 %v731, %v726
  %v917 = vpack.c.b16 %v737, %v732
  %v918 = vpack.c.b16 %v738, %v733
  %v919 = vpack.c.b16 %v739, %v734
  %v920 = vpack.c.b16 %v740, %v735
  %v921 = vpack.c.b16 %v741, %v736
  %v922 = vpack.c.b16 %v747, %v742
  %v923 = vpack.c.b16 %v748, %v743
  %v924 = vpack.c.b16 %v749, %v744
  %v925 = vpack.c.b16 %v750, %v745
  %v926 = vpack.c.b16 %v751, %v746
  %v927 = vpack.c.b16 %v757, %v752
  %v928 = vpack.c.b16 %v758, %v753
  %v929 = vpack.c.b16 %v759, %v754
  %v930 = vpack.c.b16 %v760, %v755
  %v931 = vpack.c.b16 %v761, %v756
  %v932 = vpack.c.b16 %v767, %v762
  %v933 = vpack.c.b16 %v768, %v763
  %v934 = vpack.c.b16 %v769, %v764
  %v935 = vpack.c.b16 %v770, %v765
  %v936 = vpack.c.b16 %v771, %v766
  %v937 = vpack.c.b16 %v777, %v772
  %v938 = vpack.c.b16 %v778, %v773
  %v939 = vpack.c.b16 %v779, %v774
  %v940 = vpack.c.b16 %v780, %v775
  %v941 = vpack.c.b16 %v781, %v776
  %1102 = vmatprep.subr.bf16.mxu0 %v818
  %1103 = vmatpush1.bf16.msra.mxu0 %v817
  %1104 = vmatprep.subr.bf16.mxu0 %v813
  %1105 = vmatpush1.bf16.msra.mxu0 %v812
  %1106 = vmatprep.subr.bf16.mxu0 %v808
  %1107 = vmatpush1.bf16.msra.mxu0 %v807
  %1108 = vmatprep.subr.bf16.mxu0 %v803
  %1109 = vmatpush1.bf16.msra.mxu0 %v802
  %1110 = vmatprep.subr.bf16.mxu0 %v798
  %1111 = vmatpush1.bf16.msra.mxu0 %v797
  %1112 = vmatprep.subr.bf16.mxu0 %v793
  %1113 = vmatpush1.bf16.msra.mxu0 %v792
  %1114 = vmatprep.subr.bf16.mxu0 %v788
  %1115 = vmatpush1.bf16.msra.mxu0 %v787
  %1116 = vmatprep.subr.bf16.mxu0 %v783
  %1117 = vmatpush1.bf16.msra.mxu0 %v782
  %1118 = vmatprep.subr.bf16.mxu0 %v858
  %1119 = vmatpush2.bf16.msra.mxu0 %v857
  %1120 = vmatprep.subr.bf16.mxu0 %v853
  %1121 = vmatpush2.bf16.msra.mxu0 %v852
  %1122 = vmatprep.subr.bf16.mxu0 %v848
  %1123 = vmatpush2.bf16.msra.mxu0 %v847
  %1124 = vmatprep.subr.bf16.mxu0 %v843
  %1125 = vmatpush2.bf16.msra.mxu0 %v842
  %1126 = vmatprep.subr.bf16.mxu0 %v838
  %1127 = vmatpush2.bf16.msra.mxu0 %v837
  %1128 = vmatprep.subr.bf16.mxu0 %v833
  %1129 = vmatpush2.bf16.msra.mxu0 %v832
  %1130 = vmatprep.subr.bf16.mxu0 %v828
  %1131 = vmatpush2.bf16.msra.mxu0 %v827
  %1132 = vmatprep.subr.bf16.mxu0 %v823
  %1133 = vmatpush2.bf16.msra.mxu0 %v822
  %1134 = vmatprep.mubr.bf16.mxu0 %v263
  %1135 = vmatmul.mubr.bf16.gmra.mxu0 %v262
  %v1136 = vpop.f32.mrf.mxu0
  %v1137 = vadd.f32 %v228, %v1136
  %v1138 = vpop.f32.mrf.mxu0
  %v1139 = vadd.f32 %v232, %v1138
  %v1140 = vpop.f32.mrf.mxu0
  %v1141 = vadd.f32 %v228, %v1140
  %v1142 = vpop.f32.mrf.mxu0
  %v1143 = vadd.f32 %v232, %v1142
  %1144 = vdwg.mxu0
  %1145 = vmatprep.subr.bf16.mxu0 %v898
  %1146 = vmatpush1.bf16.msra.mxu0 %v897
  %1147 = vmatprep.subr.bf16.mxu0 %v893
  %1148 = vmatpush1.bf16.msra.mxu0 %v892
  %1149 = vmatprep.subr.bf16.mxu0 %v888
  %1150 = vmatpush1.bf16.msra.mxu0 %v887
  %1151 = vmatprep.subr.bf16.mxu0 %v883
  %1152 = vmatpush1.bf16.msra.mxu0 %v882
  %1153 = vmatprep.subr.bf16.mxu0 %v878
  %1154 = vmatpush1.bf16.msra.mxu0 %v877
  %1155 = vmatprep.subr.bf16.mxu0 %v873
  %1156 = vmatpush1.bf16.msra.mxu0 %v872
  %1157 = vmatprep.subr.bf16.mxu0 %v868
  %1158 = vmatpush1.bf16.msra.mxu0 %v867
  %1159 = vmatprep.subr.bf16.mxu0 %v863
  %1160 = vmatpush1.bf16.msra.mxu0 %v862
  %1161 = vmatprep.subr.bf16.mxu0 %v938
  %1162 = vmatpush2.bf16.msra.mxu0 %v937
  %1163 = vmatprep.subr.bf16.mxu0 %v933
  %1164 = vmatpush2.bf16.msra.mxu0 %v932
  %1165 = vmatprep.subr.bf16.mxu0 %v928
  %1166 = vmatpush2.bf16.msra.mxu0 %v927
  %1167 = vmatprep.subr.bf16.mxu0 %v923
  %1168 = vmatpush2.bf16.msra.mxu0 %v922
  %1169 = vmatprep.subr.bf16.mxu0 %v918
  %1170 = vmatpush2.bf16.msra.mxu0 %v917
  %1171 = vmatprep.subr.bf16.mxu0 %v913
  %1172 = vmatpush2.bf16.msra.mxu0 %v912
  %1173 = vmatprep.subr.bf16.mxu0 %v908
  %1174 = vmatpush2.bf16.msra.mxu0 %v907
  %1175 = vmatprep.subr.bf16.mxu0 %v903
  %1176 = vmatpush2.bf16.msra.mxu0 %v902
  %1177 = vmatprep.mubr.bf16.mxu0 %v265
  %1178 = vmatmul.mubr.bf16.gmra.mxu0 %v264
  %v1179 = vpop.f32.mrf.mxu0
  %v1180 = vadd.f32 %v1137, %v1179
  %v1181 = vpop.f32.mrf.mxu0
  %v1182 = vadd.f32 %v1139, %v1181
  %v1183 = vpop.f32.mrf.mxu0
  %v1184 = vadd.f32 %v1141, %v1183
  %v1185 = vpop.f32.mrf.mxu0
  %v1186 = vadd.f32 %v1143, %v1185
  %1187 = vdwg.mxu0
  %1188 = vmatprep.subr.bf16.mxu0 %v820
  %1189 = vmatpush1.bf16.msra.mxu0 %v819
  %1190 = vmatprep.subr.bf16.mxu0 %v815
  %1191 = vmatpush1.bf16.msra.mxu0 %v814
  %1192 = vmatprep.subr.bf16.mxu0 %v810
  %1193 = vmatpush1.bf16.msra.mxu0 %v809
  %1194 = vmatprep.subr.bf16.mxu0 %v805
  %1195 = vmatpush1.bf16.msra.mxu0 %v804
  %1196 = vmatprep.subr.bf16.mxu0 %v800
  %1197 = vmatpush1.bf16.msra.mxu0 %v799
  %1198 = vmatprep.subr.bf16.mxu0 %v795
  %1199 = vmatpush1.bf16.msra.mxu0 %v794
  %1200 = vmatprep.subr.bf16.mxu0 %v790
  %1201 = vmatpush1.bf16.msra.mxu0 %v789
  %1202 = vmatprep.subr.bf16.mxu0 %v785
  %1203 = vmatpush1.bf16.msra.mxu0 %v784
  %1204 = vmatprep.subr.bf16.mxu0 %v860
  %1205 = vmatpush2.bf16.msra.mxu0 %v859
  %1206 = vmatprep.subr.bf16.mxu0 %v855
  %1207 = vmatpush2.bf16.msra.mxu0 %v854
  %1208 = vmatprep.subr.bf16.mxu0 %v850
  %1209 = vmatpush2.bf16.msra.mxu0 %v849
  %1210 = vmatprep.subr.bf16.mxu0 %v845
  %1211 = vmatpush2.bf16.msra.mxu0 %v844
  %1212 = vmatprep.subr.bf16.mxu0 %v840
  %1213 = vmatpush2.bf16.msra.mxu0 %v839
  %1214 = vmatprep.subr.bf16.mxu0 %v835
  %1215 = vmatpush2.bf16.msra.mxu0 %v834
  %1216 = vmatprep.subr.bf16.mxu0 %v830
  %1217 = vmatpush2.bf16.msra.mxu0 %v829
  %1218 = vmatprep.subr.bf16.mxu0 %v825
  %1219 = vmatpush2.bf16.msra.mxu0 %v824
  %1220 = vmatprep.mubr.bf16.mxu0 %v263
  %1221 = vmatmul.mubr.bf16.gmra.mxu0 %v262
  %v1222 = vpop.f32.mrf.mxu0
  %v1223 = vadd.f32 %v236, %v1222
  %v1224 = vpop.f32.mrf.mxu0
  %v1225 = vadd.f32 %v240, %v1224
  %v1226 = vpop.f32.mrf.mxu0
  %v1227 = vadd.f32 %v236, %v1226
  %v1228 = vpop.f32.mrf.mxu0
  %v1229 = vadd.f32 %v240, %v1228
  %1230 = vdwg.mxu0
  %1231 = vmatprep.subr.bf16.mxu0 %v900
  %1232 = vmatpush1.bf16.msra.mxu0 %v899
  %1233 = vmatprep.subr.bf16.mxu0 %v895
  %1234 = vmatpush1.bf16.msra.mxu0 %v894
  %1235 = vmatprep.subr.bf16.mxu0 %v890
  %1236 = vmatpush1.bf16.msra.mxu0 %v889
  %1237 = vmatprep.subr.bf16.mxu0 %v885
  %1238 = vmatpush1.bf16.msra.mxu0 %v884
  %1239 = vmatprep.subr.bf16.mxu0 %v880
  %1240 = vmatpush1.bf16.msra.mxu0 %v879
  %1241 = vmatprep.subr.bf16.mxu0 %v875
  %1242 = vmatpush1.bf16.msra.mxu0 %v874
  %1243 = vmatprep.subr.bf16.mxu0 %v870
  %1244 = vmatpush1.bf16.msra.mxu0 %v869
  %1245 = vmatprep.subr.bf16.mxu0 %v865
  %1246 = vmatpush1.bf16.msra.mxu0 %v864
  %1247 = vmatprep.subr.bf16.mxu0 %v940
  %1248 = vmatpush2.bf16.msra.mxu0 %v939
  %1249 = vmatprep.subr.bf16.mxu0 %v935
  %1250 = vmatpush2.bf16.msra.mxu0 %v934
  %1251 = vmatprep.subr.bf16.mxu0 %v930
  %1252 = vmatpush2.bf16.msra.mxu0 %v929
  %1253 = vmatprep.subr.bf16.mxu0 %v925
  %1254 = vmatpush2.bf16.msra.mxu0 %v924
  %1255 = vmatprep.subr.bf16.mxu0 %v920
  %1256 = vmatpush2.bf16.msra.mxu0 %v919
  %1257 = vmatprep.subr.bf16.mxu0 %v915
  %1258 = vmatpush2.bf16.msra.mxu0 %v914
  %1259 = vmatprep.subr.bf16.mxu0 %v910
  %1260 = vmatpush2.bf16.msra.mxu0 %v909
  %1261 = vmatprep.subr.bf16.mxu0 %v905
  %1262 = vmatpush2.bf16.msra.mxu0 %v904
  %1263 = vmatprep.mubr.bf16.mxu0 %v265
  %1264 = vmatmul.mubr.bf16.gmra.mxu0 %v264
  %v1265 = vpop.f32.mrf.mxu0
  %v1266 = vadd.f32 %v1223, %v1265
  %v1267 = vpop.f32.mrf.mxu0
  %v1268 = vadd.f32 %v1225, %v1267
  %v1269 = vpop.f32.mrf.mxu0
  %v1270 = vadd.f32 %v1227, %v1269
  %v1271 = vpop.f32.mrf.mxu0
  %v1272 = vadd.f32 %v1229, %v1271
  %1273 = vdwg.mxu0
  %1274 = vmatprep.subr.bf16.mxu0 0
  %1275 = vmatpush1.bf16.msra.mxu0 %v821
  %1276 = vmatprep.subr.bf16.mxu0 0
  %1277 = vmatpush1.bf16.msra.mxu0 %v816
  %1278 = vmatprep.subr.bf16.mxu0 0
  %1279 = vmatpush1.bf16.msra.mxu0 %v811
  %1280 = vmatprep.subr.bf16.mxu0 0
  %1281 = vmatpush1.bf16.msra.mxu0 %v806
  %1282 = vmatprep.subr.bf16.mxu0 0
  %1283 = vmatpush1.bf16.msra.mxu0 %v801
  %1284 = vmatprep.subr.bf16.mxu0 0
  %1285 = vmatpush1.bf16.msra.mxu0 %v796
  %1286 = vmatprep.subr.bf16.mxu0 0
  %1287 = vmatpush1.bf16.msra.mxu0 %v791
  %1288 = vmatprep.subr.bf16.mxu0 0
  %1289 = vmatpush1.bf16.msra.mxu0 %v786
  %1290 = vmatprep.subr.bf16.mxu0 0
  %1291 = vmatpush2.bf16.msra.mxu0 %v861
  %1292 = vmatprep.subr.bf16.mxu0 0
  %1293 = vmatpush2.bf16.msra.mxu0 %v856
  %1294 = vmatprep.subr.bf16.mxu0 0
  %1295 = vmatpush2.bf16.msra.mxu0 %v851
  %1296 = vmatprep.subr.bf16.mxu0 0
  %1297 = vmatpush2.bf16.msra.mxu0 %v846
  %1298 = vmatprep.subr.bf16.mxu0 0
  %1299 = vmatpush2.bf16.msra.mxu0 %v841
  %1300 = vmatprep.subr.bf16.mxu0 0
  %1301 = vmatpush2.bf16.msra.mxu0 %v836
  %1302 = vmatprep.subr.bf16.mxu0 0
  %1303 = vmatpush2.bf16.msra.mxu0 %v831
  %1304 = vmatprep.subr.bf16.mxu0 0
  %1305 = vmatpush2.bf16.msra.mxu0 %v826
  %1306 = vmatprep.mubr.bf16.mxu0 %v263
  %1307 = vmatmul.mubr.bf16.gmra.mxu0 %v262
  %v1308 = vpop.f32.mrf.mxu0
  %v1309 = vadd.f32 %v244, %v1308
  %v1310 = vpop.f32.mrf.mxu0
  %v1311 = vpop.f32.mrf.mxu0
  %v1312 = vadd.f32 %v244, %v1311
  %v1313 = vpop.f32.mrf.mxu0
  %1314 = vdwg.mxu0
  %1315 = vmatprep.subr.bf16.mxu0 0
  %1316 = vmatpush1.bf16.msra.mxu0 %v901
  %1317 = vmatprep.subr.bf16.mxu0 0
  %1318 = vmatpush1.bf16.msra.mxu0 %v896
  %1319 = vmatprep.subr.bf16.mxu0 0
  %1320 = vmatpush1.bf16.msra.mxu0 %v891
  %1321 = vmatprep.subr.bf16.mxu0 0
  %1322 = vmatpush1.bf16.msra.mxu0 %v886
  %1323 = vmatprep.subr.bf16.mxu0 0
  %1324 = vmatpush1.bf16.msra.mxu0 %v881
  %1325 = vmatprep.subr.bf16.mxu0 0
  %1326 = vmatpush1.bf16.msra.mxu0 %v876
  %1327 = vmatprep.subr.bf16.mxu0 0
  %1328 = vmatpush1.bf16.msra.mxu0 %v871
  %1329 = vmatprep.subr.bf16.mxu0 0
  %1330 = vmatpush1.bf16.msra.mxu0 %v866
  %1331 = vmatprep.subr.bf16.mxu0 0
  %1332 = vmatpush2.bf16.msra.mxu0 %v941
  %1333 = vmatprep.subr.bf16.mxu0 0
  %1334 = vmatpush2.bf16.msra.mxu0 %v936
  %1335 = vmatprep.subr.bf16.mxu0 0
  %1336 = vmatpush2.bf16.msra.mxu0 %v931
  %1337 = vmatprep.subr.bf16.mxu0 0
  %1338 = vmatpush2.bf16.msra.mxu0 %v926
  %1339 = vmatprep.subr.bf16.mxu0 0
  %1340 = vmatpush2.bf16.msra.mxu0 %v921
  %1341 = vmatprep.subr.bf16.mxu0 0
  %1342 = vmatpush2.bf16.msra.mxu0 %v916
  %1343 = vmatprep.subr.bf16.mxu0 0
  %1344 = vmatpush2.bf16.msra.mxu0 %v911
  %1345 = vmatprep.subr.bf16.mxu0 0
  %1346 = vmatpush2.bf16.msra.mxu0 %v906
  %1347 = vmatprep.mubr.bf16.mxu0 %v265
  %1348 = vmatmul.mubr.bf16.gmra.mxu0 %v264
  %v1349 = vpop.f32.mrf.mxu0
  %v1350 = vadd.f32 %v1309, %v1349
  %v1351 = vpop.f32.mrf.mxu0
  %v1352 = vpop.f32.mrf.mxu0
  %v1353 = vadd.f32 %v1312, %v1352
  %v1354 = vpop.f32.mrf.mxu0
  %1355 = vdwg.mxu0
  %v1356 = vmax.f32 %v1180, 0.0
  %v1357 = vmax.f32 %v1182, 0.0
  %v1358 = vmax.f32 %v1266, 0.0
  %v1359 = vmax.f32 %v1268, 0.0
  %v1360 = vmax.f32 %v1350, 0.0
  %v1361 = vmax.f32 %v1184, 0.0
  %v1362 = vmax.f32 %v1186, 0.0
  %v1363 = vmax.f32 %v1270, 0.0
  %v1364 = vmax.f32 %v1272, 0.0
  %v1365 = vmax.f32 %v1353, 0.0
  %v1366 = vpack.c.bf16 %v1361, %v1356
  %v1367 = vpack.c.bf16 %v1362, %v1357
  %v1368 = vpack.c.bf16 %v1363, %v1358
  %v1369 = vpack.c.bf16 %v1364, %v1359
  %v1370 = vpack.c.bf16 %v1365, %v1360
  %v1371 = vld [vmem:[%s3] sm:$0xff]
  %v1372 = vld [vmem:[%s3 + $0x8] sm:$0xff]
  %v1373 = vld [vmem:[%s3 + $0x10] sm:$0xf]
  %v1374 = vld [vmem:[%s3 + $0x14] sm:$0xff]
  %v1375 = vld [vmem:[%s3 + $0x1c] sm:$0xff]
  %v1376 = vld [vmem:[%s3 + $0x24] sm:$0xf]
  %v1377 = vld [vmem:[%s3 + $0x28] sm:$0xff]
  %v1378 = vld [vmem:[%s3 + $0x30] sm:$0xff]
  %v1379 = vld [vmem:[%s3 + $0x38] sm:$0xf]
  %v1380 = vld [vmem:[%s3 + $0x3c] sm:$0xff]
  %v1381 = vld [vmem:[%s3 + $0x44] sm:$0xff]
  %v1382 = vld [vmem:[%s3 + $0x4c] sm:$0xf]
  %v1383 = vld [vmem:[%s3 + $0x50] sm:$0xff]
  %v1384 = vld [vmem:[%s3 + $0x58] sm:$0xff]
  %v1385 = vld [vmem:[%s3 + $0x60] sm:$0xf]
  %v1386 = vld [vmem:[%s3 + $0x64] sm:$0xff]
  %v1387 = vld [vmem:[%s3 + $0x6c] sm:$0xff]
  %v1388 = vld [vmem:[%s3 + $0x74] sm:$0xf]
  %v1389 = vld [vmem:[%s3 + $0x78] sm:$0xff]
  %v1390 = vld [vmem:[%s3 + $0x80] sm:$0xff]
  %v1391 = vld [vmem:[%s3 + $0x88] sm:$0xf]
  %v1392 = vld [vmem:[%s3 + $0x8c] sm:$0xff]
  %v1393 = vld [vmem:[%s3 + $0x94] sm:$0xff]
  %v1394 = vld [vmem:[%s3 + $0x9c] sm:$0xf]
  %v1395 = vld [vmem:[%s3 + $0xa0] sm:$0xff]
  %v1396 = vld [vmem:[%s3 + $0xa8] sm:$0xff]
  %v1397 = vld [vmem:[%s3 + $0xb0] sm:$0xf]
  %v1398 = vld [vmem:[%s3 + $0xb4] sm:$0xff]
  %v1399 = vld [vmem:[%s3 + $0xbc] sm:$0xff]
  %v1400 = vld [vmem:[%s3 + $0xc4] sm:$0xf]
  %v1401 = vld [vmem:[%s3 + $0xc8] sm:$0xff]
  %v1402 = vld [vmem:[%s3 + $0xd0] sm:$0xff]
  %v1403 = vld [vmem:[%s3 + $0xd8] sm:$0xf]
  %v1404 = vld [vmem:[%s3 + $0xdc] sm:$0xff]
  %v1405 = vld [vmem:[%s3 + $0xe4] sm:$0xff]
  %v1406 = vld [vmem:[%s3 + $0xec] sm:$0xf]
  %v1407 = vld [vmem:[%s3 + $0xf0] sm:$0xff]
  %v1408 = vld [vmem:[%s3 + $0xf8] sm:$0xff]
  %v1409 = vld [vmem:[%s3 + $0x100] sm:$0xf]
  %v1410 = vld [vmem:[%s3 + $0x104] sm:$0xff]
  %v1411 = vld [vmem:[%s3 + $0x10c] sm:$0xff]
  %v1412 = vld [vmem:[%s3 + $0x114] sm:$0xf]
  %v1413 = vld [vmem:[%s3 + $0x118] sm:$0xff]
  %v1414 = vld [vmem:[%s3 + $0x120] sm:$0xff]
  %v1415 = vld [vmem:[%s3 + $0x128] sm:$0xf]
  %v1416 = vld [vmem:[%s3 + $0x12c] sm:$0xff]
  %v1417 = vld [vmem:[%s3 + $0x134] sm:$0xff]
  %v1418 = vld [vmem:[%s3 + $0x13c] sm:$0xf]
  %v1419 = vld [vmem:[%s3 + $0x140] sm:$0xff]
  %v1420 = vld [vmem:[%s3 + $0x148] sm:$0xff]
  %v1421 = vld [vmem:[%s3 + $0x150] sm:$0xf]
  %v1422 = vld [vmem:[%s3 + $0x154] sm:$0xff]
  %v1423 = vld [vmem:[%s3 + $0x15c] sm:$0xff]
  %v1424 = vld [vmem:[%s3 + $0x164] sm:$0xf]
  %v1425 = vld [vmem:[%s3 + $0x168] sm:$0xff]
  %v1426 = vld [vmem:[%s3 + $0x170] sm:$0xff]
  %v1427 = vld [vmem:[%s3 + $0x178] sm:$0xf]
  %v1428 = vld [vmem:[%s3 + $0x17c] sm:$0xff]
  %v1429 = vld [vmem:[%s3 + $0x184] sm:$0xff]
  %v1430 = vld [vmem:[%s3 + $0x18c] sm:$0xf]
  %v1431 = vld [vmem:[%s3 + $0x190] sm:$0xff]
  %v1432 = vld [vmem:[%s3 + $0x198] sm:$0xff]
  %v1433 = vld [vmem:[%s3 + $0x1a0] sm:$0xf]
  %v1434 = vld [vmem:[%s3 + $0x1a4] sm:$0xff]
  %v1435 = vld [vmem:[%s3 + $0x1ac] sm:$0xff]
  %v1436 = vld [vmem:[%s3 + $0x1b4] sm:$0xf]
  %v1437 = vld [vmem:[%s3 + $0x1b8] sm:$0xff]
  %v1438 = vld [vmem:[%s3 + $0x1c0] sm:$0xff]
  %v1439 = vld [vmem:[%s3 + $0x1c8] sm:$0xf]
  %v1440 = vld [vmem:[%s3 + $0x1cc] sm:$0xff]
  %v1441 = vld [vmem:[%s3 + $0x1d4] sm:$0xff]
  %v1442 = vld [vmem:[%s3 + $0x1dc] sm:$0xf]
  %v1443 = vld [vmem:[%s3 + $0x1e0] sm:$0xff]
  %v1444 = vld [vmem:[%s3 + $0x1e8] sm:$0xff]
  %v1445 = vld [vmem:[%s3 + $0x1f0] sm:$0xf]
  %v1446 = vld [vmem:[%s3 + $0x1f4] sm:$0xff]
  %v1447 = vld [vmem:[%s3 + $0x1fc] sm:$0xff]
  %v1448 = vld [vmem:[%s3 + $0x204] sm:$0xf]
  %v1449 = vld [vmem:[%s3 + $0x208] sm:$0xff]
  %v1450 = vld [vmem:[%s3 + $0x210] sm:$0xff]
  %v1451 = vld [vmem:[%s3 + $0x218] sm:$0xf]
  %v1452 = vld [vmem:[%s3 + $0x21c] sm:$0xff]
  %v1453 = vld [vmem:[%s3 + $0x224] sm:$0xff]
  %v1454 = vld [vmem:[%s3 + $0x22c] sm:$0xf]
  %v1455 = vld [vmem:[%s3 + $0x230] sm:$0xff]
  %v1456 = vld [vmem:[%s3 + $0x238] sm:$0xff]
  %v1457 = vld [vmem:[%s3 + $0x240] sm:$0xf]
  %v1458 = vld [vmem:[%s3 + $0x244] sm:$0xff]
  %v1459 = vld [vmem:[%s3 + $0x24c] sm:$0xff]
  %v1460 = vld [vmem:[%s3 + $0x254] sm:$0xf]
  %v1461 = vld [vmem:[%s3 + $0x258] sm:$0xff]
  %v1462 = vld [vmem:[%s3 + $0x260] sm:$0xff]
  %v1463 = vld [vmem:[%s3 + $0x268] sm:$0xf]
  %v1464 = vld [vmem:[%s3 + $0x26c] sm:$0xff]
  %v1465 = vld [vmem:[%s3 + $0x274] sm:$0xff]
  %v1466 = vld [vmem:[%s3 + $0x27c] sm:$0xf]
  %v1467 = vld [vmem:[%s3 + $0x280] sm:$0xff]
  %v1468 = vld [vmem:[%s3 + $0x288] sm:$0xff]
  %v1469 = vld [vmem:[%s3 + $0x290] sm:$0xf]
  %v1470 = vld [vmem:[%s3 + $0x294] sm:$0xff]
  %v1471 = vld [vmem:[%s3 + $0x29c] sm:$0xff]
  %v1472 = vld [vmem:[%s3 + $0x2a4] sm:$0xf]
  %v1473 = vld [vmem:[%s3 + $0x2a8] sm:$0xff]
  %v1474 = vld [vmem:[%s3 + $0x2b0] sm:$0xff]
  %v1475 = vld [vmem:[%s3 + $0x2b8] sm:$0xf]
  %v1476 = vld [vmem:[%s3 + $0x2bc] sm:$0xff]
  %v1477 = vld [vmem:[%s3 + $0x2c4] sm:$0xff]
  %v1478 = vld [vmem:[%s3 + $0x2cc] sm:$0xf]
  %v1479 = vld [vmem:[%s3 + $0x2d0] sm:$0xff]
  %v1480 = vld [vmem:[%s3 + $0x2d8] sm:$0xff]
  %v1481 = vld [vmem:[%s3 + $0x2e0] sm:$0xf]
  %v1482 = vld [vmem:[%s3 + $0x2e4] sm:$0xff]
  %v1483 = vld [vmem:[%s3 + $0x2ec] sm:$0xff]
  %v1484 = vld [vmem:[%s3 + $0x2f4] sm:$0xf]
  %v1485 = vld [vmem:[%s3 + $0x2f8] sm:$0xff]
  %v1486 = vld [vmem:[%s3 + $0x300] sm:$0xff]
  %v1487 = vld [vmem:[%s3 + $0x308] sm:$0xf]
  %v1488 = vld [vmem:[%s3 + $0x30c] sm:$0xff]
  %v1489 = vld [vmem:[%s3 + $0x314] sm:$0xff]
  %v1490 = vld [vmem:[%s3 + $0x31c] sm:$0xf]
  %v1491 = vld [vmem:[%s3 + $0x320] sm:$0xff]
  %v1492 = vld [vmem:[%s3 + $0x328] sm:$0xff]
  %v1493 = vld [vmem:[%s3 + $0x330] sm:$0xf]
  %v1494 = vld [vmem:[%s3 + $0x334] sm:$0xff]
  %v1495 = vld [vmem:[%s3 + $0x33c] sm:$0xff]
  %v1496 = vld [vmem:[%s3 + $0x344] sm:$0xf]
  %v1497 = vld [vmem:[%s3 + $0x348] sm:$0xff]
  %v1498 = vld [vmem:[%s3 + $0x350] sm:$0xff]
  %v1499 = vld [vmem:[%s3 + $0x358] sm:$0xf]
  %v1500 = vld [vmem:[%s3 + $0x35c] sm:$0xff]
  %v1501 = vld [vmem:[%s3 + $0x364] sm:$0xff]
  %v1502 = vld [vmem:[%s3 + $0x36c] sm:$0xf]
  %v1503 = vld [vmem:[%s3 + $0x370] sm:$0xff]
  %v1504 = vld [vmem:[%s3 + $0x378] sm:$0xff]
  %v1505 = vld [vmem:[%s3 + $0x380] sm:$0xf]
  %v1506 = vld [vmem:[%s3 + $0x384] sm:$0xff]
  %v1507 = vld [vmem:[%s3 + $0x38c] sm:$0xff]
  %v1508 = vld [vmem:[%s3 + $0x394] sm:$0xf]
  %v1509 = vld [vmem:[%s3 + $0x398] sm:$0xff]
  %v1510 = vld [vmem:[%s3 + $0x3a0] sm:$0xff]
  %v1511 = vld [vmem:[%s3 + $0x3a8] sm:$0xf]
  %v1512 = vld [vmem:[%s3 + $0x3ac] sm:$0xff]
  %v1513 = vld [vmem:[%s3 + $0x3b4] sm:$0xff]
  %v1514 = vld [vmem:[%s3 + $0x3bc] sm:$0xf]
  %v1515 = vld [vmem:[%s3 + $0x3c0] sm:$0xff]
  %v1516 = vld [vmem:[%s3 + $0x3c8] sm:$0xff]
  %v1517 = vld [vmem:[%s3 + $0x3d0] sm:$0xf]
  %v1518 = vld [vmem:[%s3 + $0x3d4] sm:$0xff]
  %v1519 = vld [vmem:[%s3 + $0x3dc] sm:$0xff]
  %v1520 = vld [vmem:[%s3 + $0x3e4] sm:$0xf]
  %v1521 = vld [vmem:[%s3 + $0x3e8] sm:$0xff]
  %v1522 = vld [vmem:[%s3 + $0x3f0] sm:$0xff]
  %v1523 = vld [vmem:[%s3 + $0x3f8] sm:$0xf]
  %v1524 = vld [vmem:[%s3 + $0x3fc] sm:$0xff]
  %v1525 = vld [vmem:[%s3 + $0x404] sm:$0xff]
  %v1526 = vld [vmem:[%s3 + $0x40c] sm:$0xf]
  %v1527 = vld [vmem:[%s3 + $0x410] sm:$0xff]
  %v1528 = vld [vmem:[%s3 + $0x418] sm:$0xff]
  %v1529 = vld [vmem:[%s3 + $0x420] sm:$0xf]
  %v1530 = vld [vmem:[%s3 + $0x424] sm:$0xff]
  %v1531 = vld [vmem:[%s3 + $0x42c] sm:$0xff]
  %v1532 = vld [vmem:[%s3 + $0x434] sm:$0xf]
  %v1533 = vld [vmem:[%s3 + $0x438] sm:$0xff]
  %v1534 = vld [vmem:[%s3 + $0x440] sm:$0xff]
  %v1535 = vld [vmem:[%s3 + $0x448] sm:$0xf]
  %v1536 = vld [vmem:[%s3 + $0x44c] sm:$0xff]
  %v1537 = vld [vmem:[%s3 + $0x454] sm:$0xff]
  %v1538 = vld [vmem:[%s3 + $0x45c] sm:$0xf]
  %v1539 = vld [vmem:[%s3 + $0x460] sm:$0xff]
  %v1540 = vld [vmem:[%s3 + $0x468] sm:$0xff]
  %v1541 = vld [vmem:[%s3 + $0x470] sm:$0xf]
  %v1542 = vld [vmem:[%s3 + $0x474] sm:$0xff]
  %v1543 = vld [vmem:[%s3 + $0x47c] sm:$0xff]
  %v1544 = vld [vmem:[%s3 + $0x484] sm:$0xf]
  %v1545 = vld [vmem:[%s3 + $0x488] sm:$0xff]
  %v1546 = vld [vmem:[%s3 + $0x490] sm:$0xff]
  %v1547 = vld [vmem:[%s3 + $0x498] sm:$0xf]
  %v1548 = vld [vmem:[%s3 + $0x49c] sm:$0xff]
  %v1549 = vld [vmem:[%s3 + $0x4a4] sm:$0xff]
  %v1550 = vld [vmem:[%s3 + $0x4ac] sm:$0xf]
  %v1551 = vld [vmem:[%s3 + $0x4b0] sm:$0xff]
  %v1552 = vld [vmem:[%s3 + $0x4b8] sm:$0xff]
  %v1553 = vld [vmem:[%s3 + $0x4c0] sm:$0xf]
  %v1554 = vld [vmem:[%s3 + $0x4c4] sm:$0xff]
  %v1555 = vld [vmem:[%s3 + $0x4cc] sm:$0xff]
  %v1556 = vld [vmem:[%s3 + $0x4d4] sm:$0xf]
  %v1557 = vld [vmem:[%s3 + $0x4d8] sm:$0xff]
  %v1558 = vld [vmem:[%s3 + $0x4e0] sm:$0xff]
  %v1559 = vld [vmem:[%s3 + $0x4e8] sm:$0xf]
  %v1560 = vld [vmem:[%s3 + $0x4ec] sm:$0xff]
  %v1561 = vld [vmem:[%s3 + $0x4f4] sm:$0xff]
  %v1562 = vld [vmem:[%s3 + $0x4fc] sm:$0xf]
  %v1563 = vld [vmem:[%s3 + $0x500] sm:$0xff]
  %v1564 = vld [vmem:[%s3 + $0x508] sm:$0xff]
  %v1565 = vld [vmem:[%s3 + $0x510] sm:$0xf]
  %v1566 = vld [vmem:[%s3 + $0x514] sm:$0xff]
  %v1567 = vld [vmem:[%s3 + $0x51c] sm:$0xff]
  %v1568 = vld [vmem:[%s3 + $0x524] sm:$0xf]
  %v1569 = vld [vmem:[%s3 + $0x528] sm:$0xff]
  %v1570 = vld [vmem:[%s3 + $0x530] sm:$0xff]
  %v1571 = vld [vmem:[%s3 + $0x538] sm:$0xf]
  %v1572 = vld [vmem:[%s3 + $0x53c] sm:$0xff]
  %v1573 = vld [vmem:[%s3 + $0x544] sm:$0xff]
  %v1574 = vld [vmem:[%s3 + $0x54c] sm:$0xf]
  %v1575 = vld [vmem:[%s3 + $0x550] sm:$0xff]
  %v1576 = vld [vmem:[%s3 + $0x558] sm:$0xff]
  %v1577 = vld [vmem:[%s3 + $0x560] sm:$0xf]
  %v1578 = vld [vmem:[%s3 + $0x564] sm:$0xff]
  %v1579 = vld [vmem:[%s3 + $0x56c] sm:$0xff]
  %v1580 = vld [vmem:[%s3 + $0x574] sm:$0xf]
  %v1581 = vld [vmem:[%s3 + $0x578] sm:$0xff]
  %v1582 = vld [vmem:[%s3 + $0x580] sm:$0xff]
  %v1583 = vld [vmem:[%s3 + $0x588] sm:$0xf]
  %v1584 = vld [vmem:[%s3 + $0x58c] sm:$0xff]
  %v1585 = vld [vmem:[%s3 + $0x594] sm:$0xff]
  %v1586 = vld [vmem:[%s3 + $0x59c] sm:$0xf]
  %v1587 = vld [vmem:[%s3 + $0x5a0] sm:$0xff]
  %v1588 = vld [vmem:[%s3 + $0x5a8] sm:$0xff]
  %v1589 = vld [vmem:[%s3 + $0x5b0] sm:$0xf]
  %v1590 = vld [vmem:[%s3 + $0x5b4] sm:$0xff]
  %v1591 = vld [vmem:[%s3 + $0x5bc] sm:$0xff]
  %v1592 = vld [vmem:[%s3 + $0x5c4] sm:$0xf]
  %v1593 = vld [vmem:[%s3 + $0x5c8] sm:$0xff]
  %v1594 = vld [vmem:[%s3 + $0x5d0] sm:$0xff]
  %v1595 = vld [vmem:[%s3 + $0x5d8] sm:$0xf]
  %v1596 = vld [vmem:[%s3 + $0x5dc] sm:$0xff]
  %v1597 = vld [vmem:[%s3 + $0x5e4] sm:$0xff]
  %v1598 = vld [vmem:[%s3 + $0x5ec] sm:$0xf]
  %v1599 = vld [vmem:[%s3 + $0x5f0] sm:$0xff]
  %v1600 = vld [vmem:[%s3 + $0x5f8] sm:$0xff]
  %v1601 = vld [vmem:[%s3 + $0x600] sm:$0xf]
  %v1602 = vld [vmem:[%s3 + $0x604] sm:$0xff]
  %v1603 = vld [vmem:[%s3 + $0x60c] sm:$0xff]
  %v1604 = vld [vmem:[%s3 + $0x614] sm:$0xf]
  %v1605 = vld [vmem:[%s3 + $0x618] sm:$0xff]
  %v1606 = vld [vmem:[%s3 + $0x620] sm:$0xff]
  %v1607 = vld [vmem:[%s3 + $0x628] sm:$0xf]
  %v1608 = vld [vmem:[%s3 + $0x62c] sm:$0xff]
  %v1609 = vld [vmem:[%s3 + $0x634] sm:$0xff]
  %v1610 = vld [vmem:[%s3 + $0x63c] sm:$0xf]
  %v1611 = vld [vmem:[%s4] sm:$0x1f]
  %v1613 = vlaneseq
  %v1614 = vshrl.u32 %v1613, 7
  %v1615 = vsub.s32 0, %v1614
  %v1616 = vrot.slane %v1611, %v1615
  %v1617 = vlaneseq
  %v1618 = vshrl.u32 %v1617, 7
  %v1619 = vsub.s32 1, %v1618
  %v1620 = vrot.slane %v1611, %v1619
  %v1621 = vlaneseq
  %v1622 = vshrl.u32 %v1621, 7
  %v1623 = vsub.s32 2, %v1622
  %v1624 = vrot.slane %v1611, %v1623
  %v1625 = vlaneseq
  %v1626 = vshrl.u32 %v1625, 7
  %v1627 = vsub.s32 3, %v1626
  %v1628 = vrot.slane %v1611, %v1627
  %v1629 = vlaneseq
  %v1630 = vshrl.u32 %v1629, 7
  %v1631 = vsub.s32 4, %v1630
  %v1632 = vrot.slane %v1611, %v1631
  %v1878 = vunpack.c.l.b16 %v1371
  %v1879 = vunpack.c.h.b16 %v1371
  %v1880 = vunpack.c.l.b16 %v1372
  %v1881 = vunpack.c.h.b16 %v1372
  %v1882 = vunpack.c.l.b16 %v1373
  %v1883 = vunpack.c.l.b16 %v1374
  %v1884 = vunpack.c.h.b16 %v1374
  %v1885 = vunpack.c.l.b16 %v1375
  %v1886 = vunpack.c.h.b16 %v1375
  %v1887 = vunpack.c.l.b16 %v1376
  %v1888 = vunpack.c.l.b16 %v1377
  %v1889 = vunpack.c.h.b16 %v1377
  %v1890 = vunpack.c.l.b16 %v1378
  %v1891 = vunpack.c.h.b16 %v1378
  %v1892 = vunpack.c.l.b16 %v1379
  %v1893 = vunpack.c.l.b16 %v1380
  %v1894 = vunpack.c.h.b16 %v1380
  %v1895 = vunpack.c.l.b16 %v1381
  %v1896 = vunpack.c.h.b16 %v1381
  %v1897 = vunpack.c.l.b16 %v1382
  %v1898 = vunpack.c.l.b16 %v1383
  %v1899 = vunpack.c.h.b16 %v1383
  %v1900 = vunpack.c.l.b16 %v1384
  %v1901 = vunpack.c.h.b16 %v1384
  %v1902 = vunpack.c.l.b16 %v1385
  %v1903 = vunpack.c.l.b16 %v1386
  %v1904 = vunpack.c.h.b16 %v1386
  %v1905 = vunpack.c.l.b16 %v1387
  %v1906 = vunpack.c.h.b16 %v1387
  %v1907 = vunpack.c.l.b16 %v1388
  %v1908 = vunpack.c.l.b16 %v1389
  %v1909 = vunpack.c.h.b16 %v1389
  %v1910 = vunpack.c.l.b16 %v1390
  %v1911 = vunpack.c.h.b16 %v1390
  %v1912 = vunpack.c.l.b16 %v1391
  %v1913 = vunpack.c.l.b16 %v1392
  %v1914 = vunpack.c.h.b16 %v1392
  %v1915 = vunpack.c.l.b16 %v1393
  %v1916 = vunpack.c.h.b16 %v1393
  %v1917 = vunpack.c.l.b16 %v1394
  %v1918 = vunpack.c.l.b16 %v1395
  %v1919 = vunpack.c.h.b16 %v1395
  %v1920 = vunpack.c.l.b16 %v1396
  %v1921 = vunpack.c.h.b16 %v1396
  %v1922 = vunpack.c.l.b16 %v1397
  %v1923 = vunpack.c.l.b16 %v1398
  %v1924 = vunpack.c.h.b16 %v1398
  %v1925 = vunpack.c.l.b16 %v1399
  %v1926 = vunpack.c.h.b16 %v1399
  %v1927 = vunpack.c.l.b16 %v1400
  %v1928 = vunpack.c.l.b16 %v1401
  %v1929 = vunpack.c.h.b16 %v1401
  %v1930 = vunpack.c.l.b16 %v1402
  %v1931 = vunpack.c.h.b16 %v1402
  %v1932 = vunpack.c.l.b16 %v1403
  %v1933 = vunpack.c.l.b16 %v1404
  %v1934 = vunpack.c.h.b16 %v1404
  %v1935 = vunpack.c.l.b16 %v1405
  %v1936 = vunpack.c.h.b16 %v1405
  %v1937 = vunpack.c.l.b16 %v1406
  %v1938 = vunpack.c.l.b16 %v1407
  %v1939 = vunpack.c.h.b16 %v1407
  %v1940 = vunpack.c.l.b16 %v1408
  %v1941 = vunpack.c.h.b16 %v1408
  %v1942 = vunpack.c.l.b16 %v1409
  %v1943 = vunpack.c.l.b16 %v1410
  %v1944 = vunpack.c.h.b16 %v1410
  %v1945 = vunpack.c.l.b16 %v1411
  %v1946 = vunpack.c.h.b16 %v1411
  %v1947 = vunpack.c.l.b16 %v1412
  %v1948 = vunpack.c.l.b16 %v1413
  %v1949 = vunpack.c.h.b16 %v1413
  %v1950 = vunpack.c.l.b16 %v1414
  %v1951 = vunpack.c.h.b16 %v1414
  %v1952 = vunpack.c.l.b16 %v1415
  %v1953 = vunpack.c.l.b16 %v1416
  %v1954 = vunpack.c.h.b16 %v1416
  %v1955 = vunpack.c.l.b16 %v1417
  %v1956 = vunpack.c.h.b16 %v1417
  %v1957 = vunpack.c.l.b16 %v1418
  %v1958 = vunpack.c.l.b16 %v1419
  %v1959 = vunpack.c.h.b16 %v1419
  %v1960 = vunpack.c.l.b16 %v1420
  %v1961 = vunpack.c.h.b16 %v1420
  %v1962 = vunpack.c.l.b16 %v1421
  %v1963 = vunpack.c.l.b16 %v1422
  %v1964 = vunpack.c.h.b16 %v1422
  %v1965 = vunpack.c.l.b16 %v1423
  %v1966 = vunpack.c.h.b16 %v1423
  %v1967 = vunpack.c.l.b16 %v1424
  %v1968 = vunpack.c.l.b16 %v1425
  %v1969 = vunpack.c.h.b16 %v1425
  %v1970 = vunpack.c.l.b16 %v1426
  %v1971 = vunpack.c.h.b16 %v1426
  %v1972 = vunpack.c.l.b16 %v1427
  %v1973 = vunpack.c.l.b16 %v1428
  %v1974 = vunpack.c.h.b16 %v1428
  %v1975 = vunpack.c.l.b16 %v1429
  %v1976 = vunpack.c.h.b16 %v1429
  %v1977 = vunpack.c.l.b16 %v1430
  %v1978 = vunpack.c.l.b16 %v1431
  %v1979 = vunpack.c.h.b16 %v1431
  %v1980 = vunpack.c.l.b16 %v1432
  %v1981 = vunpack.c.h.b16 %v1432
  %v1982 = vunpack.c.l.b16 %v1433
  %v1983 = vunpack.c.l.b16 %v1434
  %v1984 = vunpack.c.h.b16 %v1434
  %v1985 = vunpack.c.l.b16 %v1435
  %v1986 = vunpack.c.h.b16 %v1435
  %v1987 = vunpack.c.l.b16 %v1436
  %v1988 = vunpack.c.l.b16 %v1437
  %v1989 = vunpack.c.h.b16 %v1437
  %v1990 = vunpack.c.l.b16 %v1438
  %v1991 = vunpack.c.h.b16 %v1438
  %v1992 = vunpack.c.l.b16 %v1439
  %v1993 = vunpack.c.l.b16 %v1440
  %v1994 = vunpack.c.h.b16 %v1440
  %v1995 = vunpack.c.l.b16 %v1441
  %v1996 = vunpack.c.h.b16 %v1441
  %v1997 = vunpack.c.l.b16 %v1442
  %v1998 = vunpack.c.l.b16 %v1443
  %v1999 = vunpack.c.h.b16 %v1443
  %v2000 = vunpack.c.l.b16 %v1444
  %v2001 = vunpack.c.h.b16 %v1444
  %v2002 = vunpack.c.l.b16 %v1445
  %v2003 = vunpack.c.l.b16 %v1446
  %v2004 = vunpack.c.h.b16 %v1446
  %v2005 = vunpack.c.l.b16 %v1447
  %v2006 = vunpack.c.h.b16 %v1447
  %v2007 = vunpack.c.l.b16 %v1448
  %v2008 = vunpack.c.l.b16 %v1449
  %v2009 = vunpack.c.h.b16 %v1449
  %v2010 = vunpack.c.l.b16 %v1450
  %v2011 = vunpack.c.h.b16 %v1450
  %v2012 = vunpack.c.l.b16 %v1451
  %v2013 = vunpack.c.l.b16 %v1452
  %v2014 = vunpack.c.h.b16 %v1452
  %v2015 = vunpack.c.l.b16 %v1453
  %v2016 = vunpack.c.h.b16 %v1453
  %v2017 = vunpack.c.l.b16 %v1454
  %v2018 = vunpack.c.l.b16 %v1455
  %v2019 = vunpack.c.h.b16 %v1455
  %v2020 = vunpack.c.l.b16 %v1456
  %v2021 = vunpack.c.h.b16 %v1456
  %v2022 = vunpack.c.l.b16 %v1457
  %v2023 = vunpack.c.l.b16 %v1458
  %v2024 = vunpack.c.h.b16 %v1458
  %v2025 = vunpack.c.l.b16 %v1459
  %v2026 = vunpack.c.h.b16 %v1459
  %v2027 = vunpack.c.l.b16 %v1460
  %v2028 = vunpack.c.l.b16 %v1461
  %v2029 = vunpack.c.h.b16 %v1461
  %v2030 = vunpack.c.l.b16 %v1462
  %v2031 = vunpack.c.h.b16 %v1462
  %v2032 = vunpack.c.l.b16 %v1463
  %v2033 = vunpack.c.l.b16 %v1464
  %v2034 = vunpack.c.h.b16 %v1464
  %v2035 = vunpack.c.l.b16 %v1465
  %v2036 = vunpack.c.h.b16 %v1465
  %v2037 = vunpack.c.l.b16 %v1466
  %v2038 = vunpack.c.l.b16 %v1467
  %v2039 = vunpack.c.h.b16 %v1467
  %v2040 = vunpack.c.l.b16 %v1468
  %v2041 = vunpack.c.h.b16 %v1468
  %v2042 = vunpack.c.l.b16 %v1469
  %v2043 = vunpack.c.l.b16 %v1470
  %v2044 = vunpack.c.h.b16 %v1470
  %v2045 = vunpack.c.l.b16 %v1471
  %v2046 = vunpack.c.h.b16 %v1471
  %v2047 = vunpack.c.l.b16 %v1472
  %v2048 = vunpack.c.l.b16 %v1473
  %v2049 = vunpack.c.h.b16 %v1473
  %v2050 = vunpack.c.l.b16 %v1474
  %v2051 = vunpack.c.h.b16 %v1474
  %v2052 = vunpack.c.l.b16 %v1475
  %v2053 = vunpack.c.l.b16 %v1476
  %v2054 = vunpack.c.h.b16 %v1476
  %v2055 = vunpack.c.l.b16 %v1477
  %v2056 = vunpack.c.h.b16 %v1477
  %v2057 = vunpack.c.l.b16 %v1478
  %v2058 = vunpack.c.l.b16 %v1479
  %v2059 = vunpack.c.h.b16 %v1479
  %v2060 = vunpack.c.l.b16 %v1480
  %v2061 = vunpack.c.h.b16 %v1480
  %v2062 = vunpack.c.l.b16 %v1481
  %v2063 = vunpack.c.l.b16 %v1482
  %v2064 = vunpack.c.h.b16 %v1482
  %v2065 = vunpack.c.l.b16 %v1483
  %v2066 = vunpack.c.h.b16 %v1483
  %v2067 = vunpack.c.l.b16 %v1484
  %v2068 = vunpack.c.l.b16 %v1485
  %v2069 = vunpack.c.h.b16 %v1485
  %v2070 = vunpack.c.l.b16 %v1486
  %v2071 = vunpack.c.h.b16 %v1486
  %v2072 = vunpack.c.l.b16 %v1487
  %v2073 = vunpack.c.l.b16 %v1488
  %v2074 = vunpack.c.h.b16 %v1488
  %v2075 = vunpack.c.l.b16 %v1489
  %v2076 = vunpack.c.h.b16 %v1489
  %v2077 = vunpack.c.l.b16 %v1490
  %v2078 = vunpack.c.l.b16 %v1491
  %v2079 = vunpack.c.h.b16 %v1491
  %v2080 = vunpack.c.l.b16 %v1492
  %v2081 = vunpack.c.h.b16 %v1492
  %v2082 = vunpack.c.l.b16 %v1493
  %v2083 = vunpack.c.l.b16 %v1494
  %v2084 = vunpack.c.h.b16 %v1494
  %v2085 = vunpack.c.l.b16 %v1495
  %v2086 = vunpack.c.h.b16 %v1495
  %v2087 = vunpack.c.l.b16 %v1496
  %v2088 = vunpack.c.l.b16 %v1497
  %v2089 = vunpack.c.h.b16 %v1497
  %v2090 = vunpack.c.l.b16 %v1498
  %v2091 = vunpack.c.h.b16 %v1498
  %v2092 = vunpack.c.l.b16 %v1499
  %v2093 = vunpack.c.l.b16 %v1500
  %v2094 = vunpack.c.h.b16 %v1500
  %v2095 = vunpack.c.l.b16 %v1501
  %v2096 = vunpack.c.h.b16 %v1501
  %v2097 = vunpack.c.l.b16 %v1502
  %v2098 = vunpack.c.l.b16 %v1503
  %v2099 = vunpack.c.h.b16 %v1503
  %v2100 = vunpack.c.l.b16 %v1504
  %v2101 = vunpack.c.h.b16 %v1504
  %v2102 = vunpack.c.l.b16 %v1505
  %v2103 = vunpack.c.l.b16 %v1506
  %v2104 = vunpack.c.h.b16 %v1506
  %v2105 = vunpack.c.l.b16 %v1507
  %v2106 = vunpack.c.h.b16 %v1507
  %v2107 = vunpack.c.l.b16 %v1508
  %v2108 = vunpack.c.l.b16 %v1509
  %v2109 = vunpack.c.h.b16 %v1509
  %v2110 = vunpack.c.l.b16 %v1510
  %v2111 = vunpack.c.h.b16 %v1510
  %v2112 = vunpack.c.l.b16 %v1511
  %v2113 = vunpack.c.l.b16 %v1512
  %v2114 = vunpack.c.h.b16 %v1512
  %v2115 = vunpack.c.l.b16 %v1513
  %v2116 = vunpack.c.h.b16 %v1513
  %v2117 = vunpack.c.l.b16 %v1514
  %v2118 = vunpack.c.l.b16 %v1515
  %v2119 = vunpack.c.h.b16 %v1515
  %v2120 = vunpack.c.l.b16 %v1516
  %v2121 = vunpack.c.h.b16 %v1516
  %v2122 = vunpack.c.l.b16 %v1517
  %v2123 = vunpack.c.l.b16 %v1518
  %v2124 = vunpack.c.h.b16 %v1518
  %v2125 = vunpack.c.l.b16 %v1519
  %v2126 = vunpack.c.h.b16 %v1519
  %v2127 = vunpack.c.l.b16 %v1520
  %v2128 = vunpack.c.l.b16 %v1521
  %v2129 = vunpack.c.h.b16 %v1521
  %v2130 = vunpack.c.l.b16 %v1522
  %v2131 = vunpack.c.h.b16 %v1522
  %v2132 = vunpack.c.l.b16 %v1523
  %v2133 = vunpack.c.l.b16 %v1524
  %v2134 = vunpack.c.h.b16 %v1524
  %v2135 = vunpack.c.l.b16 %v1525
  %v2136 = vunpack.c.h.b16 %v1525
  %v2137 = vunpack.c.l.b16 %v1526
  %v2138 = vunpack.c.l.b16 %v1527
  %v2139 = vunpack.c.h.b16 %v1527
  %v2140 = vunpack.c.l.b16 %v1528
  %v2141 = vunpack.c.h.b16 %v1528
  %v2142 = vunpack.c.l.b16 %v1529
  %v2143 = vunpack.c.l.b16 %v1530
  %v2144 = vunpack.c.h.b16 %v1530
  %v2145 = vunpack.c.l.b16 %v1531
  %v2146 = vunpack.c.h.b16 %v1531
  %v2147 = vunpack.c.l.b16 %v1532
  %v2148 = vunpack.c.l.b16 %v1533
  %v2149 = vunpack.c.h.b16 %v1533
  %v2150 = vunpack.c.l.b16 %v1534
  %v2151 = vunpack.c.h.b16 %v1534
  %v2152 = vunpack.c.l.b16 %v1535
  %v2153 = vunpack.c.l.b16 %v1536
  %v2154 = vunpack.c.h.b16 %v1536
  %v2155 = vunpack.c.l.b16 %v1537
  %v2156 = vunpack.c.h.b16 %v1537
  %v2157 = vunpack.c.l.b16 %v1538
  %v2158 = vunpack.c.l.b16 %v1539
  %v2159 = vunpack.c.h.b16 %v1539
  %v2160 = vunpack.c.l.b16 %v1540
  %v2161 = vunpack.c.h.b16 %v1540
  %v2162 = vunpack.c.l.b16 %v1541
  %v2163 = vunpack.c.l.b16 %v1542
  %v2164 = vunpack.c.h.b16 %v1542
  %v2165 = vunpack.c.l.b16 %v1543
  %v2166 = vunpack.c.h.b16 %v1543
  %v2167 = vunpack.c.l.b16 %v1544
  %v2168 = vunpack.c.l.b16 %v1545
  %v2169 = vunpack.c.h.b16 %v1545
  %v2170 = vunpack.c.l.b16 %v1546
  %v2171 = vunpack.c.h.b16 %v1546
  %v2172 = vunpack.c.l.b16 %v1547
  %v2173 = vunpack.c.l.b16 %v1548
  %v2174 = vunpack.c.h.b16 %v1548
  %v2175 = vunpack.c.l.b16 %v1549
  %v2176 = vunpack.c.h.b16 %v1549
  %v2177 = vunpack.c.l.b16 %v1550
  %v2178 = vunpack.c.l.b16 %v1551
  %v2179 = vunpack.c.h.b16 %v1551
  %v2180 = vunpack.c.l.b16 %v1552
  %v2181 = vunpack.c.h.b16 %v1552
  %v2182 = vunpack.c.l.b16 %v1553
  %v2183 = vunpack.c.l.b16 %v1554
  %v2184 = vunpack.c.h.b16 %v1554
  %v2185 = vunpack.c.l.b16 %v1555
  %v2186 = vunpack.c.h.b16 %v1555
  %v2187 = vunpack.c.l.b16 %v1556
  %v2188 = vunpack.c.l.b16 %v1557
  %v2189 = vunpack.c.h.b16 %v1557
  %v2190 = vunpack.c.l.b16 %v1558
  %v2191 = vunpack.c.h.b16 %v1558
  %v2192 = vunpack.c.l.b16 %v1559
  %v2193 = vunpack.c.l.b16 %v1560
  %v2194 = vunpack.c.h.b16 %v1560
  %v2195 = vunpack.c.l.b16 %v1561
  %v2196 = vunpack.c.h.b16 %v1561
  %v2197 = vunpack.c.l.b16 %v1562
  %v2198 = vunpack.c.l.b16 %v1563
  %v2199 = vunpack.c.h.b16 %v1563
  %v2200 = vunpack.c.l.b16 %v1564
  %v2201 = vunpack.c.h.b16 %v1564
  %v2202 = vunpack.c.l.b16 %v1565
  %v2203 = vunpack.c.l.b16 %v1566
  %v2204 = vunpack.c.h.b16 %v1566
  %v2205 = vunpack.c.l.b16 %v1567
  %v2206 = vunpack.c.h.b16 %v1567
  %v2207 = vunpack.c.l.b16 %v1568
  %v2208 = vunpack.c.l.b16 %v1569
  %v2209 = vunpack.c.h.b16 %v1569
  %v2210 = vunpack.c.l.b16 %v1570
  %v2211 = vunpack.c.h.b16 %v1570
  %v2212 = vunpack.c.l.b16 %v1571
  %v2213 = vunpack.c.l.b16 %v1572
  %v2214 = vunpack.c.h.b16 %v1572
  %v2215 = vunpack.c.l.b16 %v1573
  %v2216 = vunpack.c.h.b16 %v1573
  %v2217 = vunpack.c.l.b16 %v1574
  %v2218 = vunpack.c.l.b16 %v1575
  %v2219 = vunpack.c.h.b16 %v1575
  %v2220 = vunpack.c.l.b16 %v1576
  %v2221 = vunpack.c.h.b16 %v1576
  %v2222 = vunpack.c.l.b16 %v1577
  %v2223 = vunpack.c.l.b16 %v1578
  %v2224 = vunpack.c.h.b16 %v1578
  %v2225 = vunpack.c.l.b16 %v1579
  %v2226 = vunpack.c.h.b16 %v1579
  %v2227 = vunpack.c.l.b16 %v1580
  %v2228 = vunpack.c.l.b16 %v1581
  %v2229 = vunpack.c.h.b16 %v1581
  %v2230 = vunpack.c.l.b16 %v1582
  %v2231 = vunpack.c.h.b16 %v1582
  %v2232 = vunpack.c.l.b16 %v1583
  %v2233 = vunpack.c.l.b16 %v1584
  %v2234 = vunpack.c.h.b16 %v1584
  %v2235 = vunpack.c.l.b16 %v1585
  %v2236 = vunpack.c.h.b16 %v1585
  %v2237 = vunpack.c.l.b16 %v1586
  %v2238 = vunpack.c.l.b16 %v1587
  %v2239 = vunpack.c.h.b16 %v1587
  %v2240 = vunpack.c.l.b16 %v1588
  %v2241 = vunpack.c.h.b16 %v1588
  %v2242 = vunpack.c.l.b16 %v1589
  %v2243 = vunpack.c.l.b16 %v1590
  %v2244 = vunpack.c.h.b16 %v1590
  %v2245 = vunpack.c.l.b16 %v1591
  %v2246 = vunpack.c.h.b16 %v1591
  %v2247 = vunpack.c.l.b16 %v1592
  %v2248 = vunpack.c.l.b16 %v1593
  %v2249 = vunpack.c.h.b16 %v1593
  %v2250 = vunpack.c.l.b16 %v1594
  %v2251 = vunpack.c.h.b16 %v1594
  %v2252 = vunpack.c.l.b16 %v1595
  %v2253 = vunpack.c.l.b16 %v1596
  %v2254 = vunpack.c.h.b16 %v1596
  %v2255 = vunpack.c.l.b16 %v1597
  %v2256 = vunpack.c.h.b16 %v1597
  %v2257 = vunpack.c.l.b16 %v1598
  %v2258 = vunpack.c.l.b16 %v1599
  %v2259 = vunpack.c.h.b16 %v1599
  %v2260 = vunpack.c.l.b16 %v1600
  %v2261 = vunpack.c.h.b16 %v1600
  %v2262 = vunpack.c.l.b16 %v1601
  %v2263 = vunpack.c.l.b16 %v1602
  %v2264 = vunpack.c.h.b16 %v1602
  %v2265 = vunpack.c.l.b16 %v1603
  %v2266 = vunpack.c.h.b16 %v1603
  %v2267 = vunpack.c.l.b16 %v1604
  %v2268 = vunpack.c.l.b16 %v1605
  %v2269 = vunpack.c.h.b16 %v1605
  %v2270 = vunpack.c.l.b16 %v1606
  %v2271 = vunpack.c.h.b16 %v1606
  %v2272 = vunpack.c.l.b16 %v1607
  %v2273 = vunpack.c.l.b16 %v1608
  %v2274 = vunpack.c.h.b16 %v1608
  %v2275 = vunpack.c.l.b16 %v1609
  %v2276 = vunpack.c.h.b16 %v1609
  %v2277 = vunpack.c.l.b16 %v1610
  %v2278 = vpack.c.b16 %v1883, %v1878
  %v2279 = vpack.c.b16 %v1884, %v1879
  %v2280 = vpack.c.b16 %v1885, %v1880
  %v2281 = vpack.c.b16 %v1886, %v1881
  %v2282 = vpack.c.b16 %v1887, %v1882
  %v2283 = vpack.c.b16 %v1893, %v1888
  %v2284 = vpack.c.b16 %v1894, %v1889
  %v2285 = vpack.c.b16 %v1895, %v1890
  %v2286 = vpack.c.b16 %v1896, %v1891
  %v2287 = vpack.c.b16 %v1897, %v1892
  %v2288 = vpack.c.b16 %v1903, %v1898
  %v2289 = vpack.c.b16 %v1904, %v1899
  %v2290 = vpack.c.b16 %v1905, %v1900
  %v2291 = vpack.c.b16 %v1906, %v1901
  %v2292 = vpack.c.b16 %v1907, %v1902
  %v2293 = vpack.c.b16 %v1913, %v1908
  %v2294 = vpack.c.b16 %v1914, %v1909
  %v2295 = vpack.c.b16 %v1915, %v1910
  %v2296 = vpack.c.b16 %v1916, %v1911
  %v2297 = vpack.c.b16 %v1917, %v1912
  %v2298 = vpack.c.b16 %v1923, %v1918
  %v2299 = vpack.c.b16 %v1924, %v1919
  %v2300 = vpack.c.b16 %v1925, %v1920
  %v2301 = vpack.c.b16 %v1926, %v1921
  %v2302 = vpack.c.b16 %v1927, %v1922
  %v2303 = vpack.c.b16 %v1933, %v1928
  %v2304 = vpack.c.b16 %v1934, %v1929
  %v2305 = vpack.c.b16 %v1935, %v1930
  %v2306 = vpack.c.b16 %v1936, %v1931
  %v2307 = vpack.c.b16 %v1937, %v1932
  %v2308 = vpack.c.b16 %v1943, %v1938
  %v2309 = vpack.c.b16 %v1944, %v1939
  %v2310 = vpack.c.b16 %v1945, %v1940
  %v2311 = vpack.c.b16 %v1946, %v1941
  %v2312 = vpack.c.b16 %v1947, %v1942
  %v2313 = vpack.c.b16 %v1953, %v1948
  %v2314 = vpack.c.b16 %v1954, %v1949
  %v2315 = vpack.c.b16 %v1955, %v1950
  %v2316 = vpack.c.b16 %v1956, %v1951
  %v2317 = vpack.c.b16 %v1957, %v1952
  %v2318 = vpack.c.b16 %v1963, %v1958
  %v2319 = vpack.c.b16 %v1964, %v1959
  %v2320 = vpack.c.b16 %v1965, %v1960
  %v2321 = vpack.c.b16 %v1966, %v1961
  %v2322 = vpack.c.b16 %v1967, %v1962
  %v2323 = vpack.c.b16 %v1973, %v1968
  %v2324 = vpack.c.b16 %v1974, %v1969
  %v2325 = vpack.c.b16 %v1975, %v1970
  %v2326 = vpack.c.b16 %v1976, %v1971
  %v2327 = vpack.c.b16 %v1977, %v1972
  %v2328 = vpack.c.b16 %v1983, %v1978
  %v2329 = vpack.c.b16 %v1984, %v1979
  %v2330 = vpack.c.b16 %v1985, %v1980
  %v2331 = vpack.c.b16 %v1986, %v1981
  %v2332 = vpack.c.b16 %v1987, %v1982
  %v2333 = vpack.c.b16 %v1993, %v1988
  %v2334 = vpack.c.b16 %v1994, %v1989
  %v2335 = vpack.c.b16 %v1995, %v1990
  %v2336 = vpack.c.b16 %v1996, %v1991
  %v2337 = vpack.c.b16 %v1997, %v1992
  %v2338 = vpack.c.b16 %v2003, %v1998
  %v2339 = vpack.c.b16 %v2004, %v1999
  %v2340 = vpack.c.b16 %v2005, %v2000
  %v2341 = vpack.c.b16 %v2006, %v2001
  %v2342 = vpack.c.b16 %v2007, %v2002
  %v2343 = vpack.c.b16 %v2013, %v2008
  %v2344 = vpack.c.b16 %v2014, %v2009
  %v2345 = vpack.c.b16 %v2015, %v2010
  %v2346 = vpack.c.b16 %v2016, %v2011
  %v2347 = vpack.c.b16 %v2017, %v2012
  %v2348 = vpack.c.b16 %v2023, %v2018
  %v2349 = vpack.c.b16 %v2024, %v2019
  %v2350 = vpack.c.b16 %v2025, %v2020
  %v2351 = vpack.c.b16 %v2026, %v2021
  %v2352 = vpack.c.b16 %v2027, %v2022
  %v2353 = vpack.c.b16 %v2033, %v2028
  %v2354 = vpack.c.b16 %v2034, %v2029
  %v2355 = vpack.c.b16 %v2035, %v2030
  %v2356 = vpack.c.b16 %v2036, %v2031
  %v2357 = vpack.c.b16 %v2037, %v2032
  %v2358 = vpack.c.b16 %v2043, %v2038
  %v2359 = vpack.c.b16 %v2044, %v2039
  %v2360 = vpack.c.b16 %v2045, %v2040
  %v2361 = vpack.c.b16 %v2046, %v2041
  %v2362 = vpack.c.b16 %v2047, %v2042
  %v2363 = vpack.c.b16 %v2053, %v2048
  %v2364 = vpack.c.b16 %v2054, %v2049
  %v2365 = vpack.c.b16 %v2055, %v2050
  %v2366 = vpack.c.b16 %v2056, %v2051
  %v2367 = vpack.c.b16 %v2057, %v2052
  %v2368 = vpack.c.b16 %v2063, %v2058
  %v2369 = vpack.c.b16 %v2064, %v2059
  %v2370 = vpack.c.b16 %v2065, %v2060
  %v2371 = vpack.c.b16 %v2066, %v2061
  %v2372 = vpack.c.b16 %v2067, %v2062
  %v2373 = vpack.c.b16 %v2073, %v2068
  %v2374 = vpack.c.b16 %v2074, %v2069
  %v2375 = vpack.c.b16 %v2075, %v2070
  %v2376 = vpack.c.b16 %v2076, %v2071
  %v2377 = vpack.c.b16 %v2077, %v2072
  %v2378 = vpack.c.b16 %v2083, %v2078
  %v2379 = vpack.c.b16 %v2084, %v2079
  %v2380 = vpack.c.b16 %v2085, %v2080
  %v2381 = vpack.c.b16 %v2086, %v2081
  %v2382 = vpack.c.b16 %v2087, %v2082
  %v2383 = vpack.c.b16 %v2093, %v2088
  %v2384 = vpack.c.b16 %v2094, %v2089
  %v2385 = vpack.c.b16 %v2095, %v2090
  %v2386 = vpack.c.b16 %v2096, %v2091
  %v2387 = vpack.c.b16 %v2097, %v2092
  %v2388 = vpack.c.b16 %v2103, %v2098
  %v2389 = vpack.c.b16 %v2104, %v2099
  %v2390 = vpack.c.b16 %v2105, %v2100
  %v2391 = vpack.c.b16 %v2106, %v2101
  %v2392 = vpack.c.b16 %v2107, %v2102
  %v2393 = vpack.c.b16 %v2113, %v2108
  %v2394 = vpack.c.b16 %v2114, %v2109
  %v2395 = vpack.c.b16 %v2115, %v2110
  %v2396 = vpack.c.b16 %v2116, %v2111
  %v2397 = vpack.c.b16 %v2117, %v2112
  %v2398 = vpack.c.b16 %v2123, %v2118
  %v2399 = vpack.c.b16 %v2124, %v2119
  %v2400 = vpack.c.b16 %v2125, %v2120
  %v2401 = vpack.c.b16 %v2126, %v2121
  %v2402 = vpack.c.b16 %v2127, %v2122
  %v2403 = vpack.c.b16 %v2133, %v2128
  %v2404 = vpack.c.b16 %v2134, %v2129
  %v2405 = vpack.c.b16 %v2135, %v2130
  %v2406 = vpack.c.b16 %v2136, %v2131
  %v2407 = vpack.c.b16 %v2137, %v2132
  %v2408 = vpack.c.b16 %v2143, %v2138
  %v2409 = vpack.c.b16 %v2144, %v2139
  %v2410 = vpack.c.b16 %v2145, %v2140
  %v2411 = vpack.c.b16 %v2146, %v2141
  %v2412 = vpack.c.b16 %v2147, %v2142
  %v2413 = vpack.c.b16 %v2153, %v2148
  %v2414 = vpack.c.b16 %v2154, %v2149
  %v2415 = vpack.c.b16 %v2155, %v2150
  %v2416 = vpack.c.b16 %v2156, %v2151
  %v2417 = vpack.c.b16 %v2157, %v2152
  %v2418 = vpack.c.b16 %v2163, %v2158
  %v2419 = vpack.c.b16 %v2164, %v2159
  %v2420 = vpack.c.b16 %v2165, %v2160
  %v2421 = vpack.c.b16 %v2166, %v2161
  %v2422 = vpack.c.b16 %v2167, %v2162
  %v2423 = vpack.c.b16 %v2173, %v2168
  %v2424 = vpack.c.b16 %v2174, %v2169
  %v2425 = vpack.c.b16 %v2175, %v2170
  %v2426 = vpack.c.b16 %v2176, %v2171
  %v2427 = vpack.c.b16 %v2177, %v2172
  %v2428 = vpack.c.b16 %v2183, %v2178
  %v2429 = vpack.c.b16 %v2184, %v2179
  %v2430 = vpack.c.b16 %v2185, %v2180
  %v2431 = vpack.c.b16 %v2186, %v2181
  %v2432 = vpack.c.b16 %v2187, %v2182
  %v2433 = vpack.c.b16 %v2193, %v2188
  %v2434 = vpack.c.b16 %v2194, %v2189
  %v2435 = vpack.c.b16 %v2195, %v2190
  %v2436 = vpack.c.b16 %v2196, %v2191
  %v2437 = vpack.c.b16 %v2197, %v2192
  %v2438 = vpack.c.b16 %v2203, %v2198
  %v2439 = vpack.c.b16 %v2204, %v2199
  %v2440 = vpack.c.b16 %v2205, %v2200
  %v2441 = vpack.c.b16 %v2206, %v2201
  %v2442 = vpack.c.b16 %v2207, %v2202
  %v2443 = vpack.c.b16 %v2213, %v2208
  %v2444 = vpack.c.b16 %v2214, %v2209
  %v2445 = vpack.c.b16 %v2215, %v2210
  %v2446 = vpack.c.b16 %v2216, %v2211
  %v2447 = vpack.c.b16 %v2217, %v2212
  %v2448 = vpack.c.b16 %v2223, %v2218
  %v2449 = vpack.c.b16 %v2224, %v2219
  %v2450 = vpack.c.b16 %v2225, %v2220
  %v2451 = vpack.c.b16 %v2226, %v2221
  %v2452 = vpack.c.b16 %v2227, %v2222
  %v2453 = vpack.c.b16 %v2233, %v2228
  %v2454 = vpack.c.b16 %v2234, %v2229
  %v2455 = vpack.c.b16 %v2235, %v2230
  %v2456 = vpack.c.b16 %v2236, %v2231
  %v2457 = vpack.c.b16 %v2237, %v2232
  %v2458 = vpack.c.b16 %v2243, %v2238
  %v2459 = vpack.c.b16 %v2244, %v2239
  %v2460 = vpack.c.b16 %v2245, %v2240
  %v2461 = vpack.c.b16 %v2246, %v2241
  %v2462 = vpack.c.b16 %v2247, %v2242
  %v2463 = vpack.c.b16 %v2253, %v2248
  %v2464 = vpack.c.b16 %v2254, %v2249
  %v2465 = vpack.c.b16 %v2255, %v2250
  %v2466 = vpack.c.b16 %v2256, %v2251
  %v2467 = vpack.c.b16 %v2257, %v2252
  %v2468 = vpack.c.b16 %v2263, %v2258
  %v2469 = vpack.c.b16 %v2264, %v2259
  %v2470 = vpack.c.b16 %v2265, %v2260
  %v2471 = vpack.c.b16 %v2266, %v2261
  %v2472 = vpack.c.b16 %v2267, %v2262
  %v2473 = vpack.c.b16 %v2273, %v2268
  %v2474 = vpack.c.b16 %v2274, %v2269
  %v2475 = vpack.c.b16 %v2275, %v2270
  %v2476 = vpack.c.b16 %v2276, %v2271
  %v2477 = vpack.c.b16 %v2277, %v2272
  %2678 = vmatprep.subr.bf16.mxu0 %v2314
  %2679 = vmatpush1.bf16.msra.mxu0 %v2313
  %2680 = vmatprep.subr.bf16.mxu0 %v2309
  %2681 = vmatpush1.bf16.msra.mxu0 %v2308
  %2682 = vmatprep.subr.bf16.mxu0 %v2304
  %2683 = vmatpush1.bf16.msra.mxu0 %v2303
  %2684 = vmatprep.subr.bf16.mxu0 %v2299
  %2685 = vmatpush1.bf16.msra.mxu0 %v2298
  %2686 = vmatprep.subr.bf16.mxu0 %v2294
  %2687 = vmatpush1.bf16.msra.mxu0 %v2293
  %2688 = vmatprep.subr.bf16.mxu0 %v2289
  %2689 = vmatpush1.bf16.msra.mxu0 %v2288
  %2690 = vmatprep.subr.bf16.mxu0 %v2284
  %2691 = vmatpush1.bf16.msra.mxu0 %v2283
  %2692 = vmatprep.subr.bf16.mxu0 %v2279
  %2693 = vmatpush1.bf16.msra.mxu0 %v2278
  %2694 = vmatprep.subr.bf16.mxu0 %v2354
  %2695 = vmatpush2.bf16.msra.mxu0 %v2353
  %2696 = vmatprep.subr.bf16.mxu0 %v2349
  %2697 = vmatpush2.bf16.msra.mxu0 %v2348
  %2698 = vmatprep.subr.bf16.mxu0 %v2344
  %2699 = vmatpush2.bf16.msra.mxu0 %v2343
  %2700 = vmatprep.subr.bf16.mxu0 %v2339
  %2701 = vmatpush2.bf16.msra.mxu0 %v2338
  %2702 = vmatprep.subr.bf16.mxu0 %v2334
  %2703 = vmatpush2.bf16.msra.mxu0 %v2333
  %2704 = vmatprep.subr.bf16.mxu0 %v2329
  %2705 = vmatpush2.bf16.msra.mxu0 %v2328
  %2706 = vmatprep.subr.bf16.mxu0 %v2324
  %2707 = vmatpush2.bf16.msra.mxu0 %v2323
  %2708 = vmatprep.subr.bf16.mxu0 %v2319
  %2709 = vmatpush2.bf16.msra.mxu0 %v2318
  %2710 = vmatprep.mubr.bf16.mxu0 %v1367
  %2711 = vmatmul.mubr.bf16.gmra.mxu0 %v1366
  %v2712 = vpop.f32.mrf.mxu0
  %v2713 = vadd.f32 %v1616, %v2712
  %v2714 = vpop.f32.mrf.mxu0
  %v2715 = vadd.f32 %v1620, %v2714
  %v2716 = vpop.f32.mrf.mxu0
  %v2717 = vadd.f32 %v1616, %v2716
  %v2718 = vpop.f32.mrf.mxu0
  %v2719 = vadd.f32 %v1620, %v2718
  %2720 = vdwg.mxu0
  %2721 = vmatprep.subr.bf16.mxu0 %v2394
  %2722 = vmatpush1.bf16.msra.mxu0 %v2393
  %2723 = vmatprep.subr.bf16.mxu0 %v2389
  %2724 = vmatpush1.bf16.msra.mxu0 %v2388
  %2725 = vmatprep.subr.bf16.mxu0 %v2384
  %2726 = vmatpush1.bf16.msra.mxu0 %v2383
  %2727 = vmatprep.subr.bf16.mxu0 %v2379
  %2728 = vmatpush1.bf16.msra.mxu0 %v2378
  %2729 = vmatprep.subr.bf16.mxu0 %v2374
  %2730 = vmatpush1.bf16.msra.mxu0 %v2373
  %2731 = vmatprep.subr.bf16.mxu0 %v2369
  %2732 = vmatpush1.bf16.msra.mxu0 %v2368
  %2733 = vmatprep.subr.bf16.mxu0 %v2364
  %2734 = vmatpush1.bf16.msra.mxu0 %v2363
  %2735 = vmatprep.subr.bf16.mxu0 %v2359
  %2736 = vmatpush1.bf16.msra.mxu0 %v2358
  %2737 = vmatprep.subr.bf16.mxu0 %v2434
  %2738 = vmatpush2.bf16.msra.mxu0 %v2433
  %2739 = vmatprep.subr.bf16.mxu0 %v2429
  %2740 = vmatpush2.bf16.msra.mxu0 %v2428
  %2741 = vmatprep.subr.bf16.mxu0 %v2424
  %2742 = vmatpush2.bf16.msra.mxu0 %v2423
  %2743 = vmatprep.subr.bf16.mxu0 %v2419
  %2744 = vmatpush2.bf16.msra.mxu0 %v2418
  %2745 = vmatprep.subr.bf16.mxu0 %v2414
  %2746 = vmatpush2.bf16.msra.mxu0 %v2413
  %2747 = vmatprep.subr.bf16.mxu0 %v2409
  %2748 = vmatpush2.bf16.msra.mxu0 %v2408
  %2749 = vmatprep.subr.bf16.mxu0 %v2404
  %2750 = vmatpush2.bf16.msra.mxu0 %v2403
  %2751 = vmatprep.subr.bf16.mxu0 %v2399
  %2752 = vmatpush2.bf16.msra.mxu0 %v2398
  %2753 = vmatprep.mubr.bf16.mxu0 %v1369
  %2754 = vmatmul.mubr.bf16.gmra.mxu0 %v1368
  %v2755 = vpop.f32.mrf.mxu0
  %v2756 = vadd.f32 %v2713, %v2755
  %v2757 = vpop.f32.mrf.mxu0
  %v2758 = vadd.f32 %v2715, %v2757
  %v2759 = vpop.f32.mrf.mxu0
  %v2760 = vadd.f32 %v2717, %v2759
  %v2761 = vpop.f32.mrf.mxu0
  %v2762 = vadd.f32 %v2719, %v2761
  %2763 = vdwg.mxu0
  %2764 = vmatprep.subr.bf16.mxu0 %v2474
  %2765 = vmatpush1.bf16.msra.mxu0 %v2473
  %2766 = vmatprep.subr.bf16.mxu0 %v2469
  %2767 = vmatpush1.bf16.msra.mxu0 %v2468
  %2768 = vmatprep.subr.bf16.mxu0 %v2464
  %2769 = vmatpush1.bf16.msra.mxu0 %v2463
  %2770 = vmatprep.subr.bf16.mxu0 %v2459
  %2771 = vmatpush1.bf16.msra.mxu0 %v2458
  %2772 = vmatprep.subr.bf16.mxu0 %v2454
  %2773 = vmatpush1.bf16.msra.mxu0 %v2453
  %2774 = vmatprep.subr.bf16.mxu0 %v2449
  %2775 = vmatpush1.bf16.msra.mxu0 %v2448
  %2776 = vmatprep.subr.bf16.mxu0 %v2444
  %2777 = vmatpush1.bf16.msra.mxu0 %v2443
  %2778 = vmatprep.subr.bf16.mxu0 %v2439
  %2779 = vmatpush1.bf16.msra.mxu0 %v2438
  %2780 = vmatprep.subr.bf16.mxu0 0
  %2781 = vmatpush2.bf16.msra.mxu0 0
  %2782 = vmatprep.subr.bf16.mxu0 0
  %2783 = vmatpush2.bf16.msra.mxu0 0
  %2784 = vmatprep.subr.bf16.mxu0 0
  %2785 = vmatpush2.bf16.msra.mxu0 0
  %2786 = vmatprep.subr.bf16.mxu0 0
  %2787 = vmatpush2.bf16.msra.mxu0 0
  %2788 = vmatprep.subr.bf16.mxu0 0
  %2789 = vmatpush2.bf16.msra.mxu0 0
  %2790 = vmatprep.subr.bf16.mxu0 0
  %2791 = vmatpush2.bf16.msra.mxu0 0
  %2792 = vmatprep.subr.bf16.mxu0 0
  %2793 = vmatpush2.bf16.msra.mxu0 0
  %2794 = vmatprep.subr.bf16.mxu0 0
  %2795 = vmatpush2.bf16.msra.mxu0 0
  %2796 = vmatprep.mubr.bf16.mxu0 0
  %2797 = vmatmul.mubr.bf16.gmra.mxu0 %v1370
  %v2798 = vpop.f32.mrf.mxu0
  %v2799 = vadd.f32 %v2756, %v2798
  %v2800 = vpop.f32.mrf.mxu0
  %v2801 = vadd.f32 %v2758, %v2800
  %v2802 = vpop.f32.mrf.mxu0
  %v2803 = vadd.f32 %v2760, %v2802
  %v2804 = vpop.f32.mrf.mxu0
  %v2805 = vadd.f32 %v2762, %v2804
  %2806 = vdwg.mxu0
  %2807 = vmatprep.subr.bf16.mxu0 %v2316
  %2808 = vmatpush1.bf16.msra.mxu0 %v2315
  %2809 = vmatprep.subr.bf16.mxu0 %v2311
  %2810 = vmatpush1.bf16.msra.mxu0 %v2310
  %2811 = vmatprep.subr.bf16.mxu0 %v2306
  %2812 = vmatpush1.bf16.msra.mxu0 %v2305
  %2813 = vmatprep.subr.bf16.mxu0 %v2301
  %2814 = vmatpush1.bf16.msra.mxu0 %v2300
  %2815 = vmatprep.subr.bf16.mxu0 %v2296
  %2816 = vmatpush1.bf16.msra.mxu0 %v2295
  %2817 = vmatprep.subr.bf16.mxu0 %v2291
  %2818 = vmatpush1.bf16.msra.mxu0 %v2290
  %2819 = vmatprep.subr.bf16.mxu0 %v2286
  %2820 = vmatpush1.bf16.msra.mxu0 %v2285
  %2821 = vmatprep.subr.bf16.mxu0 %v2281
  %2822 = vmatpush1.bf16.msra.mxu0 %v2280
  %2823 = vmatprep.subr.bf16.mxu0 %v2356
  %2824 = vmatpush2.bf16.msra.mxu0 %v2355
  %2825 = vmatprep.subr.bf16.mxu0 %v2351
  %2826 = vmatpush2.bf16.msra.mxu0 %v2350
  %2827 = vmatprep.subr.bf16.mxu0 %v2346
  %2828 = vmatpush2.bf16.msra.mxu0 %v2345
  %2829 = vmatprep.subr.bf16.mxu0 %v2341
  %2830 = vmatpush2.bf16.msra.mxu0 %v2340
  %2831 = vmatprep.subr.bf16.mxu0 %v2336
  %2832 = vmatpush2.bf16.msra.mxu0 %v2335
  %2833 = vmatprep.subr.bf16.mxu0 %v2331
  %2834 = vmatpush2.bf16.msra.mxu0 %v2330
  %2835 = vmatprep.subr.bf16.mxu0 %v2326
  %2836 = vmatpush2.bf16.msra.mxu0 %v2325
  %2837 = vmatprep.subr.bf16.mxu0 %v2321
  %2838 = vmatpush2.bf16.msra.mxu0 %v2320
  %2839 = vmatprep.mubr.bf16.mxu0 %v1367
  %2840 = vmatmul.mubr.bf16.gmra.mxu0 %v1366
  %v2841 = vpop.f32.mrf.mxu0
  %v2842 = vadd.f32 %v1624, %v2841
  %v2843 = vpop.f32.mrf.mxu0
  %v2844 = vadd.f32 %v1628, %v2843
  %v2845 = vpop.f32.mrf.mxu0
  %v2846 = vadd.f32 %v1624, %v2845
  %v2847 = vpop.f32.mrf.mxu0
  %v2848 = vadd.f32 %v1628, %v2847
  %2849 = vdwg.mxu0
  %2850 = vmatprep.subr.bf16.mxu0 %v2396
  %2851 = vmatpush1.bf16.msra.mxu0 %v2395
  %2852 = vmatprep.subr.bf16.mxu0 %v2391
  %2853 = vmatpush1.bf16.msra.mxu0 %v2390
  %2854 = vmatprep.subr.bf16.mxu0 %v2386
  %2855 = vmatpush1.bf16.msra.mxu0 %v2385
  %2856 = vmatprep.subr.bf16.mxu0 %v2381
  %2857 = vmatpush1.bf16.msra.mxu0 %v2380
  %2858 = vmatprep.subr.bf16.mxu0 %v2376
  %2859 = vmatpush1.bf16.msra.mxu0 %v2375
  %2860 = vmatprep.subr.bf16.mxu0 %v2371
  %2861 = vmatpush1.bf16.msra.mxu0 %v2370
  %2862 = vmatprep.subr.bf16.mxu0 %v2366
  %2863 = vmatpush1.bf16.msra.mxu0 %v2365
  %2864 = vmatprep.subr.bf16.mxu0 %v2361
  %2865 = vmatpush1.bf16.msra.mxu0 %v2360
  %2866 = vmatprep.subr.bf16.mxu0 %v2436
  %2867 = vmatpush2.bf16.msra.mxu0 %v2435
  %2868 = vmatprep.subr.bf16.mxu0 %v2431
  %2869 = vmatpush2.bf16.msra.mxu0 %v2430
  %2870 = vmatprep.subr.bf16.mxu0 %v2426
  %2871 = vmatpush2.bf16.msra.mxu0 %v2425
  %2872 = vmatprep.subr.bf16.mxu0 %v2421
  %2873 = vmatpush2.bf16.msra.mxu0 %v2420
  %2874 = vmatprep.subr.bf16.mxu0 %v2416
  %2875 = vmatpush2.bf16.msra.mxu0 %v2415
  %2876 = vmatprep.subr.bf16.mxu0 %v2411
  %2877 = vmatpush2.bf16.msra.mxu0 %v2410
  %2878 = vmatprep.subr.bf16.mxu0 %v2406
  %2879 = vmatpush2.bf16.msra.mxu0 %v2405
  %2880 = vmatprep.subr.bf16.mxu0 %v2401
  %2881 = vmatpush2.bf16.msra.mxu0 %v2400
  %2882 = vmatprep.mubr.bf16.mxu0 %v1369
  %2883 = vmatmul.mubr.bf16.gmra.mxu0 %v1368
  %v2884 = vpop.f32.mrf.mxu0
  %v2885 = vadd.f32 %v2842, %v2884
  %v2886 = vpop.f32.mrf.mxu0
  %v2887 = vadd.f32 %v2844, %v2886
  %v2888 = vpop.f32.mrf.mxu0
  %v2889 = vadd.f32 %v2846, %v2888
  %v2890 = vpop.f32.mrf.mxu0
  %v2891 = vadd.f32 %v2848, %v2890
  %2892 = vdwg.mxu0
  %2893 = vmatprep.subr.bf16.mxu0 %v2476
  %2894 = vmatpush1.bf16.msra.mxu0 %v2475
  %2895 = vmatprep.subr.bf16.mxu0 %v2471
  %2896 = vmatpush1.bf16.msra.mxu0 %v2470
  %2897 = vmatprep.subr.bf16.mxu0 %v2466
  %2898 = vmatpush1.bf16.msra.mxu0 %v2465
  %2899 = vmatprep.subr.bf16.mxu0 %v2461
  %2900 = vmatpush1.bf16.msra.mxu0 %v2460
  %2901 = vmatprep.subr.bf16.mxu0 %v2456
  %2902 = vmatpush1.bf16.msra.mxu0 %v2455
  %2903 = vmatprep.subr.bf16.mxu0 %v2451
  %2904 = vmatpush1.bf16.msra.mxu0 %v2450
  %2905 = vmatprep.subr.bf16.mxu0 %v2446
  %2906 = vmatpush1.bf16.msra.mxu0 %v2445
  %2907 = vmatprep.subr.bf16.mxu0 %v2441
  %2908 = vmatpush1.bf16.msra.mxu0 %v2440
  %2909 = vmatprep.subr.bf16.mxu0 0
  %2910 = vmatpush2.bf16.msra.mxu0 0
  %2911 = vmatprep.subr.bf16.mxu0 0
  %2912 = vmatpush2.bf16.msra.mxu0 0
  %2913 = vmatprep.subr.bf16.mxu0 0
  %2914 = vmatpush2.bf16.msra.mxu0 0
  %2915 = vmatprep.subr.bf16.mxu0 0
  %2916 = vmatpush2.bf16.msra.mxu0 0
  %2917 = vmatprep.subr.bf16.mxu0 0
  %2918 = vmatpush2.bf16.msra.mxu0 0
  %2919 = vmatprep.subr.bf16.mxu0 0
  %2920 = vmatpush2.bf16.msra.mxu0 0
  %2921 = vmatprep.subr.bf16.mxu0 0
  %2922 = vmatpush2.bf16.msra.mxu0 0
  %2923 = vmatprep.subr.bf16.mxu0 0
  %2924 = vmatpush2.bf16.msra.mxu0 0
  %2925 = vmatprep.mubr.bf16.mxu0 0
  %2926 = vmatmul.mubr.bf16.gmra.mxu0 %v1370
  %v2927 = vpop.f32.mrf.mxu0
  %v2928 = vadd.f32 %v2885, %v2927
  %v2929 = vpop.f32.mrf.mxu0
  %v2930 = vadd.f32 %v2887, %v2929
  %v2931 = vpop.f32.mrf.mxu0
  %v2932 = vadd.f32 %v2889, %v2931
  %v2933 = vpop.f32.mrf.mxu0
  %v2934 = vadd.f32 %v2891, %v2933
  %2935 = vdwg.mxu0
  %2936 = vmatprep.subr.bf16.mxu0 0
  %2937 = vmatpush1.bf16.msra.mxu0 %v2317
  %2938 = vmatprep.subr.bf16.mxu0 0
  %2939 = vmatpush1.bf16.msra.mxu0 %v2312
  %2940 = vmatprep.subr.bf16.mxu0 0
  %2941 = vmatpush1.bf16.msra.mxu0 %v2307
  %2942 = vmatprep.subr.bf16.mxu0 0
  %2943 = vmatpush1.bf16.msra.mxu0 %v2302
  %2944 = vmatprep.subr.bf16.mxu0 0
  %2945 = vmatpush1.bf16.msra.mxu0 %v2297
  %2946 = vmatprep.subr.bf16.mxu0 0
  %2947 = vmatpush1.bf16.msra.mxu0 %v2292
  %2948 = vmatprep.subr.bf16.mxu0 0
  %2949 = vmatpush1.bf16.msra.mxu0 %v2287
  %2950 = vmatprep.subr.bf16.mxu0 0
  %2951 = vmatpush1.bf16.msra.mxu0 %v2282
  %2952 = vmatprep.subr.bf16.mxu0 0
  %2953 = vmatpush2.bf16.msra.mxu0 %v2357
  %2954 = vmatprep.subr.bf16.mxu0 0
  %2955 = vmatpush2.bf16.msra.mxu0 %v2352
  %2956 = vmatprep.subr.bf16.mxu0 0
  %2957 = vmatpush2.bf16.msra.mxu0 %v2347
  %2958 = vmatprep.subr.bf16.mxu0 0
  %2959 = vmatpush2.bf16.msra.mxu0 %v2342
  %2960 = vmatprep.subr.bf16.mxu0 0
  %2961 = vmatpush2.bf16.msra.mxu0 %v2337
  %2962 = vmatprep.subr.bf16.mxu0 0
  %2963 = vmatpush2.bf16.msra.mxu0 %v2332
  %2964 = vmatprep.subr.bf16.mxu0 0
  %2965 = vmatpush2.bf16.msra.mxu0 %v2327
  %2966 = vmatprep.subr.bf16.mxu0 0
  %2967 = vmatpush2.bf16.msra.mxu0 %v2322
  %2968 = vmatprep.mubr.bf16.mxu0 %v1367
  %2969 = vmatmul.mubr.bf16.gmra.mxu0 %v1366
  %v2970 = vpop.f32.mrf.mxu0
  %v2971 = vadd.f32 %v1632, %v2970
  %v2972 = vpop.f32.mrf.mxu0
  %v2973 = vpop.f32.mrf.mxu0
  %v2974 = vadd.f32 %v1632, %v2973
  %v2975 = vpop.f32.mrf.mxu0
  %2976 = vdwg.mxu0
  %2977 = vmatprep.subr.bf16.mxu0 0
  %2978 = vmatpush1.bf16.msra.mxu0 %v2397
  %2979 = vmatprep.subr.bf16.mxu0 0
  %2980 = vmatpush1.bf16.msra.mxu0 %v2392
  %2981 = vmatprep.subr.bf16.mxu0 0
  %2982 = vmatpush1.bf16.msra.mxu0 %v2387
  %2983 = vmatprep.subr.bf16.mxu0 0
  %2984 = vmatpush1.bf16.msra.mxu0 %v2382
  %2985 = vmatprep.subr.bf16.mxu0 0
  %2986 = vmatpush1.bf16.msra.mxu0 %v2377
  %2987 = vmatprep.subr.bf16.mxu0 0
  %2988 = vmatpush1.bf16.msra.mxu0 %v2372
  %2989 = vmatprep.subr.bf16.mxu0 0
  %2990 = vmatpush1.bf16.msra.mxu0 %v2367
  %2991 = vmatprep.subr.bf16.mxu0 0
  %2992 = vmatpush1.bf16.msra.mxu0 %v2362
  %2993 = vmatprep.subr.bf16.mxu0 0
  %2994 = vmatpush2.bf16.msra.mxu0 %v2437
  %2995 = vmatprep.subr.bf16.mxu0 0
  %2996 = vmatpush2.bf16.msra.mxu0 %v2432
  %2997 = vmatprep.subr.bf16.mxu0 0
  %2998 = vmatpush2.bf16.msra.mxu0 %v2427
  %2999 = vmatprep.subr.bf16.mxu0 0
  %3000 = vmatpush2.bf16.msra.mxu0 %v2422
  %3001 = vmatprep.subr.bf16.mxu0 0
  %3002 = vmatpush2.bf16.msra.mxu0 %v2417
  %3003 = vmatprep.subr.bf16.mxu0 0
  %3004 = vmatpush2.bf16.msra.mxu0 %v2412
  %3005 = vmatprep.subr.bf16.mxu0 0
  %3006 = vmatpush2.bf16.msra.mxu0 %v2407
  %3007 = vmatprep.subr.bf16.mxu0 0
  %3008 = vmatpush2.bf16.msra.mxu0 %v2402
  %3009 = vmatprep.mubr.bf16.mxu0 %v1369
  %3010 = vmatmul.mubr.bf16.gmra.mxu0 %v1368
  %v3011 = vpop.f32.mrf.mxu0
  %v3012 = vadd.f32 %v2971, %v3011
  %v3013 = vpop.f32.mrf.mxu0
  %v3014 = vpop.f32.mrf.mxu0
  %v3015 = vadd.f32 %v2974, %v3014
  %v3016 = vpop.f32.mrf.mxu0
  %3017 = vdwg.mxu0
  %3018 = vmatprep.subr.bf16.mxu0 0
  %3019 = vmatpush1.bf16.msra.mxu0 %v2477
  %3020 = vmatprep.subr.bf16.mxu0 0
  %3021 = vmatpush1.bf16.msra.mxu0 %v2472
  %3022 = vmatprep.subr.bf16.mxu0 0
  %3023 = vmatpush1.bf16.msra.mxu0 %v2467
  %3024 = vmatprep.subr.bf16.mxu0 0
  %3025 = vmatpush1.bf16.msra.mxu0 %v2462
  %3026 = vmatprep.subr.bf16.mxu0 0
  %3027 = vmatpush1.bf16.msra.mxu0 %v2457
  %3028 = vmatprep.subr.bf16.mxu0 0
  %3029 = vmatpush1.bf16.msra.mxu0 %v2452
  %3030 = vmatprep.subr.bf16.mxu0 0
  %3031 = vmatpush1.bf16.msra.mxu0 %v2447
  %3032 = vmatprep.subr.bf16.mxu0 0
  %3033 = vmatpush1.bf16.msra.mxu0 %v2442
  %3034 = vmatprep.subr.bf16.mxu0 0
  %3035 = vmatpush2.bf16.msra.mxu0 0
  %3036 = vmatprep.subr.bf16.mxu0 0
  %3037 = vmatpush2.bf16.msra.mxu0 0
  %3038 = vmatprep.subr.bf16.mxu0 0
  %3039 = vmatpush2.bf16.msra.mxu0 0
  %3040 = vmatprep.subr.bf16.mxu0 0
  %3041 = vmatpush2.bf16.msra.mxu0 0
  %3042 = vmatprep.subr.bf16.mxu0 0
  %3043 = vmatpush2.bf16.msra.mxu0 0
  %3044 = vmatprep.subr.bf16.mxu0 0
  %3045 = vmatpush2.bf16.msra.mxu0 0
  %3046 = vmatprep.subr.bf16.mxu0 0
  %3047 = vmatpush2.bf16.msra.mxu0 0
  %3048 = vmatprep.subr.bf16.mxu0 0
  %3049 = vmatpush2.bf16.msra.mxu0 0
  %3050 = vmatprep.mubr.bf16.mxu0 0
  %3051 = vmatmul.mubr.bf16.gmra.mxu0 %v1370
  %v3052 = vpop.f32.mrf.mxu0
  %v3053 = vadd.f32 %v3012, %v3052
  %v3054 = vpop.f32.mrf.mxu0
  %v3055 = vpop.f32.mrf.mxu0
  %v3056 = vadd.f32 %v3015, %v3055
  %v3057 = vpop.f32.mrf.mxu0
  %3058 = vdwg.mxu0
  %v3059 = vmax.f32 %v2799, 0.0
  %v3060 = vmax.f32 %v2801, 0.0
  %v3061 = vmax.f32 %v2928, 0.0
  %v3062 = vmax.f32 %v2930, 0.0
  %v3063 = vmax.f32 %v3053, 0.0
  %v3064 = vmax.f32 %v2803, 0.0
  %v3065 = vmax.f32 %v2805, 0.0
  %v3066 = vmax.f32 %v2932, 0.0
  %v3067 = vmax.f32 %v2934, 0.0
  %v3068 = vmax.f32 %v3056, 0.0
  %v3069 = vpack.c.bf16 %v3064, %v3059
  %v3070 = vpack.c.bf16 %v3065, %v3060
  %v3071 = vpack.c.bf16 %v3066, %v3061
  %v3072 = vpack.c.bf16 %v3067, %v3062
  %v3073 = vpack.c.bf16 %v3068, %v3063
  %v3074 = vld [vmem:[%s5] sm:$0xf]
  %v3075 = vld [vmem:[%s5 + $0x4] sm:$0xf]
  %v3076 = vld [vmem:[%s5 + $0x8] sm:$0xf]
  %v3077 = vld [vmem:[%s5 + $0xc] sm:$0xf]
  %v3078 = vld [vmem:[%s5 + $0x10] sm:$0xf]
  %v3079 = vld [vmem:[%s5 + $0x14] sm:$0xf]
  %v3080 = vld [vmem:[%s5 + $0x18] sm:$0xf]
  %v3081 = vld [vmem:[%s5 + $0x1c] sm:$0xf]
  %v3082 = vld [vmem:[%s5 + $0x20] sm:$0xf]
  %v3083 = vld [vmem:[%s5 + $0x24] sm:$0xf]
  %v3084 = vld [vmem:[%s5 + $0x28] sm:$0xf]
  %v3085 = vld [vmem:[%s5 + $0x2c] sm:$0xf]
  %v3086 = vld [vmem:[%s5 + $0x30] sm:$0xf]
  %v3087 = vld [vmem:[%s5 + $0x34] sm:$0xf]
  %v3088 = vld [vmem:[%s5 + $0x38] sm:$0xf]
  %v3089 = vld [vmem:[%s5 + $0x3c] sm:$0xf]
  %v3090 = vld [vmem:[%s5 + $0x40] sm:$0xf]
  %v3091 = vld [vmem:[%s5 + $0x44] sm:$0xf]
  %v3092 = vld [vmem:[%s5 + $0x48] sm:$0xf]
  %v3093 = vld [vmem:[%s5 + $0x4c] sm:$0xf]
  %v3094 = vld [vmem:[%s5 + $0x50] sm:$0xf]
  %v3095 = vld [vmem:[%s5 + $0x54] sm:$0xf]
  %v3096 = vld [vmem:[%s5 + $0x58] sm:$0xf]
  %v3097 = vld [vmem:[%s5 + $0x5c] sm:$0xf]
  %v3098 = vld [vmem:[%s5 + $0x60] sm:$0xf]
  %v3099 = vld [vmem:[%s5 + $0x64] sm:$0xf]
  %v3100 = vld [vmem:[%s5 + $0x68] sm:$0xf]
  %v3101 = vld [vmem:[%s5 + $0x6c] sm:$0xf]
  %v3102 = vld [vmem:[%s5 + $0x70] sm:$0xf]
  %v3103 = vld [vmem:[%s5 + $0x74] sm:$0xf]
  %v3104 = vld [vmem:[%s5 + $0x78] sm:$0xf]
  %v3105 = vld [vmem:[%s5 + $0x7c] sm:$0xf]
  %v3106 = vld [vmem:[%s5 + $0x80] sm:$0xf]
  %v3107 = vld [vmem:[%s5 + $0x84] sm:$0xf]
  %v3108 = vld [vmem:[%s5 + $0x88] sm:$0xf]
  %v3109 = vld [vmem:[%s5 + $0x8c] sm:$0xf]
  %v3110 = vld [vmem:[%s5 + $0x90] sm:$0xf]
  %v3111 = vld [vmem:[%s5 + $0x94] sm:$0xf]
  %v3112 = vld [vmem:[%s5 + $0x98] sm:$0xf]
  %v3113 = vld [vmem:[%s5 + $0x9c] sm:$0xf]
  %v3114 = vld [vmem:[%s5 + $0xa0] sm:$0xf]
  %v3115 = vld [vmem:[%s5 + $0xa4] sm:$0xf]
  %v3116 = vld [vmem:[%s5 + $0xa8] sm:$0xf]
  %v3117 = vld [vmem:[%s5 + $0xac] sm:$0xf]
  %v3118 = vld [vmem:[%s5 + $0xb0] sm:$0xf]
  %v3119 = vld [vmem:[%s5 + $0xb4] sm:$0xf]
  %v3120 = vld [vmem:[%s5 + $0xb8] sm:$0xf]
  %v3121 = vld [vmem:[%s5 + $0xbc] sm:$0xf]
  %v3122 = vld [vmem:[%s5 + $0xc0] sm:$0xf]
  %v3123 = vld [vmem:[%s5 + $0xc4] sm:$0xf]
  %v3124 = vld [vmem:[%s5 + $0xc8] sm:$0xf]
  %v3125 = vld [vmem:[%s5 + $0xcc] sm:$0xf]
  %v3126 = vld [vmem:[%s5 + $0xd0] sm:$0xf]
  %v3127 = vld [vmem:[%s5 + $0xd4] sm:$0xf]
  %v3128 = vld [vmem:[%s5 + $0xd8] sm:$0xf]
  %v3129 = vld [vmem:[%s5 + $0xdc] sm:$0xf]
  %v3130 = vld [vmem:[%s5 + $0xe0] sm:$0xf]
  %v3131 = vld [vmem:[%s5 + $0xe4] sm:$0xf]
  %v3132 = vld [vmem:[%s5 + $0xe8] sm:$0xf]
  %v3133 = vld [vmem:[%s5 + $0xec] sm:$0xf]
  %v3134 = vld [vmem:[%s5 + $0xf0] sm:$0xf]
  %v3135 = vld [vmem:[%s5 + $0xf4] sm:$0xf]
  %v3136 = vld [vmem:[%s5 + $0xf8] sm:$0xf]
  %v3137 = vld [vmem:[%s5 + $0xfc] sm:$0xf]
  %v3138 = vld [vmem:[%s5 + $0x100] sm:$0xf]
  %v3139 = vld [vmem:[%s5 + $0x104] sm:$0xf]
  %v3140 = vld [vmem:[%s5 + $0x108] sm:$0xf]
  %v3141 = vld [vmem:[%s5 + $0x10c] sm:$0xf]
  %v3142 = vld [vmem:[%s5 + $0x110] sm:$0xf]
  %v3143 = vld [vmem:[%s5 + $0x114] sm:$0xf]
  %v3144 = vld [vmem:[%s5 + $0x118] sm:$0xf]
  %v3145 = vld [vmem:[%s5 + $0x11c] sm:$0xf]
  %v3146 = vld [vmem:[%s5 + $0x120] sm:$0xf]
  %v3147 = vld [vmem:[%s5 + $0x124] sm:$0xf]
  %v3148 = vld [vmem:[%s5 + $0x128] sm:$0xf]
  %v3149 = vld [vmem:[%s5 + $0x12c] sm:$0xf]
  %v3150 = vld [vmem:[%s5 + $0x130] sm:$0xf]
  %v3151 = vld [vmem:[%s5 + $0x134] sm:$0xf]
  %v3152 = vld [vmem:[%s5 + $0x138] sm:$0xf]
  %v3153 = vld [vmem:[%s5 + $0x13c] sm:$0xf]
  %v3154 = vld [vmem:[%s6] sm:$0x1]
  %v3156 = vlaneseq
  %v3157 = vshrl.u32 %v3156, 7
  %v3158 = vsub.s32 0, %v3157
  %v3159 = vrot.slane %v3154, %v3158
  %v3241 = vunpack.c.l.b16 %v3074
  %v3242 = vunpack.c.l.b16 %v3075
  %v3243 = vunpack.c.l.b16 %v3076
  %v3244 = vunpack.c.l.b16 %v3077
  %v3245 = vunpack.c.l.b16 %v3078
  %v3246 = vunpack.c.l.b16 %v3079
  %v3247 = vunpack.c.l.b16 %v3080
  %v3248 = vunpack.c.l.b16 %v3081
  %v3249 = vunpack.c.l.b16 %v3082
  %v3250 = vunpack.c.l.b16 %v3083
  %v3251 = vunpack.c.l.b16 %v3084
  %v3252 = vunpack.c.l.b16 %v3085
  %v3253 = vunpack.c.l.b16 %v3086
  %v3254 = vunpack.c.l.b16 %v3087
  %v3255 = vunpack.c.l.b16 %v3088
  %v3256 = vunpack.c.l.b16 %v3089
  %v3257 = vunpack.c.l.b16 %v3090
  %v3258 = vunpack.c.l.b16 %v3091
  %v3259 = vunpack.c.l.b16 %v3092
  %v3260 = vunpack.c.l.b16 %v3093
  %v3261 = vunpack.c.l.b16 %v3094
  %v3262 = vunpack.c.l.b16 %v3095
  %v3263 = vunpack.c.l.b16 %v3096
  %v3264 = vunpack.c.l.b16 %v3097
  %v3265 = vunpack.c.l.b16 %v3098
  %v3266 = vunpack.c.l.b16 %v3099
  %v3267 = vunpack.c.l.b16 %v3100
  %v3268 = vunpack.c.l.b16 %v3101
  %v3269 = vunpack.c.l.b16 %v3102
  %v3270 = vunpack.c.l.b16 %v3103
  %v3271 = vunpack.c.l.b16 %v3104
  %v3272 = vunpack.c.l.b16 %v3105
  %v3273 = vunpack.c.l.b16 %v3106
  %v3274 = vunpack.c.l.b16 %v3107
  %v3275 = vunpack.c.l.b16 %v3108
  %v3276 = vunpack.c.l.b16 %v3109
  %v3277 = vunpack.c.l.b16 %v3110
  %v3278 = vunpack.c.l.b16 %v3111
  %v3279 = vunpack.c.l.b16 %v3112
  %v3280 = vunpack.c.l.b16 %v3113
  %v3281 = vunpack.c.l.b16 %v3114
  %v3282 = vunpack.c.l.b16 %v3115
  %v3283 = vunpack.c.l.b16 %v3116
  %v3284 = vunpack.c.l.b16 %v3117
  %v3285 = vunpack.c.l.b16 %v3118
  %v3286 = vunpack.c.l.b16 %v3119
  %v3287 = vunpack.c.l.b16 %v3120
  %v3288 = vunpack.c.l.b16 %v3121
  %v3289 = vunpack.c.l.b16 %v3122
  %v3290 = vunpack.c.l.b16 %v3123
  %v3291 = vunpack.c.l.b16 %v3124
  %v3292 = vunpack.c.l.b16 %v3125
  %v3293 = vunpack.c.l.b16 %v3126
  %v3294 = vunpack.c.l.b16 %v3127
  %v3295 = vunpack.c.l.b16 %v3128
  %v3296 = vunpack.c.l.b16 %v3129
  %v3297 = vunpack.c.l.b16 %v3130
  %v3298 = vunpack.c.l.b16 %v3131
  %v3299 = vunpack.c.l.b16 %v3132
  %v3300 = vunpack.c.l.b16 %v3133
  %v3301 = vunpack.c.l.b16 %v3134
  %v3302 = vunpack.c.l.b16 %v3135
  %v3303 = vunpack.c.l.b16 %v3136
  %v3304 = vunpack.c.l.b16 %v3137
  %v3305 = vunpack.c.l.b16 %v3138
  %v3306 = vunpack.c.l.b16 %v3139
  %v3307 = vunpack.c.l.b16 %v3140
  %v3308 = vunpack.c.l.b16 %v3141
  %v3309 = vunpack.c.l.b16 %v3142
  %v3310 = vunpack.c.l.b16 %v3143
  %v3311 = vunpack.c.l.b16 %v3144
  %v3312 = vunpack.c.l.b16 %v3145
  %v3313 = vunpack.c.l.b16 %v3146
  %v3314 = vunpack.c.l.b16 %v3147
  %v3315 = vunpack.c.l.b16 %v3148
  %v3316 = vunpack.c.l.b16 %v3149
  %v3317 = vunpack.c.l.b16 %v3150
  %v3318 = vunpack.c.l.b16 %v3151
  %v3319 = vunpack.c.l.b16 %v3152
  %v3320 = vunpack.c.l.b16 %v3153
  %v3321 = vpack.c.b16 %v3242, %v3241
  %v3322 = vpack.c.b16 %v3244, %v3243
  %v3323 = vpack.c.b16 %v3246, %v3245
  %v3324 = vpack.c.b16 %v3248, %v3247
  %v3325 = vpack.c.b16 %v3250, %v3249
  %v3326 = vpack.c.b16 %v3252, %v3251
  %v3327 = vpack.c.b16 %v3254, %v3253
  %v3328 = vpack.c.b16 %v3256, %v3255
  %v3329 = vpack.c.b16 %v3258, %v3257
  %v3330 = vpack.c.b16 %v3260, %v3259
  %v3331 = vpack.c.b16 %v3262, %v3261
  %v3332 = vpack.c.b16 %v3264, %v3263
  %v3333 = vpack.c.b16 %v3266, %v3265
  %v3334 = vpack.c.b16 %v3268, %v3267
  %v3335 = vpack.c.b16 %v3270, %v3269
  %v3336 = vpack.c.b16 %v3272, %v3271
  %v3337 = vpack.c.b16 %v3274, %v3273
  %v3338 = vpack.c.b16 %v3276, %v3275
  %v3339 = vpack.c.b16 %v3278, %v3277
  %v3340 = vpack.c.b16 %v3280, %v3279
  %v3341 = vpack.c.b16 %v3282, %v3281
  %v3342 = vpack.c.b16 %v3284, %v3283
  %v3343 = vpack.c.b16 %v3286, %v3285
  %v3344 = vpack.c.b16 %v3288, %v3287
  %v3345 = vpack.c.b16 %v3290, %v3289
  %v3346 = vpack.c.b16 %v3292, %v3291
  %v3347 = vpack.c.b16 %v3294, %v3293
  %v3348 = vpack.c.b16 %v3296, %v3295
  %v3349 = vpack.c.b16 %v3298, %v3297
  %v3350 = vpack.c.b16 %v3300, %v3299
  %v3351 = vpack.c.b16 %v3302, %v3301
  %v3352 = vpack.c.b16 %v3304, %v3303
  %v3353 = vpack.c.b16 %v3306, %v3305
  %v3354 = vpack.c.b16 %v3308, %v3307
  %v3355 = vpack.c.b16 %v3310, %v3309
  %v3356 = vpack.c.b16 %v3312, %v3311
  %v3357 = vpack.c.b16 %v3314, %v3313
  %v3358 = vpack.c.b16 %v3316, %v3315
  %v3359 = vpack.c.b16 %v3318, %v3317
  %v3360 = vpack.c.b16 %v3320, %v3319
  %3401 = vmatprep.subr.bf16.mxu0 0
  %3402 = vmatpush1.bf16.msra.mxu0 %v3328
  %3403 = vmatprep.subr.bf16.mxu0 0
  %3404 = vmatpush1.bf16.msra.mxu0 %v3327
  %3405 = vmatprep.subr.bf16.mxu0 0
  %3406 = vmatpush1.bf16.msra.mxu0 %v3326
  %3407 = vmatprep.subr.bf16.mxu0 0
  %3408 = vmatpush1.bf16.msra.mxu0 %v3325
  %3409 = vmatprep.subr.bf16.mxu0 0
  %3410 = vmatpush1.bf16.msra.mxu0 %v3324
  %3411 = vmatprep.subr.bf16.mxu0 0
  %3412 = vmatpush1.bf16.msra.mxu0 %v3323
  %3413 = vmatprep.subr.bf16.mxu0 0
  %3414 = vmatpush1.bf16.msra.mxu0 %v3322
  %3415 = vmatprep.subr.bf16.mxu0 0
  %3416 = vmatpush1.bf16.msra.mxu0 %v3321
  %3417 = vmatprep.subr.bf16.mxu0 0
  %3418 = vmatpush2.bf16.msra.mxu0 %v3336
  %3419 = vmatprep.subr.bf16.mxu0 0
  %3420 = vmatpush2.bf16.msra.mxu0 %v3335
  %3421 = vmatprep.subr.bf16.mxu0 0
  %3422 = vmatpush2.bf16.msra.mxu0 %v3334
  %3423 = vmatprep.subr.bf16.mxu0 0
  %3424 = vmatpush2.bf16.msra.mxu0 %v3333
  %3425 = vmatprep.subr.bf16.mxu0 0
  %3426 = vmatpush2.bf16.msra.mxu0 %v3332
  %3427 = vmatprep.subr.bf16.mxu0 0
  %3428 = vmatpush2.bf16.msra.mxu0 %v3331
  %3429 = vmatprep.subr.bf16.mxu0 0
  %3430 = vmatpush2.bf16.msra.mxu0 %v3330
  %3431 = vmatprep.subr.bf16.mxu0 0
  %3432 = vmatpush2.bf16.msra.mxu0 %v3329
  %3433 = vmatprep.mubr.bf16.mxu0 %v3070
  %3434 = vmatmul.mubr.bf16.gmra.mxu0 %v3069
  %v3435 = vpop.f32.mrf.mxu0
  %v3436 = vadd.f32 %v3159, %v3435
  %v3437 = vpop.f32.mrf.mxu0
  %v3438 = vpop.f32.mrf.mxu0
  %v3439 = vadd.f32 %v3159, %v3438
  %v3440 = vpop.f32.mrf.mxu0
  %3441 = vdwg.mxu0
  %3442 = vmatprep.subr.bf16.mxu0 0
  %3443 = vmatpush1.bf16.msra.mxu0 %v3344
  %3444 = vmatprep.subr.bf16.mxu0 0
  %3445 = vmatpush1.bf16.msra.mxu0 %v3343
  %3446 = vmatprep.subr.bf16.mxu0 0
  %3447 = vmatpush1.bf16.msra.mxu0 %v3342
  %3448 = vmatprep.subr.bf16.mxu0 0
  %3449 = vmatpush1.bf16.msra.mxu0 %v3341
  %3450 = vmatprep.subr.bf16.mxu0 0
  %3451 = vmatpush1.bf16.msra.mxu0 %v3340
  %3452 = vmatprep.subr.bf16.mxu0 0
  %3453 = vmatpush1.bf16.msra.mxu0 %v3339
  %3454 = vmatprep.subr.bf16.mxu0 0
  %3455 = vmatpush1.bf16.msra.mxu0 %v3338
  %3456 = vmatprep.subr.bf16.mxu0 0
  %3457 = vmatpush1.bf16.msra.mxu0 %v3337
  %3458 = vmatprep.subr.bf16.mxu0 0
  %3459 = vmatpush2.bf16.msra.mxu0 %v3352
  %3460 = vmatprep.subr.bf16.mxu0 0
  %3461 = vmatpush2.bf16.msra.mxu0 %v3351
  %3462 = vmatprep.subr.bf16.mxu0 0
  %3463 = vmatpush2.bf16.msra.mxu0 %v3350
  %3464 = vmatprep.subr.bf16.mxu0 0
  %3465 = vmatpush2.bf16.msra.mxu0 %v3349
  %3466 = vmatprep.subr.bf16.mxu0 0
  %3467 = vmatpush2.bf16.msra.mxu0 %v3348
  %3468 = vmatprep.subr.bf16.mxu0 0
  %3469 = vmatpush2.bf16.msra.mxu0 %v3347
  %3470 = vmatprep.subr.bf16.mxu0 0
  %3471 = vmatpush2.bf16.msra.mxu0 %v3346
  %3472 = vmatprep.subr.bf16.mxu0 0
  %3473 = vmatpush2.bf16.msra.mxu0 %v3345
  %3474 = vmatprep.mubr.bf16.mxu0 %v3072
  %3475 = vmatmul.mubr.bf16.gmra.mxu0 %v3071
  %v3476 = vpop.f32.mrf.mxu0
  %v3477 = vadd.f32 %v3436, %v3476
  %v3478 = vpop.f32.mrf.mxu0
  %v3479 = vpop.f32.mrf.mxu0
  %v3480 = vadd.f32 %v3439, %v3479
  %v3481 = vpop.f32.mrf.mxu0
  %3482 = vdwg.mxu0
  %3483 = vmatprep.subr.bf16.mxu0 0
  %3484 = vmatpush1.bf16.msra.mxu0 %v3360
  %3485 = vmatprep.subr.bf16.mxu0 0
  %3486 = vmatpush1.bf16.msra.mxu0 %v3359
  %3487 = vmatprep.subr.bf16.mxu0 0
  %3488 = vmatpush1.bf16.msra.mxu0 %v3358
  %3489 = vmatprep.subr.bf16.mxu0 0
  %3490 = vmatpush1.bf16.msra.mxu0 %v3357
  %3491 = vmatprep.subr.bf16.mxu0 0
  %3492 = vmatpush1.bf16.msra.mxu0 %v3356
  %3493 = vmatprep.subr.bf16.mxu0 0
  %3494 = vmatpush1.bf16.msra.mxu0 %v3355
  %3495 = vmatprep.subr.bf16.mxu0 0
  %3496 = vmatpush1.bf16.msra.mxu0 %v3354
  %3497 = vmatprep.subr.bf16.mxu0 0
  %3498 = vmatpush1.bf16.msra.mxu0 %v3353
  %3499 = vmatprep.subr.bf16.mxu0 0
  %3500 = vmatpush2.bf16.msra.mxu0 0
  %3501 = vmatprep.subr.bf16.mxu0 0
  %3502 = vmatpush2.bf16.msra.mxu0 0
  %3503 = vmatprep.subr.bf16.mxu0 0
  %3504 = vmatpush2.bf16.msra.mxu0 0
  %3505 = vmatprep.subr.bf16.mxu0 0
  %3506 = vmatpush2.bf16.msra.mxu0 0
  %3507 = vmatprep.subr.bf16.mxu0 0
  %3508 = vmatpush2.bf16.msra.mxu0 0
  %3509 = vmatprep.subr.bf16.mxu0 0
  %3510 = vmatpush2.bf16.msra.mxu0 0
  %3511 = vmatprep.subr.bf16.mxu0 0
  %3512 = vmatpush2.bf16.msra.mxu0 0
  %3513 = vmatprep.subr.bf16.mxu0 0
  %3514 = vmatpush2.bf16.msra.mxu0 0
  %3515 = vmatprep.mubr.bf16.mxu0 0
  %3516 = vmatmul.mubr.bf16.gmra.mxu0 %v3073
  %v3517 = vpop.f32.mrf.mxu0
  %v3518 = vadd.f32 %v3477, %v3517
  %v3519 = vpop.f32.mrf.mxu0
  %v3520 = vpop.f32.mrf.mxu0
  %v3521 = vadd.f32 %v3480, %v3520
  %v3522 = vpop.f32.mrf.mxu0
  %3523 = vdwg.mxu0
  %v3524 = vsub.f32 0.0, %v3518
  %v3525 = vsub.f32 0.0, %v3521
  %v3526 = vmul.f32 %v3524, 1.442695
  %v3527 = vpow.pop %v3526
  %v3528 = vmul.f32 %v3525, 1.442695
  %v3529 = vpow.pop %v3528
  %v3530 = vadd.f32 %v3527, 1.0
  %v3531 = vadd.f32 %v3529, 1.0
  %v3532 = vrcp.pop %v3530
  %v3533 = vmul.f32 1.0, %v3532
  %v3534 = vrcp.pop %v3531
  %v3535 = vmul.f32 1.0, %v3534
  %3536 = vst [vmem:[%s7] sm:$0xff] %v3533
  %3537 = vst [vmem:[%s7 + $0x8] sm:$0xff] %v3535
  // Predicated region
  $region30: #{forward.29} parent=0 // pred_check
    _
  $region31: #{forward.29} parent=0 // pred_check_branch
    %3539 = sbr.rel (0) target = $region33
  $region32: #{forward.29} parent=0 // pred_region
    _
  $region33: #{forward.29} parent=0 // pred_fallthru
    _
  // Predicated region
  $region34: #{forward.29} parent=0 // pred_check
    _
  $region35: #{forward.29} parent=0 // pred_check_branch
    %3541 = sbr.rel (0) target = $region37
  $region36: #{forward.29} parent=0 // pred_region
    _
  $region37: #{forward.29} parent=0 // pred_fallthru
    _

</llo_original>
